<compile_context>
chip_gen: v7x
topology: tpu7x:2x2x1
jax: 0.10.0
libtpu: 0.0.40
codegen_flags: <defaults>
</compile_context>

<pallas_src>
import jax
import jax.numpy as jnp
from jax.experimental import pallas as pl
from jax.experimental.pallas import tpu as pltpu


# ------------------------------ Pallas kernel ------------------------------

def _fused_comb_kernel(xl_ref, xu_ref, wcol_ref, s_up_ref, t_up_ref,
                       wu_t_ref, wl_t_ref, s_cat_ref, t_cat_ref,
                       o_ref, xp_ref):
    # xl_ref   : (1, D, H, W, Cin)   resized x_low, channels-last
    # xu_ref   : (1, Cu, D*H*W)      x_up, channels-first (spatial on lanes)
    # wcol_ref : (27*Cin, Cu)        3x3x3 weights, rows ordered (kd, kh, kw, cin)
    # s_up/t_up: (Cu, 1)             folded conv-bias + BN for the 3x3x3 stage
    # wu_t/wl_t: (Cu, Cu)            transposed halves of the 1x1x1 weight
    # s_cat/t_cat: (Cu, 1)           folded conv-bias + BN for the 1x1x1 stage
    # o_ref    : (1, Cu, D*H*W)      final output, channels-first (lane-dense)
    # xp_ref   : VMEM scratch (D+2, H+2, W+2, Cin) zero-padded conv input
    D, H, W, Cin = xl_ref.shape[1:]
    DHW = D * H * W

    # Zero-pad the resized x_low inside VMEM (no extra HBM pass for jnp.pad).
    xp_ref[...] = jnp.zeros_like(xp_ref)
    xp_ref[1:1 + D, 1:1 + H, 1:1 + W, :] = xl_ref[0]

    # Implicit GEMM: in-VMEM im2col folds all 27 taps into the contraction
    # dim -> a single dot with K = 27*Cin instead of 27 dots with K = Cin.
    cols = []
    for kd in range(3):
        for kh in range(3):
            for kw in range(3):
                patch = xp_ref[kd:kd + D, kh:kh + H, kw:kw + W, :]
                cols.append(patch.reshape(DHW, Cin))
    im2col = jnp.concatenate(cols, axis=-1)                     # (DHW, 27*Cin)
    acc = jnp.dot(im2col, wcol_ref[...],
                  preferred_element_type=jnp.float32)           # (DHW, Cu)

    # One small transpose so everything downstream (epilogue, 1x1 mixing,
    # output store) is lane-dense: (Cu, DHW) with DHW on lanes.
    y = jnp.transpose(acc)                                      # (Cu, DHW) f32
    y = jnp.maximum(y * s_up_ref[...] + t_up_ref[...], 0.0)

    # 1x1x1 conv over concat([x_up, y]) == Wu^T @ x_up + Wl^T @ y (transposed).
    xu = xu_ref[0]                                              # (Cu, DHW)
    z = (jnp.dot(wu_t_ref[...], xu, preferred_element_type=jnp.float32)
         + jnp.dot(wl_t_ref[...], y.astype(xu.dtype),
                   preferred_element_type=jnp.float32))
    z = jnp.maximum(z * s_cat_ref[...] + t_cat_ref[...], 0.0)
    o_ref[0] = z.astype(o_ref.dtype)


# ------------------------------ Pallas wrapper ------------------------------

def fused_combination(x_low_resized_ndhwc, x_up_ncdhw, params,
                      *, compute_dtype=jnp.float32):
    N, D, H, W, Cin = x_low_resized_ndhwc.shape
    _, Cu, Du, Hu, Wu = x_up_ncdhw.shape
    assert (D, H, W) == (Du, Hu, Wu)
    DHW = D * H * W

    xl = x_low_resized_ndhwc.astype(compute_dtype)
    # x_up stays in its native NCDHW layout; reshape to (N, Cu, DHW) is free.
    xu = x_up_ncdhw.reshape(N, Cu, DHW).astype(compute_dtype)
    wcol = params["w_up_col"].astype(compute_dtype)
    wu_t = params["wu_t"].astype(compute_dtype)
    wl_t = params["wl_t"].astype(compute_dtype)

    out = pl.pallas_call(
        _fused_comb_kernel,
        out_shape=jax.ShapeDtypeStruct((N, Cu, DHW), jnp.float32),
        grid=(N,),
        in_specs=[
            pl.BlockSpec((1, D, H, W, Cin), lambda n: (n, 0, 0, 0, 0)),
            pl.BlockSpec((1, Cu, DHW), lambda n: (n, 0, 0)),
            pl.BlockSpec((27 * Cin, Cu), lambda n: (0, 0)),
            pl.BlockSpec((Cu, 1), lambda n: (0, 0)),
            pl.BlockSpec((Cu, 1), lambda n: (0, 0)),
            pl.BlockSpec((Cu, Cu), lambda n: (0, 0)),
            pl.BlockSpec((Cu, Cu), lambda n: (0, 0)),
            pl.BlockSpec((Cu, 1), lambda n: (0, 0)),
            pl.BlockSpec((Cu, 1), lambda n: (0, 0)),
        ],
        out_specs=pl.BlockSpec((1, Cu, DHW), lambda n: (n, 0, 0)),
        scratch_shapes=[pltpu.VMEM((D + 2, H + 2, W + 2, Cin), compute_dtype)],
        compiler_params=pltpu.CompilerParams(
            dimension_semantics=("parallel",),
            vmem_limit_bytes=32 * 1024 * 1024),
    )(xl, xu, wcol,
      params["s_up_col"], params["t_up_col"],
      wu_t, wl_t,
      params["s_cat_col"], params["t_cat_col"])

    # Output is already channels-first: just un-flatten the spatial axis.
    return out.reshape(N, Cu, D, H, W)


# ------------------------- glue: interpolation & params --------------------

def trilinear_resize(x, out_size):
    # x: (N, Di, Hi, Wi, C) -> (N, Do, Ho, Wo, C), PyTorch align_corners=False.
    # TODO(synk): fold trilinear_resize (index/weight tables via scalar
    # prefetch in SMEM) into the fused Pallas kernel to remove the remaining
    # HBM round trip of the upsampled volume.
    _, Di, Hi, Wi, _ = x.shape
    Do, Ho, Wo = out_size

    def lin(out_s, in_s):
        o = jnp.arange(out_s, dtype=jnp.float32)
        src = (o + 0.5) * (in_s / out_s) - 0.5
        src = jnp.clip(src, 0.0, in_s - 1)
        i0 = jnp.floor(src).astype(jnp.int32)
        i1 = jnp.minimum(i0 + 1, in_s - 1)
        w1 = src - i0.astype(jnp.float32)
        return i0, i1, 1.0 - w1, w1

    d0, d1, wd0, wd1 = lin(Do, Di)
    h0, h1, wh0, wh1 = lin(Ho, Hi)
    w0, w1, ww0, ww1 = lin(Wo, Wi)
    x = (x[:, d0] * wd0[None, :, None, None, None]
         + x[:, d1] * wd1[None, :, None, None, None])
    x = (x[:, :, h0] * wh0[None, None, :, None, None]
         + x[:, :, h1] * wh1[None, None, :, None, None])
    x = (x[:, :, :, w0] * ww0[None, None, None, :, None]
         + x[:, :, :, w1] * ww1[None, None, None, :, None])
    return x


def _fold_bn(bias, gamma, beta, mean, var, eps=1e-5):
    s = gamma / jnp.sqrt(var + eps)
    t = beta + (bias - mean) * s
    return s.astype(jnp.float32), t.astype(jnp.float32)


def make_params(key, c_low, c_up):
    ks = jax.random.split(key, 12)
    # self.up = Conv3d(c_low, c_up, k=3, pad=1) + BN(c_up) + ReLU
    w_up = 0.1 * jax.random.normal(ks[0], (3, 3, 3, c_low, c_up), jnp.float32)  # DHWIO
    b_up = 0.1 * jax.random.normal(ks[1], (c_up,), jnp.float32)
    g_up = 1.0 + 0.1 * jax.random.normal(ks[2], (c_up,), jnp.float32)
    be_up = 0.1 * jax.random.normal(ks[3], (c_up,), jnp.float32)
    m_up = 0.05 * jax.random.normal(ks[4], (c_up,), jnp.float32)
    v_up = 1.0 + 0.1 * jnp.abs(jax.random.normal(ks[5], (c_up,), jnp.float32))
    # self.cat_conv = Conv3d(2*c_up, c_up, k=1) + BN(c_up) + ReLU
    w_cat = 0.1 * jax.random.normal(ks[6], (2 * c_up, c_up), jnp.float32)       # (Cin, Cout)
    b_cat = 0.1 * jax.random.normal(ks[7], (c_up,), jnp.float32)
    g_cat = 1.0 + 0.1 * jax.random.normal(ks[8], (c_up,), jnp.float32)
    be_cat = 0.1 * jax.random.normal(ks[9], (c_up,), jnp.float32)
    m_cat = 0.05 * jax.random.normal(ks[10], (c_up,), jnp.float32)
    v_cat = 1.0 + 0.1 * jnp.abs(jax.random.normal(ks[11], (c_up,), jnp.float32))

    s_up, t_up = _fold_bn(b_up, g_up, be_up, m_up, v_up)
    s_cat, t_cat = _fold_bn(b_cat, g_cat, be_cat, m_cat, v_cat)
    return {
        # kernel-layout params
        "w_up_col": w_up.reshape(27 * c_low, c_up),   # rows ordered (kd, kh, kw, cin)
        "s_up_col": s_up.reshape(c_up, 1), "t_up_col": t_up.reshape(c_up, 1),
        "wu_t": w_cat[:c_up].T,                        # applied to x_up (first in concat)
        "wl_t": w_cat[c_up:].T,                        # applied to conv output
        "s_cat_col": s_cat.reshape(c_up, 1), "t_cat_col": t_cat.reshape(c_up, 1),
        # reference-layout params
        "w_up_full": w_up, "w_cat_full": w_cat,
        "s_up": s_up, "t_up": t_up, "s_cat": s_cat, "t_cat": t_cat,
    }


def combination_module_forward(x_low_ncdhw, x_up_ncdhw, params,
                               *, compute_dtype=jnp.float32):
    # Only the (small, low-resolution) x_low is transposed to channels-last,
    # before upsampling; x_up and the output stay in native NCDHW layout.
    x_low = jnp.transpose(x_low_ncdhw, (0, 2, 3, 4, 1))          # -> NDHWC
    x_low = trilinear_resize(x_low, x_up_ncdhw.shape[2:5])
    # TODO(synk): for large volumes add a spatial grid axis with a 1-voxel halo
    # (manual DMA / Element index_map) instead of one batch element per step.
    return fused_combination(x_low, x_up_ncdhw, params,
                             compute_dtype=compute_dtype)


# ----------------------------- pure-JAX reference --------------------------

def _ref_forward(x_low_ncdhw, x_up_ncdhw, params):
    xl = jnp.transpose(x_low_ncdhw, (0, 2, 3, 4, 1))
    xu = jnp.transpose(x_up_ncdhw, (0, 2, 3, 4, 1))
    xl = trilinear_resize(xl, xu.shape[1:4])
    y = jax.lax.conv_general_dilated(
        xl, params["w_up_full"], (1, 1, 1), [(1, 1)] * 3,
        dimension_numbers=("NDHWC", "DHWIO", "NDHWC"))
    y = jnp.maximum(y * params["s_up"] + params["t_up"], 0.0)
    cat = jnp.concatenate([xu, y], axis=-1)
    z = jnp.einsum("ndhwc,co->ndhwo", cat, params["w_cat_full"])
    z = jnp.maximum(z * params["s_cat"] + params["t_cat"], 0.0)
    return jnp.transpose(z, (0, 4, 1, 2, 3))


# ---------------------------------- main -----------------------------------

if __name__ == "__main__":
    key = jax.random.PRNGKey(0)
    k_params, k_low, k_up = jax.random.split(key, 3)

    N, c_low, c_up = 2, 8, 4
    # PyTorch-style NCDHW inputs; x_low is lower-resolution than x_up.
    x_low = jax.random.normal(k_low, (N, c_low, 4, 4, 4), jnp.float32)
    x_up = jax.random.normal(k_up, (N, c_up, 8, 8, 8), jnp.float32)

    params = make_params(k_params, c_low, c_up)

    out = jax.block_until_ready(combination_module_forward(x_low, x_up, params))
    ref = jax.block_until_ready(_ref_forward(x_low, x_up, params))

    assert out.shape == (N, c_up, 8, 8, 8), out.shape
    max_err = float(jnp.max(jnp.abs(out - ref)))
    assert jnp.allclose(out, ref, atol=1e-3, rtol=1e-3), max_err

    print("KERNEL_OK")
</pallas_src>

<mosaic_0001>
module attributes {stable_mosaic.version = 11 : i64} {
  func.func @_fused_comb_kernel(%arg0: i32, %arg1: memref<1x8x8x8x8xf32, #tpu.memory_space<vmem>>, %arg2: memref<1x4x512xf32, #tpu.memory_space<vmem>>, %arg3: memref<216x4xf32, #tpu.memory_space<vmem>>, %arg4: memref<4x1xf32, #tpu.memory_space<vmem>>, %arg5: memref<4x1xf32, #tpu.memory_space<vmem>>, %arg6: memref<4x4xf32, #tpu.memory_space<vmem>>, %arg7: memref<4x4xf32, #tpu.memory_space<vmem>>, %arg8: memref<4x1xf32, #tpu.memory_space<vmem>>, %arg9: memref<4x1xf32, #tpu.memory_space<vmem>>, %arg10: memref<1x4x512xf32, #tpu.memory_space<vmem>>, %arg11: memref<10x10x10x8xf32, #tpu.memory_space<vmem>>) attributes {dimension_semantics = [#tpu.dimension_semantics<parallel>], iteration_bounds = array<i64: 2>, scalar_prefetch = 0 : i64, scratch_operands = 1 : i64, tpu.core_type = #tpu.core_type<tc>, window_params = [{transform_indices = @transform_0, window_bounds = array<i64: 1, 8, 8, 8, 8>}, {transform_indices = @transform_1, window_bounds = array<i64: 1, 4, 512>}, {pipeline_mode = #tpu.pipeline_mode<synchronous>, transform_indices = @transform_2, window_bounds = array<i64: 216, 4>}, {pipeline_mode = #tpu.pipeline_mode<synchronous>, transform_indices = @transform_3, window_bounds = array<i64: 4, 1>}, {pipeline_mode = #tpu.pipeline_mode<synchronous>, transform_indices = @transform_4, window_bounds = array<i64: 4, 1>}, {pipeline_mode = #tpu.pipeline_mode<synchronous>, transform_indices = @transform_5, window_bounds = array<i64: 4, 4>}, {pipeline_mode = #tpu.pipeline_mode<synchronous>, transform_indices = @transform_6, window_bounds = array<i64: 4, 4>}, {pipeline_mode = #tpu.pipeline_mode<synchronous>, transform_indices = @transform_7, window_bounds = array<i64: 4, 1>}, {pipeline_mode = #tpu.pipeline_mode<synchronous>, transform_indices = @transform_8, window_bounds = array<i64: 4, 1>}, {transform_indices = @transform_9, window_bounds = array<i64: 1, 4, 512>}]} {
    %cst = arith.constant 0.000000e+00 : f32
    %0 = vector.broadcast %cst : f32 to vector<10x10x10x8xf32>
    %c0 = arith.constant 0 : index
    %c0_0 = arith.constant 0 : index
    %c0_1 = arith.constant 0 : index
    %c0_2 = arith.constant 0 : index
    %1 = vector.load %arg11[%c0, %c0_0, %c0_1, %c0_2] : memref<10x10x10x8xf32, #tpu.memory_space<vmem>>, vector<10x10x10x8xf32>
    tpu.vector_store %arg11[%c0, %c0_0, %c0_1, %c0_2], %0 {strides = array<i32>} : memref<10x10x10x8xf32, #tpu.memory_space<vmem>>, vector<10x10x10x8xf32>,
    %c0_3 = arith.constant 0 : index
    %c0_4 = arith.constant 0 : index
    %c0_5 = arith.constant 0 : index
    %c0_6 = arith.constant 0 : index
    %c0_7 = arith.constant 0 : index
    %2 = vector.load %arg1[%c0_3, %c0_4, %c0_5, %c0_6, %c0_7] : memref<1x8x8x8x8xf32, #tpu.memory_space<vmem>>, vector<1x8x8x8x8xf32>
    %3 = vector.shape_cast %2 : vector<1x8x8x8x8xf32> to vector<8x8x8x8xf32>
    %c1 = arith.constant 1 : index
    %c1_8 = arith.constant 1 : index
    %c1_9 = arith.constant 1 : index
    %c0_10 = arith.constant 0 : index
    %4 = vector.load %arg11[%c1, %c1_8, %c1_9, %c0_10] : memref<10x10x10x8xf32, #tpu.memory_space<vmem>>, vector<8x8x8x8xf32>
    tpu.vector_store %arg11[%c1, %c1_8, %c1_9, %c0_10], %3 {strides = array<i32>} : memref<10x10x10x8xf32, #tpu.memory_space<vmem>>, vector<8x8x8x8xf32>,
    %c0_11 = arith.constant 0 : index
    %c0_12 = arith.constant 0 : index
    %c0_13 = arith.constant 0 : index
    %c0_14 = arith.constant 0 : index
    %5 = vector.load %arg11[%c0_11, %c0_12, %c0_13, %c0_14] : memref<10x10x10x8xf32, #tpu.memory_space<vmem>>, vector<8x8x8x8xf32>
    %6 = vector.shape_cast %5 : vector<8x8x8x8xf32> to vector<512x8xf32>
    %c0_15 = arith.constant 0 : index
    %c0_16 = arith.constant 0 : index
    %c1_17 = arith.constant 1 : index
    %c0_18 = arith.constant 0 : index
    %7 = vector.load %arg11[%c0_15, %c0_16, %c1_17, %c0_18] : memref<10x10x10x8xf32, #tpu.memory_space<vmem>>, vector<8x8x8x8xf32>
    %8 = vector.shape_cast %7 : vector<8x8x8x8xf32> to vector<512x8xf32>
    %c0_19 = arith.constant 0 : index
    %c0_20 = arith.constant 0 : index
    %c2 = arith.constant 2 : index
    %c0_21 = arith.constant 0 : index
    %9 = vector.load %arg11[%c0_19, %c0_20, %c2, %c0_21] : memref<10x10x10x8xf32, #tpu.memory_space<vmem>>, vector<8x8x8x8xf32>
    %10 = vector.shape_cast %9 : vector<8x8x8x8xf32> to vector<512x8xf32>
    %c0_22 = arith.constant 0 : index
    %c1_23 = arith.constant 1 : index
    %c0_24 = arith.constant 0 : index
    %c0_25 = arith.constant 0 : index
    %11 = vector.load %arg11[%c0_22, %c1_23, %c0_24, %c0_25] : memref<10x10x10x8xf32, #tpu.memory_space<vmem>>, vector<8x8x8x8xf32>
    %12 = vector.shape_cast %11 : vector<8x8x8x8xf32> to vector<512x8xf32>
    %c0_26 = arith.constant 0 : index
    %c1_27 = arith.constant 1 : index
    %c1_28 = arith.constant 1 : index
    %c0_29 = arith.constant 0 : index
    %13 = vector.load %arg11[%c0_26, %c1_27, %c1_28, %c0_29] : memref<10x10x10x8xf32, #tpu.memory_space<vmem>>, vector<8x8x8x8xf32>
    %14 = vector.shape_cast %13 : vector<8x8x8x8xf32> to vector<512x8xf32>
    %c0_30 = arith.constant 0 : index
    %c1_31 = arith.constant 1 : index
    %c2_32 = arith.constant 2 : index
    %c0_33 = arith.constant 0 : index
    %15 = vector.load %arg11[%c0_30, %c1_31, %c2_32, %c0_33] : memref<10x10x10x8xf32, #tpu.memory_space<vmem>>, vector<8x8x8x8xf32>
    %16 = vector.shape_cast %15 : vector<8x8x8x8xf32> to vector<512x8xf32>
    %c0_34 = arith.constant 0 : index
    %c2_35 = arith.constant 2 : index
    %c0_36 = arith.constant 0 : index
    %c0_37 = arith.constant 0 : index
    %17 = vector.load %arg11[%c0_34, %c2_35, %c0_36, %c0_37] : memref<10x10x10x8xf32, #tpu.memory_space<vmem>>, vector<8x8x8x8xf32>
    %18 = vector.shape_cast %17 : vector<8x8x8x8xf32> to vector<512x8xf32>
    %c0_38 = arith.constant 0 : index
    %c2_39 = arith.constant 2 : index
    %c1_40 = arith.constant 1 : index
    %c0_41 = arith.constant 0 : index
    %19 = vector.load %arg11[%c0_38, %c2_39, %c1_40, %c0_41] : memref<10x10x10x8xf32, #tpu.memory_space<vmem>>, vector<8x8x8x8xf32>
    %20 = vector.shape_cast %19 : vector<8x8x8x8xf32> to vector<512x8xf32>
    %c0_42 = arith.constant 0 : index
    %c2_43 = arith.constant 2 : index
    %c2_44 = arith.constant 2 : index
    %c0_45 = arith.constant 0 : index
    %21 = vector.load %arg11[%c0_42, %c2_43, %c2_44, %c0_45] : memref<10x10x10x8xf32, #tpu.memory_space<vmem>>, vector<8x8x8x8xf32>
    %22 = vector.shape_cast %21 : vector<8x8x8x8xf32> to vector<512x8xf32>
    %c1_46 = arith.constant 1 : index
    %c0_47 = arith.constant 0 : index
    %c0_48 = arith.constant 0 : index
    %c0_49 = arith.constant 0 : index
    %23 = vector.load %arg11[%c1_46, %c0_47, %c0_48, %c0_49] : memref<10x10x10x8xf32, #tpu.memory_space<vmem>>, vector<8x8x8x8xf32>
    %24 = vector.shape_cast %23 : vector<8x8x8x8xf32> to vector<512x8xf32>
    %c1_50 = arith.constant 1 : index
    %c0_51 = arith.constant 0 : index
    %c1_52 = arith.constant 1 : index
    %c0_53 = arith.constant 0 : index
    %25 = vector.load %arg11[%c1_50, %c0_51, %c1_52, %c0_53] : memref<10x10x10x8xf32, #tpu.memory_space<vmem>>, vector<8x8x8x8xf32>
    %26 = vector.shape_cast %25 : vector<8x8x8x8xf32> to vector<512x8xf32>
    %c1_54 = arith.constant 1 : index
    %c0_55 = arith.constant 0 : index
    %c2_56 = arith.constant 2 : index
    %c0_57 = arith.constant 0 : index
    %27 = vector.load %arg11[%c1_54, %c0_55, %c2_56, %c0_57] : memref<10x10x10x8xf32, #tpu.memory_space<vmem>>, vector<8x8x8x8xf32>
    %28 = vector.shape_cast %27 : vector<8x8x8x8xf32> to vector<512x8xf32>
    %c1_58 = arith.constant 1 : index
    %c1_59 = arith.constant 1 : index
    %c0_60 = arith.constant 0 : index
    %c0_61 = arith.constant 0 : index
    %29 = vector.load %arg11[%c1_58, %c1_59, %c0_60, %c0_61] : memref<10x10x10x8xf32, #tpu.memory_space<vmem>>, vector<8x8x8x8xf32>
    %30 = vector.shape_cast %29 : vector<8x8x8x8xf32> to vector<512x8xf32>
    %c1_62 = arith.constant 1 : index
    %c1_63 = arith.constant 1 : index
    %c1_64 = arith.constant 1 : index
    %c0_65 = arith.constant 0 : index
    %31 = vector.load %arg11[%c1_62, %c1_63, %c1_64, %c0_65] : memref<10x10x10x8xf32, #tpu.memory_space<vmem>>, vector<8x8x8x8xf32>
    %32 = vector.shape_cast %31 : vector<8x8x8x8xf32> to vector<512x8xf32>
    %c1_66 = arith.constant 1 : index
    %c1_67 = arith.constant 1 : index
    %c2_68 = arith.constant 2 : index
    %c0_69 = arith.constant 0 : index
    %33 = vector.load %arg11[%c1_66, %c1_67, %c2_68, %c0_69] : memref<10x10x10x8xf32, #tpu.memory_space<vmem>>, vector<8x8x8x8xf32>
    %34 = vector.shape_cast %33 : vector<8x8x8x8xf32> to vector<512x8xf32>
    %c1_70 = arith.constant 1 : index
    %c2_71 = arith.constant 2 : index
    %c0_72 = arith.constant 0 : index
    %c0_73 = arith.constant 0 : index
    %35 = vector.load %arg11[%c1_70, %c2_71, %c0_72, %c0_73] : memref<10x10x10x8xf32, #tpu.memory_space<vmem>>, vector<8x8x8x8xf32>
    %36 = vector.shape_cast %35 : vector<8x8x8x8xf32> to vector<512x8xf32>
    %c1_74 = arith.constant 1 : index
    %c2_75 = arith.constant 2 : index
    %c1_76 = arith.constant 1 : index
    %c0_77 = arith.constant 0 : index
    %37 = vector.load %arg11[%c1_74, %c2_75, %c1_76, %c0_77] : memref<10x10x10x8xf32, #tpu.memory_space<vmem>>, vector<8x8x8x8xf32>
    %38 = vector.shape_cast %37 : vector<8x8x8x8xf32> to vector<512x8xf32>
    %c1_78 = arith.constant 1 : index
    %c2_79 = arith.constant 2 : index
    %c2_80 = arith.constant 2 : index
    %c0_81 = arith.constant 0 : index
    %39 = vector.load %arg11[%c1_78, %c2_79, %c2_80, %c0_81] : memref<10x10x10x8xf32, #tpu.memory_space<vmem>>, vector<8x8x8x8xf32>
    %40 = vector.shape_cast %39 : vector<8x8x8x8xf32> to vector<512x8xf32>
    %c2_82 = arith.constant 2 : index
    %c0_83 = arith.constant 0 : index
    %c0_84 = arith.constant 0 : index
    %c0_85 = arith.constant 0 : index
    %41 = vector.load %arg11[%c2_82, %c0_83, %c0_84, %c0_85] : memref<10x10x10x8xf32, #tpu.memory_space<vmem>>, vector<8x8x8x8xf32>
    %42 = vector.shape_cast %41 : vector<8x8x8x8xf32> to vector<512x8xf32>
    %c2_86 = arith.constant 2 : index
    %c0_87 = arith.constant 0 : index
    %c1_88 = arith.constant 1 : index
    %c0_89 = arith.constant 0 : index
    %43 = vector.load %arg11[%c2_86, %c0_87, %c1_88, %c0_89] : memref<10x10x10x8xf32, #tpu.memory_space<vmem>>, vector<8x8x8x8xf32>
    %44 = vector.shape_cast %43 : vector<8x8x8x8xf32> to vector<512x8xf32>
    %c2_90 = arith.constant 2 : index
    %c0_91 = arith.constant 0 : index
    %c2_92 = arith.constant 2 : index
    %c0_93 = arith.constant 0 : index
    %45 = vector.load %arg11[%c2_90, %c0_91, %c2_92, %c0_93] : memref<10x10x10x8xf32, #tpu.memory_space<vmem>>, vector<8x8x8x8xf32>
    %46 = vector.shape_cast %45 : vector<8x8x8x8xf32> to vector<512x8xf32>
    %c2_94 = arith.constant 2 : index
    %c1_95 = arith.constant 1 : index
    %c0_96 = arith.constant 0 : index
    %c0_97 = arith.constant 0 : index
    %47 = vector.load %arg11[%c2_94, %c1_95, %c0_96, %c0_97] : memref<10x10x10x8xf32, #tpu.memory_space<vmem>>, vector<8x8x8x8xf32>
    %48 = vector.shape_cast %47 : vector<8x8x8x8xf32> to vector<512x8xf32>
    %c2_98 = arith.constant 2 : index
    %c1_99 = arith.constant 1 : index
    %c1_100 = arith.constant 1 : index
    %c0_101 = arith.constant 0 : index
    %49 = vector.load %arg11[%c2_98, %c1_99, %c1_100, %c0_101] : memref<10x10x10x8xf32, #tpu.memory_space<vmem>>, vector<8x8x8x8xf32>
    %50 = vector.shape_cast %49 : vector<8x8x8x8xf32> to vector<512x8xf32>
    %c2_102 = arith.constant 2 : index
    %c1_103 = arith.constant 1 : index
    %c2_104 = arith.constant 2 : index
    %c0_105 = arith.constant 0 : index
    %51 = vector.load %arg11[%c2_102, %c1_103, %c2_104, %c0_105] : memref<10x10x10x8xf32, #tpu.memory_space<vmem>>, vector<8x8x8x8xf32>
    %52 = vector.shape_cast %51 : vector<8x8x8x8xf32> to vector<512x8xf32>
    %c2_106 = arith.constant 2 : index
    %c2_107 = arith.constant 2 : index
    %c0_108 = arith.constant 0 : index
    %c0_109 = arith.constant 0 : index
    %53 = vector.load %arg11[%c2_106, %c2_107, %c0_108, %c0_109] : memref<10x10x10x8xf32, #tpu.memory_space<vmem>>, vector<8x8x8x8xf32>
    %54 = vector.shape_cast %53 : vector<8x8x8x8xf32> to vector<512x8xf32>
    %c2_110 = arith.constant 2 : index
    %c2_111 = arith.constant 2 : index
    %c1_112 = arith.constant 1 : index
    %c0_113 = arith.constant 0 : index
    %55 = vector.load %arg11[%c2_110, %c2_111, %c1_112, %c0_113] : memref<10x10x10x8xf32, #tpu.memory_space<vmem>>, vector<8x8x8x8xf32>
    %56 = vector.shape_cast %55 : vector<8x8x8x8xf32> to vector<512x8xf32>
    %c2_114 = arith.constant 2 : index
    %c2_115 = arith.constant 2 : index
    %c2_116 = arith.constant 2 : index
    %c0_117 = arith.constant 0 : index
    %57 = vector.load %arg11[%c2_114, %c2_115, %c2_116, %c0_117] : memref<10x10x10x8xf32, #tpu.memory_space<vmem>>, vector<8x8x8x8xf32>
    %58 = vector.shape_cast %57 : vector<8x8x8x8xf32> to vector<512x8xf32>
    %59 = tpu.concatenate %6, %8, %10, %12, %14, %16, %18, %20, %22, %24, %26, %28, %30, %32, %34, %36 in 1 : vector<512x8xf32>, vector<512x8xf32>, vector<512x8xf32>, vector<512x8xf32>, vector<512x8xf32>, vector<512x8xf32>, vector<512x8xf32>, vector<512x8xf32>, vector<512x8xf32>, vector<512x8xf32>, vector<512x8xf32>, vector<512x8xf32>, vector<512x8xf32>, vector<512x8xf32>, vector<512x8xf32>, vector<512x8xf32> -> vector<512x128xf32>
    %60 = tpu.concatenate %38, %40, %42, %44, %46, %48, %50, %52, %54, %56, %58 in 1 : vector<512x8xf32>, vector<512x8xf32>, vector<512x8xf32>, vector<512x8xf32>, vector<512x8xf32>, vector<512x8xf32>, vector<512x8xf32>, vector<512x8xf32>, vector<512x8xf32>, vector<512x8xf32>, vector<512x8xf32> -> vector<512x88xf32>
    %61 = tpu.concatenate %59, %60 in 1 : vector<512x128xf32>, vector<512x88xf32> -> vector<512x216xf32>
    %c0_118 = arith.constant 0 : index
    %c0_119 = arith.constant 0 : index
    %62 = vector.load %arg3[%c0_118, %c0_119] : memref<216x4xf32, #tpu.memory_space<vmem>>, vector<216x4xf32>
    %cst_120 = arith.constant dense<0.000000e+00> : vector<512x4xf32>
    %63 = tpu.matmul %61, %62, %cst_120 {dimension_numbers = #tpu.dot_dimension_numbers<[1], [0], [0], [1], [0, 0, 1, 1], [], []>} : vector<512x216xf32>, vector<216x4xf32>, vector<512x4xf32> -> vector<512x4xf32>
    %64 = tpu.transpose %63, [1, 0] : vector<512x4xf32> -> vector<4x512xf32>
    %c0_121 = arith.constant 0 : index
    %c0_122 = arith.constant 0 : index
    %65 = vector.load %arg4[%c0_121, %c0_122] : memref<4x1xf32, #tpu.memory_space<vmem>>, vector<4x1xf32>
    %66 = vector.broadcast %65 : vector<4x1xf32> to vector<4x512xf32>
    %67 = arith.mulf %64, %66 : vector<4x512xf32>
    %c0_123 = arith.constant 0 : index
    %c0_124 = arith.constant 0 : index
    %68 = vector.load %arg5[%c0_123, %c0_124] : memref<4x1xf32, #tpu.memory_space<vmem>>, vector<4x1xf32>
    %69 = vector.broadcast %68 : vector<4x1xf32> to vector<4x512xf32>
    %70 = arith.addf %67, %69 : vector<4x512xf32>
    %cst_125 = arith.constant 0.000000e+00 : f32
    %71 = vector.broadcast %cst_125 : f32 to vector<4x512xf32>
    %72 = arith.maximumf %70, %71 : vector<4x512xf32>
    %c0_126 = arith.constant 0 : index
    %c0_127 = arith.constant 0 : index
    %c0_128 = arith.constant 0 : index
    %73 = vector.load %arg2[%c0_126, %c0_127, %c0_128] : memref<1x4x512xf32, #tpu.memory_space<vmem>>, vector<1x4x512xf32>
    %74 = vector.shape_cast %73 : vector<1x4x512xf32> to vector<4x512xf32>
    %c0_129 = arith.constant 0 : index
    %c0_130 = arith.constant 0 : index
    %75 = vector.load %arg6[%c0_129, %c0_130] : memref<4x4xf32, #tpu.memory_space<vmem>>, vector<4x4xf32>
    %cst_131 = arith.constant dense<0.000000e+00> : vector<4x512xf32>
    %76 = tpu.matmul %75, %74, %cst_131 {dimension_numbers = #tpu.dot_dimension_numbers<[1], [0], [0], [1], [0, 0, 1, 1], [], []>} : vector<4x4xf32>, vector<4x512xf32>, vector<4x512xf32> -> vector<4x512xf32>
    %c0_132 = arith.constant 0 : index
    %c0_133 = arith.constant 0 : index
    %77 = vector.load %arg7[%c0_132, %c0_133] : memref<4x4xf32, #tpu.memory_space<vmem>>, vector<4x4xf32>
    %cst_134 = arith.constant dense<0.000000e+00> : vector<4x512xf32>
    %78 = tpu.matmul %77, %72, %cst_134 {dimension_numbers = #tpu.dot_dimension_numbers<[1], [0], [0], [1], [0, 0, 1, 1], [], []>} : vector<4x4xf32>, vector<4x512xf32>, vector<4x512xf32> -> vector<4x512xf32>
    %79 = arith.addf %76, %78 : vector<4x512xf32>
    %c0_135 = arith.constant 0 : index
    %c0_136 = arith.constant 0 : index
    %80 = vector.load %arg8[%c0_135, %c0_136] : memref<4x1xf32, #tpu.memory_space<vmem>>, vector<4x1xf32>
    %81 = vector.broadcast %80 : vector<4x1xf32> to vector<4x512xf32>
    %82 = arith.mulf %79, %81 : vector<4x512xf32>
    %c0_137 = arith.constant 0 : index
    %c0_138 = arith.constant 0 : index
    %83 = vector.load %arg9[%c0_137, %c0_138] : memref<4x1xf32, #tpu.memory_space<vmem>>, vector<4x1xf32>
    %84 = vector.broadcast %83 : vector<4x1xf32> to vector<4x512xf32>
    %85 = arith.addf %82, %84 : vector<4x512xf32>
    %cst_139 = arith.constant 0.000000e+00 : f32
    %86 = vector.broadcast %cst_139 : f32 to vector<4x512xf32>
    %87 = arith.maximumf %85, %86 : vector<4x512xf32>
    %c0_140 = arith.constant 0 : index
    %c0_141 = arith.constant 0 : index
    %c0_142 = arith.constant 0 : index
    %88 = vector.load %arg10[%c0_140, %c0_141, %c0_142] : memref<1x4x512xf32, #tpu.memory_space<vmem>>, vector<1x4x512xf32>
    %89 = vector.shape_cast %88 : vector<1x4x512xf32> to vector<4x512xf32>
    %90 = vector.shape_cast %87 : vector<4x512xf32> to vector<1x4x512xf32>
    tpu.vector_store %arg10[%c0_140, %c0_141, %c0_142], %90 {strides = array<i32>} : memref<1x4x512xf32, #tpu.memory_space<vmem>>, vector<1x4x512xf32>,
    return
  }
  func.func @transform_0(%arg0: i32) -> (i32, i32, i32, i32, i32) {
    %c0_i32 = arith.constant 0 : i32
    %c0_i32_0 = arith.constant 0 : i32
    %c0_i32_1 = arith.constant 0 : i32
    %c0_i32_2 = arith.constant 0 : i32
    %c0_i32_3 = arith.constant 0 : i32
    return %arg0, %c0_i32, %c0_i32_0, %c0_i32_1, %c0_i32_2 : i32, i32, i32, i32, i32
  }
  func.func @transform_1(%arg0: i32) -> (i32, i32, i32) {
    %c0_i32 = arith.constant 0 : i32
    %c0_i32_0 = arith.constant 0 : i32
    %c0_i32_1 = arith.constant 0 : i32
    return %arg0, %c0_i32, %c0_i32_0 : i32, i32, i32
  }
  func.func @transform_2(%arg0: i32) -> (i32, i32) {
    %c0_i32 = arith.constant 0 : i32
    %c0_i32_0 = arith.constant 0 : i32
    %c0_i32_1 = arith.constant 0 : i32
    return %c0_i32, %c0_i32_0 : i32, i32
  }
  func.func @transform_3(%arg0: i32) -> (i32, i32) {
    %c0_i32 = arith.constant 0 : i32
    %c0_i32_0 = arith.constant 0 : i32
    %c0_i32_1 = arith.constant 0 : i32
    return %c0_i32, %c0_i32_0 : i32, i32
  }
  func.func @transform_4(%arg0: i32) -> (i32, i32) {
    %c0_i32 = arith.constant 0 : i32
    %c0_i32_0 = arith.constant 0 : i32
    %c0_i32_1 = arith.constant 0 : i32
    return %c0_i32, %c0_i32_0 : i32, i32
  }
  func.func @transform_5(%arg0: i32) -> (i32, i32) {
    %c0_i32 = arith.constant 0 : i32
    %c0_i32_0 = arith.constant 0 : i32
    %c0_i32_1 = arith.constant 0 : i32
    return %c0_i32, %c0_i32_0 : i32, i32
  }
  func.func @transform_6(%arg0: i32) -> (i32, i32) {
    %c0_i32 = arith.constant 0 : i32
    %c0_i32_0 = arith.constant 0 : i32
    %c0_i32_1 = arith.constant 0 : i32
    return %c0_i32, %c0_i32_0 : i32, i32
  }
  func.func @transform_7(%arg0: i32) -> (i32, i32) {
    %c0_i32 = arith.constant 0 : i32
    %c0_i32_0 = arith.constant 0 : i32
    %c0_i32_1 = arith.constant 0 : i32
    return %c0_i32, %c0_i32_0 : i32, i32
  }
  func.func @transform_8(%arg0: i32) -> (i32, i32) {
    %c0_i32 = arith.constant 0 : i32
    %c0_i32_0 = arith.constant 0 : i32
    %c0_i32_1 = arith.constant 0 : i32
    return %c0_i32, %c0_i32_0 : i32, i32
  }
  func.func @transform_9(%arg0: i32) -> (i32, i32, i32) {
    %c0_i32 = arith.constant 0 : i32
    %c0_i32_0 = arith.constant 0 : i32
    %c0_i32_1 = arith.constant 0 : i32
    return %arg0, %c0_i32, %c0_i32_0 : i32, i32, i32
  }
}

</mosaic_0001>

<llo_original>
// kernel: tpu_custom_call.1
$region0: #{tpu_custom_call.1}
  #allocation0 [shape = 'u32[]', space=smem, size = 0x4, offset = 0x4, fixed_abs, tag = 'smem constant byte address 0x4 - core index']
  #allocation1 [shape = 'u32[144,128]{1,0:T(1,128)}', space=vmem, size = 0x12000, scoped, tag = 'internal scratch']
  #allocation2 [shape = 'f32[10,10,10,8]{3,2,1,0:T(8,128)}', space=vmem, size = 0xc8000, scoped, tag = 'scratch operand']
  %s0 = inlined_call_operand.hbm [shape: f32[2,8,8,8,8], index: 0, kind: input, shape index: {}]
  %s1 = inlined_call_operand.vmem [shape: f32[2,4,512], index: 1, kind: input, shape index: {}]
  %s2 = inlined_call_operand.vmem [shape: f32[216,4], index: 2, kind: input, shape index: {}]
  %s3 = inlined_call_operand.vmem [shape: f32[4,1], index: 3, kind: input, shape index: {}]
  %s4 = inlined_call_operand.vmem [shape: f32[4,1], index: 4, kind: input, shape index: {}]
  %s5 = inlined_call_operand.vmem [shape: f32[4,4], index: 5, kind: input, shape index: {}]
  %s6 = inlined_call_operand.vmem [shape: f32[4,4], index: 6, kind: input, shape index: {}]
  %s7 = inlined_call_operand.vmem [shape: f32[4,1], index: 7, kind: input, shape index: {}]
  %s8 = inlined_call_operand.vmem [shape: f32[4,1], index: 8, kind: input, shape index: {}]
  %s9 = inlined_call_operand.hbm [shape: f32[2,4,512], index: 9, kind: output, shape index: {}]
  %s10 = sld [smem:[#allocation0]]
  $region73: #{tpu_custom_call.1} parent=0
    _
  %s12 = ssub.s32 1, %s10
  %s13 = scalar_select 0, %s12, %s10
  $region1: #{tpu_custom_call.1} parent=0
    #allocation3 [shape = 'u8[524288]{0}', space=vmem, size = 0x80000, scoped, tag = 'input window, operand 0']
    #allocation4 [shape = 's32[2]{0}', space=sflag, size = 0x8, scoped, tag = 'scoped memory for tpu_custom_call.1']
    #allocation5 [shape = 's32[2]{0}', space=sflag, size = 0x8, scoped, tag = 'scoped memory for tpu_custom_call.1']
    #allocation6 [shape = 'u8[16384]{0}', space=vmem, size = 0x4000, scoped, tag = 'output window, operand 0']
    %14 = vsyncpa [#allocation4], 0
    %s15 = scalar_lea.sflag [#allocation4], 1
    %16 = vsyncpa %s15, 0
    %17 = vsyncpa [#allocation5], 0
    %s18 = scalar_lea.sflag [#allocation5], 1
    %19 = vsyncpa %s18, 0
    loop: start=0, step=1, limit=4
    $region2: #{tpu_custom_call.1} parent=1 // loop_pre_header
      _
    $region3: #{tpu_custom_call.1} parent=1 // loop_header
      %s21 = sphi 0, %s25
      %p22 = scmp.ge.s32.totalorder %s21, 4
      %s31 = sphi 0, %s33
      %s34 = sphi 0, %s31
      %s35 = sphi 0, %s34
      %s51 = sphi 0, %s35
      %s57 = sphi 0, %s59
      %s60 = sphi 0, %s57
      %s61 = sphi 0, %s60
      %s77 = sphi 0, %s61
      %s81 = sphi 0, %s81
      %s83 = sphi 0, %s81
      %s84 = sphi 0, %s83
      %s98 = sphi 0, %s84
      %s102 = sphi 0, %s102
      %s104 = sphi 0, %s102
      %s105 = sphi 0, %s104
      %s119 = sphi 0, %s105
      %s123 = sphi 0, %s123
      %s125 = sphi 0, %s123
      %s126 = sphi 0, %s125
      %s140 = sphi 0, %s126
      %s144 = sphi 0, %s144
      %s146 = sphi 0, %s144
      %s147 = sphi 0, %s146
      %s161 = sphi 0, %s147
      %s165 = sphi 0, %s165
      %s167 = sphi 0, %s165
      %s168 = sphi 0, %s167
      %s182 = sphi 0, %s168
      %s186 = sphi 0, %s186
      %s188 = sphi 0, %s186
      %s189 = sphi 0, %s188
      %s203 = sphi 0, %s189
      %s207 = sphi 0, %s207
      %s209 = sphi 0, %s207
      %s210 = sphi 0, %s209
      %s224 = sphi 0, %s210
      %s230 = sphi 0, %s232
      %s233 = sphi 0, %s230
      %s234 = sphi 0, %s233
      %s250 = sphi 0, %s234
    $region4: #{tpu_custom_call.1} parent=1 // loop_header_branch
      %24 = sbr.rel (%p22) target = $region8
    $region5: #{tpu_custom_call.1} parent=1 // loop_body
      %s26 = ssub.s32 %s21, 1
      %s27 = ssub.s32 %s21, 2
      %s28 = sadd.s32 %s21, 1
      %s29 = ssub.s32 %s21, %s28
      %p30 = scmp.eq.s32.totalorder %s29, 0
      %s32 = sadd.s32 %s31, 1
      %s33 = scalar_select %p30, %s31, %s32
      %p36 = pneg %p30
      %p37 = scmp.eq.s32.totalorder %s21, 1
      %p38 = por %p36, %p37
      %p39 = scmp.ne.s32.totalorder %s31, %s34
      %p40 = scmp.eq.s32.totalorder %s21, 0
      %p41 = por %p39, %p40
      %p42 = scmp.ne.s32.totalorder %s31, %s34
      %p43 = scmp.eq.s32.totalorder %s26, 1
      %p44 = por %p42, %p43
      %p45 = scmp.ne.s32.totalorder %s34, %s35
      %p46 = scmp.eq.s32.totalorder %s26, 0
      %p47 = por %p45, %p46
      %p48 = scmp.ne.s32.totalorder %s34, %s35
      %p49 = scmp.eq.s32.totalorder %s27, 1
      %p50 = por %p48, %p49
      %p52 = scmp.ne.s32.totalorder %s35, %s51
      %p53 = scmp.eq.s32.totalorder %s27, 0
      %p54 = por %p52, %p53
      %s55 = ssub.s32 %s21, %s28
      %p56 = scmp.eq.s32.totalorder %s55, 0
      %s58 = sadd.s32 %s57, 1
      %s59 = scalar_select %p56, %s57, %s58
      %p62 = pneg %p56
      %p63 = scmp.eq.s32.totalorder %s21, 1
      %p64 = por %p62, %p63
      %p65 = scmp.ne.s32.totalorder %s57, %s60
      %p66 = scmp.eq.s32.totalorder %s21, 0
      %p67 = por %p65, %p66
      %p68 = scmp.ne.s32.totalorder %s57, %s60
      %p69 = scmp.eq.s32.totalorder %s26, 1
      %p70 = por %p68, %p69
      %p71 = scmp.ne.s32.totalorder %s60, %s61
      %p72 = scmp.eq.s32.totalorder %s26, 0
      %p73 = por %p71, %p72
      %p74 = scmp.ne.s32.totalorder %s60, %s61
      %p75 = scmp.eq.s32.totalorder %s27, 1
      %p76 = por %p74, %p75
      %p78 = scmp.ne.s32.totalorder %s61, %s77
      %p79 = scmp.eq.s32.totalorder %s27, 0
      %p80 = por %p78, %p79
      %s82 = sadd.s32 %s81, 1
      %p85 = scmp.eq.s32.totalorder %s21, 1
      %p86 = scmp.ne.s32.totalorder %s81, %s83
      %p87 = scmp.eq.s32.totalorder %s21, 0
      %p88 = por %p86, %p87
      %p89 = scmp.ne.s32.totalorder %s81, %s83
      %p90 = scmp.eq.s32.totalorder %s26, 1
      %p91 = por %p89, %p90
      %p92 = scmp.ne.s32.totalorder %s83, %s84
      %p93 = scmp.eq.s32.totalorder %s26, 0
      %p94 = por %p92, %p93
      %p95 = scmp.ne.s32.totalorder %s83, %s84
      %p96 = scmp.eq.s32.totalorder %s27, 1
      %p97 = por %p95, %p96
      %p99 = scmp.ne.s32.totalorder %s84, %s98
      %p100 = scmp.eq.s32.totalorder %s27, 0
      %p101 = por %p99, %p100
      %s103 = sadd.s32 %s102, 1
      %p106 = scmp.eq.s32.totalorder %s21, 1
      %p107 = scmp.ne.s32.totalorder %s102, %s104
      %p108 = scmp.eq.s32.totalorder %s21, 0
      %p109 = por %p107, %p108
      %p110 = scmp.ne.s32.totalorder %s102, %s104
      %p111 = scmp.eq.s32.totalorder %s26, 1
      %p112 = por %p110, %p111
      %p113 = scmp.ne.s32.totalorder %s104, %s105
      %p114 = scmp.eq.s32.totalorder %s26, 0
      %p115 = por %p113, %p114
      %p116 = scmp.ne.s32.totalorder %s104, %s105
      %p117 = scmp.eq.s32.totalorder %s27, 1
      %p118 = por %p116, %p117
      %p120 = scmp.ne.s32.totalorder %s105, %s119
      %p121 = scmp.eq.s32.totalorder %s27, 0
      %p122 = por %p120, %p121
      %s124 = sadd.s32 %s123, 1
      %p127 = scmp.eq.s32.totalorder %s21, 1
      %p128 = scmp.ne.s32.totalorder %s123, %s125
      %p129 = scmp.eq.s32.totalorder %s21, 0
      %p130 = por %p128, %p129
      %p131 = scmp.ne.s32.totalorder %s123, %s125
      %p132 = scmp.eq.s32.totalorder %s26, 1
      %p133 = por %p131, %p132
      %p134 = scmp.ne.s32.totalorder %s125, %s126
      %p135 = scmp.eq.s32.totalorder %s26, 0
      %p136 = por %p134, %p135
      %p137 = scmp.ne.s32.totalorder %s125, %s126
      %p138 = scmp.eq.s32.totalorder %s27, 1
      %p139 = por %p137, %p138
      %p141 = scmp.ne.s32.totalorder %s126, %s140
      %p142 = scmp.eq.s32.totalorder %s27, 0
      %p143 = por %p141, %p142
      %s145 = sadd.s32 %s144, 1
      %p148 = scmp.eq.s32.totalorder %s21, 1
      %p149 = scmp.ne.s32.totalorder %s144, %s146
      %p150 = scmp.eq.s32.totalorder %s21, 0
      %p151 = por %p149, %p150
      %p152 = scmp.ne.s32.totalorder %s144, %s146
      %p153 = scmp.eq.s32.totalorder %s26, 1
      %p154 = por %p152, %p153
      %p155 = scmp.ne.s32.totalorder %s146, %s147
      %p156 = scmp.eq.s32.totalorder %s26, 0
      %p157 = por %p155, %p156
      %p158 = scmp.ne.s32.totalorder %s146, %s147
      %p159 = scmp.eq.s32.totalorder %s27, 1
      %p160 = por %p158, %p159
      %p162 = scmp.ne.s32.totalorder %s147, %s161
      %p163 = scmp.eq.s32.totalorder %s27, 0
      %p164 = por %p162, %p163
      %s166 = sadd.s32 %s165, 1
      %p169 = scmp.eq.s32.totalorder %s21, 1
      %p170 = scmp.ne.s32.totalorder %s165, %s167
      %p171 = scmp.eq.s32.totalorder %s21, 0
      %p172 = por %p170, %p171
      %p173 = scmp.ne.s32.totalorder %s165, %s167
      %p174 = scmp.eq.s32.totalorder %s26, 1
      %p175 = por %p173, %p174
      %p176 = scmp.ne.s32.totalorder %s167, %s168
      %p177 = scmp.eq.s32.totalorder %s26, 0
      %p178 = por %p176, %p177
      %p179 = scmp.ne.s32.totalorder %s167, %s168
      %p180 = scmp.eq.s32.totalorder %s27, 1
      %p181 = por %p179, %p180
      %p183 = scmp.ne.s32.totalorder %s168, %s182
      %p184 = scmp.eq.s32.totalorder %s27, 0
      %p185 = por %p183, %p184
      %s187 = sadd.s32 %s186, 1
      %p190 = scmp.eq.s32.totalorder %s21, 1
      %p191 = scmp.ne.s32.totalorder %s186, %s188
      %p192 = scmp.eq.s32.totalorder %s21, 0
      %p193 = por %p191, %p192
      %p194 = scmp.ne.s32.totalorder %s186, %s188
      %p195 = scmp.eq.s32.totalorder %s26, 1
      %p196 = por %p194, %p195
      %p197 = scmp.ne.s32.totalorder %s188, %s189
      %p198 = scmp.eq.s32.totalorder %s26, 0
      %p199 = por %p197, %p198
      %p200 = scmp.ne.s32.totalorder %s188, %s189
      %p201 = scmp.eq.s32.totalorder %s27, 1
      %p202 = por %p200, %p201
      %p204 = scmp.ne.s32.totalorder %s189, %s203
      %p205 = scmp.eq.s32.totalorder %s27, 0
      %p206 = por %p204, %p205
      %s208 = sadd.s32 %s207, 1
      %p211 = scmp.eq.s32.totalorder %s21, 1
      %p212 = scmp.ne.s32.totalorder %s207, %s209
      %p213 = scmp.eq.s32.totalorder %s21, 0
      %p214 = por %p212, %p213
      %p215 = scmp.ne.s32.totalorder %s207, %s209
      %p216 = scmp.eq.s32.totalorder %s26, 1
      %p217 = por %p215, %p216
      %p218 = scmp.ne.s32.totalorder %s209, %s210
      %p219 = scmp.eq.s32.totalorder %s26, 0
      %p220 = por %p218, %p219
      %p221 = scmp.ne.s32.totalorder %s209, %s210
      %p222 = scmp.eq.s32.totalorder %s27, 1
      %p223 = por %p221, %p222
      %p225 = scmp.ne.s32.totalorder %s210, %s224
      %p226 = scmp.eq.s32.totalorder %s27, 0
      %p227 = por %p225, %p226
      %s228 = ssub.s32 %s21, %s28
      %p229 = scmp.eq.s32.totalorder %s228, 0
      %s231 = sadd.s32 %s230, 1
      %s232 = scalar_select %p229, %s230, %s231
      %p235 = pneg %p229
      %p236 = scmp.eq.s32.totalorder %s21, 1
      %p237 = por %p235, %p236
      %p238 = scmp.ne.s32.totalorder %s230, %s233
      %p239 = scmp.eq.s32.totalorder %s21, 0
      %p240 = por %p238, %p239
      %p241 = scmp.ne.s32.totalorder %s230, %s233
      %p242 = scmp.eq.s32.totalorder %s26, 1
      %p243 = por %p241, %p242
      %p244 = scmp.ne.s32.totalorder %s233, %s234
      %p245 = scmp.eq.s32.totalorder %s26, 0
      %p246 = por %p244, %p245
      %p247 = scmp.ne.s32.totalorder %s233, %s234
      %p248 = scmp.eq.s32.totalorder %s27, 1
      %p249 = por %p247, %p248
      %p251 = scmp.ne.s32.totalorder %s234, %s250
      %p252 = scmp.eq.s32.totalorder %s27, 0
      %p253 = por %p251, %p252
      %p254 = scmp.le.s32.totalorder 1, %s21
      %p255 = scmp.lt.s32.totalorder %s21, 3
      %p256 = pnand %p254, %p255
      %p257 = pneg %p256
      // Predicated region
      $region9: #{tpu_custom_call.1} parent=5 // pred_check
        _
      $region10: #{tpu_custom_call.1} parent=5 // pred_check_branch
        %259 = sbr.rel (%p256) target = $region12
      $region11: #{tpu_custom_call.1} parent=5 // pred_region
        %s260 = ssub.s32 %s21, 1
        // Predicated region
        $region13: #{tpu_custom_call.1} parent=11 // pred_check
          %p261 = pneg %p94
        $region14: #{tpu_custom_call.1} parent=11 // pred_check_branch
          %263 = sbr.rel (%p261) target = $region16
        $region15: #{tpu_custom_call.1} parent=11 // pred_region
          _
        $region16: #{tpu_custom_call.1} parent=11 // pred_fallthru
          _
        // Predicated region
        $region17: #{tpu_custom_call.1} parent=11 // pred_check
          %p264 = pneg %p115
        $region18: #{tpu_custom_call.1} parent=11 // pred_check_branch
          %266 = sbr.rel (%p264) target = $region20
        $region19: #{tpu_custom_call.1} parent=11 // pred_region
          _
        $region20: #{tpu_custom_call.1} parent=11 // pred_fallthru
          _
        // Predicated region
        $region21: #{tpu_custom_call.1} parent=11 // pred_check
          %p267 = pneg %p136
        $region22: #{tpu_custom_call.1} parent=11 // pred_check_branch
          %269 = sbr.rel (%p267) target = $region24
        $region23: #{tpu_custom_call.1} parent=11 // pred_region
          _
        $region24: #{tpu_custom_call.1} parent=11 // pred_fallthru
          _
        // Predicated region
        $region25: #{tpu_custom_call.1} parent=11 // pred_check
          %p270 = pneg %p157
        $region26: #{tpu_custom_call.1} parent=11 // pred_check_branch
          %272 = sbr.rel (%p270) target = $region28
        $region27: #{tpu_custom_call.1} parent=11 // pred_region
          _
        $region28: #{tpu_custom_call.1} parent=11 // pred_fallthru
          _
        // Predicated region
        $region29: #{tpu_custom_call.1} parent=11 // pred_check
          %p273 = pneg %p178
        $region30: #{tpu_custom_call.1} parent=11 // pred_check_branch
          %275 = sbr.rel (%p273) target = $region32
        $region31: #{tpu_custom_call.1} parent=11 // pred_region
          _
        $region32: #{tpu_custom_call.1} parent=11 // pred_fallthru
          _
        // Predicated region
        $region33: #{tpu_custom_call.1} parent=11 // pred_check
          %p276 = pneg %p199
        $region34: #{tpu_custom_call.1} parent=11 // pred_check_branch
          %278 = sbr.rel (%p276) target = $region36
        $region35: #{tpu_custom_call.1} parent=11 // pred_region
          _
        $region36: #{tpu_custom_call.1} parent=11 // pred_fallthru
          _
        // Predicated region
        $region37: #{tpu_custom_call.1} parent=11 // pred_check
          %p279 = pneg %p220
        $region38: #{tpu_custom_call.1} parent=11 // pred_check_branch
          %281 = sbr.rel (%p279) target = $region40
        $region39: #{tpu_custom_call.1} parent=11 // pred_region
          _
        $region40: #{tpu_custom_call.1} parent=11 // pred_fallthru
          _
      $region12: #{tpu_custom_call.1} parent=5 // pred_fallthru
        _
      %p282 = scmp.lt.s32.totalorder %s21, 2
      // Predicated region
      $region41: #{tpu_custom_call.1} parent=5 // pred_check
        %p283 = pneg %p282
      $region42: #{tpu_custom_call.1} parent=5 // pred_check_branch
        %285 = sbr.rel (%p283) target = $region44
      $region43: #{tpu_custom_call.1} parent=5 // pred_region
        // Predicated region
        $region45: #{tpu_custom_call.1} parent=43 // pred_check
          %p286 = pneg %p41
        $region46: #{tpu_custom_call.1} parent=43 // pred_check_branch
          %288 = sbr.rel (%p286) target = $region48
        $region47: #{tpu_custom_call.1} parent=43 // pred_region
          %s289 = sand.u32 %s31, 1
          %s290 = scalar_lea.sflag [#allocation4], %s289
          %s291 = sand.u32 %s31, 1
          %s292 = smul.addr %s291, 512
          %s293 = scalar_lea.vmem [#allocation3], %s292
          %s295 = ssub.s32 8192, 8192
          %296 = vsyncadd %s290, %s295
          %s297 = smul.addr %s21, 64
          %s298 = smul.addr %s297, 128
          %s299 = scalar_lea.hbm %s0, %s298
          %s300 = sshll.u32 %s293, 4
          %s301 = int_to_ptr.vmem [resolvable:$true] %s300
          %306 = dma.hbm_to_vmem [thread:$0]  %s299, 8192, %s301, %s290, 128, 128, 8
        $region48: #{tpu_custom_call.1} parent=43 // pred_fallthru
          _
        // Predicated region
        $region49: #{tpu_custom_call.1} parent=43 // pred_check
          %p307 = pneg %p67
        $region50: #{tpu_custom_call.1} parent=43 // pred_check_branch
          %309 = sbr.rel (%p307) target = $region52
        $region51: #{tpu_custom_call.1} parent=43 // pred_region
          %p310 = scmp.lt.s32.totalorder %s21, 1
          %s311 = scalar_select %p310, %s21, 1
          %s312 = smul.addr %s311, 4
          %s313 = smul.addr %s312, 4
          %s314 = scalar_lea.vmem %s1, %s313
        $region52: #{tpu_custom_call.1} parent=43 // pred_fallthru
          _
      $region44: #{tpu_custom_call.1} parent=5 // pred_fallthru
        _
      %p315 = scmp.le.s32.totalorder 1, %s21
      %p316 = scmp.lt.s32.totalorder %s21, 3
      %p317 = pnand %p315, %p316
      %p318 = pneg %p317
      // Predicated region
      $region53: #{tpu_custom_call.1} parent=5 // pred_check
        _
      $region54: #{tpu_custom_call.1} parent=5 // pred_check_branch
        %320 = sbr.rel (%p317) target = $region56
      $region55: #{tpu_custom_call.1} parent=5 // pred_region
        %s321 = ssub.s32 %s21, 1
        %s322 = sand.u32 %s34, 1
        %s323 = scalar_lea.sflag [#allocation4], %s322
        %s324 = sand.u32 %s34, 1
        %s325 = smul.addr %s324, 512
        %s326 = scalar_lea.vmem [#allocation3], %s325
        // Predicated region
        $region57: #{tpu_custom_call.1} parent=55 // pred_check
          %p327 = pneg %p47
        $region58: #{tpu_custom_call.1} parent=55 // pred_check_branch
          %329 = sbr.rel (%p327) target = $region60
        $region59: #{tpu_custom_call.1} parent=55 // pred_region
          %330 = dma.done %s323, 8192
        $region60: #{tpu_custom_call.1} parent=55 // pred_fallthru
          _
        %s331 = sand.u32 %s34, 1
        %s332 = scalar_lea.sflag [#allocation4], %s331
        %s333 = sand.u32 %s34, 1
        %s334 = smul.addr %s333, 512
        %s335 = scalar_lea.vmem [#allocation3], %s334
        %p336 = pneg %p47
        %p337 = pneg %p44
        %p338 = scmp.lt.s32.totalorder %s26, 1
        %s339 = scalar_select %p338, %s26, 1
        %s340 = smul.addr %s339, 4
        %s341 = smul.addr %s340, 4
        %s342 = scalar_lea.vmem %s1, %s341
        %p343 = pneg %p73
        %p344 = pneg %p70
        %p345 = pneg %p94
        %p346 = pneg %p91
        %p347 = pneg %p115
        %p348 = pneg %p112
        %p349 = pneg %p136
        %p350 = pneg %p133
        %p351 = pneg %p157
        %p352 = pneg %p154
        %p353 = pneg %p178
        %p354 = pneg %p175
        %p355 = pneg %p199
        %p356 = pneg %p196
        %p357 = pneg %p220
        %p358 = pneg %p217
        %p359 = pneg %p246
        %p360 = pneg %p243
        %s361 = sand.u32 %s233, 1
        %s362 = scalar_lea.sflag [#allocation5], %s361
        %s363 = sand.u32 %s233, 1
        %s364 = smul.addr %s363, 16
        %s365 = scalar_lea.vmem [#allocation6], %s364
        %p366 = scmp.lt.s32.totalorder %s26, 1
        %s367 = scalar_select %p366, %s26, 1
        %s368 = smul.addr %s367, 4
        %s369 = smul.addr %s368, 4
        %s370 = scalar_lea.vmem %s1, %s369
        %vm371 = vcmask 64512
        %372 = vst.msk [vmem:[#allocation2] sm:$0xff] %vm371, 0.0
        %vm373 = vcmask 58368
        %374 = vst.msk [vmem:[#allocation2 + $0x8] sm:$0x3] %vm373, 0.0
        %375 = vst.msk [vmem:[#allocation2 + $0x10] sm:$0xff] %vm371, 0.0
        %376 = vst.msk [vmem:[#allocation2 + $0x18] sm:$0x3] %vm373, 0.0
        %377 = vst.msk [vmem:[#allocation2 + $0x20] sm:$0xff] %vm371, 0.0
        %378 = vst.msk [vmem:[#allocation2 + $0x28] sm:$0x3] %vm373, 0.0
        %379 = vst.msk [vmem:[#allocation2 + $0x30] sm:$0xff] %vm371, 0.0
        %380 = vst.msk [vmem:[#allocation2 + $0x38] sm:$0x3] %vm373, 0.0
        %381 = vst.msk [vmem:[#allocation2 + $0x40] sm:$0xff] %vm371, 0.0
        %382 = vst.msk [vmem:[#allocation2 + $0x48] sm:$0x3] %vm373, 0.0
        %383 = vst.msk [vmem:[#allocation2 + $0x50] sm:$0xff] %vm371, 0.0
        %384 = vst.msk [vmem:[#allocation2 + $0x58] sm:$0x3] %vm373, 0.0
        %385 = vst.msk [vmem:[#allocation2 + $0x60] sm:$0xff] %vm371, 0.0
        %386 = vst.msk [vmem:[#allocation2 + $0x68] sm:$0x3] %vm373, 0.0
        %387 = vst.msk [vmem:[#allocation2 + $0x70] sm:$0xff] %vm371, 0.0
        %388 = vst.msk [vmem:[#allocation2 + $0x78] sm:$0x3] %vm373, 0.0
        %389 = vst.msk [vmem:[#allocation2 + $0x80] sm:$0xff] %vm371, 0.0
        %390 = vst.msk [vmem:[#allocation2 + $0x88] sm:$0x3] %vm373, 0.0
        %391 = vst.msk [vmem:[#allocation2 + $0x90] sm:$0xff] %vm371, 0.0
        %392 = vst.msk [vmem:[#allocation2 + $0x98] sm:$0x3] %vm373, 0.0
        %393 = vst.msk [vmem:[#allocation2 + $0xa0] sm:$0xff] %vm371, 0.0
        %394 = vst.msk [vmem:[#allocation2 + $0xa8] sm:$0x3] %vm373, 0.0
        %395 = vst.msk [vmem:[#allocation2 + $0xb0] sm:$0xff] %vm371, 0.0
        %396 = vst.msk [vmem:[#allocation2 + $0xb8] sm:$0x3] %vm373, 0.0
        %397 = vst.msk [vmem:[#allocation2 + $0xc0] sm:$0xff] %vm371, 0.0
        %398 = vst.msk [vmem:[#allocation2 + $0xc8] sm:$0x3] %vm373, 0.0
        %399 = vst.msk [vmem:[#allocation2 + $0xd0] sm:$0xff] %vm371, 0.0
        %400 = vst.msk [vmem:[#allocation2 + $0xd8] sm:$0x3] %vm373, 0.0
        %401 = vst.msk [vmem:[#allocation2 + $0xe0] sm:$0xff] %vm371, 0.0
        %402 = vst.msk [vmem:[#allocation2 + $0xe8] sm:$0x3] %vm373, 0.0
        %403 = vst.msk [vmem:[#allocation2 + $0xf0] sm:$0xff] %vm371, 0.0
        %404 = vst.msk [vmem:[#allocation2 + $0xf8] sm:$0x3] %vm373, 0.0
        %405 = vst.msk [vmem:[#allocation2 + $0x100] sm:$0xff] %vm371, 0.0
        %406 = vst.msk [vmem:[#allocation2 + $0x108] sm:$0x3] %vm373, 0.0
        %407 = vst.msk [vmem:[#allocation2 + $0x110] sm:$0xff] %vm371, 0.0
        %408 = vst.msk [vmem:[#allocation2 + $0x118] sm:$0x3] %vm373, 0.0
        %409 = vst.msk [vmem:[#allocation2 + $0x120] sm:$0xff] %vm371, 0.0
        %410 = vst.msk [vmem:[#allocation2 + $0x128] sm:$0x3] %vm373, 0.0
        %411 = vst.msk [vmem:[#allocation2 + $0x130] sm:$0xff] %vm371, 0.0
        %412 = vst.msk [vmem:[#allocation2 + $0x138] sm:$0x3] %vm373, 0.0
        %413 = vst.msk [vmem:[#allocation2 + $0x140] sm:$0xff] %vm371, 0.0
        %414 = vst.msk [vmem:[#allocation2 + $0x148] sm:$0x3] %vm373, 0.0
        %415 = vst.msk [vmem:[#allocation2 + $0x150] sm:$0xff] %vm371, 0.0
        %416 = vst.msk [vmem:[#allocation2 + $0x158] sm:$0x3] %vm373, 0.0
        %417 = vst.msk [vmem:[#allocation2 + $0x160] sm:$0xff] %vm371, 0.0
        %418 = vst.msk [vmem:[#allocation2 + $0x168] sm:$0x3] %vm373, 0.0
        %419 = vst.msk [vmem:[#allocation2 + $0x170] sm:$0xff] %vm371, 0.0
        %420 = vst.msk [vmem:[#allocation2 + $0x178] sm:$0x3] %vm373, 0.0
        %421 = vst.msk [vmem:[#allocation2 + $0x180] sm:$0xff] %vm371, 0.0
        %422 = vst.msk [vmem:[#allocation2 + $0x188] sm:$0x3] %vm373, 0.0
        %423 = vst.msk [vmem:[#allocation2 + $0x190] sm:$0xff] %vm371, 0.0
        %424 = vst.msk [vmem:[#allocation2 + $0x198] sm:$0x3] %vm373, 0.0
        %425 = vst.msk [vmem:[#allocation2 + $0x1a0] sm:$0xff] %vm371, 0.0
        %426 = vst.msk [vmem:[#allocation2 + $0x1a8] sm:$0x3] %vm373, 0.0
        %427 = vst.msk [vmem:[#allocation2 + $0x1b0] sm:$0xff] %vm371, 0.0
        %428 = vst.msk [vmem:[#allocation2 + $0x1b8] sm:$0x3] %vm373, 0.0
        %429 = vst.msk [vmem:[#allocation2 + $0x1c0] sm:$0xff] %vm371, 0.0
        %430 = vst.msk [vmem:[#allocation2 + $0x1c8] sm:$0x3] %vm373, 0.0
        %431 = vst.msk [vmem:[#allocation2 + $0x1d0] sm:$0xff] %vm371, 0.0
        %432 = vst.msk [vmem:[#allocation2 + $0x1d8] sm:$0x3] %vm373, 0.0
        %433 = vst.msk [vmem:[#allocation2 + $0x1e0] sm:$0xff] %vm371, 0.0
        %434 = vst.msk [vmem:[#allocation2 + $0x1e8] sm:$0x3] %vm373, 0.0
        %435 = vst.msk [vmem:[#allocation2 + $0x1f0] sm:$0xff] %vm371, 0.0
        %436 = vst.msk [vmem:[#allocation2 + $0x1f8] sm:$0x3] %vm373, 0.0
        %437 = vst.msk [vmem:[#allocation2 + $0x200] sm:$0xff] %vm371, 0.0
        %438 = vst.msk [vmem:[#allocation2 + $0x208] sm:$0x3] %vm373, 0.0
        %439 = vst.msk [vmem:[#allocation2 + $0x210] sm:$0xff] %vm371, 0.0
        %440 = vst.msk [vmem:[#allocation2 + $0x218] sm:$0x3] %vm373, 0.0
        %441 = vst.msk [vmem:[#allocation2 + $0x220] sm:$0xff] %vm371, 0.0
        %442 = vst.msk [vmem:[#allocation2 + $0x228] sm:$0x3] %vm373, 0.0
        %443 = vst.msk [vmem:[#allocation2 + $0x230] sm:$0xff] %vm371, 0.0
        %444 = vst.msk [vmem:[#allocation2 + $0x238] sm:$0x3] %vm373, 0.0
        %445 = vst.msk [vmem:[#allocation2 + $0x240] sm:$0xff] %vm371, 0.0
        %446 = vst.msk [vmem:[#allocation2 + $0x248] sm:$0x3] %vm373, 0.0
        %447 = vst.msk [vmem:[#allocation2 + $0x250] sm:$0xff] %vm371, 0.0
        %448 = vst.msk [vmem:[#allocation2 + $0x258] sm:$0x3] %vm373, 0.0
        %449 = vst.msk [vmem:[#allocation2 + $0x260] sm:$0xff] %vm371, 0.0
        %450 = vst.msk [vmem:[#allocation2 + $0x268] sm:$0x3] %vm373, 0.0
        %451 = vst.msk [vmem:[#allocation2 + $0x270] sm:$0xff] %vm371, 0.0
        %452 = vst.msk [vmem:[#allocation2 + $0x278] sm:$0x3] %vm373, 0.0
        %453 = vst.msk [vmem:[#allocation2 + $0x280] sm:$0xff] %vm371, 0.0
        %454 = vst.msk [vmem:[#allocation2 + $0x288] sm:$0x3] %vm373, 0.0
        %455 = vst.msk [vmem:[#allocation2 + $0x290] sm:$0xff] %vm371, 0.0
        %456 = vst.msk [vmem:[#allocation2 + $0x298] sm:$0x3] %vm373, 0.0
        %457 = vst.msk [vmem:[#allocation2 + $0x2a0] sm:$0xff] %vm371, 0.0
        %458 = vst.msk [vmem:[#allocation2 + $0x2a8] sm:$0x3] %vm373, 0.0
        %459 = vst.msk [vmem:[#allocation2 + $0x2b0] sm:$0xff] %vm371, 0.0
        %460 = vst.msk [vmem:[#allocation2 + $0x2b8] sm:$0x3] %vm373, 0.0
        %461 = vst.msk [vmem:[#allocation2 + $0x2c0] sm:$0xff] %vm371, 0.0
        %462 = vst.msk [vmem:[#allocation2 + $0x2c8] sm:$0x3] %vm373, 0.0
        %463 = vst.msk [vmem:[#allocation2 + $0x2d0] sm:$0xff] %vm371, 0.0
        %464 = vst.msk [vmem:[#allocation2 + $0x2d8] sm:$0x3] %vm373, 0.0
        %465 = vst.msk [vmem:[#allocation2 + $0x2e0] sm:$0xff] %vm371, 0.0
        %466 = vst.msk [vmem:[#allocation2 + $0x2e8] sm:$0x3] %vm373, 0.0
        %467 = vst.msk [vmem:[#allocation2 + $0x2f0] sm:$0xff] %vm371, 0.0
        %468 = vst.msk [vmem:[#allocation2 + $0x2f8] sm:$0x3] %vm373, 0.0
        %469 = vst.msk [vmem:[#allocation2 + $0x300] sm:$0xff] %vm371, 0.0
        %470 = vst.msk [vmem:[#allocation2 + $0x308] sm:$0x3] %vm373, 0.0
        %471 = vst.msk [vmem:[#allocation2 + $0x310] sm:$0xff] %vm371, 0.0
        %472 = vst.msk [vmem:[#allocation2 + $0x318] sm:$0x3] %vm373, 0.0
        %473 = vst.msk [vmem:[#allocation2 + $0x320] sm:$0xff] %vm371, 0.0
        %474 = vst.msk [vmem:[#allocation2 + $0x328] sm:$0x3] %vm373, 0.0
        %475 = vst.msk [vmem:[#allocation2 + $0x330] sm:$0xff] %vm371, 0.0
        %476 = vst.msk [vmem:[#allocation2 + $0x338] sm:$0x3] %vm373, 0.0
        %477 = vst.msk [vmem:[#allocation2 + $0x340] sm:$0xff] %vm371, 0.0
        %478 = vst.msk [vmem:[#allocation2 + $0x348] sm:$0x3] %vm373, 0.0
        %479 = vst.msk [vmem:[#allocation2 + $0x350] sm:$0xff] %vm371, 0.0
        %480 = vst.msk [vmem:[#allocation2 + $0x358] sm:$0x3] %vm373, 0.0
        %481 = vst.msk [vmem:[#allocation2 + $0x360] sm:$0xff] %vm371, 0.0
        %482 = vst.msk [vmem:[#allocation2 + $0x368] sm:$0x3] %vm373, 0.0
        %483 = vst.msk [vmem:[#allocation2 + $0x370] sm:$0xff] %vm371, 0.0
        %484 = vst.msk [vmem:[#allocation2 + $0x378] sm:$0x3] %vm373, 0.0
        %485 = vst.msk [vmem:[#allocation2 + $0x380] sm:$0xff] %vm371, 0.0
        %486 = vst.msk [vmem:[#allocation2 + $0x388] sm:$0x3] %vm373, 0.0
        %487 = vst.msk [vmem:[#allocation2 + $0x390] sm:$0xff] %vm371, 0.0
        %488 = vst.msk [vmem:[#allocation2 + $0x398] sm:$0x3] %vm373, 0.0
        %489 = vst.msk [vmem:[#allocation2 + $0x3a0] sm:$0xff] %vm371, 0.0
        %490 = vst.msk [vmem:[#allocation2 + $0x3a8] sm:$0x3] %vm373, 0.0
        %491 = vst.msk [vmem:[#allocation2 + $0x3b0] sm:$0xff] %vm371, 0.0
        %492 = vst.msk [vmem:[#allocation2 + $0x3b8] sm:$0x3] %vm373, 0.0
        %493 = vst.msk [vmem:[#allocation2 + $0x3c0] sm:$0xff] %vm371, 0.0
        %494 = vst.msk [vmem:[#allocation2 + $0x3c8] sm:$0x3] %vm373, 0.0
        %495 = vst.msk [vmem:[#allocation2 + $0x3d0] sm:$0xff] %vm371, 0.0
        %496 = vst.msk [vmem:[#allocation2 + $0x3d8] sm:$0x3] %vm373, 0.0
        %497 = vst.msk [vmem:[#allocation2 + $0x3e0] sm:$0xff] %vm371, 0.0
        %498 = vst.msk [vmem:[#allocation2 + $0x3e8] sm:$0x3] %vm373, 0.0
        %499 = vst.msk [vmem:[#allocation2 + $0x3f0] sm:$0xff] %vm371, 0.0
        %500 = vst.msk [vmem:[#allocation2 + $0x3f8] sm:$0x3] %vm373, 0.0
        %501 = vst.msk [vmem:[#allocation2 + $0x400] sm:$0xff] %vm371, 0.0
        %502 = vst.msk [vmem:[#allocation2 + $0x408] sm:$0x3] %vm373, 0.0
        %503 = vst.msk [vmem:[#allocation2 + $0x410] sm:$0xff] %vm371, 0.0
        %504 = vst.msk [vmem:[#allocation2 + $0x418] sm:$0x3] %vm373, 0.0
        %505 = vst.msk [vmem:[#allocation2 + $0x420] sm:$0xff] %vm371, 0.0
        %506 = vst.msk [vmem:[#allocation2 + $0x428] sm:$0x3] %vm373, 0.0
        %507 = vst.msk [vmem:[#allocation2 + $0x430] sm:$0xff] %vm371, 0.0
        %508 = vst.msk [vmem:[#allocation2 + $0x438] sm:$0x3] %vm373, 0.0
        %509 = vst.msk [vmem:[#allocation2 + $0x440] sm:$0xff] %vm371, 0.0
        %510 = vst.msk [vmem:[#allocation2 + $0x448] sm:$0x3] %vm373, 0.0
        %511 = vst.msk [vmem:[#allocation2 + $0x450] sm:$0xff] %vm371, 0.0
        %512 = vst.msk [vmem:[#allocation2 + $0x458] sm:$0x3] %vm373, 0.0
        %513 = vst.msk [vmem:[#allocation2 + $0x460] sm:$0xff] %vm371, 0.0
        %514 = vst.msk [vmem:[#allocation2 + $0x468] sm:$0x3] %vm373, 0.0
        %515 = vst.msk [vmem:[#allocation2 + $0x470] sm:$0xff] %vm371, 0.0
        %516 = vst.msk [vmem:[#allocation2 + $0x478] sm:$0x3] %vm373, 0.0
        %517 = vst.msk [vmem:[#allocation2 + $0x480] sm:$0xff] %vm371, 0.0
        %518 = vst.msk [vmem:[#allocation2 + $0x488] sm:$0x3] %vm373, 0.0
        %519 = vst.msk [vmem:[#allocation2 + $0x490] sm:$0xff] %vm371, 0.0
        %520 = vst.msk [vmem:[#allocation2 + $0x498] sm:$0x3] %vm373, 0.0
        %521 = vst.msk [vmem:[#allocation2 + $0x4a0] sm:$0xff] %vm371, 0.0
        %522 = vst.msk [vmem:[#allocation2 + $0x4a8] sm:$0x3] %vm373, 0.0
        %523 = vst.msk [vmem:[#allocation2 + $0x4b0] sm:$0xff] %vm371, 0.0
        %524 = vst.msk [vmem:[#allocation2 + $0x4b8] sm:$0x3] %vm373, 0.0
        %525 = vst.msk [vmem:[#allocation2 + $0x4c0] sm:$0xff] %vm371, 0.0
        %526 = vst.msk [vmem:[#allocation2 + $0x4c8] sm:$0x3] %vm373, 0.0
        %527 = vst.msk [vmem:[#allocation2 + $0x4d0] sm:$0xff] %vm371, 0.0
        %528 = vst.msk [vmem:[#allocation2 + $0x4d8] sm:$0x3] %vm373, 0.0
        %529 = vst.msk [vmem:[#allocation2 + $0x4e0] sm:$0xff] %vm371, 0.0
        %530 = vst.msk [vmem:[#allocation2 + $0x4e8] sm:$0x3] %vm373, 0.0
        %531 = vst.msk [vmem:[#allocation2 + $0x4f0] sm:$0xff] %vm371, 0.0
        %532 = vst.msk [vmem:[#allocation2 + $0x4f8] sm:$0x3] %vm373, 0.0
        %533 = vst.msk [vmem:[#allocation2 + $0x500] sm:$0xff] %vm371, 0.0
        %534 = vst.msk [vmem:[#allocation2 + $0x508] sm:$0x3] %vm373, 0.0
        %535 = vst.msk [vmem:[#allocation2 + $0x510] sm:$0xff] %vm371, 0.0
        %536 = vst.msk [vmem:[#allocation2 + $0x518] sm:$0x3] %vm373, 0.0
        %537 = vst.msk [vmem:[#allocation2 + $0x520] sm:$0xff] %vm371, 0.0
        %538 = vst.msk [vmem:[#allocation2 + $0x528] sm:$0x3] %vm373, 0.0
        %539 = vst.msk [vmem:[#allocation2 + $0x530] sm:$0xff] %vm371, 0.0
        %540 = vst.msk [vmem:[#allocation2 + $0x538] sm:$0x3] %vm373, 0.0
        %541 = vst.msk [vmem:[#allocation2 + $0x540] sm:$0xff] %vm371, 0.0
        %542 = vst.msk [vmem:[#allocation2 + $0x548] sm:$0x3] %vm373, 0.0
        %543 = vst.msk [vmem:[#allocation2 + $0x550] sm:$0xff] %vm371, 0.0
        %544 = vst.msk [vmem:[#allocation2 + $0x558] sm:$0x3] %vm373, 0.0
        %545 = vst.msk [vmem:[#allocation2 + $0x560] sm:$0xff] %vm371, 0.0
        %546 = vst.msk [vmem:[#allocation2 + $0x568] sm:$0x3] %vm373, 0.0
        %547 = vst.msk [vmem:[#allocation2 + $0x570] sm:$0xff] %vm371, 0.0
        %548 = vst.msk [vmem:[#allocation2 + $0x578] sm:$0x3] %vm373, 0.0
        %549 = vst.msk [vmem:[#allocation2 + $0x580] sm:$0xff] %vm371, 0.0
        %550 = vst.msk [vmem:[#allocation2 + $0x588] sm:$0x3] %vm373, 0.0
        %551 = vst.msk [vmem:[#allocation2 + $0x590] sm:$0xff] %vm371, 0.0
        %552 = vst.msk [vmem:[#allocation2 + $0x598] sm:$0x3] %vm373, 0.0
        %553 = vst.msk [vmem:[#allocation2 + $0x5a0] sm:$0xff] %vm371, 0.0
        %554 = vst.msk [vmem:[#allocation2 + $0x5a8] sm:$0x3] %vm373, 0.0
        %555 = vst.msk [vmem:[#allocation2 + $0x5b0] sm:$0xff] %vm371, 0.0
        %556 = vst.msk [vmem:[#allocation2 + $0x5b8] sm:$0x3] %vm373, 0.0
        %557 = vst.msk [vmem:[#allocation2 + $0x5c0] sm:$0xff] %vm371, 0.0
        %558 = vst.msk [vmem:[#allocation2 + $0x5c8] sm:$0x3] %vm373, 0.0
        %559 = vst.msk [vmem:[#allocation2 + $0x5d0] sm:$0xff] %vm371, 0.0
        %560 = vst.msk [vmem:[#allocation2 + $0x5d8] sm:$0x3] %vm373, 0.0
        %561 = vst.msk [vmem:[#allocation2 + $0x5e0] sm:$0xff] %vm371, 0.0
        %562 = vst.msk [vmem:[#allocation2 + $0x5e8] sm:$0x3] %vm373, 0.0
        %563 = vst.msk [vmem:[#allocation2 + $0x5f0] sm:$0xff] %vm371, 0.0
        %564 = vst.msk [vmem:[#allocation2 + $0x5f8] sm:$0x3] %vm373, 0.0
        %565 = vst.msk [vmem:[#allocation2 + $0x600] sm:$0xff] %vm371, 0.0
        %566 = vst.msk [vmem:[#allocation2 + $0x608] sm:$0x3] %vm373, 0.0
        %567 = vst.msk [vmem:[#allocation2 + $0x610] sm:$0xff] %vm371, 0.0
        %568 = vst.msk [vmem:[#allocation2 + $0x618] sm:$0x3] %vm373, 0.0
        %569 = vst.msk [vmem:[#allocation2 + $0x620] sm:$0xff] %vm371, 0.0
        %570 = vst.msk [vmem:[#allocation2 + $0x628] sm:$0x3] %vm373, 0.0
        %571 = vst.msk [vmem:[#allocation2 + $0x630] sm:$0xff] %vm371, 0.0
        %572 = vst.msk [vmem:[#allocation2 + $0x638] sm:$0x3] %vm373, 0.0
        %v573 = vld [vmem:[%s326] sm:$0xff]
        %v574 = vld [vmem:[%s326 + $0x8] sm:$0xff]
        %v575 = vld [vmem:[%s326 + $0x10] sm:$0xff]
        %v576 = vld [vmem:[%s326 + $0x18] sm:$0xff]
        %v577 = vld [vmem:[%s326 + $0x20] sm:$0xff]
        %v578 = vld [vmem:[%s326 + $0x28] sm:$0xff]
        %v579 = vld [vmem:[%s326 + $0x30] sm:$0xff]
        %v580 = vld [vmem:[%s326 + $0x38] sm:$0xff]
        %v581 = vld [vmem:[%s326 + $0x40] sm:$0xff]
        %v582 = vld [vmem:[%s326 + $0x48] sm:$0xff]
        %v583 = vld [vmem:[%s326 + $0x50] sm:$0xff]
        %v584 = vld [vmem:[%s326 + $0x58] sm:$0xff]
        %v585 = vld [vmem:[%s326 + $0x60] sm:$0xff]
        %v586 = vld [vmem:[%s326 + $0x68] sm:$0xff]
        %v587 = vld [vmem:[%s326 + $0x70] sm:$0xff]
        %v588 = vld [vmem:[%s326 + $0x78] sm:$0xff]
        %v589 = vld [vmem:[%s326 + $0x80] sm:$0xff]
        %v590 = vld [vmem:[%s326 + $0x88] sm:$0xff]
        %v591 = vld [vmem:[%s326 + $0x90] sm:$0xff]
        %v592 = vld [vmem:[%s326 + $0x98] sm:$0xff]
        %v593 = vld [vmem:[%s326 + $0xa0] sm:$0xff]
        %v594 = vld [vmem:[%s326 + $0xa8] sm:$0xff]
        %v595 = vld [vmem:[%s326 + $0xb0] sm:$0xff]
        %v596 = vld [vmem:[%s326 + $0xb8] sm:$0xff]
        %v597 = vld [vmem:[%s326 + $0xc0] sm:$0xff]
        %v598 = vld [vmem:[%s326 + $0xc8] sm:$0xff]
        %v599 = vld [vmem:[%s326 + $0xd0] sm:$0xff]
        %v600 = vld [vmem:[%s326 + $0xd8] sm:$0xff]
        %v601 = vld [vmem:[%s326 + $0xe0] sm:$0xff]
        %v602 = vld [vmem:[%s326 + $0xe8] sm:$0xff]
        %v603 = vld [vmem:[%s326 + $0xf0] sm:$0xff]
        %v604 = vld [vmem:[%s326 + $0xf8] sm:$0xff]
        %v605 = vld [vmem:[%s326 + $0x100] sm:$0xff]
        %v606 = vld [vmem:[%s326 + $0x108] sm:$0xff]
        %v607 = vld [vmem:[%s326 + $0x110] sm:$0xff]
        %v608 = vld [vmem:[%s326 + $0x118] sm:$0xff]
        %v609 = vld [vmem:[%s326 + $0x120] sm:$0xff]
        %v610 = vld [vmem:[%s326 + $0x128] sm:$0xff]
        %v611 = vld [vmem:[%s326 + $0x130] sm:$0xff]
        %v612 = vld [vmem:[%s326 + $0x138] sm:$0xff]
        %v613 = vld [vmem:[%s326 + $0x140] sm:$0xff]
        %v614 = vld [vmem:[%s326 + $0x148] sm:$0xff]
        %v615 = vld [vmem:[%s326 + $0x150] sm:$0xff]
        %v616 = vld [vmem:[%s326 + $0x158] sm:$0xff]
        %v617 = vld [vmem:[%s326 + $0x160] sm:$0xff]
        %v618 = vld [vmem:[%s326 + $0x168] sm:$0xff]
        %v619 = vld [vmem:[%s326 + $0x170] sm:$0xff]
        %v620 = vld [vmem:[%s326 + $0x178] sm:$0xff]
        %v621 = vld [vmem:[%s326 + $0x180] sm:$0xff]
        %v622 = vld [vmem:[%s326 + $0x188] sm:$0xff]
        %v623 = vld [vmem:[%s326 + $0x190] sm:$0xff]
        %v624 = vld [vmem:[%s326 + $0x198] sm:$0xff]
        %v625 = vld [vmem:[%s326 + $0x1a0] sm:$0xff]
        %v626 = vld [vmem:[%s326 + $0x1a8] sm:$0xff]
        %v627 = vld [vmem:[%s326 + $0x1b0] sm:$0xff]
        %v628 = vld [vmem:[%s326 + $0x1b8] sm:$0xff]
        %v629 = vld [vmem:[%s326 + $0x1c0] sm:$0xff]
        %v630 = vld [vmem:[%s326 + $0x1c8] sm:$0xff]
        %v631 = vld [vmem:[%s326 + $0x1d0] sm:$0xff]
        %v632 = vld [vmem:[%s326 + $0x1d8] sm:$0xff]
        %v633 = vld [vmem:[%s326 + $0x1e0] sm:$0xff]
        %v634 = vld [vmem:[%s326 + $0x1e8] sm:$0xff]
        %v635 = vld [vmem:[%s326 + $0x1f0] sm:$0xff]
        %v636 = vld [vmem:[%s326 + $0x1f8] sm:$0xff]
        %s637 = scalar_lea.vmem [#allocation2], 176
        %638 = vst.msk [vmem:[%s637 + $0x1] sm:$0xff] %vm371, %v573
        %639 = vst.msk [vmem:[%s637 + $0x11] sm:$0xff] %vm371, %v574
        %640 = vst.msk [vmem:[%s637 + $0x21] sm:$0xff] %vm371, %v575
        %641 = vst.msk [vmem:[%s637 + $0x31] sm:$0xff] %vm371, %v576
        %642 = vst.msk [vmem:[%s637 + $0x41] sm:$0xff] %vm371, %v577
        %643 = vst.msk [vmem:[%s637 + $0x51] sm:$0xff] %vm371, %v578
        %644 = vst.msk [vmem:[%s637 + $0x61] sm:$0xff] %vm371, %v579
        %645 = vst.msk [vmem:[%s637 + $0x71] sm:$0xff] %vm371, %v580
        %646 = vst.msk [vmem:[%s637 + $0xa1] sm:$0xff] %vm371, %v581
        %647 = vst.msk [vmem:[%s637 + $0xb1] sm:$0xff] %vm371, %v582
        %648 = vst.msk [vmem:[%s637 + $0xc1] sm:$0xff] %vm371, %v583
        %649 = vst.msk [vmem:[%s637 + $0xd1] sm:$0xff] %vm371, %v584
        %650 = vst.msk [vmem:[%s637 + $0xe1] sm:$0xff] %vm371, %v585
        %651 = vst.msk [vmem:[%s637 + $0xf1] sm:$0xff] %vm371, %v586
        %652 = vst.msk [vmem:[%s637 + $0x101] sm:$0xff] %vm371, %v587
        %653 = vst.msk [vmem:[%s637 + $0x111] sm:$0xff] %vm371, %v588
        %654 = vst.msk [vmem:[%s637 + $0x141] sm:$0xff] %vm371, %v589
        %655 = vst.msk [vmem:[%s637 + $0x151] sm:$0xff] %vm371, %v590
        %656 = vst.msk [vmem:[%s637 + $0x161] sm:$0xff] %vm371, %v591
        %657 = vst.msk [vmem:[%s637 + $0x171] sm:$0xff] %vm371, %v592
        %658 = vst.msk [vmem:[%s637 + $0x181] sm:$0xff] %vm371, %v593
        %659 = vst.msk [vmem:[%s637 + $0x191] sm:$0xff] %vm371, %v594
        %660 = vst.msk [vmem:[%s637 + $0x1a1] sm:$0xff] %vm371, %v595
        %661 = vst.msk [vmem:[%s637 + $0x1b1] sm:$0xff] %vm371, %v596
        %662 = vst.msk [vmem:[%s637 + $0x1e1] sm:$0xff] %vm371, %v597
        %663 = vst.msk [vmem:[%s637 + $0x1f1] sm:$0xff] %vm371, %v598
        %664 = vst.msk [vmem:[%s637 + $0x201] sm:$0xff] %vm371, %v599
        %665 = vst.msk [vmem:[%s637 + $0x211] sm:$0xff] %vm371, %v600
        %666 = vst.msk [vmem:[%s637 + $0x221] sm:$0xff] %vm371, %v601
        %667 = vst.msk [vmem:[%s637 + $0x231] sm:$0xff] %vm371, %v602
        %668 = vst.msk [vmem:[%s637 + $0x241] sm:$0xff] %vm371, %v603
        %669 = vst.msk [vmem:[%s637 + $0x251] sm:$0xff] %vm371, %v604
        %670 = vst.msk [vmem:[%s637 + $0x281] sm:$0xff] %vm371, %v605
        %671 = vst.msk [vmem:[%s637 + $0x291] sm:$0xff] %vm371, %v606
        %672 = vst.msk [vmem:[%s637 + $0x2a1] sm:$0xff] %vm371, %v607
        %673 = vst.msk [vmem:[%s637 + $0x2b1] sm:$0xff] %vm371, %v608
        %674 = vst.msk [vmem:[%s637 + $0x2c1] sm:$0xff] %vm371, %v609
        %675 = vst.msk [vmem:[%s637 + $0x2d1] sm:$0xff] %vm371, %v610
        %676 = vst.msk [vmem:[%s637 + $0x2e1] sm:$0xff] %vm371, %v611
        %677 = vst.msk [vmem:[%s637 + $0x2f1] sm:$0xff] %vm371, %v612
        %678 = vst.msk [vmem:[%s637 + $0x321] sm:$0xff] %vm371, %v613
        %679 = vst.msk [vmem:[%s637 + $0x331] sm:$0xff] %vm371, %v614
        %680 = vst.msk [vmem:[%s637 + $0x341] sm:$0xff] %vm371, %v615
        %681 = vst.msk [vmem:[%s637 + $0x351] sm:$0xff] %vm371, %v616
        %682 = vst.msk [vmem:[%s637 + $0x361] sm:$0xff] %vm371, %v617
        %683 = vst.msk [vmem:[%s637 + $0x371] sm:$0xff] %vm371, %v618
        %684 = vst.msk [vmem:[%s637 + $0x381] sm:$0xff] %vm371, %v619
        %685 = vst.msk [vmem:[%s637 + $0x391] sm:$0xff] %vm371, %v620
        %686 = vst.msk [vmem:[%s637 + $0x3c1] sm:$0xff] %vm371, %v621
        %687 = vst.msk [vmem:[%s637 + $0x3d1] sm:$0xff] %vm371, %v622
        %688 = vst.msk [vmem:[%s637 + $0x3e1] sm:$0xff] %vm371, %v623
        %689 = vst.msk [vmem:[%s637 + $0x3f1] sm:$0xff] %vm371, %v624
        %690 = vst.msk [vmem:[%s637 + $0x401] sm:$0xff] %vm371, %v625
        %691 = vst.msk [vmem:[%s637 + $0x411] sm:$0xff] %vm371, %v626
        %692 = vst.msk [vmem:[%s637 + $0x421] sm:$0xff] %vm371, %v627
        %693 = vst.msk [vmem:[%s637 + $0x431] sm:$0xff] %vm371, %v628
        %694 = vst.msk [vmem:[%s637 + $0x461] sm:$0xff] %vm371, %v629
        %695 = vst.msk [vmem:[%s637 + $0x471] sm:$0xff] %vm371, %v630
        %696 = vst.msk [vmem:[%s637 + $0x481] sm:$0xff] %vm371, %v631
        %697 = vst.msk [vmem:[%s637 + $0x491] sm:$0xff] %vm371, %v632
        %698 = vst.msk [vmem:[%s637 + $0x4a1] sm:$0xff] %vm371, %v633
        %699 = vst.msk [vmem:[%s637 + $0x4b1] sm:$0xff] %vm371, %v634
        %700 = vst.msk [vmem:[%s637 + $0x4c1] sm:$0xff] %vm371, %v635
        %701 = vst.msk [vmem:[%s637 + $0x4d1] sm:$0xff] %vm371, %v636
        %v702 = vld [vmem:[#allocation2] sm:$0xff]
        %v703 = vld [vmem:[#allocation2 + $0x10] sm:$0xff]
        %v704 = vld [vmem:[#allocation2 + $0x20] sm:$0xff]
        %v705 = vld [vmem:[#allocation2 + $0x30] sm:$0xff]
        %v706 = vld [vmem:[#allocation2 + $0x40] sm:$0xff]
        %v707 = vld [vmem:[#allocation2 + $0x50] sm:$0xff]
        %v708 = vld [vmem:[#allocation2 + $0x60] sm:$0xff]
        %v709 = vld [vmem:[#allocation2 + $0x70] sm:$0xff]
        %v710 = vld [vmem:[#allocation2 + $0xa0] sm:$0xff]
        %v711 = vld [vmem:[#allocation2 + $0xb0] sm:$0xff]
        %v712 = vld [vmem:[#allocation2 + $0xc0] sm:$0xff]
        %v713 = vld [vmem:[#allocation2 + $0xd0] sm:$0xff]
        %v714 = vld [vmem:[#allocation2 + $0xe0] sm:$0xff]
        %v715 = vld [vmem:[#allocation2 + $0xf0] sm:$0xff]
        %v716 = vld [vmem:[#allocation2 + $0x100] sm:$0xff]
        %v717 = vld [vmem:[#allocation2 + $0x110] sm:$0xff]
        %v718 = vld [vmem:[#allocation2 + $0x140] sm:$0xff]
        %v719 = vld [vmem:[#allocation2 + $0x150] sm:$0xff]
        %v720 = vld [vmem:[#allocation2 + $0x160] sm:$0xff]
        %v721 = vld [vmem:[#allocation2 + $0x170] sm:$0xff]
        %v722 = vld [vmem:[#allocation2 + $0x180] sm:$0xff]
        %v723 = vld [vmem:[#allocation2 + $0x190] sm:$0xff]
        %v724 = vld [vmem:[#allocation2 + $0x1a0] sm:$0xff]
        %v725 = vld [vmem:[#allocation2 + $0x1b0] sm:$0xff]
        %v726 = vld [vmem:[#allocation2 + $0x1e0] sm:$0xff]
        %v727 = vld [vmem:[#allocation2 + $0x1f0] sm:$0xff]
        %v728 = vld [vmem:[#allocation2 + $0x200] sm:$0xff]
        %v729 = vld [vmem:[#allocation2 + $0x210] sm:$0xff]
        %v730 = vld [vmem:[#allocation2 + $0x220] sm:$0xff]
        %v731 = vld [vmem:[#allocation2 + $0x230] sm:$0xff]
        %v732 = vld [vmem:[#allocation2 + $0x240] sm:$0xff]
        %v733 = vld [vmem:[#allocation2 + $0x250] sm:$0xff]
        %v734 = vld [vmem:[#allocation2 + $0x280] sm:$0xff]
        %v735 = vld [vmem:[#allocation2 + $0x290] sm:$0xff]
        %v736 = vld [vmem:[#allocation2 + $0x2a0] sm:$0xff]
        %v737 = vld [vmem:[#allocation2 + $0x2b0] sm:$0xff]
        %v738 = vld [vmem:[#allocation2 + $0x2c0] sm:$0xff]
        %v739 = vld [vmem:[#allocation2 + $0x2d0] sm:$0xff]
        %v740 = vld [vmem:[#allocation2 + $0x2e0] sm:$0xff]
        %v741 = vld [vmem:[#allocation2 + $0x2f0] sm:$0xff]
        %v742 = vld [vmem:[#allocation2 + $0x320] sm:$0xff]
        %v743 = vld [vmem:[#allocation2 + $0x330] sm:$0xff]
        %v744 = vld [vmem:[#allocation2 + $0x340] sm:$0xff]
        %v745 = vld [vmem:[#allocation2 + $0x350] sm:$0xff]
        %v746 = vld [vmem:[#allocation2 + $0x360] sm:$0xff]
        %v747 = vld [vmem:[#allocation2 + $0x370] sm:$0xff]
        %v748 = vld [vmem:[#allocation2 + $0x380] sm:$0xff]
        %v749 = vld [vmem:[#allocation2 + $0x390] sm:$0xff]
        %v750 = vld [vmem:[#allocation2 + $0x3c0] sm:$0xff]
        %v751 = vld [vmem:[#allocation2 + $0x3d0] sm:$0xff]
        %v752 = vld [vmem:[#allocation2 + $0x3e0] sm:$0xff]
        %v753 = vld [vmem:[#allocation2 + $0x3f0] sm:$0xff]
        %v754 = vld [vmem:[#allocation2 + $0x400] sm:$0xff]
        %v755 = vld [vmem:[#allocation2 + $0x410] sm:$0xff]
        %v756 = vld [vmem:[#allocation2 + $0x420] sm:$0xff]
        %v757 = vld [vmem:[#allocation2 + $0x430] sm:$0xff]
        %v758 = vld [vmem:[#allocation2 + $0x460] sm:$0xff]
        %v759 = vld [vmem:[#allocation2 + $0x470] sm:$0xff]
        %v760 = vld [vmem:[#allocation2 + $0x480] sm:$0xff]
        %v761 = vld [vmem:[#allocation2 + $0x490] sm:$0xff]
        %v762 = vld [vmem:[#allocation2 + $0x4a0] sm:$0xff]
        %v763 = vld [vmem:[#allocation2 + $0x4b0] sm:$0xff]
        %v764 = vld [vmem:[#allocation2 + $0x4c0] sm:$0xff]
        %v765 = vld [vmem:[#allocation2 + $0x4d0] sm:$0xff]
        %v766 = vld [vmem:[#allocation2 + $0x1] sm:$0xff]
        %v767 = vld [vmem:[#allocation2 + $0x11] sm:$0xff]
        %v768 = vld [vmem:[#allocation2 + $0x21] sm:$0xff]
        %v769 = vld [vmem:[#allocation2 + $0x31] sm:$0xff]
        %v770 = vld [vmem:[#allocation2 + $0x41] sm:$0xff]
        %v771 = vld [vmem:[#allocation2 + $0x51] sm:$0xff]
        %v772 = vld [vmem:[#allocation2 + $0x61] sm:$0xff]
        %v773 = vld [vmem:[#allocation2 + $0x71] sm:$0xff]
        %v774 = vld [vmem:[#allocation2 + $0xa1] sm:$0xff]
        %v775 = vld [vmem:[#allocation2 + $0xb1] sm:$0xff]
        %v776 = vld [vmem:[#allocation2 + $0xc1] sm:$0xff]
        %v777 = vld [vmem:[#allocation2 + $0xd1] sm:$0xff]
        %v778 = vld [vmem:[#allocation2 + $0xe1] sm:$0xff]
        %v779 = vld [vmem:[#allocation2 + $0xf1] sm:$0xff]
        %v780 = vld [vmem:[#allocation2 + $0x101] sm:$0xff]
        %v781 = vld [vmem:[#allocation2 + $0x111] sm:$0xff]
        %v782 = vld [vmem:[#allocation2 + $0x141] sm:$0xff]
        %v783 = vld [vmem:[#allocation2 + $0x151] sm:$0xff]
        %v784 = vld [vmem:[#allocation2 + $0x161] sm:$0xff]
        %v785 = vld [vmem:[#allocation2 + $0x171] sm:$0xff]
        %v786 = vld [vmem:[#allocation2 + $0x181] sm:$0xff]
        %v787 = vld [vmem:[#allocation2 + $0x191] sm:$0xff]
        %v788 = vld [vmem:[#allocation2 + $0x1a1] sm:$0xff]
        %v789 = vld [vmem:[#allocation2 + $0x1b1] sm:$0xff]
        %v790 = vld [vmem:[#allocation2 + $0x1e1] sm:$0xff]
        %v791 = vld [vmem:[#allocation2 + $0x1f1] sm:$0xff]
        %v792 = vld [vmem:[#allocation2 + $0x201] sm:$0xff]
        %v793 = vld [vmem:[#allocation2 + $0x211] sm:$0xff]
        %v794 = vld [vmem:[#allocation2 + $0x221] sm:$0xff]
        %v795 = vld [vmem:[#allocation2 + $0x231] sm:$0xff]
        %v796 = vld [vmem:[#allocation2 + $0x241] sm:$0xff]
        %v797 = vld [vmem:[#allocation2 + $0x251] sm:$0xff]
        %v798 = vld [vmem:[#allocation2 + $0x281] sm:$0xff]
        %v799 = vld [vmem:[#allocation2 + $0x291] sm:$0xff]
        %v800 = vld [vmem:[#allocation2 + $0x2a1] sm:$0xff]
        %v801 = vld [vmem:[#allocation2 + $0x2b1] sm:$0xff]
        %v802 = vld [vmem:[#allocation2 + $0x2c1] sm:$0xff]
        %v803 = vld [vmem:[#allocation2 + $0x2d1] sm:$0xff]
        %v804 = vld [vmem:[#allocation2 + $0x2e1] sm:$0xff]
        %v805 = vld [vmem:[#allocation2 + $0x2f1] sm:$0xff]
        %v806 = vld [vmem:[#allocation2 + $0x321] sm:$0xff]
        %v807 = vld [vmem:[#allocation2 + $0x331] sm:$0xff]
        %v808 = vld [vmem:[#allocation2 + $0x341] sm:$0xff]
        %v809 = vld [vmem:[#allocation2 + $0x351] sm:$0xff]
        %v810 = vld [vmem:[#allocation2 + $0x361] sm:$0xff]
        %v811 = vld [vmem:[#allocation2 + $0x371] sm:$0xff]
        %v812 = vld [vmem:[#allocation2 + $0x381] sm:$0xff]
        %v813 = vld [vmem:[#allocation2 + $0x391] sm:$0xff]
        %v814 = vld [vmem:[#allocation2 + $0x3c1] sm:$0xff]
        %v815 = vld [vmem:[#allocation2 + $0x3d1] sm:$0xff]
        %v816 = vld [vmem:[#allocation2 + $0x3e1] sm:$0xff]
        %v817 = vld [vmem:[#allocation2 + $0x3f1] sm:$0xff]
        %v818 = vld [vmem:[#allocation2 + $0x401] sm:$0xff]
        %v819 = vld [vmem:[#allocation2 + $0x411] sm:$0xff]
        %v820 = vld [vmem:[#allocation2 + $0x421] sm:$0xff]
        %v821 = vld [vmem:[#allocation2 + $0x431] sm:$0xff]
        %v822 = vld [vmem:[#allocation2 + $0x461] sm:$0xff]
        %v823 = vld [vmem:[#allocation2 + $0x471] sm:$0xff]
        %v824 = vld [vmem:[#allocation2 + $0x481] sm:$0xff]
        %v825 = vld [vmem:[#allocation2 + $0x491] sm:$0xff]
        %v826 = vld [vmem:[#allocation2 + $0x4a1] sm:$0xff]
        %v827 = vld [vmem:[#allocation2 + $0x4b1] sm:$0xff]
        %v828 = vld [vmem:[#allocation2 + $0x4c1] sm:$0xff]
        %v829 = vld [vmem:[#allocation2 + $0x4d1] sm:$0xff]
        %v830 = vld [vmem:[#allocation2 + $0x2] sm:$0xff]
        %v831 = vld [vmem:[#allocation2 + $0x12] sm:$0xff]
        %v832 = vld [vmem:[#allocation2 + $0x22] sm:$0xff]
        %v833 = vld [vmem:[#allocation2 + $0x32] sm:$0xff]
        %v834 = vld [vmem:[#allocation2 + $0x42] sm:$0xff]
        %v835 = vld [vmem:[#allocation2 + $0x52] sm:$0xff]
        %v836 = vld [vmem:[#allocation2 + $0x62] sm:$0xff]
        %v837 = vld [vmem:[#allocation2 + $0x72] sm:$0xff]
        %v838 = vld [vmem:[#allocation2 + $0xa2] sm:$0xff]
        %v839 = vld [vmem:[#allocation2 + $0xb2] sm:$0xff]
        %v840 = vld [vmem:[#allocation2 + $0xc2] sm:$0xff]
        %v841 = vld [vmem:[#allocation2 + $0xd2] sm:$0xff]
        %v842 = vld [vmem:[#allocation2 + $0xe2] sm:$0xff]
        %v843 = vld [vmem:[#allocation2 + $0xf2] sm:$0xff]
        %v844 = vld [vmem:[#allocation2 + $0x102] sm:$0xff]
        %v845 = vld [vmem:[#allocation2 + $0x112] sm:$0xff]
        %v846 = vld [vmem:[#allocation2 + $0x142] sm:$0xff]
        %v847 = vld [vmem:[#allocation2 + $0x152] sm:$0xff]
        %v848 = vld [vmem:[#allocation2 + $0x162] sm:$0xff]
        %v849 = vld [vmem:[#allocation2 + $0x172] sm:$0xff]
        %v850 = vld [vmem:[#allocation2 + $0x182] sm:$0xff]
        %v851 = vld [vmem:[#allocation2 + $0x192] sm:$0xff]
        %v852 = vld [vmem:[#allocation2 + $0x1a2] sm:$0xff]
        %v853 = vld [vmem:[#allocation2 + $0x1b2] sm:$0xff]
        %v854 = vld [vmem:[#allocation2 + $0x1e2] sm:$0xff]
        %v855 = vld [vmem:[#allocation2 + $0x1f2] sm:$0xff]
        %v856 = vld [vmem:[#allocation2 + $0x202] sm:$0xff]
        %v857 = vld [vmem:[#allocation2 + $0x212] sm:$0xff]
        %v858 = vld [vmem:[#allocation2 + $0x222] sm:$0xff]
        %v859 = vld [vmem:[#allocation2 + $0x232] sm:$0xff]
        %v860 = vld [vmem:[#allocation2 + $0x242] sm:$0xff]
        %v861 = vld [vmem:[#allocation2 + $0x252] sm:$0xff]
        %v862 = vld [vmem:[#allocation2 + $0x282] sm:$0xff]
        %v863 = vld [vmem:[#allocation2 + $0x292] sm:$0xff]
        %v864 = vld [vmem:[#allocation2 + $0x2a2] sm:$0xff]
        %v865 = vld [vmem:[#allocation2 + $0x2b2] sm:$0xff]
        %v866 = vld [vmem:[#allocation2 + $0x2c2] sm:$0xff]
        %v867 = vld [vmem:[#allocation2 + $0x2d2] sm:$0xff]
        %v868 = vld [vmem:[#allocation2 + $0x2e2] sm:$0xff]
        %v869 = vld [vmem:[#allocation2 + $0x2f2] sm:$0xff]
        %v870 = vld [vmem:[#allocation2 + $0x322] sm:$0xff]
        %v871 = vld [vmem:[#allocation2 + $0x332] sm:$0xff]
        %v872 = vld [vmem:[#allocation2 + $0x342] sm:$0xff]
        %v873 = vld [vmem:[#allocation2 + $0x352] sm:$0xff]
        %v874 = vld [vmem:[#allocation2 + $0x362] sm:$0xff]
        %v875 = vld [vmem:[#allocation2 + $0x372] sm:$0xff]
        %v876 = vld [vmem:[#allocation2 + $0x382] sm:$0xff]
        %v877 = vld [vmem:[#allocation2 + $0x392] sm:$0xff]
        %v878 = vld [vmem:[#allocation2 + $0x3c2] sm:$0xff]
        %v879 = vld [vmem:[#allocation2 + $0x3d2] sm:$0xff]
        %v880 = vld [vmem:[#allocation2 + $0x3e2] sm:$0xff]
        %v881 = vld [vmem:[#allocation2 + $0x3f2] sm:$0xff]
        %v882 = vld [vmem:[#allocation2 + $0x402] sm:$0xff]
        %v883 = vld [vmem:[#allocation2 + $0x412] sm:$0xff]
        %v884 = vld [vmem:[#allocation2 + $0x422] sm:$0xff]
        %v885 = vld [vmem:[#allocation2 + $0x432] sm:$0xff]
        %v886 = vld [vmem:[#allocation2 + $0x462] sm:$0xff]
        %v887 = vld [vmem:[#allocation2 + $0x472] sm:$0xff]
        %v888 = vld [vmem:[#allocation2 + $0x482] sm:$0xff]
        %v889 = vld [vmem:[#allocation2 + $0x492] sm:$0xff]
        %v890 = vld [vmem:[#allocation2 + $0x4a2] sm:$0xff]
        %v891 = vld [vmem:[#allocation2 + $0x4b2] sm:$0xff]
        %v892 = vld [vmem:[#allocation2 + $0x4c2] sm:$0xff]
        %v893 = vld [vmem:[#allocation2 + $0x4d2] sm:$0xff]
        %s894 = scalar_lea.vmem [#allocation2], 16
        %v895 = vld [vmem:[%s894] sm:$0xff]
        %v896 = vld [vmem:[%s894 + $0x10] sm:$0xff]
        %v897 = vld [vmem:[%s894 + $0x20] sm:$0xff]
        %v898 = vld [vmem:[%s894 + $0x30] sm:$0xff]
        %v899 = vld [vmem:[%s894 + $0x40] sm:$0xff]
        %v900 = vld [vmem:[%s894 + $0x50] sm:$0xff]
        %v901 = vld [vmem:[%s894 + $0x60] sm:$0xff]
        %v902 = vld [vmem:[%s894 + $0x70] sm:$0xff]
        %v903 = vld [vmem:[%s894 + $0xa0] sm:$0xff]
        %v904 = vld [vmem:[%s894 + $0xb0] sm:$0xff]
        %v905 = vld [vmem:[%s894 + $0xc0] sm:$0xff]
        %v906 = vld [vmem:[%s894 + $0xd0] sm:$0xff]
        %v907 = vld [vmem:[%s894 + $0xe0] sm:$0xff]
        %v908 = vld [vmem:[%s894 + $0xf0] sm:$0xff]
        %v909 = vld [vmem:[%s894 + $0x100] sm:$0xff]
        %v910 = vld [vmem:[%s894 + $0x110] sm:$0xff]
        %v911 = vld [vmem:[%s894 + $0x140] sm:$0xff]
        %v912 = vld [vmem:[%s894 + $0x150] sm:$0xff]
        %v913 = vld [vmem:[%s894 + $0x160] sm:$0xff]
        %v914 = vld [vmem:[%s894 + $0x170] sm:$0xff]
        %v915 = vld [vmem:[%s894 + $0x180] sm:$0xff]
        %v916 = vld [vmem:[%s894 + $0x190] sm:$0xff]
        %v917 = vld [vmem:[%s894 + $0x1a0] sm:$0xff]
        %v918 = vld [vmem:[%s894 + $0x1b0] sm:$0xff]
        %v919 = vld [vmem:[%s894 + $0x1e0] sm:$0xff]
        %v920 = vld [vmem:[%s894 + $0x1f0] sm:$0xff]
        %v921 = vld [vmem:[%s894 + $0x200] sm:$0xff]
        %v922 = vld [vmem:[%s894 + $0x210] sm:$0xff]
        %v923 = vld [vmem:[%s894 + $0x220] sm:$0xff]
        %v924 = vld [vmem:[%s894 + $0x230] sm:$0xff]
        %v925 = vld [vmem:[%s894 + $0x240] sm:$0xff]
        %v926 = vld [vmem:[%s894 + $0x250] sm:$0xff]
        %v927 = vld [vmem:[%s894 + $0x280] sm:$0xff]
        %v928 = vld [vmem:[%s894 + $0x290] sm:$0xff]
        %v929 = vld [vmem:[%s894 + $0x2a0] sm:$0xff]
        %v930 = vld [vmem:[%s894 + $0x2b0] sm:$0xff]
        %v931 = vld [vmem:[%s894 + $0x2c0] sm:$0xff]
        %v932 = vld [vmem:[%s894 + $0x2d0] sm:$0xff]
        %v933 = vld [vmem:[%s894 + $0x2e0] sm:$0xff]
        %v934 = vld [vmem:[%s894 + $0x2f0] sm:$0xff]
        %v935 = vld [vmem:[%s894 + $0x320] sm:$0xff]
        %v936 = vld [vmem:[%s894 + $0x330] sm:$0xff]
        %v937 = vld [vmem:[%s894 + $0x340] sm:$0xff]
        %v938 = vld [vmem:[%s894 + $0x350] sm:$0xff]
        %v939 = vld [vmem:[%s894 + $0x360] sm:$0xff]
        %v940 = vld [vmem:[%s894 + $0x370] sm:$0xff]
        %v941 = vld [vmem:[%s894 + $0x380] sm:$0xff]
        %v942 = vld [vmem:[%s894 + $0x390] sm:$0xff]
        %v943 = vld [vmem:[%s894 + $0x3c0] sm:$0xff]
        %v944 = vld [vmem:[%s894 + $0x3d0] sm:$0xff]
        %v945 = vld [vmem:[%s894 + $0x3e0] sm:$0xff]
        %v946 = vld [vmem:[%s894 + $0x3f0] sm:$0xff]
        %v947 = vld [vmem:[%s894 + $0x400] sm:$0xff]
        %v948 = vld [vmem:[%s894 + $0x410] sm:$0xff]
        %v949 = vld [vmem:[%s894 + $0x420] sm:$0xff]
        %v950 = vld [vmem:[%s894 + $0x430] sm:$0xff]
        %v951 = vld [vmem:[%s894 + $0x460] sm:$0xff]
        %v952 = vld [vmem:[%s894 + $0x470] sm:$0xff]
        %v953 = vld [vmem:[%s894 + $0x480] sm:$0xff]
        %v954 = vld [vmem:[%s894 + $0x490] sm:$0xff]
        %v955 = vld [vmem:[%s894 + $0x4a0] sm:$0xff]
        %v956 = vld [vmem:[%s894 + $0x4b0] sm:$0xff]
        %v957 = vld [vmem:[%s894 + $0x4c0] sm:$0xff]
        %v958 = vld [vmem:[%s894 + $0x4d0] sm:$0xff]
        %v959 = vld [vmem:[%s894 + $0x1] sm:$0xff]
        %v960 = vld [vmem:[%s894 + $0x11] sm:$0xff]
        %v961 = vld [vmem:[%s894 + $0x21] sm:$0xff]
        %v962 = vld [vmem:[%s894 + $0x31] sm:$0xff]
        %v963 = vld [vmem:[%s894 + $0x41] sm:$0xff]
        %v964 = vld [vmem:[%s894 + $0x51] sm:$0xff]
        %v965 = vld [vmem:[%s894 + $0x61] sm:$0xff]
        %v966 = vld [vmem:[%s894 + $0x71] sm:$0xff]
        %v967 = vld [vmem:[%s894 + $0xa1] sm:$0xff]
        %v968 = vld [vmem:[%s894 + $0xb1] sm:$0xff]
        %v969 = vld [vmem:[%s894 + $0xc1] sm:$0xff]
        %v970 = vld [vmem:[%s894 + $0xd1] sm:$0xff]
        %v971 = vld [vmem:[%s894 + $0xe1] sm:$0xff]
        %v972 = vld [vmem:[%s894 + $0xf1] sm:$0xff]
        %v973 = vld [vmem:[%s894 + $0x101] sm:$0xff]
        %v974 = vld [vmem:[%s894 + $0x111] sm:$0xff]
        %v975 = vld [vmem:[%s894 + $0x141] sm:$0xff]
        %v976 = vld [vmem:[%s894 + $0x151] sm:$0xff]
        %v977 = vld [vmem:[%s894 + $0x161] sm:$0xff]
        %v978 = vld [vmem:[%s894 + $0x171] sm:$0xff]
        %v979 = vld [vmem:[%s894 + $0x181] sm:$0xff]
        %v980 = vld [vmem:[%s894 + $0x191] sm:$0xff]
        %v981 = vld [vmem:[%s894 + $0x1a1] sm:$0xff]
        %v982 = vld [vmem:[%s894 + $0x1b1] sm:$0xff]
        %v983 = vld [vmem:[%s894 + $0x1e1] sm:$0xff]
        %v984 = vld [vmem:[%s894 + $0x1f1] sm:$0xff]
        %v985 = vld [vmem:[%s894 + $0x201] sm:$0xff]
        %v986 = vld [vmem:[%s894 + $0x211] sm:$0xff]
        %v987 = vld [vmem:[%s894 + $0x221] sm:$0xff]
        %v988 = vld [vmem:[%s894 + $0x231] sm:$0xff]
        %v989 = vld [vmem:[%s894 + $0x241] sm:$0xff]
        %v990 = vld [vmem:[%s894 + $0x251] sm:$0xff]
        %v991 = vld [vmem:[%s894 + $0x281] sm:$0xff]
        %v992 = vld [vmem:[%s894 + $0x291] sm:$0xff]
        %v993 = vld [vmem:[%s894 + $0x2a1] sm:$0xff]
        %v994 = vld [vmem:[%s894 + $0x2b1] sm:$0xff]
        %v995 = vld [vmem:[%s894 + $0x2c1] sm:$0xff]
        %v996 = vld [vmem:[%s894 + $0x2d1] sm:$0xff]
        %v997 = vld [vmem:[%s894 + $0x2e1] sm:$0xff]
        %v998 = vld [vmem:[%s894 + $0x2f1] sm:$0xff]
        %v999 = vld [vmem:[%s894 + $0x321] sm:$0xff]
        %v1000 = vld [vmem:[%s894 + $0x331] sm:$0xff]
        %v1001 = vld [vmem:[%s894 + $0x341] sm:$0xff]
        %v1002 = vld [vmem:[%s894 + $0x351] sm:$0xff]
        %v1003 = vld [vmem:[%s894 + $0x361] sm:$0xff]
        %v1004 = vld [vmem:[%s894 + $0x371] sm:$0xff]
        %v1005 = vld [vmem:[%s894 + $0x381] sm:$0xff]
        %v1006 = vld [vmem:[%s894 + $0x391] sm:$0xff]
        %v1007 = vld [vmem:[%s894 + $0x3c1] sm:$0xff]
        %v1008 = vld [vmem:[%s894 + $0x3d1] sm:$0xff]
        %v1009 = vld [vmem:[%s894 + $0x3e1] sm:$0xff]
        %v1010 = vld [vmem:[%s894 + $0x3f1] sm:$0xff]
        %v1011 = vld [vmem:[%s894 + $0x401] sm:$0xff]
        %v1012 = vld [vmem:[%s894 + $0x411] sm:$0xff]
        %v1013 = vld [vmem:[%s894 + $0x421] sm:$0xff]
        %v1014 = vld [vmem:[%s894 + $0x431] sm:$0xff]
        %v1015 = vld [vmem:[%s894 + $0x461] sm:$0xff]
        %v1016 = vld [vmem:[%s894 + $0x471] sm:$0xff]
        %v1017 = vld [vmem:[%s894 + $0x481] sm:$0xff]
        %v1018 = vld [vmem:[%s894 + $0x491] sm:$0xff]
        %v1019 = vld [vmem:[%s894 + $0x4a1] sm:$0xff]
        %v1020 = vld [vmem:[%s894 + $0x4b1] sm:$0xff]
        %v1021 = vld [vmem:[%s894 + $0x4c1] sm:$0xff]
        %v1022 = vld [vmem:[%s894 + $0x4d1] sm:$0xff]
        %v1023 = vld [vmem:[%s894 + $0x2] sm:$0xff]
        %v1024 = vld [vmem:[%s894 + $0x12] sm:$0xff]
        %v1025 = vld [vmem:[%s894 + $0x22] sm:$0xff]
        %v1026 = vld [vmem:[%s894 + $0x32] sm:$0xff]
        %v1027 = vld [vmem:[%s894 + $0x42] sm:$0xff]
        %v1028 = vld [vmem:[%s894 + $0x52] sm:$0xff]
        %v1029 = vld [vmem:[%s894 + $0x62] sm:$0xff]
        %v1030 = vld [vmem:[%s894 + $0x72] sm:$0xff]
        %v1031 = vld [vmem:[%s894 + $0xa2] sm:$0xff]
        %v1032 = vld [vmem:[%s894 + $0xb2] sm:$0xff]
        %v1033 = vld [vmem:[%s894 + $0xc2] sm:$0xff]
        %v1034 = vld [vmem:[%s894 + $0xd2] sm:$0xff]
        %v1035 = vld [vmem:[%s894 + $0xe2] sm:$0xff]
        %v1036 = vld [vmem:[%s894 + $0xf2] sm:$0xff]
        %v1037 = vld [vmem:[%s894 + $0x102] sm:$0xff]
        %v1038 = vld [vmem:[%s894 + $0x112] sm:$0xff]
        %v1039 = vld [vmem:[%s894 + $0x142] sm:$0xff]
        %v1040 = vld [vmem:[%s894 + $0x152] sm:$0xff]
        %v1041 = vld [vmem:[%s894 + $0x162] sm:$0xff]
        %v1042 = vld [vmem:[%s894 + $0x172] sm:$0xff]
        %v1043 = vld [vmem:[%s894 + $0x182] sm:$0xff]
        %v1044 = vld [vmem:[%s894 + $0x192] sm:$0xff]
        %v1045 = vld [vmem:[%s894 + $0x1a2] sm:$0xff]
        %v1046 = vld [vmem:[%s894 + $0x1b2] sm:$0xff]
        %v1047 = vld [vmem:[%s894 + $0x1e2] sm:$0xff]
        %v1048 = vld [vmem:[%s894 + $0x1f2] sm:$0xff]
        %v1049 = vld [vmem:[%s894 + $0x202] sm:$0xff]
        %v1050 = vld [vmem:[%s894 + $0x212] sm:$0xff]
        %v1051 = vld [vmem:[%s894 + $0x222] sm:$0xff]
        %v1052 = vld [vmem:[%s894 + $0x232] sm:$0xff]
        %v1053 = vld [vmem:[%s894 + $0x242] sm:$0xff]
        %v1054 = vld [vmem:[%s894 + $0x252] sm:$0xff]
        %v1055 = vld [vmem:[%s894 + $0x282] sm:$0xff]
        %v1056 = vld [vmem:[%s894 + $0x292] sm:$0xff]
        %v1057 = vld [vmem:[%s894 + $0x2a2] sm:$0xff]
        %v1058 = vld [vmem:[%s894 + $0x2b2] sm:$0xff]
        %v1059 = vld [vmem:[%s894 + $0x2c2] sm:$0xff]
        %v1060 = vld [vmem:[%s894 + $0x2d2] sm:$0xff]
        %v1061 = vld [vmem:[%s894 + $0x2e2] sm:$0xff]
        %v1062 = vld [vmem:[%s894 + $0x2f2] sm:$0xff]
        %v1063 = vld [vmem:[%s894 + $0x322] sm:$0xff]
        %v1064 = vld [vmem:[%s894 + $0x332] sm:$0xff]
        %v1065 = vld [vmem:[%s894 + $0x342] sm:$0xff]
        %v1066 = vld [vmem:[%s894 + $0x352] sm:$0xff]
        %v1067 = vld [vmem:[%s894 + $0x362] sm:$0xff]
        %v1068 = vld [vmem:[%s894 + $0x372] sm:$0xff]
        %v1069 = vld [vmem:[%s894 + $0x382] sm:$0xff]
        %v1070 = vld [vmem:[%s894 + $0x392] sm:$0xff]
        %v1071 = vld [vmem:[%s894 + $0x3c2] sm:$0xff]
        %v1072 = vld [vmem:[%s894 + $0x3d2] sm:$0xff]
        %v1073 = vld [vmem:[%s894 + $0x3e2] sm:$0xff]
        %v1074 = vld [vmem:[%s894 + $0x3f2] sm:$0xff]
        %v1075 = vld [vmem:[%s894 + $0x402] sm:$0xff]
        %v1076 = vld [vmem:[%s894 + $0x412] sm:$0xff]
        %v1077 = vld [vmem:[%s894 + $0x422] sm:$0xff]
        %v1078 = vld [vmem:[%s894 + $0x432] sm:$0xff]
        %v1079 = vld [vmem:[%s894 + $0x462] sm:$0xff]
        %v1080 = vld [vmem:[%s894 + $0x472] sm:$0xff]
        %v1081 = vld [vmem:[%s894 + $0x482] sm:$0xff]
        %v1082 = vld [vmem:[%s894 + $0x492] sm:$0xff]
        %v1083 = vld [vmem:[%s894 + $0x4a2] sm:$0xff]
        %v1084 = vld [vmem:[%s894 + $0x4b2] sm:$0xff]
        %v1085 = vld [vmem:[%s894 + $0x4c2] sm:$0xff]
        %v1086 = vld [vmem:[%s894 + $0x4d2] sm:$0xff]
        %s1087 = scalar_lea.vmem [#allocation2], 32
        %v1088 = vld [vmem:[%s1087] sm:$0xff]
        %v1089 = vld [vmem:[%s1087 + $0x10] sm:$0xff]
        %v1090 = vld [vmem:[%s1087 + $0x20] sm:$0xff]
        %v1091 = vld [vmem:[%s1087 + $0x30] sm:$0xff]
        %v1092 = vld [vmem:[%s1087 + $0x40] sm:$0xff]
        %v1093 = vld [vmem:[%s1087 + $0x50] sm:$0xff]
        %v1094 = vld [vmem:[%s1087 + $0x60] sm:$0xff]
        %v1095 = vld [vmem:[%s1087 + $0x70] sm:$0xff]
        %v1096 = vld [vmem:[%s1087 + $0xa0] sm:$0xff]
        %v1097 = vld [vmem:[%s1087 + $0xb0] sm:$0xff]
        %v1098 = vld [vmem:[%s1087 + $0xc0] sm:$0xff]
        %v1099 = vld [vmem:[%s1087 + $0xd0] sm:$0xff]
        %v1100 = vld [vmem:[%s1087 + $0xe0] sm:$0xff]
        %v1101 = vld [vmem:[%s1087 + $0xf0] sm:$0xff]
        %v1102 = vld [vmem:[%s1087 + $0x100] sm:$0xff]
        %v1103 = vld [vmem:[%s1087 + $0x110] sm:$0xff]
        %v1104 = vld [vmem:[%s1087 + $0x140] sm:$0xff]
        %v1105 = vld [vmem:[%s1087 + $0x150] sm:$0xff]
        %v1106 = vld [vmem:[%s1087 + $0x160] sm:$0xff]
        %v1107 = vld [vmem:[%s1087 + $0x170] sm:$0xff]
        %v1108 = vld [vmem:[%s1087 + $0x180] sm:$0xff]
        %v1109 = vld [vmem:[%s1087 + $0x190] sm:$0xff]
        %v1110 = vld [vmem:[%s1087 + $0x1a0] sm:$0xff]
        %v1111 = vld [vmem:[%s1087 + $0x1b0] sm:$0xff]
        %v1112 = vld [vmem:[%s1087 + $0x1e0] sm:$0xff]
        %v1113 = vld [vmem:[%s1087 + $0x1f0] sm:$0xff]
        %v1114 = vld [vmem:[%s1087 + $0x200] sm:$0xff]
        %v1115 = vld [vmem:[%s1087 + $0x210] sm:$0xff]
        %v1116 = vld [vmem:[%s1087 + $0x220] sm:$0xff]
        %v1117 = vld [vmem:[%s1087 + $0x230] sm:$0xff]
        %v1118 = vld [vmem:[%s1087 + $0x240] sm:$0xff]
        %v1119 = vld [vmem:[%s1087 + $0x250] sm:$0xff]
        %v1120 = vld [vmem:[%s1087 + $0x280] sm:$0xff]
        %v1121 = vld [vmem:[%s1087 + $0x290] sm:$0xff]
        %v1122 = vld [vmem:[%s1087 + $0x2a0] sm:$0xff]
        %v1123 = vld [vmem:[%s1087 + $0x2b0] sm:$0xff]
        %v1124 = vld [vmem:[%s1087 + $0x2c0] sm:$0xff]
        %v1125 = vld [vmem:[%s1087 + $0x2d0] sm:$0xff]
        %v1126 = vld [vmem:[%s1087 + $0x2e0] sm:$0xff]
        %v1127 = vld [vmem:[%s1087 + $0x2f0] sm:$0xff]
        %v1128 = vld [vmem:[%s1087 + $0x320] sm:$0xff]
        %v1129 = vld [vmem:[%s1087 + $0x330] sm:$0xff]
        %v1130 = vld [vmem:[%s1087 + $0x340] sm:$0xff]
        %v1131 = vld [vmem:[%s1087 + $0x350] sm:$0xff]
        %v1132 = vld [vmem:[%s1087 + $0x360] sm:$0xff]
        %v1133 = vld [vmem:[%s1087 + $0x370] sm:$0xff]
        %v1134 = vld [vmem:[%s1087 + $0x380] sm:$0xff]
        %v1135 = vld [vmem:[%s1087 + $0x390] sm:$0xff]
        %v1136 = vld [vmem:[%s1087 + $0x3c0] sm:$0xff]
        %v1137 = vld [vmem:[%s1087 + $0x3d0] sm:$0xff]
        %v1138 = vld [vmem:[%s1087 + $0x3e0] sm:$0xff]
        %v1139 = vld [vmem:[%s1087 + $0x3f0] sm:$0xff]
        %v1140 = vld [vmem:[%s1087 + $0x400] sm:$0xff]
        %v1141 = vld [vmem:[%s1087 + $0x410] sm:$0xff]
        %v1142 = vld [vmem:[%s1087 + $0x420] sm:$0xff]
        %v1143 = vld [vmem:[%s1087 + $0x430] sm:$0xff]
        %v1144 = vld [vmem:[%s1087 + $0x460] sm:$0xff]
        %v1145 = vld [vmem:[%s1087 + $0x470] sm:$0xff]
        %v1146 = vld [vmem:[%s1087 + $0x480] sm:$0xff]
        %v1147 = vld [vmem:[%s1087 + $0x490] sm:$0xff]
        %v1148 = vld [vmem:[%s1087 + $0x4a0] sm:$0xff]
        %v1149 = vld [vmem:[%s1087 + $0x4b0] sm:$0xff]
        %v1150 = vld [vmem:[%s1087 + $0x4c0] sm:$0xff]
        %v1151 = vld [vmem:[%s1087 + $0x4d0] sm:$0xff]
        %v1152 = vld [vmem:[%s1087 + $0x1] sm:$0xff]
        %v1153 = vld [vmem:[%s1087 + $0x11] sm:$0xff]
        %v1154 = vld [vmem:[%s1087 + $0x21] sm:$0xff]
        %v1155 = vld [vmem:[%s1087 + $0x31] sm:$0xff]
        %v1156 = vld [vmem:[%s1087 + $0x41] sm:$0xff]
        %v1157 = vld [vmem:[%s1087 + $0x51] sm:$0xff]
        %v1158 = vld [vmem:[%s1087 + $0x61] sm:$0xff]
        %v1159 = vld [vmem:[%s1087 + $0x71] sm:$0xff]
        %v1160 = vld [vmem:[%s1087 + $0xa1] sm:$0xff]
        %v1161 = vld [vmem:[%s1087 + $0xb1] sm:$0xff]
        %v1162 = vld [vmem:[%s1087 + $0xc1] sm:$0xff]
        %v1163 = vld [vmem:[%s1087 + $0xd1] sm:$0xff]
        %v1164 = vld [vmem:[%s1087 + $0xe1] sm:$0xff]
        %v1165 = vld [vmem:[%s1087 + $0xf1] sm:$0xff]
        %v1166 = vld [vmem:[%s1087 + $0x101] sm:$0xff]
        %v1167 = vld [vmem:[%s1087 + $0x111] sm:$0xff]
        %v1168 = vld [vmem:[%s1087 + $0x141] sm:$0xff]
        %v1169 = vld [vmem:[%s1087 + $0x151] sm:$0xff]
        %v1170 = vld [vmem:[%s1087 + $0x161] sm:$0xff]
        %v1171 = vld [vmem:[%s1087 + $0x171] sm:$0xff]
        %v1172 = vld [vmem:[%s1087 + $0x181] sm:$0xff]
        %v1173 = vld [vmem:[%s1087 + $0x191] sm:$0xff]
        %v1174 = vld [vmem:[%s1087 + $0x1a1] sm:$0xff]
        %v1175 = vld [vmem:[%s1087 + $0x1b1] sm:$0xff]
        %v1176 = vld [vmem:[%s1087 + $0x1e1] sm:$0xff]
        %v1177 = vld [vmem:[%s1087 + $0x1f1] sm:$0xff]
        %v1178 = vld [vmem:[%s1087 + $0x201] sm:$0xff]
        %v1179 = vld [vmem:[%s1087 + $0x211] sm:$0xff]
        %v1180 = vld [vmem:[%s1087 + $0x221] sm:$0xff]
        %v1181 = vld [vmem:[%s1087 + $0x231] sm:$0xff]
        %v1182 = vld [vmem:[%s1087 + $0x241] sm:$0xff]
        %v1183 = vld [vmem:[%s1087 + $0x251] sm:$0xff]
        %v1184 = vld [vmem:[%s1087 + $0x281] sm:$0xff]
        %v1185 = vld [vmem:[%s1087 + $0x291] sm:$0xff]
        %v1186 = vld [vmem:[%s1087 + $0x2a1] sm:$0xff]
        %v1187 = vld [vmem:[%s1087 + $0x2b1] sm:$0xff]
        %v1188 = vld [vmem:[%s1087 + $0x2c1] sm:$0xff]
        %v1189 = vld [vmem:[%s1087 + $0x2d1] sm:$0xff]
        %v1190 = vld [vmem:[%s1087 + $0x2e1] sm:$0xff]
        %v1191 = vld [vmem:[%s1087 + $0x2f1] sm:$0xff]
        %v1192 = vld [vmem:[%s1087 + $0x321] sm:$0xff]
        %v1193 = vld [vmem:[%s1087 + $0x331] sm:$0xff]
        %v1194 = vld [vmem:[%s1087 + $0x341] sm:$0xff]
        %v1195 = vld [vmem:[%s1087 + $0x351] sm:$0xff]
        %v1196 = vld [vmem:[%s1087 + $0x361] sm:$0xff]
        %v1197 = vld [vmem:[%s1087 + $0x371] sm:$0xff]
        %v1198 = vld [vmem:[%s1087 + $0x381] sm:$0xff]
        %v1199 = vld [vmem:[%s1087 + $0x391] sm:$0xff]
        %v1200 = vld [vmem:[%s1087 + $0x3c1] sm:$0xff]
        %v1201 = vld [vmem:[%s1087 + $0x3d1] sm:$0xff]
        %v1202 = vld [vmem:[%s1087 + $0x3e1] sm:$0xff]
        %v1203 = vld [vmem:[%s1087 + $0x3f1] sm:$0xff]
        %v1204 = vld [vmem:[%s1087 + $0x401] sm:$0xff]
        %v1205 = vld [vmem:[%s1087 + $0x411] sm:$0xff]
        %v1206 = vld [vmem:[%s1087 + $0x421] sm:$0xff]
        %v1207 = vld [vmem:[%s1087 + $0x431] sm:$0xff]
        %v1208 = vld [vmem:[%s1087 + $0x461] sm:$0xff]
        %v1209 = vld [vmem:[%s1087 + $0x471] sm:$0xff]
        %v1210 = vld [vmem:[%s1087 + $0x481] sm:$0xff]
        %v1211 = vld [vmem:[%s1087 + $0x491] sm:$0xff]
        %v1212 = vld [vmem:[%s1087 + $0x4a1] sm:$0xff]
        %v1213 = vld [vmem:[%s1087 + $0x4b1] sm:$0xff]
        %v1214 = vld [vmem:[%s1087 + $0x4c1] sm:$0xff]
        %v1215 = vld [vmem:[%s1087 + $0x4d1] sm:$0xff]
        %v1216 = vld [vmem:[%s1087 + $0x2] sm:$0xff]
        %v1217 = vld [vmem:[%s1087 + $0x12] sm:$0xff]
        %v1218 = vld [vmem:[%s1087 + $0x22] sm:$0xff]
        %v1219 = vld [vmem:[%s1087 + $0x32] sm:$0xff]
        %v1220 = vld [vmem:[%s1087 + $0x42] sm:$0xff]
        %v1221 = vld [vmem:[%s1087 + $0x52] sm:$0xff]
        %v1222 = vld [vmem:[%s1087 + $0x62] sm:$0xff]
        %v1223 = vld [vmem:[%s1087 + $0x72] sm:$0xff]
        %v1224 = vld [vmem:[%s1087 + $0xa2] sm:$0xff]
        %v1225 = vld [vmem:[%s1087 + $0xb2] sm:$0xff]
        %v1226 = vld [vmem:[%s1087 + $0xc2] sm:$0xff]
        %v1227 = vld [vmem:[%s1087 + $0xd2] sm:$0xff]
        %v1228 = vld [vmem:[%s1087 + $0xe2] sm:$0xff]
        %v1229 = vld [vmem:[%s1087 + $0xf2] sm:$0xff]
        %v1230 = vld [vmem:[%s1087 + $0x102] sm:$0xff]
        %v1231 = vld [vmem:[%s1087 + $0x112] sm:$0xff]
        %v1232 = vld [vmem:[%s1087 + $0x142] sm:$0xff]
        %v1233 = vld [vmem:[%s1087 + $0x152] sm:$0xff]
        %v1234 = vld [vmem:[%s1087 + $0x162] sm:$0xff]
        %v1235 = vld [vmem:[%s1087 + $0x172] sm:$0xff]
        %v1236 = vld [vmem:[%s1087 + $0x182] sm:$0xff]
        %v1237 = vld [vmem:[%s1087 + $0x192] sm:$0xff]
        %v1238 = vld [vmem:[%s1087 + $0x1a2] sm:$0xff]
        %v1239 = vld [vmem:[%s1087 + $0x1b2] sm:$0xff]
        %v1240 = vld [vmem:[%s1087 + $0x1e2] sm:$0xff]
        %v1241 = vld [vmem:[%s1087 + $0x1f2] sm:$0xff]
        %v1242 = vld [vmem:[%s1087 + $0x202] sm:$0xff]
        %v1243 = vld [vmem:[%s1087 + $0x212] sm:$0xff]
        %v1244 = vld [vmem:[%s1087 + $0x222] sm:$0xff]
        %v1245 = vld [vmem:[%s1087 + $0x232] sm:$0xff]
        %v1246 = vld [vmem:[%s1087 + $0x242] sm:$0xff]
        %v1247 = vld [vmem:[%s1087 + $0x252] sm:$0xff]
        %v1248 = vld [vmem:[%s1087 + $0x282] sm:$0xff]
        %v1249 = vld [vmem:[%s1087 + $0x292] sm:$0xff]
        %v1250 = vld [vmem:[%s1087 + $0x2a2] sm:$0xff]
        %v1251 = vld [vmem:[%s1087 + $0x2b2] sm:$0xff]
        %v1252 = vld [vmem:[%s1087 + $0x2c2] sm:$0xff]
        %v1253 = vld [vmem:[%s1087 + $0x2d2] sm:$0xff]
        %v1254 = vld [vmem:[%s1087 + $0x2e2] sm:$0xff]
        %v1255 = vld [vmem:[%s1087 + $0x2f2] sm:$0xff]
        %v1256 = vld [vmem:[%s1087 + $0x322] sm:$0xff]
        %v1257 = vld [vmem:[%s1087 + $0x332] sm:$0xff]
        %v1258 = vld [vmem:[%s1087 + $0x342] sm:$0xff]
        %v1259 = vld [vmem:[%s1087 + $0x352] sm:$0xff]
        %v1260 = vld [vmem:[%s1087 + $0x362] sm:$0xff]
        %v1261 = vld [vmem:[%s1087 + $0x372] sm:$0xff]
        %v1262 = vld [vmem:[%s1087 + $0x382] sm:$0xff]
        %v1263 = vld [vmem:[%s1087 + $0x392] sm:$0xff]
        %v1264 = vld [vmem:[%s1087 + $0x3c2] sm:$0xff]
        %v1265 = vld [vmem:[%s1087 + $0x3d2] sm:$0xff]
        %v1266 = vld [vmem:[%s1087 + $0x3e2] sm:$0xff]
        %v1267 = vld [vmem:[%s1087 + $0x3f2] sm:$0xff]
        %v1268 = vld [vmem:[%s1087 + $0x402] sm:$0xff]
        %v1269 = vld [vmem:[%s1087 + $0x412] sm:$0xff]
        %v1270 = vld [vmem:[%s1087 + $0x422] sm:$0xff]
        %v1271 = vld [vmem:[%s1087 + $0x432] sm:$0xff]
        %v1272 = vld [vmem:[%s1087 + $0x462] sm:$0xff]
        %v1273 = vld [vmem:[%s1087 + $0x472] sm:$0xff]
        %v1274 = vld [vmem:[%s1087 + $0x482] sm:$0xff]
        %v1275 = vld [vmem:[%s1087 + $0x492] sm:$0xff]
        %v1276 = vld [vmem:[%s1087 + $0x4a2] sm:$0xff]
        %v1277 = vld [vmem:[%s1087 + $0x4b2] sm:$0xff]
        %v1278 = vld [vmem:[%s1087 + $0x4c2] sm:$0xff]
        %v1279 = vld [vmem:[%s1087 + $0x4d2] sm:$0xff]
        %s1280 = scalar_lea.vmem [#allocation2], 160
        %v1281 = vld [vmem:[%s1280] sm:$0xff]
        %v1282 = vld [vmem:[%s1280 + $0x10] sm:$0xff]
        %v1283 = vld [vmem:[%s1280 + $0x20] sm:$0xff]
        %v1284 = vld [vmem:[%s1280 + $0x30] sm:$0xff]
        %v1285 = vld [vmem:[%s1280 + $0x40] sm:$0xff]
        %v1286 = vld [vmem:[%s1280 + $0x50] sm:$0xff]
        %v1287 = vld [vmem:[%s1280 + $0x60] sm:$0xff]
        %v1288 = vld [vmem:[%s1280 + $0x70] sm:$0xff]
        %v1289 = vld [vmem:[%s1280 + $0xa0] sm:$0xff]
        %v1290 = vld [vmem:[%s1280 + $0xb0] sm:$0xff]
        %v1291 = vld [vmem:[%s1280 + $0xc0] sm:$0xff]
        %v1292 = vld [vmem:[%s1280 + $0xd0] sm:$0xff]
        %v1293 = vld [vmem:[%s1280 + $0xe0] sm:$0xff]
        %v1294 = vld [vmem:[%s1280 + $0xf0] sm:$0xff]
        %v1295 = vld [vmem:[%s1280 + $0x100] sm:$0xff]
        %v1296 = vld [vmem:[%s1280 + $0x110] sm:$0xff]
        %v1297 = vld [vmem:[%s1280 + $0x140] sm:$0xff]
        %v1298 = vld [vmem:[%s1280 + $0x150] sm:$0xff]
        %v1299 = vld [vmem:[%s1280 + $0x160] sm:$0xff]
        %v1300 = vld [vmem:[%s1280 + $0x170] sm:$0xff]
        %v1301 = vld [vmem:[%s1280 + $0x180] sm:$0xff]
        %v1302 = vld [vmem:[%s1280 + $0x190] sm:$0xff]
        %v1303 = vld [vmem:[%s1280 + $0x1a0] sm:$0xff]
        %v1304 = vld [vmem:[%s1280 + $0x1b0] sm:$0xff]
        %v1305 = vld [vmem:[%s1280 + $0x1e0] sm:$0xff]
        %v1306 = vld [vmem:[%s1280 + $0x1f0] sm:$0xff]
        %v1307 = vld [vmem:[%s1280 + $0x200] sm:$0xff]
        %v1308 = vld [vmem:[%s1280 + $0x210] sm:$0xff]
        %v1309 = vld [vmem:[%s1280 + $0x220] sm:$0xff]
        %v1310 = vld [vmem:[%s1280 + $0x230] sm:$0xff]
        %v1311 = vld [vmem:[%s1280 + $0x240] sm:$0xff]
        %v1312 = vld [vmem:[%s1280 + $0x250] sm:$0xff]
        %v1313 = vld [vmem:[%s1280 + $0x280] sm:$0xff]
        %v1314 = vld [vmem:[%s1280 + $0x290] sm:$0xff]
        %v1315 = vld [vmem:[%s1280 + $0x2a0] sm:$0xff]
        %v1316 = vld [vmem:[%s1280 + $0x2b0] sm:$0xff]
        %v1317 = vld [vmem:[%s1280 + $0x2c0] sm:$0xff]
        %v1318 = vld [vmem:[%s1280 + $0x2d0] sm:$0xff]
        %v1319 = vld [vmem:[%s1280 + $0x2e0] sm:$0xff]
        %v1320 = vld [vmem:[%s1280 + $0x2f0] sm:$0xff]
        %v1321 = vld [vmem:[%s1280 + $0x320] sm:$0xff]
        %v1322 = vld [vmem:[%s1280 + $0x330] sm:$0xff]
        %v1323 = vld [vmem:[%s1280 + $0x340] sm:$0xff]
        %v1324 = vld [vmem:[%s1280 + $0x350] sm:$0xff]
        %v1325 = vld [vmem:[%s1280 + $0x360] sm:$0xff]
        %v1326 = vld [vmem:[%s1280 + $0x370] sm:$0xff]
        %v1327 = vld [vmem:[%s1280 + $0x380] sm:$0xff]
        %v1328 = vld [vmem:[%s1280 + $0x390] sm:$0xff]
        %v1329 = vld [vmem:[%s1280 + $0x3c0] sm:$0xff]
        %v1330 = vld [vmem:[%s1280 + $0x3d0] sm:$0xff]
        %v1331 = vld [vmem:[%s1280 + $0x3e0] sm:$0xff]
        %v1332 = vld [vmem:[%s1280 + $0x3f0] sm:$0xff]
        %v1333 = vld [vmem:[%s1280 + $0x400] sm:$0xff]
        %v1334 = vld [vmem:[%s1280 + $0x410] sm:$0xff]
        %v1335 = vld [vmem:[%s1280 + $0x420] sm:$0xff]
        %v1336 = vld [vmem:[%s1280 + $0x430] sm:$0xff]
        %v1337 = vld [vmem:[%s1280 + $0x460] sm:$0xff]
        %v1338 = vld [vmem:[%s1280 + $0x470] sm:$0xff]
        %v1339 = vld [vmem:[%s1280 + $0x480] sm:$0xff]
        %v1340 = vld [vmem:[%s1280 + $0x490] sm:$0xff]
        %v1341 = vld [vmem:[%s1280 + $0x4a0] sm:$0xff]
        %v1342 = vld [vmem:[%s1280 + $0x4b0] sm:$0xff]
        %v1343 = vld [vmem:[%s1280 + $0x4c0] sm:$0xff]
        %v1344 = vld [vmem:[%s1280 + $0x4d0] sm:$0xff]
        %v1345 = vld [vmem:[%s1280 + $0x1] sm:$0xff]
        %v1346 = vld [vmem:[%s1280 + $0x11] sm:$0xff]
        %v1347 = vld [vmem:[%s1280 + $0x21] sm:$0xff]
        %v1348 = vld [vmem:[%s1280 + $0x31] sm:$0xff]
        %v1349 = vld [vmem:[%s1280 + $0x41] sm:$0xff]
        %v1350 = vld [vmem:[%s1280 + $0x51] sm:$0xff]
        %v1351 = vld [vmem:[%s1280 + $0x61] sm:$0xff]
        %v1352 = vld [vmem:[%s1280 + $0x71] sm:$0xff]
        %v1353 = vld [vmem:[%s1280 + $0xa1] sm:$0xff]
        %v1354 = vld [vmem:[%s1280 + $0xb1] sm:$0xff]
        %v1355 = vld [vmem:[%s1280 + $0xc1] sm:$0xff]
        %v1356 = vld [vmem:[%s1280 + $0xd1] sm:$0xff]
        %v1357 = vld [vmem:[%s1280 + $0xe1] sm:$0xff]
        %v1358 = vld [vmem:[%s1280 + $0xf1] sm:$0xff]
        %v1359 = vld [vmem:[%s1280 + $0x101] sm:$0xff]
        %v1360 = vld [vmem:[%s1280 + $0x111] sm:$0xff]
        %v1361 = vld [vmem:[%s1280 + $0x141] sm:$0xff]
        %v1362 = vld [vmem:[%s1280 + $0x151] sm:$0xff]
        %v1363 = vld [vmem:[%s1280 + $0x161] sm:$0xff]
        %v1364 = vld [vmem:[%s1280 + $0x171] sm:$0xff]
        %v1365 = vld [vmem:[%s1280 + $0x181] sm:$0xff]
        %v1366 = vld [vmem:[%s1280 + $0x191] sm:$0xff]
        %v1367 = vld [vmem:[%s1280 + $0x1a1] sm:$0xff]
        %v1368 = vld [vmem:[%s1280 + $0x1b1] sm:$0xff]
        %v1369 = vld [vmem:[%s1280 + $0x1e1] sm:$0xff]
        %v1370 = vld [vmem:[%s1280 + $0x1f1] sm:$0xff]
        %v1371 = vld [vmem:[%s1280 + $0x201] sm:$0xff]
        %v1372 = vld [vmem:[%s1280 + $0x211] sm:$0xff]
        %v1373 = vld [vmem:[%s1280 + $0x221] sm:$0xff]
        %v1374 = vld [vmem:[%s1280 + $0x231] sm:$0xff]
        %v1375 = vld [vmem:[%s1280 + $0x241] sm:$0xff]
        %v1376 = vld [vmem:[%s1280 + $0x251] sm:$0xff]
        %v1377 = vld [vmem:[%s1280 + $0x281] sm:$0xff]
        %v1378 = vld [vmem:[%s1280 + $0x291] sm:$0xff]
        %v1379 = vld [vmem:[%s1280 + $0x2a1] sm:$0xff]
        %v1380 = vld [vmem:[%s1280 + $0x2b1] sm:$0xff]
        %v1381 = vld [vmem:[%s1280 + $0x2c1] sm:$0xff]
        %v1382 = vld [vmem:[%s1280 + $0x2d1] sm:$0xff]
        %v1383 = vld [vmem:[%s1280 + $0x2e1] sm:$0xff]
        %v1384 = vld [vmem:[%s1280 + $0x2f1] sm:$0xff]
        %v1385 = vld [vmem:[%s1280 + $0x321] sm:$0xff]
        %v1386 = vld [vmem:[%s1280 + $0x331] sm:$0xff]
        %v1387 = vld [vmem:[%s1280 + $0x341] sm:$0xff]
        %v1388 = vld [vmem:[%s1280 + $0x351] sm:$0xff]
        %v1389 = vld [vmem:[%s1280 + $0x361] sm:$0xff]
        %v1390 = vld [vmem:[%s1280 + $0x371] sm:$0xff]
        %v1391 = vld [vmem:[%s1280 + $0x381] sm:$0xff]
        %v1392 = vld [vmem:[%s1280 + $0x391] sm:$0xff]
        %v1393 = vld [vmem:[%s1280 + $0x3c1] sm:$0xff]
        %v1394 = vld [vmem:[%s1280 + $0x3d1] sm:$0xff]
        %v1395 = vld [vmem:[%s1280 + $0x3e1] sm:$0xff]
        %v1396 = vld [vmem:[%s1280 + $0x3f1] sm:$0xff]
        %v1397 = vld [vmem:[%s1280 + $0x401] sm:$0xff]
        %v1398 = vld [vmem:[%s1280 + $0x411] sm:$0xff]
        %v1399 = vld [vmem:[%s1280 + $0x421] sm:$0xff]
        %v1400 = vld [vmem:[%s1280 + $0x431] sm:$0xff]
        %v1401 = vld [vmem:[%s1280 + $0x461] sm:$0xff]
        %v1402 = vld [vmem:[%s1280 + $0x471] sm:$0xff]
        %v1403 = vld [vmem:[%s1280 + $0x481] sm:$0xff]
        %v1404 = vld [vmem:[%s1280 + $0x491] sm:$0xff]
        %v1405 = vld [vmem:[%s1280 + $0x4a1] sm:$0xff]
        %v1406 = vld [vmem:[%s1280 + $0x4b1] sm:$0xff]
        %v1407 = vld [vmem:[%s1280 + $0x4c1] sm:$0xff]
        %v1408 = vld [vmem:[%s1280 + $0x4d1] sm:$0xff]
        %v1409 = vld [vmem:[%s1280 + $0x2] sm:$0xff]
        %v1410 = vld [vmem:[%s1280 + $0x12] sm:$0xff]
        %v1411 = vld [vmem:[%s1280 + $0x22] sm:$0xff]
        %v1412 = vld [vmem:[%s1280 + $0x32] sm:$0xff]
        %v1413 = vld [vmem:[%s1280 + $0x42] sm:$0xff]
        %v1414 = vld [vmem:[%s1280 + $0x52] sm:$0xff]
        %v1415 = vld [vmem:[%s1280 + $0x62] sm:$0xff]
        %v1416 = vld [vmem:[%s1280 + $0x72] sm:$0xff]
        %v1417 = vld [vmem:[%s1280 + $0xa2] sm:$0xff]
        %v1418 = vld [vmem:[%s1280 + $0xb2] sm:$0xff]
        %v1419 = vld [vmem:[%s1280 + $0xc2] sm:$0xff]
        %v1420 = vld [vmem:[%s1280 + $0xd2] sm:$0xff]
        %v1421 = vld [vmem:[%s1280 + $0xe2] sm:$0xff]
        %v1422 = vld [vmem:[%s1280 + $0xf2] sm:$0xff]
        %v1423 = vld [vmem:[%s1280 + $0x102] sm:$0xff]
        %v1424 = vld [vmem:[%s1280 + $0x112] sm:$0xff]
        %v1425 = vld [vmem:[%s1280 + $0x142] sm:$0xff]
        %v1426 = vld [vmem:[%s1280 + $0x152] sm:$0xff]
        %v1427 = vld [vmem:[%s1280 + $0x162] sm:$0xff]
        %v1428 = vld [vmem:[%s1280 + $0x172] sm:$0xff]
        %v1429 = vld [vmem:[%s1280 + $0x182] sm:$0xff]
        %v1430 = vld [vmem:[%s1280 + $0x192] sm:$0xff]
        %v1431 = vld [vmem:[%s1280 + $0x1a2] sm:$0xff]
        %v1432 = vld [vmem:[%s1280 + $0x1b2] sm:$0xff]
        %v1433 = vld [vmem:[%s1280 + $0x1e2] sm:$0xff]
        %v1434 = vld [vmem:[%s1280 + $0x1f2] sm:$0xff]
        %v1435 = vld [vmem:[%s1280 + $0x202] sm:$0xff]
        %v1436 = vld [vmem:[%s1280 + $0x212] sm:$0xff]
        %v1437 = vld [vmem:[%s1280 + $0x222] sm:$0xff]
        %v1438 = vld [vmem:[%s1280 + $0x232] sm:$0xff]
        %v1439 = vld [vmem:[%s1280 + $0x242] sm:$0xff]
        %v1440 = vld [vmem:[%s1280 + $0x252] sm:$0xff]
        %v1441 = vld [vmem:[%s1280 + $0x282] sm:$0xff]
        %v1442 = vld [vmem:[%s1280 + $0x292] sm:$0xff]
        %v1443 = vld [vmem:[%s1280 + $0x2a2] sm:$0xff]
        %v1444 = vld [vmem:[%s1280 + $0x2b2] sm:$0xff]
        %v1445 = vld [vmem:[%s1280 + $0x2c2] sm:$0xff]
        %v1446 = vld [vmem:[%s1280 + $0x2d2] sm:$0xff]
        %v1447 = vld [vmem:[%s1280 + $0x2e2] sm:$0xff]
        %v1448 = vld [vmem:[%s1280 + $0x2f2] sm:$0xff]
        %v1449 = vld [vmem:[%s1280 + $0x322] sm:$0xff]
        %v1450 = vld [vmem:[%s1280 + $0x332] sm:$0xff]
        %v1451 = vld [vmem:[%s1280 + $0x342] sm:$0xff]
        %v1452 = vld [vmem:[%s1280 + $0x352] sm:$0xff]
        %v1453 = vld [vmem:[%s1280 + $0x362] sm:$0xff]
        %v1454 = vld [vmem:[%s1280 + $0x372] sm:$0xff]
        %v1455 = vld [vmem:[%s1280 + $0x382] sm:$0xff]
        %v1456 = vld [vmem:[%s1280 + $0x392] sm:$0xff]
        %v1457 = vld [vmem:[%s1280 + $0x3c2] sm:$0xff]
        %v1458 = vld [vmem:[%s1280 + $0x3d2] sm:$0xff]
        %v1459 = vld [vmem:[%s1280 + $0x3e2] sm:$0xff]
        %v1460 = vld [vmem:[%s1280 + $0x3f2] sm:$0xff]
        %v1461 = vld [vmem:[%s1280 + $0x402] sm:$0xff]
        %v1462 = vld [vmem:[%s1280 + $0x412] sm:$0xff]
        %v1463 = vld [vmem:[%s1280 + $0x422] sm:$0xff]
        %v1464 = vld [vmem:[%s1280 + $0x432] sm:$0xff]
        %v1465 = vld [vmem:[%s1280 + $0x462] sm:$0xff]
        %v1466 = vld [vmem:[%s1280 + $0x472] sm:$0xff]
        %v1467 = vld [vmem:[%s1280 + $0x482] sm:$0xff]
        %v1468 = vld [vmem:[%s1280 + $0x492] sm:$0xff]
        %v1469 = vld [vmem:[%s1280 + $0x4a2] sm:$0xff]
        %v1470 = vld [vmem:[%s1280 + $0x4b2] sm:$0xff]
        %v1471 = vld [vmem:[%s1280 + $0x4c2] sm:$0xff]
        %v1472 = vld [vmem:[%s1280 + $0x4d2] sm:$0xff]
        %v1473 = vld [vmem:[%s637] sm:$0xff]
        %v1474 = vld [vmem:[%s637 + $0x10] sm:$0xff]
        %v1475 = vld [vmem:[%s637 + $0x20] sm:$0xff]
        %v1476 = vld [vmem:[%s637 + $0x30] sm:$0xff]
        %v1477 = vld [vmem:[%s637 + $0x40] sm:$0xff]
        %v1478 = vld [vmem:[%s637 + $0x50] sm:$0xff]
        %v1479 = vld [vmem:[%s637 + $0x60] sm:$0xff]
        %v1480 = vld [vmem:[%s637 + $0x70] sm:$0xff]
        %v1481 = vld [vmem:[%s637 + $0xa0] sm:$0xff]
        %v1482 = vld [vmem:[%s637 + $0xb0] sm:$0xff]
        %v1483 = vld [vmem:[%s637 + $0xc0] sm:$0xff]
        %v1484 = vld [vmem:[%s637 + $0xd0] sm:$0xff]
        %v1485 = vld [vmem:[%s637 + $0xe0] sm:$0xff]
        %v1486 = vld [vmem:[%s637 + $0xf0] sm:$0xff]
        %v1487 = vld [vmem:[%s637 + $0x100] sm:$0xff]
        %v1488 = vld [vmem:[%s637 + $0x110] sm:$0xff]
        %v1489 = vld [vmem:[%s637 + $0x140] sm:$0xff]
        %v1490 = vld [vmem:[%s637 + $0x150] sm:$0xff]
        %v1491 = vld [vmem:[%s637 + $0x160] sm:$0xff]
        %v1492 = vld [vmem:[%s637 + $0x170] sm:$0xff]
        %v1493 = vld [vmem:[%s637 + $0x180] sm:$0xff]
        %v1494 = vld [vmem:[%s637 + $0x190] sm:$0xff]
        %v1495 = vld [vmem:[%s637 + $0x1a0] sm:$0xff]
        %v1496 = vld [vmem:[%s637 + $0x1b0] sm:$0xff]
        %v1497 = vld [vmem:[%s637 + $0x1e0] sm:$0xff]
        %v1498 = vld [vmem:[%s637 + $0x1f0] sm:$0xff]
        %v1499 = vld [vmem:[%s637 + $0x200] sm:$0xff]
        %v1500 = vld [vmem:[%s637 + $0x210] sm:$0xff]
        %v1501 = vld [vmem:[%s637 + $0x220] sm:$0xff]
        %v1502 = vld [vmem:[%s637 + $0x230] sm:$0xff]
        %v1503 = vld [vmem:[%s637 + $0x240] sm:$0xff]
        %v1504 = vld [vmem:[%s637 + $0x250] sm:$0xff]
        %v1505 = vld [vmem:[%s637 + $0x280] sm:$0xff]
        %v1506 = vld [vmem:[%s637 + $0x290] sm:$0xff]
        %v1507 = vld [vmem:[%s637 + $0x2a0] sm:$0xff]
        %v1508 = vld [vmem:[%s637 + $0x2b0] sm:$0xff]
        %v1509 = vld [vmem:[%s637 + $0x2c0] sm:$0xff]
        %v1510 = vld [vmem:[%s637 + $0x2d0] sm:$0xff]
        %v1511 = vld [vmem:[%s637 + $0x2e0] sm:$0xff]
        %v1512 = vld [vmem:[%s637 + $0x2f0] sm:$0xff]
        %v1513 = vld [vmem:[%s637 + $0x320] sm:$0xff]
        %v1514 = vld [vmem:[%s637 + $0x330] sm:$0xff]
        %v1515 = vld [vmem:[%s637 + $0x340] sm:$0xff]
        %v1516 = vld [vmem:[%s637 + $0x350] sm:$0xff]
        %v1517 = vld [vmem:[%s637 + $0x360] sm:$0xff]
        %v1518 = vld [vmem:[%s637 + $0x370] sm:$0xff]
        %v1519 = vld [vmem:[%s637 + $0x380] sm:$0xff]
        %v1520 = vld [vmem:[%s637 + $0x390] sm:$0xff]
        %v1521 = vld [vmem:[%s637 + $0x3c0] sm:$0xff]
        %v1522 = vld [vmem:[%s637 + $0x3d0] sm:$0xff]
        %v1523 = vld [vmem:[%s637 + $0x3e0] sm:$0xff]
        %v1524 = vld [vmem:[%s637 + $0x3f0] sm:$0xff]
        %v1525 = vld [vmem:[%s637 + $0x400] sm:$0xff]
        %v1526 = vld [vmem:[%s637 + $0x410] sm:$0xff]
        %v1527 = vld [vmem:[%s637 + $0x420] sm:$0xff]
        %v1528 = vld [vmem:[%s637 + $0x430] sm:$0xff]
        %v1529 = vld [vmem:[%s637 + $0x460] sm:$0xff]
        %v1530 = vld [vmem:[%s637 + $0x470] sm:$0xff]
        %v1531 = vld [vmem:[%s637 + $0x480] sm:$0xff]
        %v1532 = vld [vmem:[%s637 + $0x490] sm:$0xff]
        %v1533 = vld [vmem:[%s637 + $0x4a0] sm:$0xff]
        %v1534 = vld [vmem:[%s637 + $0x4b0] sm:$0xff]
        %v1535 = vld [vmem:[%s637 + $0x4c0] sm:$0xff]
        %v1536 = vld [vmem:[%s637 + $0x4d0] sm:$0xff]
        %v1537 = vld [vmem:[%s637 + $0x1] sm:$0xff]
        %v1538 = vld [vmem:[%s637 + $0x11] sm:$0xff]
        %v1539 = vld [vmem:[%s637 + $0x21] sm:$0xff]
        %v1540 = vld [vmem:[%s637 + $0x31] sm:$0xff]
        %v1541 = vld [vmem:[%s637 + $0x41] sm:$0xff]
        %v1542 = vld [vmem:[%s637 + $0x51] sm:$0xff]
        %v1543 = vld [vmem:[%s637 + $0x61] sm:$0xff]
        %v1544 = vld [vmem:[%s637 + $0x71] sm:$0xff]
        %v1545 = vld [vmem:[%s637 + $0xa1] sm:$0xff]
        %v1546 = vld [vmem:[%s637 + $0xb1] sm:$0xff]
        %v1547 = vld [vmem:[%s637 + $0xc1] sm:$0xff]
        %v1548 = vld [vmem:[%s637 + $0xd1] sm:$0xff]
        %v1549 = vld [vmem:[%s637 + $0xe1] sm:$0xff]
        %v1550 = vld [vmem:[%s637 + $0xf1] sm:$0xff]
        %v1551 = vld [vmem:[%s637 + $0x101] sm:$0xff]
        %v1552 = vld [vmem:[%s637 + $0x111] sm:$0xff]
        %v1553 = vld [vmem:[%s637 + $0x141] sm:$0xff]
        %v1554 = vld [vmem:[%s637 + $0x151] sm:$0xff]
        %v1555 = vld [vmem:[%s637 + $0x161] sm:$0xff]
        %v1556 = vld [vmem:[%s637 + $0x171] sm:$0xff]
        %v1557 = vld [vmem:[%s637 + $0x181] sm:$0xff]
        %v1558 = vld [vmem:[%s637 + $0x191] sm:$0xff]
        %v1559 = vld [vmem:[%s637 + $0x1a1] sm:$0xff]
        %v1560 = vld [vmem:[%s637 + $0x1b1] sm:$0xff]
        %v1561 = vld [vmem:[%s637 + $0x1e1] sm:$0xff]
        %v1562 = vld [vmem:[%s637 + $0x1f1] sm:$0xff]
        %v1563 = vld [vmem:[%s637 + $0x201] sm:$0xff]
        %v1564 = vld [vmem:[%s637 + $0x211] sm:$0xff]
        %v1565 = vld [vmem:[%s637 + $0x221] sm:$0xff]
        %v1566 = vld [vmem:[%s637 + $0x231] sm:$0xff]
        %v1567 = vld [vmem:[%s637 + $0x241] sm:$0xff]
        %v1568 = vld [vmem:[%s637 + $0x251] sm:$0xff]
        %v1569 = vld [vmem:[%s637 + $0x281] sm:$0xff]
        %v1570 = vld [vmem:[%s637 + $0x291] sm:$0xff]
        %v1571 = vld [vmem:[%s637 + $0x2a1] sm:$0xff]
        %v1572 = vld [vmem:[%s637 + $0x2b1] sm:$0xff]
        %v1573 = vld [vmem:[%s637 + $0x2c1] sm:$0xff]
        %v1574 = vld [vmem:[%s637 + $0x2d1] sm:$0xff]
        %v1575 = vld [vmem:[%s637 + $0x2e1] sm:$0xff]
        %v1576 = vld [vmem:[%s637 + $0x2f1] sm:$0xff]
        %v1577 = vld [vmem:[%s637 + $0x321] sm:$0xff]
        %v1578 = vld [vmem:[%s637 + $0x331] sm:$0xff]
        %v1579 = vld [vmem:[%s637 + $0x341] sm:$0xff]
        %v1580 = vld [vmem:[%s637 + $0x351] sm:$0xff]
        %v1581 = vld [vmem:[%s637 + $0x361] sm:$0xff]
        %v1582 = vld [vmem:[%s637 + $0x371] sm:$0xff]
        %v1583 = vld [vmem:[%s637 + $0x381] sm:$0xff]
        %v1584 = vld [vmem:[%s637 + $0x391] sm:$0xff]
        %v1585 = vld [vmem:[%s637 + $0x3c1] sm:$0xff]
        %v1586 = vld [vmem:[%s637 + $0x3d1] sm:$0xff]
        %v1587 = vld [vmem:[%s637 + $0x3e1] sm:$0xff]
        %v1588 = vld [vmem:[%s637 + $0x3f1] sm:$0xff]
        %v1589 = vld [vmem:[%s637 + $0x401] sm:$0xff]
        %v1590 = vld [vmem:[%s637 + $0x411] sm:$0xff]
        %v1591 = vld [vmem:[%s637 + $0x421] sm:$0xff]
        %v1592 = vld [vmem:[%s637 + $0x431] sm:$0xff]
        %v1593 = vld [vmem:[%s637 + $0x461] sm:$0xff]
        %v1594 = vld [vmem:[%s637 + $0x471] sm:$0xff]
        %v1595 = vld [vmem:[%s637 + $0x481] sm:$0xff]
        %v1596 = vld [vmem:[%s637 + $0x491] sm:$0xff]
        %v1597 = vld [vmem:[%s637 + $0x4a1] sm:$0xff]
        %v1598 = vld [vmem:[%s637 + $0x4b1] sm:$0xff]
        %v1599 = vld [vmem:[%s637 + $0x4c1] sm:$0xff]
        %v1600 = vld [vmem:[%s637 + $0x4d1] sm:$0xff]
        %v1601 = vld [vmem:[%s637 + $0x2] sm:$0xff]
        %v1602 = vld [vmem:[%s637 + $0x12] sm:$0xff]
        %v1603 = vld [vmem:[%s637 + $0x22] sm:$0xff]
        %v1604 = vld [vmem:[%s637 + $0x32] sm:$0xff]
        %v1605 = vld [vmem:[%s637 + $0x42] sm:$0xff]
        %v1606 = vld [vmem:[%s637 + $0x52] sm:$0xff]
        %v1607 = vld [vmem:[%s637 + $0x62] sm:$0xff]
        %v1608 = vld [vmem:[%s637 + $0x72] sm:$0xff]
        %v1609 = vld [vmem:[%s637 + $0xa2] sm:$0xff]
        %v1610 = vld [vmem:[%s637 + $0xb2] sm:$0xff]
        %v1611 = vld [vmem:[%s637 + $0xc2] sm:$0xff]
        %v1612 = vld [vmem:[%s637 + $0xd2] sm:$0xff]
        %v1613 = vld [vmem:[%s637 + $0xe2] sm:$0xff]
        %v1614 = vld [vmem:[%s637 + $0xf2] sm:$0xff]
        %v1615 = vld [vmem:[%s637 + $0x102] sm:$0xff]
        %v1616 = vld [vmem:[%s637 + $0x112] sm:$0xff]
        %v1617 = vld [vmem:[%s637 + $0x142] sm:$0xff]
        %v1618 = vld [vmem:[%s637 + $0x152] sm:$0xff]
        %v1619 = vld [vmem:[%s637 + $0x162] sm:$0xff]
        %v1620 = vld [vmem:[%s637 + $0x172] sm:$0xff]
        %v1621 = vld [vmem:[%s637 + $0x182] sm:$0xff]
        %v1622 = vld [vmem:[%s637 + $0x192] sm:$0xff]
        %v1623 = vld [vmem:[%s637 + $0x1a2] sm:$0xff]
        %v1624 = vld [vmem:[%s637 + $0x1b2] sm:$0xff]
        %v1625 = vld [vmem:[%s637 + $0x1e2] sm:$0xff]
        %v1626 = vld [vmem:[%s637 + $0x1f2] sm:$0xff]
        %v1627 = vld [vmem:[%s637 + $0x202] sm:$0xff]
        %v1628 = vld [vmem:[%s637 + $0x212] sm:$0xff]
        %v1629 = vld [vmem:[%s637 + $0x222] sm:$0xff]
        %v1630 = vld [vmem:[%s637 + $0x232] sm:$0xff]
        %v1631 = vld [vmem:[%s637 + $0x242] sm:$0xff]
        %v1632 = vld [vmem:[%s637 + $0x252] sm:$0xff]
        %v1633 = vld [vmem:[%s637 + $0x282] sm:$0xff]
        %v1634 = vld [vmem:[%s637 + $0x292] sm:$0xff]
        %v1635 = vld [vmem:[%s637 + $0x2a2] sm:$0xff]
        %v1636 = vld [vmem:[%s637 + $0x2b2] sm:$0xff]
        %v1637 = vld [vmem:[%s637 + $0x2c2] sm:$0xff]
        %v1638 = vld [vmem:[%s637 + $0x2d2] sm:$0xff]
        %v1639 = vld [vmem:[%s637 + $0x2e2] sm:$0xff]
        %v1640 = vld [vmem:[%s637 + $0x2f2] sm:$0xff]
        %v1641 = vld [vmem:[%s637 + $0x322] sm:$0xff]
        %v1642 = vld [vmem:[%s637 + $0x332] sm:$0xff]
        %v1643 = vld [vmem:[%s637 + $0x342] sm:$0xff]
        %v1644 = vld [vmem:[%s637 + $0x352] sm:$0xff]
        %v1645 = vld [vmem:[%s637 + $0x362] sm:$0xff]
        %v1646 = vld [vmem:[%s637 + $0x372] sm:$0xff]
        %v1647 = vld [vmem:[%s637 + $0x382] sm:$0xff]
        %v1648 = vld [vmem:[%s637 + $0x392] sm:$0xff]
        %v1649 = vld [vmem:[%s637 + $0x3c2] sm:$0xff]
        %v1650 = vld [vmem:[%s637 + $0x3d2] sm:$0xff]
        %v1651 = vld [vmem:[%s637 + $0x3e2] sm:$0xff]
        %v1652 = vld [vmem:[%s637 + $0x3f2] sm:$0xff]
        %v1653 = vld [vmem:[%s637 + $0x402] sm:$0xff]
        %v1654 = vld [vmem:[%s637 + $0x412] sm:$0xff]
        %v1655 = vld [vmem:[%s637 + $0x422] sm:$0xff]
        %v1656 = vld [vmem:[%s637 + $0x432] sm:$0xff]
        %v1657 = vld [vmem:[%s637 + $0x462] sm:$0xff]
        %v1658 = vld [vmem:[%s637 + $0x472] sm:$0xff]
        %v1659 = vld [vmem:[%s637 + $0x482] sm:$0xff]
        %v1660 = vld [vmem:[%s637 + $0x492] sm:$0xff]
        %v1661 = vld [vmem:[%s637 + $0x4a2] sm:$0xff]
        %v1662 = vld [vmem:[%s637 + $0x4b2] sm:$0xff]
        %v1663 = vld [vmem:[%s637 + $0x4c2] sm:$0xff]
        %v1664 = vld [vmem:[%s637 + $0x4d2] sm:$0xff]
        %s1665 = scalar_lea.vmem [#allocation2], 192
        %v1666 = vld [vmem:[%s1665] sm:$0xff]
        %v1667 = vld [vmem:[%s1665 + $0x10] sm:$0xff]
        %v1668 = vld [vmem:[%s1665 + $0x20] sm:$0xff]
        %v1669 = vld [vmem:[%s1665 + $0x30] sm:$0xff]
        %v1670 = vld [vmem:[%s1665 + $0x40] sm:$0xff]
        %v1671 = vld [vmem:[%s1665 + $0x50] sm:$0xff]
        %v1672 = vld [vmem:[%s1665 + $0x60] sm:$0xff]
        %v1673 = vld [vmem:[%s1665 + $0x70] sm:$0xff]
        %v1674 = vld [vmem:[%s1665 + $0xa0] sm:$0xff]
        %v1675 = vld [vmem:[%s1665 + $0xb0] sm:$0xff]
        %v1676 = vld [vmem:[%s1665 + $0xc0] sm:$0xff]
        %v1677 = vld [vmem:[%s1665 + $0xd0] sm:$0xff]
        %v1678 = vld [vmem:[%s1665 + $0xe0] sm:$0xff]
        %v1679 = vld [vmem:[%s1665 + $0xf0] sm:$0xff]
        %v1680 = vld [vmem:[%s1665 + $0x100] sm:$0xff]
        %v1681 = vld [vmem:[%s1665 + $0x110] sm:$0xff]
        %v1682 = vld [vmem:[%s1665 + $0x140] sm:$0xff]
        %v1683 = vld [vmem:[%s1665 + $0x150] sm:$0xff]
        %v1684 = vld [vmem:[%s1665 + $0x160] sm:$0xff]
        %v1685 = vld [vmem:[%s1665 + $0x170] sm:$0xff]
        %v1686 = vld [vmem:[%s1665 + $0x180] sm:$0xff]
        %v1687 = vld [vmem:[%s1665 + $0x190] sm:$0xff]
        %v1688 = vld [vmem:[%s1665 + $0x1a0] sm:$0xff]
        %v1689 = vld [vmem:[%s1665 + $0x1b0] sm:$0xff]
        %v1690 = vld [vmem:[%s1665 + $0x1e0] sm:$0xff]
        %v1691 = vld [vmem:[%s1665 + $0x1f0] sm:$0xff]
        %v1692 = vld [vmem:[%s1665 + $0x200] sm:$0xff]
        %v1693 = vld [vmem:[%s1665 + $0x210] sm:$0xff]
        %v1694 = vld [vmem:[%s1665 + $0x220] sm:$0xff]
        %v1695 = vld [vmem:[%s1665 + $0x230] sm:$0xff]
        %v1696 = vld [vmem:[%s1665 + $0x240] sm:$0xff]
        %v1697 = vld [vmem:[%s1665 + $0x250] sm:$0xff]
        %v1698 = vld [vmem:[%s1665 + $0x280] sm:$0xff]
        %v1699 = vld [vmem:[%s1665 + $0x290] sm:$0xff]
        %v1700 = vld [vmem:[%s1665 + $0x2a0] sm:$0xff]
        %v1701 = vld [vmem:[%s1665 + $0x2b0] sm:$0xff]
        %v1702 = vld [vmem:[%s1665 + $0x2c0] sm:$0xff]
        %v1703 = vld [vmem:[%s1665 + $0x2d0] sm:$0xff]
        %v1704 = vld [vmem:[%s1665 + $0x2e0] sm:$0xff]
        %v1705 = vld [vmem:[%s1665 + $0x2f0] sm:$0xff]
        %v1706 = vld [vmem:[%s1665 + $0x320] sm:$0xff]
        %v1707 = vld [vmem:[%s1665 + $0x330] sm:$0xff]
        %v1708 = vld [vmem:[%s1665 + $0x340] sm:$0xff]
        %v1709 = vld [vmem:[%s1665 + $0x350] sm:$0xff]
        %v1710 = vld [vmem:[%s1665 + $0x360] sm:$0xff]
        %v1711 = vld [vmem:[%s1665 + $0x370] sm:$0xff]
        %v1712 = vld [vmem:[%s1665 + $0x380] sm:$0xff]
        %v1713 = vld [vmem:[%s1665 + $0x390] sm:$0xff]
        %v1714 = vld [vmem:[%s1665 + $0x3c0] sm:$0xff]
        %v1715 = vld [vmem:[%s1665 + $0x3d0] sm:$0xff]
        %v1716 = vld [vmem:[%s1665 + $0x3e0] sm:$0xff]
        %v1717 = vld [vmem:[%s1665 + $0x3f0] sm:$0xff]
        %v1718 = vld [vmem:[%s1665 + $0x400] sm:$0xff]
        %v1719 = vld [vmem:[%s1665 + $0x410] sm:$0xff]
        %v1720 = vld [vmem:[%s1665 + $0x420] sm:$0xff]
        %v1721 = vld [vmem:[%s1665 + $0x430] sm:$0xff]
        %v1722 = vld [vmem:[%s1665 + $0x460] sm:$0xff]
        %v1723 = vld [vmem:[%s1665 + $0x470] sm:$0xff]
        %v1724 = vld [vmem:[%s1665 + $0x480] sm:$0xff]
        %v1725 = vld [vmem:[%s1665 + $0x490] sm:$0xff]
        %v1726 = vld [vmem:[%s1665 + $0x4a0] sm:$0xff]
        %v1727 = vld [vmem:[%s1665 + $0x4b0] sm:$0xff]
        %v1728 = vld [vmem:[%s1665 + $0x4c0] sm:$0xff]
        %v1729 = vld [vmem:[%s1665 + $0x4d0] sm:$0xff]
        %v1730 = vld [vmem:[%s1665 + $0x1] sm:$0xff]
        %v1731 = vld [vmem:[%s1665 + $0x11] sm:$0xff]
        %v1732 = vld [vmem:[%s1665 + $0x21] sm:$0xff]
        %v1733 = vld [vmem:[%s1665 + $0x31] sm:$0xff]
        %v1734 = vld [vmem:[%s1665 + $0x41] sm:$0xff]
        %v1735 = vld [vmem:[%s1665 + $0x51] sm:$0xff]
        %v1736 = vld [vmem:[%s1665 + $0x61] sm:$0xff]
        %v1737 = vld [vmem:[%s1665 + $0x71] sm:$0xff]
        %v1738 = vld [vmem:[%s1665 + $0xa1] sm:$0xff]
        %v1739 = vld [vmem:[%s1665 + $0xb1] sm:$0xff]
        %v1740 = vld [vmem:[%s1665 + $0xc1] sm:$0xff]
        %v1741 = vld [vmem:[%s1665 + $0xd1] sm:$0xff]
        %v1742 = vld [vmem:[%s1665 + $0xe1] sm:$0xff]
        %v1743 = vld [vmem:[%s1665 + $0xf1] sm:$0xff]
        %v1744 = vld [vmem:[%s1665 + $0x101] sm:$0xff]
        %v1745 = vld [vmem:[%s1665 + $0x111] sm:$0xff]
        %v1746 = vld [vmem:[%s1665 + $0x141] sm:$0xff]
        %v1747 = vld [vmem:[%s1665 + $0x151] sm:$0xff]
        %v1748 = vld [vmem:[%s1665 + $0x161] sm:$0xff]
        %v1749 = vld [vmem:[%s1665 + $0x171] sm:$0xff]
        %v1750 = vld [vmem:[%s1665 + $0x181] sm:$0xff]
        %v1751 = vld [vmem:[%s1665 + $0x191] sm:$0xff]
        %v1752 = vld [vmem:[%s1665 + $0x1a1] sm:$0xff]
        %v1753 = vld [vmem:[%s1665 + $0x1b1] sm:$0xff]
        %v1754 = vld [vmem:[%s1665 + $0x1e1] sm:$0xff]
        %v1755 = vld [vmem:[%s1665 + $0x1f1] sm:$0xff]
        %v1756 = vld [vmem:[%s1665 + $0x201] sm:$0xff]
        %v1757 = vld [vmem:[%s1665 + $0x211] sm:$0xff]
        %v1758 = vld [vmem:[%s1665 + $0x221] sm:$0xff]
        %v1759 = vld [vmem:[%s1665 + $0x231] sm:$0xff]
        %v1760 = vld [vmem:[%s1665 + $0x241] sm:$0xff]
        %v1761 = vld [vmem:[%s1665 + $0x251] sm:$0xff]
        %v1762 = vld [vmem:[%s1665 + $0x281] sm:$0xff]
        %v1763 = vld [vmem:[%s1665 + $0x291] sm:$0xff]
        %v1764 = vld [vmem:[%s1665 + $0x2a1] sm:$0xff]
        %v1765 = vld [vmem:[%s1665 + $0x2b1] sm:$0xff]
        %v1766 = vld [vmem:[%s1665 + $0x2c1] sm:$0xff]
        %v1767 = vld [vmem:[%s1665 + $0x2d1] sm:$0xff]
        %v1768 = vld [vmem:[%s1665 + $0x2e1] sm:$0xff]
        %v1769 = vld [vmem:[%s1665 + $0x2f1] sm:$0xff]
        %v1770 = vld [vmem:[%s1665 + $0x321] sm:$0xff]
        %v1771 = vld [vmem:[%s1665 + $0x331] sm:$0xff]
        %v1772 = vld [vmem:[%s1665 + $0x341] sm:$0xff]
        %v1773 = vld [vmem:[%s1665 + $0x351] sm:$0xff]
        %v1774 = vld [vmem:[%s1665 + $0x361] sm:$0xff]
        %v1775 = vld [vmem:[%s1665 + $0x371] sm:$0xff]
        %v1776 = vld [vmem:[%s1665 + $0x381] sm:$0xff]
        %v1777 = vld [vmem:[%s1665 + $0x391] sm:$0xff]
        %v1778 = vld [vmem:[%s1665 + $0x3c1] sm:$0xff]
        %v1779 = vld [vmem:[%s1665 + $0x3d1] sm:$0xff]
        %v1780 = vld [vmem:[%s1665 + $0x3e1] sm:$0xff]
        %v1781 = vld [vmem:[%s1665 + $0x3f1] sm:$0xff]
        %v1782 = vld [vmem:[%s1665 + $0x401] sm:$0xff]
        %v1783 = vld [vmem:[%s1665 + $0x411] sm:$0xff]
        %v1784 = vld [vmem:[%s1665 + $0x421] sm:$0xff]
        %v1785 = vld [vmem:[%s1665 + $0x431] sm:$0xff]
        %v1786 = vld [vmem:[%s1665 + $0x461] sm:$0xff]
        %v1787 = vld [vmem:[%s1665 + $0x471] sm:$0xff]
        %v1788 = vld [vmem:[%s1665 + $0x481] sm:$0xff]
        %v1789 = vld [vmem:[%s1665 + $0x491] sm:$0xff]
        %v1790 = vld [vmem:[%s1665 + $0x4a1] sm:$0xff]
        %v1791 = vld [vmem:[%s1665 + $0x4b1] sm:$0xff]
        %v1792 = vld [vmem:[%s1665 + $0x4c1] sm:$0xff]
        %v1793 = vld [vmem:[%s1665 + $0x4d1] sm:$0xff]
        %v1794 = vld [vmem:[%s1665 + $0x2] sm:$0xff]
        %v1795 = vld [vmem:[%s1665 + $0x12] sm:$0xff]
        %v1796 = vld [vmem:[%s1665 + $0x22] sm:$0xff]
        %v1797 = vld [vmem:[%s1665 + $0x32] sm:$0xff]
        %v1798 = vld [vmem:[%s1665 + $0x42] sm:$0xff]
        %v1799 = vld [vmem:[%s1665 + $0x52] sm:$0xff]
        %v1800 = vld [vmem:[%s1665 + $0x62] sm:$0xff]
        %v1801 = vld [vmem:[%s1665 + $0x72] sm:$0xff]
        %v1802 = vld [vmem:[%s1665 + $0xa2] sm:$0xff]
        %v1803 = vld [vmem:[%s1665 + $0xb2] sm:$0xff]
        %v1804 = vld [vmem:[%s1665 + $0xc2] sm:$0xff]
        %v1805 = vld [vmem:[%s1665 + $0xd2] sm:$0xff]
        %v1806 = vld [vmem:[%s1665 + $0xe2] sm:$0xff]
        %v1807 = vld [vmem:[%s1665 + $0xf2] sm:$0xff]
        %v1808 = vld [vmem:[%s1665 + $0x102] sm:$0xff]
        %v1809 = vld [vmem:[%s1665 + $0x112] sm:$0xff]
        %v1810 = vld [vmem:[%s1665 + $0x142] sm:$0xff]
        %v1811 = vld [vmem:[%s1665 + $0x152] sm:$0xff]
        %v1812 = vld [vmem:[%s1665 + $0x162] sm:$0xff]
        %v1813 = vld [vmem:[%s1665 + $0x172] sm:$0xff]
        %v1814 = vld [vmem:[%s1665 + $0x182] sm:$0xff]
        %v1815 = vld [vmem:[%s1665 + $0x192] sm:$0xff]
        %v1816 = vld [vmem:[%s1665 + $0x1a2] sm:$0xff]
        %v1817 = vld [vmem:[%s1665 + $0x1b2] sm:$0xff]
        %v1818 = vld [vmem:[%s1665 + $0x1e2] sm:$0xff]
        %v1819 = vld [vmem:[%s1665 + $0x1f2] sm:$0xff]
        %v1820 = vld [vmem:[%s1665 + $0x202] sm:$0xff]
        %v1821 = vld [vmem:[%s1665 + $0x212] sm:$0xff]
        %v1822 = vld [vmem:[%s1665 + $0x222] sm:$0xff]
        %v1823 = vld [vmem:[%s1665 + $0x232] sm:$0xff]
        %v1824 = vld [vmem:[%s1665 + $0x242] sm:$0xff]
        %v1825 = vld [vmem:[%s1665 + $0x252] sm:$0xff]
        %v1826 = vld [vmem:[%s1665 + $0x282] sm:$0xff]
        %v1827 = vld [vmem:[%s1665 + $0x292] sm:$0xff]
        %v1828 = vld [vmem:[%s1665 + $0x2a2] sm:$0xff]
        %v1829 = vld [vmem:[%s1665 + $0x2b2] sm:$0xff]
        %v1830 = vld [vmem:[%s1665 + $0x2c2] sm:$0xff]
        %v1831 = vld [vmem:[%s1665 + $0x2d2] sm:$0xff]
        %v1832 = vld [vmem:[%s1665 + $0x2e2] sm:$0xff]
        %v1833 = vld [vmem:[%s1665 + $0x2f2] sm:$0xff]
        %v1834 = vld [vmem:[%s1665 + $0x322] sm:$0xff]
        %v1835 = vld [vmem:[%s1665 + $0x332] sm:$0xff]
        %v1836 = vld [vmem:[%s1665 + $0x342] sm:$0xff]
        %v1837 = vld [vmem:[%s1665 + $0x352] sm:$0xff]
        %v1838 = vld [vmem:[%s1665 + $0x362] sm:$0xff]
        %v1839 = vld [vmem:[%s1665 + $0x372] sm:$0xff]
        %v1840 = vld [vmem:[%s1665 + $0x382] sm:$0xff]
        %v1841 = vld [vmem:[%s1665 + $0x392] sm:$0xff]
        %v1842 = vld [vmem:[%s1665 + $0x3c2] sm:$0xff]
        %v1843 = vld [vmem:[%s1665 + $0x3d2] sm:$0xff]
        %v1844 = vld [vmem:[%s1665 + $0x3e2] sm:$0xff]
        %v1845 = vld [vmem:[%s1665 + $0x3f2] sm:$0xff]
        %v1846 = vld [vmem:[%s1665 + $0x402] sm:$0xff]
        %v1847 = vld [vmem:[%s1665 + $0x412] sm:$0xff]
        %v1848 = vld [vmem:[%s1665 + $0x422] sm:$0xff]
        %v1849 = vld [vmem:[%s1665 + $0x432] sm:$0xff]
        %v1850 = vld [vmem:[%s1665 + $0x462] sm:$0xff]
        %v1851 = vld [vmem:[%s1665 + $0x472] sm:$0xff]
        %v1852 = vld [vmem:[%s1665 + $0x482] sm:$0xff]
        %v1853 = vld [vmem:[%s1665 + $0x492] sm:$0xff]
        %v1854 = vld [vmem:[%s1665 + $0x4a2] sm:$0xff]
        %v1855 = vld [vmem:[%s1665 + $0x4b2] sm:$0xff]
        %v1856 = vld [vmem:[%s1665 + $0x4c2] sm:$0xff]
        %v1857 = vld [vmem:[%s1665 + $0x4d2] sm:$0xff]
        %s1858 = scalar_lea.vmem [#allocation2], 320
        %v1859 = vld [vmem:[%s1858] sm:$0xff]
        %v1860 = vld [vmem:[%s1858 + $0x10] sm:$0xff]
        %v1861 = vld [vmem:[%s1858 + $0x20] sm:$0xff]
        %v1862 = vld [vmem:[%s1858 + $0x30] sm:$0xff]
        %v1863 = vld [vmem:[%s1858 + $0x40] sm:$0xff]
        %v1864 = vld [vmem:[%s1858 + $0x50] sm:$0xff]
        %v1865 = vld [vmem:[%s1858 + $0x60] sm:$0xff]
        %v1866 = vld [vmem:[%s1858 + $0x70] sm:$0xff]
        %v1867 = vld [vmem:[%s1858 + $0xa0] sm:$0xff]
        %v1868 = vld [vmem:[%s1858 + $0xb0] sm:$0xff]
        %v1869 = vld [vmem:[%s1858 + $0xc0] sm:$0xff]
        %v1870 = vld [vmem:[%s1858 + $0xd0] sm:$0xff]
        %v1871 = vld [vmem:[%s1858 + $0xe0] sm:$0xff]
        %v1872 = vld [vmem:[%s1858 + $0xf0] sm:$0xff]
        %v1873 = vld [vmem:[%s1858 + $0x100] sm:$0xff]
        %v1874 = vld [vmem:[%s1858 + $0x110] sm:$0xff]
        %v1875 = vld [vmem:[%s1858 + $0x140] sm:$0xff]
        %v1876 = vld [vmem:[%s1858 + $0x150] sm:$0xff]
        %v1877 = vld [vmem:[%s1858 + $0x160] sm:$0xff]
        %v1878 = vld [vmem:[%s1858 + $0x170] sm:$0xff]
        %v1879 = vld [vmem:[%s1858 + $0x180] sm:$0xff]
        %v1880 = vld [vmem:[%s1858 + $0x190] sm:$0xff]
        %v1881 = vld [vmem:[%s1858 + $0x1a0] sm:$0xff]
        %v1882 = vld [vmem:[%s1858 + $0x1b0] sm:$0xff]
        %v1883 = vld [vmem:[%s1858 + $0x1e0] sm:$0xff]
        %v1884 = vld [vmem:[%s1858 + $0x1f0] sm:$0xff]
        %v1885 = vld [vmem:[%s1858 + $0x200] sm:$0xff]
        %v1886 = vld [vmem:[%s1858 + $0x210] sm:$0xff]
        %v1887 = vld [vmem:[%s1858 + $0x220] sm:$0xff]
        %v1888 = vld [vmem:[%s1858 + $0x230] sm:$0xff]
        %v1889 = vld [vmem:[%s1858 + $0x240] sm:$0xff]
        %v1890 = vld [vmem:[%s1858 + $0x250] sm:$0xff]
        %v1891 = vld [vmem:[%s1858 + $0x280] sm:$0xff]
        %v1892 = vld [vmem:[%s1858 + $0x290] sm:$0xff]
        %v1893 = vld [vmem:[%s1858 + $0x2a0] sm:$0xff]
        %v1894 = vld [vmem:[%s1858 + $0x2b0] sm:$0xff]
        %v1895 = vld [vmem:[%s1858 + $0x2c0] sm:$0xff]
        %v1896 = vld [vmem:[%s1858 + $0x2d0] sm:$0xff]
        %v1897 = vld [vmem:[%s1858 + $0x2e0] sm:$0xff]
        %v1898 = vld [vmem:[%s1858 + $0x2f0] sm:$0xff]
        %v1899 = vld [vmem:[%s1858 + $0x320] sm:$0xff]
        %v1900 = vld [vmem:[%s1858 + $0x330] sm:$0xff]
        %v1901 = vld [vmem:[%s1858 + $0x340] sm:$0xff]
        %v1902 = vld [vmem:[%s1858 + $0x350] sm:$0xff]
        %v1903 = vld [vmem:[%s1858 + $0x360] sm:$0xff]
        %v1904 = vld [vmem:[%s1858 + $0x370] sm:$0xff]
        %v1905 = vld [vmem:[%s1858 + $0x380] sm:$0xff]
        %v1906 = vld [vmem:[%s1858 + $0x390] sm:$0xff]
        %v1907 = vld [vmem:[%s1858 + $0x3c0] sm:$0xff]
        %v1908 = vld [vmem:[%s1858 + $0x3d0] sm:$0xff]
        %v1909 = vld [vmem:[%s1858 + $0x3e0] sm:$0xff]
        %v1910 = vld [vmem:[%s1858 + $0x3f0] sm:$0xff]
        %v1911 = vld [vmem:[%s1858 + $0x400] sm:$0xff]
        %v1912 = vld [vmem:[%s1858 + $0x410] sm:$0xff]
        %v1913 = vld [vmem:[%s1858 + $0x420] sm:$0xff]
        %v1914 = vld [vmem:[%s1858 + $0x430] sm:$0xff]
        %v1915 = vld [vmem:[%s1858 + $0x460] sm:$0xff]
        %v1916 = vld [vmem:[%s1858 + $0x470] sm:$0xff]
        %v1917 = vld [vmem:[%s1858 + $0x480] sm:$0xff]
        %v1918 = vld [vmem:[%s1858 + $0x490] sm:$0xff]
        %v1919 = vld [vmem:[%s1858 + $0x4a0] sm:$0xff]
        %v1920 = vld [vmem:[%s1858 + $0x4b0] sm:$0xff]
        %v1921 = vld [vmem:[%s1858 + $0x4c0] sm:$0xff]
        %v1922 = vld [vmem:[%s1858 + $0x4d0] sm:$0xff]
        %v1923 = vld [vmem:[%s1858 + $0x1] sm:$0xff]
        %v1924 = vld [vmem:[%s1858 + $0x11] sm:$0xff]
        %v1925 = vld [vmem:[%s1858 + $0x21] sm:$0xff]
        %v1926 = vld [vmem:[%s1858 + $0x31] sm:$0xff]
        %v1927 = vld [vmem:[%s1858 + $0x41] sm:$0xff]
        %v1928 = vld [vmem:[%s1858 + $0x51] sm:$0xff]
        %v1929 = vld [vmem:[%s1858 + $0x61] sm:$0xff]
        %v1930 = vld [vmem:[%s1858 + $0x71] sm:$0xff]
        %v1931 = vld [vmem:[%s1858 + $0xa1] sm:$0xff]
        %v1932 = vld [vmem:[%s1858 + $0xb1] sm:$0xff]
        %v1933 = vld [vmem:[%s1858 + $0xc1] sm:$0xff]
        %v1934 = vld [vmem:[%s1858 + $0xd1] sm:$0xff]
        %v1935 = vld [vmem:[%s1858 + $0xe1] sm:$0xff]
        %v1936 = vld [vmem:[%s1858 + $0xf1] sm:$0xff]
        %v1937 = vld [vmem:[%s1858 + $0x101] sm:$0xff]
        %v1938 = vld [vmem:[%s1858 + $0x111] sm:$0xff]
        %v1939 = vld [vmem:[%s1858 + $0x141] sm:$0xff]
        %v1940 = vld [vmem:[%s1858 + $0x151] sm:$0xff]
        %v1941 = vld [vmem:[%s1858 + $0x161] sm:$0xff]
        %v1942 = vld [vmem:[%s1858 + $0x171] sm:$0xff]
        %v1943 = vld [vmem:[%s1858 + $0x181] sm:$0xff]
        %v1944 = vld [vmem:[%s1858 + $0x191] sm:$0xff]
        %v1945 = vld [vmem:[%s1858 + $0x1a1] sm:$0xff]
        %v1946 = vld [vmem:[%s1858 + $0x1b1] sm:$0xff]
        %v1947 = vld [vmem:[%s1858 + $0x1e1] sm:$0xff]
        %v1948 = vld [vmem:[%s1858 + $0x1f1] sm:$0xff]
        %v1949 = vld [vmem:[%s1858 + $0x201] sm:$0xff]
        %v1950 = vld [vmem:[%s1858 + $0x211] sm:$0xff]
        %v1951 = vld [vmem:[%s1858 + $0x221] sm:$0xff]
        %v1952 = vld [vmem:[%s1858 + $0x231] sm:$0xff]
        %v1953 = vld [vmem:[%s1858 + $0x241] sm:$0xff]
        %v1954 = vld [vmem:[%s1858 + $0x251] sm:$0xff]
        %v1955 = vld [vmem:[%s1858 + $0x281] sm:$0xff]
        %v1956 = vld [vmem:[%s1858 + $0x291] sm:$0xff]
        %v1957 = vld [vmem:[%s1858 + $0x2a1] sm:$0xff]
        %v1958 = vld [vmem:[%s1858 + $0x2b1] sm:$0xff]
        %v1959 = vld [vmem:[%s1858 + $0x2c1] sm:$0xff]
        %v1960 = vld [vmem:[%s1858 + $0x2d1] sm:$0xff]
        %v1961 = vld [vmem:[%s1858 + $0x2e1] sm:$0xff]
        %v1962 = vld [vmem:[%s1858 + $0x2f1] sm:$0xff]
        %v1963 = vld [vmem:[%s1858 + $0x321] sm:$0xff]
        %v1964 = vld [vmem:[%s1858 + $0x331] sm:$0xff]
        %v1965 = vld [vmem:[%s1858 + $0x341] sm:$0xff]
        %v1966 = vld [vmem:[%s1858 + $0x351] sm:$0xff]
        %v1967 = vld [vmem:[%s1858 + $0x361] sm:$0xff]
        %v1968 = vld [vmem:[%s1858 + $0x371] sm:$0xff]
        %v1969 = vld [vmem:[%s1858 + $0x381] sm:$0xff]
        %v1970 = vld [vmem:[%s1858 + $0x391] sm:$0xff]
        %v1971 = vld [vmem:[%s1858 + $0x3c1] sm:$0xff]
        %v1972 = vld [vmem:[%s1858 + $0x3d1] sm:$0xff]
        %v1973 = vld [vmem:[%s1858 + $0x3e1] sm:$0xff]
        %v1974 = vld [vmem:[%s1858 + $0x3f1] sm:$0xff]
        %v1975 = vld [vmem:[%s1858 + $0x401] sm:$0xff]
        %v1976 = vld [vmem:[%s1858 + $0x411] sm:$0xff]
        %v1977 = vld [vmem:[%s1858 + $0x421] sm:$0xff]
        %v1978 = vld [vmem:[%s1858 + $0x431] sm:$0xff]
        %v1979 = vld [vmem:[%s1858 + $0x461] sm:$0xff]
        %v1980 = vld [vmem:[%s1858 + $0x471] sm:$0xff]
        %v1981 = vld [vmem:[%s1858 + $0x481] sm:$0xff]
        %v1982 = vld [vmem:[%s1858 + $0x491] sm:$0xff]
        %v1983 = vld [vmem:[%s1858 + $0x4a1] sm:$0xff]
        %v1984 = vld [vmem:[%s1858 + $0x4b1] sm:$0xff]
        %v1985 = vld [vmem:[%s1858 + $0x4c1] sm:$0xff]
        %v1986 = vld [vmem:[%s1858 + $0x4d1] sm:$0xff]
        %v1987 = vld [vmem:[%s1858 + $0x2] sm:$0xff]
        %v1988 = vld [vmem:[%s1858 + $0x12] sm:$0xff]
        %v1989 = vld [vmem:[%s1858 + $0x22] sm:$0xff]
        %v1990 = vld [vmem:[%s1858 + $0x32] sm:$0xff]
        %v1991 = vld [vmem:[%s1858 + $0x42] sm:$0xff]
        %v1992 = vld [vmem:[%s1858 + $0x52] sm:$0xff]
        %v1993 = vld [vmem:[%s1858 + $0x62] sm:$0xff]
        %v1994 = vld [vmem:[%s1858 + $0x72] sm:$0xff]
        %v1995 = vld [vmem:[%s1858 + $0xa2] sm:$0xff]
        %v1996 = vld [vmem:[%s1858 + $0xb2] sm:$0xff]
        %v1997 = vld [vmem:[%s1858 + $0xc2] sm:$0xff]
        %v1998 = vld [vmem:[%s1858 + $0xd2] sm:$0xff]
        %v1999 = vld [vmem:[%s1858 + $0xe2] sm:$0xff]
        %v2000 = vld [vmem:[%s1858 + $0xf2] sm:$0xff]
        %v2001 = vld [vmem:[%s1858 + $0x102] sm:$0xff]
        %v2002 = vld [vmem:[%s1858 + $0x112] sm:$0xff]
        %v2003 = vld [vmem:[%s1858 + $0x142] sm:$0xff]
        %v2004 = vld [vmem:[%s1858 + $0x152] sm:$0xff]
        %v2005 = vld [vmem:[%s1858 + $0x162] sm:$0xff]
        %v2006 = vld [vmem:[%s1858 + $0x172] sm:$0xff]
        %v2007 = vld [vmem:[%s1858 + $0x182] sm:$0xff]
        %v2008 = vld [vmem:[%s1858 + $0x192] sm:$0xff]
        %v2009 = vld [vmem:[%s1858 + $0x1a2] sm:$0xff]
        %v2010 = vld [vmem:[%s1858 + $0x1b2] sm:$0xff]
        %v2011 = vld [vmem:[%s1858 + $0x1e2] sm:$0xff]
        %v2012 = vld [vmem:[%s1858 + $0x1f2] sm:$0xff]
        %v2013 = vld [vmem:[%s1858 + $0x202] sm:$0xff]
        %v2014 = vld [vmem:[%s1858 + $0x212] sm:$0xff]
        %v2015 = vld [vmem:[%s1858 + $0x222] sm:$0xff]
        %v2016 = vld [vmem:[%s1858 + $0x232] sm:$0xff]
        %v2017 = vld [vmem:[%s1858 + $0x242] sm:$0xff]
        %v2018 = vld [vmem:[%s1858 + $0x252] sm:$0xff]
        %v2019 = vld [vmem:[%s1858 + $0x282] sm:$0xff]
        %v2020 = vld [vmem:[%s1858 + $0x292] sm:$0xff]
        %v2021 = vld [vmem:[%s1858 + $0x2a2] sm:$0xff]
        %v2022 = vld [vmem:[%s1858 + $0x2b2] sm:$0xff]
        %v2023 = vld [vmem:[%s1858 + $0x2c2] sm:$0xff]
        %v2024 = vld [vmem:[%s1858 + $0x2d2] sm:$0xff]
        %v2025 = vld [vmem:[%s1858 + $0x2e2] sm:$0xff]
        %v2026 = vld [vmem:[%s1858 + $0x2f2] sm:$0xff]
        %v2027 = vld [vmem:[%s1858 + $0x322] sm:$0xff]
        %v2028 = vld [vmem:[%s1858 + $0x332] sm:$0xff]
        %v2029 = vld [vmem:[%s1858 + $0x342] sm:$0xff]
        %v2030 = vld [vmem:[%s1858 + $0x352] sm:$0xff]
        %v2031 = vld [vmem:[%s1858 + $0x362] sm:$0xff]
        %v2032 = vld [vmem:[%s1858 + $0x372] sm:$0xff]
        %v2033 = vld [vmem:[%s1858 + $0x382] sm:$0xff]
        %v2034 = vld [vmem:[%s1858 + $0x392] sm:$0xff]
        %v2035 = vld [vmem:[%s1858 + $0x3c2] sm:$0xff]
        %v2036 = vld [vmem:[%s1858 + $0x3d2] sm:$0xff]
        %v2037 = vld [vmem:[%s1858 + $0x3e2] sm:$0xff]
        %v2038 = vld [vmem:[%s1858 + $0x3f2] sm:$0xff]
        %v2039 = vld [vmem:[%s1858 + $0x402] sm:$0xff]
        %v2040 = vld [vmem:[%s1858 + $0x412] sm:$0xff]
        %v2041 = vld [vmem:[%s1858 + $0x422] sm:$0xff]
        %v2042 = vld [vmem:[%s1858 + $0x432] sm:$0xff]
        %v2043 = vld [vmem:[%s1858 + $0x462] sm:$0xff]
        %v2044 = vld [vmem:[%s1858 + $0x472] sm:$0xff]
        %v2045 = vld [vmem:[%s1858 + $0x482] sm:$0xff]
        %v2046 = vld [vmem:[%s1858 + $0x492] sm:$0xff]
        %v2047 = vld [vmem:[%s1858 + $0x4a2] sm:$0xff]
        %v2048 = vld [vmem:[%s1858 + $0x4b2] sm:$0xff]
        %v2049 = vld [vmem:[%s1858 + $0x4c2] sm:$0xff]
        %v2050 = vld [vmem:[%s1858 + $0x4d2] sm:$0xff]
        %s2051 = scalar_lea.vmem [#allocation2], 336
        %v2052 = vld [vmem:[%s2051] sm:$0xff]
        %v2053 = vld [vmem:[%s2051 + $0x10] sm:$0xff]
        %v2054 = vld [vmem:[%s2051 + $0x20] sm:$0xff]
        %v2055 = vld [vmem:[%s2051 + $0x30] sm:$0xff]
        %v2056 = vld [vmem:[%s2051 + $0x40] sm:$0xff]
        %v2057 = vld [vmem:[%s2051 + $0x50] sm:$0xff]
        %v2058 = vld [vmem:[%s2051 + $0x60] sm:$0xff]
        %v2059 = vld [vmem:[%s2051 + $0x70] sm:$0xff]
        %v2060 = vld [vmem:[%s2051 + $0xa0] sm:$0xff]
        %v2061 = vld [vmem:[%s2051 + $0xb0] sm:$0xff]
        %v2062 = vld [vmem:[%s2051 + $0xc0] sm:$0xff]
        %v2063 = vld [vmem:[%s2051 + $0xd0] sm:$0xff]
        %v2064 = vld [vmem:[%s2051 + $0xe0] sm:$0xff]
        %v2065 = vld [vmem:[%s2051 + $0xf0] sm:$0xff]
        %v2066 = vld [vmem:[%s2051 + $0x100] sm:$0xff]
        %v2067 = vld [vmem:[%s2051 + $0x110] sm:$0xff]
        %v2068 = vld [vmem:[%s2051 + $0x140] sm:$0xff]
        %v2069 = vld [vmem:[%s2051 + $0x150] sm:$0xff]
        %v2070 = vld [vmem:[%s2051 + $0x160] sm:$0xff]
        %v2071 = vld [vmem:[%s2051 + $0x170] sm:$0xff]
        %v2072 = vld [vmem:[%s2051 + $0x180] sm:$0xff]
        %v2073 = vld [vmem:[%s2051 + $0x190] sm:$0xff]
        %v2074 = vld [vmem:[%s2051 + $0x1a0] sm:$0xff]
        %v2075 = vld [vmem:[%s2051 + $0x1b0] sm:$0xff]
        %v2076 = vld [vmem:[%s2051 + $0x1e0] sm:$0xff]
        %v2077 = vld [vmem:[%s2051 + $0x1f0] sm:$0xff]
        %v2078 = vld [vmem:[%s2051 + $0x200] sm:$0xff]
        %v2079 = vld [vmem:[%s2051 + $0x210] sm:$0xff]
        %v2080 = vld [vmem:[%s2051 + $0x220] sm:$0xff]
        %v2081 = vld [vmem:[%s2051 + $0x230] sm:$0xff]
        %v2082 = vld [vmem:[%s2051 + $0x240] sm:$0xff]
        %v2083 = vld [vmem:[%s2051 + $0x250] sm:$0xff]
        %v2084 = vld [vmem:[%s2051 + $0x280] sm:$0xff]
        %v2085 = vld [vmem:[%s2051 + $0x290] sm:$0xff]
        %v2086 = vld [vmem:[%s2051 + $0x2a0] sm:$0xff]
        %v2087 = vld [vmem:[%s2051 + $0x2b0] sm:$0xff]
        %v2088 = vld [vmem:[%s2051 + $0x2c0] sm:$0xff]
        %v2089 = vld [vmem:[%s2051 + $0x2d0] sm:$0xff]
        %v2090 = vld [vmem:[%s2051 + $0x2e0] sm:$0xff]
        %v2091 = vld [vmem:[%s2051 + $0x2f0] sm:$0xff]
        %v2092 = vld [vmem:[%s2051 + $0x320] sm:$0xff]
        %v2093 = vld [vmem:[%s2051 + $0x330] sm:$0xff]
        %v2094 = vld [vmem:[%s2051 + $0x340] sm:$0xff]
        %v2095 = vld [vmem:[%s2051 + $0x350] sm:$0xff]
        %v2096 = vld [vmem:[%s2051 + $0x360] sm:$0xff]
        %v2097 = vld [vmem:[%s2051 + $0x370] sm:$0xff]
        %v2098 = vld [vmem:[%s2051 + $0x380] sm:$0xff]
        %v2099 = vld [vmem:[%s2051 + $0x390] sm:$0xff]
        %v2100 = vld [vmem:[%s2051 + $0x3c0] sm:$0xff]
        %v2101 = vld [vmem:[%s2051 + $0x3d0] sm:$0xff]
        %v2102 = vld [vmem:[%s2051 + $0x3e0] sm:$0xff]
        %v2103 = vld [vmem:[%s2051 + $0x3f0] sm:$0xff]
        %v2104 = vld [vmem:[%s2051 + $0x400] sm:$0xff]
        %v2105 = vld [vmem:[%s2051 + $0x410] sm:$0xff]
        %v2106 = vld [vmem:[%s2051 + $0x420] sm:$0xff]
        %v2107 = vld [vmem:[%s2051 + $0x430] sm:$0xff]
        %v2108 = vld [vmem:[%s2051 + $0x460] sm:$0xff]
        %v2109 = vld [vmem:[%s2051 + $0x470] sm:$0xff]
        %v2110 = vld [vmem:[%s2051 + $0x480] sm:$0xff]
        %v2111 = vld [vmem:[%s2051 + $0x490] sm:$0xff]
        %v2112 = vld [vmem:[%s2051 + $0x4a0] sm:$0xff]
        %v2113 = vld [vmem:[%s2051 + $0x4b0] sm:$0xff]
        %v2114 = vld [vmem:[%s2051 + $0x4c0] sm:$0xff]
        %v2115 = vld [vmem:[%s2051 + $0x4d0] sm:$0xff]
        %v2116 = vld [vmem:[%s2051 + $0x1] sm:$0xff]
        %v2117 = vld [vmem:[%s2051 + $0x11] sm:$0xff]
        %v2118 = vld [vmem:[%s2051 + $0x21] sm:$0xff]
        %v2119 = vld [vmem:[%s2051 + $0x31] sm:$0xff]
        %v2120 = vld [vmem:[%s2051 + $0x41] sm:$0xff]
        %v2121 = vld [vmem:[%s2051 + $0x51] sm:$0xff]
        %v2122 = vld [vmem:[%s2051 + $0x61] sm:$0xff]
        %v2123 = vld [vmem:[%s2051 + $0x71] sm:$0xff]
        %v2124 = vld [vmem:[%s2051 + $0xa1] sm:$0xff]
        %v2125 = vld [vmem:[%s2051 + $0xb1] sm:$0xff]
        %v2126 = vld [vmem:[%s2051 + $0xc1] sm:$0xff]
        %v2127 = vld [vmem:[%s2051 + $0xd1] sm:$0xff]
        %v2128 = vld [vmem:[%s2051 + $0xe1] sm:$0xff]
        %v2129 = vld [vmem:[%s2051 + $0xf1] sm:$0xff]
        %v2130 = vld [vmem:[%s2051 + $0x101] sm:$0xff]
        %v2131 = vld [vmem:[%s2051 + $0x111] sm:$0xff]
        %v2132 = vld [vmem:[%s2051 + $0x141] sm:$0xff]
        %v2133 = vld [vmem:[%s2051 + $0x151] sm:$0xff]
        %v2134 = vld [vmem:[%s2051 + $0x161] sm:$0xff]
        %v2135 = vld [vmem:[%s2051 + $0x171] sm:$0xff]
        %v2136 = vld [vmem:[%s2051 + $0x181] sm:$0xff]
        %v2137 = vld [vmem:[%s2051 + $0x191] sm:$0xff]
        %v2138 = vld [vmem:[%s2051 + $0x1a1] sm:$0xff]
        %v2139 = vld [vmem:[%s2051 + $0x1b1] sm:$0xff]
        %v2140 = vld [vmem:[%s2051 + $0x1e1] sm:$0xff]
        %v2141 = vld [vmem:[%s2051 + $0x1f1] sm:$0xff]
        %v2142 = vld [vmem:[%s2051 + $0x201] sm:$0xff]
        %v2143 = vld [vmem:[%s2051 + $0x211] sm:$0xff]
        %v2144 = vld [vmem:[%s2051 + $0x221] sm:$0xff]
        %v2145 = vld [vmem:[%s2051 + $0x231] sm:$0xff]
        %v2146 = vld [vmem:[%s2051 + $0x241] sm:$0xff]
        %v2147 = vld [vmem:[%s2051 + $0x251] sm:$0xff]
        %v2148 = vld [vmem:[%s2051 + $0x281] sm:$0xff]
        %v2149 = vld [vmem:[%s2051 + $0x291] sm:$0xff]
        %v2150 = vld [vmem:[%s2051 + $0x2a1] sm:$0xff]
        %v2151 = vld [vmem:[%s2051 + $0x2b1] sm:$0xff]
        %v2152 = vld [vmem:[%s2051 + $0x2c1] sm:$0xff]
        %v2153 = vld [vmem:[%s2051 + $0x2d1] sm:$0xff]
        %v2154 = vld [vmem:[%s2051 + $0x2e1] sm:$0xff]
        %v2155 = vld [vmem:[%s2051 + $0x2f1] sm:$0xff]
        %v2156 = vld [vmem:[%s2051 + $0x321] sm:$0xff]
        %v2157 = vld [vmem:[%s2051 + $0x331] sm:$0xff]
        %v2158 = vld [vmem:[%s2051 + $0x341] sm:$0xff]
        %v2159 = vld [vmem:[%s2051 + $0x351] sm:$0xff]
        %v2160 = vld [vmem:[%s2051 + $0x361] sm:$0xff]
        %v2161 = vld [vmem:[%s2051 + $0x371] sm:$0xff]
        %v2162 = vld [vmem:[%s2051 + $0x381] sm:$0xff]
        %v2163 = vld [vmem:[%s2051 + $0x391] sm:$0xff]
        %v2164 = vld [vmem:[%s2051 + $0x3c1] sm:$0xff]
        %v2165 = vld [vmem:[%s2051 + $0x3d1] sm:$0xff]
        %v2166 = vld [vmem:[%s2051 + $0x3e1] sm:$0xff]
        %v2167 = vld [vmem:[%s2051 + $0x3f1] sm:$0xff]
        %v2168 = vld [vmem:[%s2051 + $0x401] sm:$0xff]
        %v2169 = vld [vmem:[%s2051 + $0x411] sm:$0xff]
        %v2170 = vld [vmem:[%s2051 + $0x421] sm:$0xff]
        %v2171 = vld [vmem:[%s2051 + $0x431] sm:$0xff]
        %v2172 = vld [vmem:[%s2051 + $0x461] sm:$0xff]
        %v2173 = vld [vmem:[%s2051 + $0x471] sm:$0xff]
        %v2174 = vld [vmem:[%s2051 + $0x481] sm:$0xff]
        %v2175 = vld [vmem:[%s2051 + $0x491] sm:$0xff]
        %v2176 = vld [vmem:[%s2051 + $0x4a1] sm:$0xff]
        %v2177 = vld [vmem:[%s2051 + $0x4b1] sm:$0xff]
        %v2178 = vld [vmem:[%s2051 + $0x4c1] sm:$0xff]
        %v2179 = vld [vmem:[%s2051 + $0x4d1] sm:$0xff]
        %v2180 = vld [vmem:[%s2051 + $0x2] sm:$0xff]
        %v2181 = vld [vmem:[%s2051 + $0x12] sm:$0xff]
        %v2182 = vld [vmem:[%s2051 + $0x22] sm:$0xff]
        %v2183 = vld [vmem:[%s2051 + $0x32] sm:$0xff]
        %v2184 = vld [vmem:[%s2051 + $0x42] sm:$0xff]
        %v2185 = vld [vmem:[%s2051 + $0x52] sm:$0xff]
        %v2186 = vld [vmem:[%s2051 + $0x62] sm:$0xff]
        %v2187 = vld [vmem:[%s2051 + $0x72] sm:$0xff]
        %v2188 = vld [vmem:[%s2051 + $0xa2] sm:$0xff]
        %v2189 = vld [vmem:[%s2051 + $0xb2] sm:$0xff]
        %v2190 = vld [vmem:[%s2051 + $0xc2] sm:$0xff]
        %v2191 = vld [vmem:[%s2051 + $0xd2] sm:$0xff]
        %v2192 = vld [vmem:[%s2051 + $0xe2] sm:$0xff]
        %v2193 = vld [vmem:[%s2051 + $0xf2] sm:$0xff]
        %v2194 = vld [vmem:[%s2051 + $0x102] sm:$0xff]
        %v2195 = vld [vmem:[%s2051 + $0x112] sm:$0xff]
        %v2196 = vld [vmem:[%s2051 + $0x142] sm:$0xff]
        %v2197 = vld [vmem:[%s2051 + $0x152] sm:$0xff]
        %v2198 = vld [vmem:[%s2051 + $0x162] sm:$0xff]
        %v2199 = vld [vmem:[%s2051 + $0x172] sm:$0xff]
        %v2200 = vld [vmem:[%s2051 + $0x182] sm:$0xff]
        %v2201 = vld [vmem:[%s2051 + $0x192] sm:$0xff]
        %v2202 = vld [vmem:[%s2051 + $0x1a2] sm:$0xff]
        %v2203 = vld [vmem:[%s2051 + $0x1b2] sm:$0xff]
        %v2204 = vld [vmem:[%s2051 + $0x1e2] sm:$0xff]
        %v2205 = vld [vmem:[%s2051 + $0x1f2] sm:$0xff]
        %v2206 = vld [vmem:[%s2051 + $0x202] sm:$0xff]
        %v2207 = vld [vmem:[%s2051 + $0x212] sm:$0xff]
        %v2208 = vld [vmem:[%s2051 + $0x222] sm:$0xff]
        %v2209 = vld [vmem:[%s2051 + $0x232] sm:$0xff]
        %v2210 = vld [vmem:[%s2051 + $0x242] sm:$0xff]
        %v2211 = vld [vmem:[%s2051 + $0x252] sm:$0xff]
        %v2212 = vld [vmem:[%s2051 + $0x282] sm:$0xff]
        %v2213 = vld [vmem:[%s2051 + $0x292] sm:$0xff]
        %v2214 = vld [vmem:[%s2051 + $0x2a2] sm:$0xff]
        %v2215 = vld [vmem:[%s2051 + $0x2b2] sm:$0xff]
        %v2216 = vld [vmem:[%s2051 + $0x2c2] sm:$0xff]
        %v2217 = vld [vmem:[%s2051 + $0x2d2] sm:$0xff]
        %v2218 = vld [vmem:[%s2051 + $0x2e2] sm:$0xff]
        %v2219 = vld [vmem:[%s2051 + $0x2f2] sm:$0xff]
        %v2220 = vld [vmem:[%s2051 + $0x322] sm:$0xff]
        %v2221 = vld [vmem:[%s2051 + $0x332] sm:$0xff]
        %v2222 = vld [vmem:[%s2051 + $0x342] sm:$0xff]
        %v2223 = vld [vmem:[%s2051 + $0x352] sm:$0xff]
        %v2224 = vld [vmem:[%s2051 + $0x362] sm:$0xff]
        %v2225 = vld [vmem:[%s2051 + $0x372] sm:$0xff]
        %v2226 = vld [vmem:[%s2051 + $0x382] sm:$0xff]
        %v2227 = vld [vmem:[%s2051 + $0x392] sm:$0xff]
        %v2228 = vld [vmem:[%s2051 + $0x3c2] sm:$0xff]
        %v2229 = vld [vmem:[%s2051 + $0x3d2] sm:$0xff]
        %v2230 = vld [vmem:[%s2051 + $0x3e2] sm:$0xff]
        %v2231 = vld [vmem:[%s2051 + $0x3f2] sm:$0xff]
        %v2232 = vld [vmem:[%s2051 + $0x402] sm:$0xff]
        %v2233 = vld [vmem:[%s2051 + $0x412] sm:$0xff]
        %v2234 = vld [vmem:[%s2051 + $0x422] sm:$0xff]
        %v2235 = vld [vmem:[%s2051 + $0x432] sm:$0xff]
        %v2236 = vld [vmem:[%s2051 + $0x462] sm:$0xff]
        %v2237 = vld [vmem:[%s2051 + $0x472] sm:$0xff]
        %v2238 = vld [vmem:[%s2051 + $0x482] sm:$0xff]
        %v2239 = vld [vmem:[%s2051 + $0x492] sm:$0xff]
        %v2240 = vld [vmem:[%s2051 + $0x4a2] sm:$0xff]
        %v2241 = vld [vmem:[%s2051 + $0x4b2] sm:$0xff]
        %v2242 = vld [vmem:[%s2051 + $0x4c2] sm:$0xff]
        %v2243 = vld [vmem:[%s2051 + $0x4d2] sm:$0xff]
        %s2244 = scalar_lea.vmem [#allocation2], 352
        %v2245 = vld [vmem:[%s2244] sm:$0xff]
        %v2246 = vld [vmem:[%s2244 + $0x10] sm:$0xff]
        %v2247 = vld [vmem:[%s2244 + $0x20] sm:$0xff]
        %v2248 = vld [vmem:[%s2244 + $0x30] sm:$0xff]
        %v2249 = vld [vmem:[%s2244 + $0x40] sm:$0xff]
        %v2250 = vld [vmem:[%s2244 + $0x50] sm:$0xff]
        %v2251 = vld [vmem:[%s2244 + $0x60] sm:$0xff]
        %v2252 = vld [vmem:[%s2244 + $0x70] sm:$0xff]
        %v2253 = vld [vmem:[%s2244 + $0xa0] sm:$0xff]
        %v2254 = vld [vmem:[%s2244 + $0xb0] sm:$0xff]
        %v2255 = vld [vmem:[%s2244 + $0xc0] sm:$0xff]
        %v2256 = vld [vmem:[%s2244 + $0xd0] sm:$0xff]
        %v2257 = vld [vmem:[%s2244 + $0xe0] sm:$0xff]
        %v2258 = vld [vmem:[%s2244 + $0xf0] sm:$0xff]
        %v2259 = vld [vmem:[%s2244 + $0x100] sm:$0xff]
        %v2260 = vld [vmem:[%s2244 + $0x110] sm:$0xff]
        %v2261 = vld [vmem:[%s2244 + $0x140] sm:$0xff]
        %v2262 = vld [vmem:[%s2244 + $0x150] sm:$0xff]
        %v2263 = vld [vmem:[%s2244 + $0x160] sm:$0xff]
        %v2264 = vld [vmem:[%s2244 + $0x170] sm:$0xff]
        %v2265 = vld [vmem:[%s2244 + $0x180] sm:$0xff]
        %v2266 = vld [vmem:[%s2244 + $0x190] sm:$0xff]
        %v2267 = vld [vmem:[%s2244 + $0x1a0] sm:$0xff]
        %v2268 = vld [vmem:[%s2244 + $0x1b0] sm:$0xff]
        %v2269 = vld [vmem:[%s2244 + $0x1e0] sm:$0xff]
        %v2270 = vld [vmem:[%s2244 + $0x1f0] sm:$0xff]
        %v2271 = vld [vmem:[%s2244 + $0x200] sm:$0xff]
        %v2272 = vld [vmem:[%s2244 + $0x210] sm:$0xff]
        %v2273 = vld [vmem:[%s2244 + $0x220] sm:$0xff]
        %v2274 = vld [vmem:[%s2244 + $0x230] sm:$0xff]
        %v2275 = vld [vmem:[%s2244 + $0x240] sm:$0xff]
        %v2276 = vld [vmem:[%s2244 + $0x250] sm:$0xff]
        %v2277 = vld [vmem:[%s2244 + $0x280] sm:$0xff]
        %v2278 = vld [vmem:[%s2244 + $0x290] sm:$0xff]
        %v2279 = vld [vmem:[%s2244 + $0x2a0] sm:$0xff]
        %v2280 = vld [vmem:[%s2244 + $0x2b0] sm:$0xff]
        %v2281 = vld [vmem:[%s2244 + $0x2c0] sm:$0xff]
        %v2282 = vld [vmem:[%s2244 + $0x2d0] sm:$0xff]
        %v2283 = vld [vmem:[%s2244 + $0x2e0] sm:$0xff]
        %v2284 = vld [vmem:[%s2244 + $0x2f0] sm:$0xff]
        %v2285 = vld [vmem:[%s2244 + $0x320] sm:$0xff]
        %v2286 = vld [vmem:[%s2244 + $0x330] sm:$0xff]
        %v2287 = vld [vmem:[%s2244 + $0x340] sm:$0xff]
        %v2288 = vld [vmem:[%s2244 + $0x350] sm:$0xff]
        %v2289 = vld [vmem:[%s2244 + $0x360] sm:$0xff]
        %v2290 = vld [vmem:[%s2244 + $0x370] sm:$0xff]
        %v2291 = vld [vmem:[%s2244 + $0x380] sm:$0xff]
        %v2292 = vld [vmem:[%s2244 + $0x390] sm:$0xff]
        %v2293 = vld [vmem:[%s2244 + $0x3c0] sm:$0xff]
        %v2294 = vld [vmem:[%s2244 + $0x3d0] sm:$0xff]
        %v2295 = vld [vmem:[%s2244 + $0x3e0] sm:$0xff]
        %v2296 = vld [vmem:[%s2244 + $0x3f0] sm:$0xff]
        %v2297 = vld [vmem:[%s2244 + $0x400] sm:$0xff]
        %v2298 = vld [vmem:[%s2244 + $0x410] sm:$0xff]
        %v2299 = vld [vmem:[%s2244 + $0x420] sm:$0xff]
        %v2300 = vld [vmem:[%s2244 + $0x430] sm:$0xff]
        %v2301 = vld [vmem:[%s2244 + $0x460] sm:$0xff]
        %v2302 = vld [vmem:[%s2244 + $0x470] sm:$0xff]
        %v2303 = vld [vmem:[%s2244 + $0x480] sm:$0xff]
        %v2304 = vld [vmem:[%s2244 + $0x490] sm:$0xff]
        %v2305 = vld [vmem:[%s2244 + $0x4a0] sm:$0xff]
        %v2306 = vld [vmem:[%s2244 + $0x4b0] sm:$0xff]
        %v2307 = vld [vmem:[%s2244 + $0x4c0] sm:$0xff]
        %v2308 = vld [vmem:[%s2244 + $0x4d0] sm:$0xff]
        %v2309 = vld [vmem:[%s2244 + $0x1] sm:$0xff]
        %v2310 = vld [vmem:[%s2244 + $0x11] sm:$0xff]
        %v2311 = vld [vmem:[%s2244 + $0x21] sm:$0xff]
        %v2312 = vld [vmem:[%s2244 + $0x31] sm:$0xff]
        %v2313 = vld [vmem:[%s2244 + $0x41] sm:$0xff]
        %v2314 = vld [vmem:[%s2244 + $0x51] sm:$0xff]
        %v2315 = vld [vmem:[%s2244 + $0x61] sm:$0xff]
        %v2316 = vld [vmem:[%s2244 + $0x71] sm:$0xff]
        %v2317 = vld [vmem:[%s2244 + $0xa1] sm:$0xff]
        %v2318 = vld [vmem:[%s2244 + $0xb1] sm:$0xff]
        %v2319 = vld [vmem:[%s2244 + $0xc1] sm:$0xff]
        %v2320 = vld [vmem:[%s2244 + $0xd1] sm:$0xff]
        %v2321 = vld [vmem:[%s2244 + $0xe1] sm:$0xff]
        %v2322 = vld [vmem:[%s2244 + $0xf1] sm:$0xff]
        %v2323 = vld [vmem:[%s2244 + $0x101] sm:$0xff]
        %v2324 = vld [vmem:[%s2244 + $0x111] sm:$0xff]
        %v2325 = vld [vmem:[%s2244 + $0x141] sm:$0xff]
        %v2326 = vld [vmem:[%s2244 + $0x151] sm:$0xff]
        %v2327 = vld [vmem:[%s2244 + $0x161] sm:$0xff]
        %v2328 = vld [vmem:[%s2244 + $0x171] sm:$0xff]
        %v2329 = vld [vmem:[%s2244 + $0x181] sm:$0xff]
        %v2330 = vld [vmem:[%s2244 + $0x191] sm:$0xff]
        %v2331 = vld [vmem:[%s2244 + $0x1a1] sm:$0xff]
        %v2332 = vld [vmem:[%s2244 + $0x1b1] sm:$0xff]
        %v2333 = vld [vmem:[%s2244 + $0x1e1] sm:$0xff]
        %v2334 = vld [vmem:[%s2244 + $0x1f1] sm:$0xff]
        %v2335 = vld [vmem:[%s2244 + $0x201] sm:$0xff]
        %v2336 = vld [vmem:[%s2244 + $0x211] sm:$0xff]
        %v2337 = vld [vmem:[%s2244 + $0x221] sm:$0xff]
        %v2338 = vld [vmem:[%s2244 + $0x231] sm:$0xff]
        %v2339 = vld [vmem:[%s2244 + $0x241] sm:$0xff]
        %v2340 = vld [vmem:[%s2244 + $0x251] sm:$0xff]
        %v2341 = vld [vmem:[%s2244 + $0x281] sm:$0xff]
        %v2342 = vld [vmem:[%s2244 + $0x291] sm:$0xff]
        %v2343 = vld [vmem:[%s2244 + $0x2a1] sm:$0xff]
        %v2344 = vld [vmem:[%s2244 + $0x2b1] sm:$0xff]
        %v2345 = vld [vmem:[%s2244 + $0x2c1] sm:$0xff]
        %v2346 = vld [vmem:[%s2244 + $0x2d1] sm:$0xff]
        %v2347 = vld [vmem:[%s2244 + $0x2e1] sm:$0xff]
        %v2348 = vld [vmem:[%s2244 + $0x2f1] sm:$0xff]
        %v2349 = vld [vmem:[%s2244 + $0x321] sm:$0xff]
        %v2350 = vld [vmem:[%s2244 + $0x331] sm:$0xff]
        %v2351 = vld [vmem:[%s2244 + $0x341] sm:$0xff]
        %v2352 = vld [vmem:[%s2244 + $0x351] sm:$0xff]
        %v2353 = vld [vmem:[%s2244 + $0x361] sm:$0xff]
        %v2354 = vld [vmem:[%s2244 + $0x371] sm:$0xff]
        %v2355 = vld [vmem:[%s2244 + $0x381] sm:$0xff]
        %v2356 = vld [vmem:[%s2244 + $0x391] sm:$0xff]
        %v2357 = vld [vmem:[%s2244 + $0x3c1] sm:$0xff]
        %v2358 = vld [vmem:[%s2244 + $0x3d1] sm:$0xff]
        %v2359 = vld [vmem:[%s2244 + $0x3e1] sm:$0xff]
        %v2360 = vld [vmem:[%s2244 + $0x3f1] sm:$0xff]
        %v2361 = vld [vmem:[%s2244 + $0x401] sm:$0xff]
        %v2362 = vld [vmem:[%s2244 + $0x411] sm:$0xff]
        %v2363 = vld [vmem:[%s2244 + $0x421] sm:$0xff]
        %v2364 = vld [vmem:[%s2244 + $0x431] sm:$0xff]
        %v2365 = vld [vmem:[%s2244 + $0x461] sm:$0xff]
        %v2366 = vld [vmem:[%s2244 + $0x471] sm:$0xff]
        %v2367 = vld [vmem:[%s2244 + $0x481] sm:$0xff]
        %v2368 = vld [vmem:[%s2244 + $0x491] sm:$0xff]
        %v2369 = vld [vmem:[%s2244 + $0x4a1] sm:$0xff]
        %v2370 = vld [vmem:[%s2244 + $0x4b1] sm:$0xff]
        %v2371 = vld [vmem:[%s2244 + $0x4c1] sm:$0xff]
        %v2372 = vld [vmem:[%s2244 + $0x4d1] sm:$0xff]
        %v2373 = vld [vmem:[%s2244 + $0x2] sm:$0xff]
        %v2374 = vld [vmem:[%s2244 + $0x12] sm:$0xff]
        %v2375 = vld [vmem:[%s2244 + $0x22] sm:$0xff]
        %v2376 = vld [vmem:[%s2244 + $0x32] sm:$0xff]
        %v2377 = vld [vmem:[%s2244 + $0x42] sm:$0xff]
        %v2378 = vld [vmem:[%s2244 + $0x52] sm:$0xff]
        %v2379 = vld [vmem:[%s2244 + $0x62] sm:$0xff]
        %v2380 = vld [vmem:[%s2244 + $0x72] sm:$0xff]
        %v2381 = vld [vmem:[%s2244 + $0xa2] sm:$0xff]
        %v2382 = vld [vmem:[%s2244 + $0xb2] sm:$0xff]
        %v2383 = vld [vmem:[%s2244 + $0xc2] sm:$0xff]
        %v2384 = vld [vmem:[%s2244 + $0xd2] sm:$0xff]
        %v2385 = vld [vmem:[%s2244 + $0xe2] sm:$0xff]
        %v2386 = vld [vmem:[%s2244 + $0xf2] sm:$0xff]
        %v2387 = vld [vmem:[%s2244 + $0x102] sm:$0xff]
        %v2388 = vld [vmem:[%s2244 + $0x112] sm:$0xff]
        %v2389 = vld [vmem:[%s2244 + $0x142] sm:$0xff]
        %v2390 = vld [vmem:[%s2244 + $0x152] sm:$0xff]
        %v2391 = vld [vmem:[%s2244 + $0x162] sm:$0xff]
        %v2392 = vld [vmem:[%s2244 + $0x172] sm:$0xff]
        %v2393 = vld [vmem:[%s2244 + $0x182] sm:$0xff]
        %v2394 = vld [vmem:[%s2244 + $0x192] sm:$0xff]
        %v2395 = vld [vmem:[%s2244 + $0x1a2] sm:$0xff]
        %v2396 = vld [vmem:[%s2244 + $0x1b2] sm:$0xff]
        %v2397 = vld [vmem:[%s2244 + $0x1e2] sm:$0xff]
        %v2398 = vld [vmem:[%s2244 + $0x1f2] sm:$0xff]
        %v2399 = vld [vmem:[%s2244 + $0x202] sm:$0xff]
        %v2400 = vld [vmem:[%s2244 + $0x212] sm:$0xff]
        %v2401 = vld [vmem:[%s2244 + $0x222] sm:$0xff]
        %v2402 = vld [vmem:[%s2244 + $0x232] sm:$0xff]
        %v2403 = vld [vmem:[%s2244 + $0x242] sm:$0xff]
        %v2404 = vld [vmem:[%s2244 + $0x252] sm:$0xff]
        %v2405 = vld [vmem:[%s2244 + $0x282] sm:$0xff]
        %v2406 = vld [vmem:[%s2244 + $0x292] sm:$0xff]
        %v2407 = vld [vmem:[%s2244 + $0x2a2] sm:$0xff]
        %v2408 = vld [vmem:[%s2244 + $0x2b2] sm:$0xff]
        %v2409 = vld [vmem:[%s2244 + $0x2c2] sm:$0xff]
        %v2410 = vld [vmem:[%s2244 + $0x2d2] sm:$0xff]
        %v2411 = vld [vmem:[%s2244 + $0x2e2] sm:$0xff]
        %v2412 = vld [vmem:[%s2244 + $0x2f2] sm:$0xff]
        %v2413 = vld [vmem:[%s2244 + $0x322] sm:$0xff]
        %v2414 = vld [vmem:[%s2244 + $0x332] sm:$0xff]
        %v2415 = vld [vmem:[%s2244 + $0x342] sm:$0xff]
        %v2416 = vld [vmem:[%s2244 + $0x352] sm:$0xff]
        %v2417 = vld [vmem:[%s2244 + $0x362] sm:$0xff]
        %v2418 = vld [vmem:[%s2244 + $0x372] sm:$0xff]
        %v2419 = vld [vmem:[%s2244 + $0x382] sm:$0xff]
        %v2420 = vld [vmem:[%s2244 + $0x392] sm:$0xff]
        %v2421 = vld [vmem:[%s2244 + $0x3c2] sm:$0xff]
        %v2422 = vld [vmem:[%s2244 + $0x3d2] sm:$0xff]
        %v2423 = vld [vmem:[%s2244 + $0x3e2] sm:$0xff]
        %v2424 = vld [vmem:[%s2244 + $0x3f2] sm:$0xff]
        %v2425 = vld [vmem:[%s2244 + $0x402] sm:$0xff]
        %v2426 = vld [vmem:[%s2244 + $0x412] sm:$0xff]
        %v2427 = vld [vmem:[%s2244 + $0x422] sm:$0xff]
        %v2428 = vld [vmem:[%s2244 + $0x432] sm:$0xff]
        %v2429 = vld [vmem:[%s2244 + $0x462] sm:$0xff]
        %v2430 = vld [vmem:[%s2244 + $0x472] sm:$0xff]
        %v2431 = vld [vmem:[%s2244 + $0x482] sm:$0xff]
        %v2432 = vld [vmem:[%s2244 + $0x492] sm:$0xff]
        %v2433 = vld [vmem:[%s2244 + $0x4a2] sm:$0xff]
        %v2434 = vld [vmem:[%s2244 + $0x4b2] sm:$0xff]
        %v2435 = vld [vmem:[%s2244 + $0x4c2] sm:$0xff]
        %v2436 = vld [vmem:[%s2244 + $0x4d2] sm:$0xff]
        %2501 = vrot.lane.b32.xlu0 %v766, 8
        %v2502 = vpop.permute.xlu0 %2501
        %2503 = vrot.lane.b32.xlu0 %v767, 8
        %v2504 = vpop.permute.xlu0 %2503
        %2505 = vrot.lane.b32.xlu0 %v768, 8
        %v2506 = vpop.permute.xlu0 %2505
        %2507 = vrot.lane.b32.xlu0 %v769, 8
        %v2508 = vpop.permute.xlu0 %2507
        %2509 = vrot.lane.b32.xlu0 %v770, 8
        %v2510 = vpop.permute.xlu0 %2509
        %2511 = vrot.lane.b32.xlu0 %v771, 8
        %v2512 = vpop.permute.xlu0 %2511
        %2513 = vrot.lane.b32.xlu0 %v772, 8
        %v2514 = vpop.permute.xlu0 %2513
        %2515 = vrot.lane.b32.xlu0 %v773, 8
        %v2516 = vpop.permute.xlu0 %2515
        %2517 = vrot.lane.b32.xlu0 %v774, 8
        %v2518 = vpop.permute.xlu0 %2517
        %2519 = vrot.lane.b32.xlu0 %v775, 8
        %v2520 = vpop.permute.xlu0 %2519
        %2521 = vrot.lane.b32.xlu0 %v776, 8
        %v2522 = vpop.permute.xlu0 %2521
        %2523 = vrot.lane.b32.xlu0 %v777, 8
        %v2524 = vpop.permute.xlu0 %2523
        %2525 = vrot.lane.b32.xlu0 %v778, 8
        %v2526 = vpop.permute.xlu0 %2525
        %2527 = vrot.lane.b32.xlu0 %v779, 8
        %v2528 = vpop.permute.xlu0 %2527
        %2529 = vrot.lane.b32.xlu0 %v780, 8
        %v2530 = vpop.permute.xlu0 %2529
        %2531 = vrot.lane.b32.xlu0 %v781, 8
        %v2532 = vpop.permute.xlu0 %2531
        %2533 = vrot.lane.b32.xlu0 %v782, 8
        %v2534 = vpop.permute.xlu0 %2533
        %2535 = vrot.lane.b32.xlu0 %v783, 8
        %v2536 = vpop.permute.xlu0 %2535
        %2537 = vrot.lane.b32.xlu0 %v784, 8
        %v2538 = vpop.permute.xlu0 %2537
        %2539 = vrot.lane.b32.xlu0 %v785, 8
        %v2540 = vpop.permute.xlu0 %2539
        %2541 = vrot.lane.b32.xlu0 %v786, 8
        %v2542 = vpop.permute.xlu0 %2541
        %2543 = vrot.lane.b32.xlu0 %v787, 8
        %v2544 = vpop.permute.xlu0 %2543
        %2545 = vrot.lane.b32.xlu0 %v788, 8
        %v2546 = vpop.permute.xlu0 %2545
        %2547 = vrot.lane.b32.xlu0 %v789, 8
        %v2548 = vpop.permute.xlu0 %2547
        %2549 = vrot.lane.b32.xlu0 %v790, 8
        %v2550 = vpop.permute.xlu0 %2549
        %2551 = vrot.lane.b32.xlu0 %v791, 8
        %v2552 = vpop.permute.xlu0 %2551
        %2553 = vrot.lane.b32.xlu0 %v792, 8
        %v2554 = vpop.permute.xlu0 %2553
        %2555 = vrot.lane.b32.xlu0 %v793, 8
        %v2556 = vpop.permute.xlu0 %2555
        %2557 = vrot.lane.b32.xlu0 %v794, 8
        %v2558 = vpop.permute.xlu0 %2557
        %2559 = vrot.lane.b32.xlu0 %v795, 8
        %v2560 = vpop.permute.xlu0 %2559
        %2561 = vrot.lane.b32.xlu0 %v796, 8
        %v2562 = vpop.permute.xlu0 %2561
        %2563 = vrot.lane.b32.xlu0 %v797, 8
        %v2564 = vpop.permute.xlu0 %2563
        %2565 = vrot.lane.b32.xlu0 %v798, 8
        %v2566 = vpop.permute.xlu0 %2565
        %2567 = vrot.lane.b32.xlu0 %v799, 8
        %v2568 = vpop.permute.xlu0 %2567
        %2569 = vrot.lane.b32.xlu0 %v800, 8
        %v2570 = vpop.permute.xlu0 %2569
        %2571 = vrot.lane.b32.xlu0 %v801, 8
        %v2572 = vpop.permute.xlu0 %2571
        %2573 = vrot.lane.b32.xlu0 %v802, 8
        %v2574 = vpop.permute.xlu0 %2573
        %2575 = vrot.lane.b32.xlu0 %v803, 8
        %v2576 = vpop.permute.xlu0 %2575
        %2577 = vrot.lane.b32.xlu0 %v804, 8
        %v2578 = vpop.permute.xlu0 %2577
        %2579 = vrot.lane.b32.xlu0 %v805, 8
        %v2580 = vpop.permute.xlu0 %2579
        %2581 = vrot.lane.b32.xlu0 %v806, 8
        %v2582 = vpop.permute.xlu0 %2581
        %2583 = vrot.lane.b32.xlu0 %v807, 8
        %v2584 = vpop.permute.xlu0 %2583
        %2585 = vrot.lane.b32.xlu0 %v808, 8
        %v2586 = vpop.permute.xlu0 %2585
        %2587 = vrot.lane.b32.xlu0 %v809, 8
        %v2588 = vpop.permute.xlu0 %2587
        %2589 = vrot.lane.b32.xlu0 %v810, 8
        %v2590 = vpop.permute.xlu0 %2589
        %2591 = vrot.lane.b32.xlu0 %v811, 8
        %v2592 = vpop.permute.xlu0 %2591
        %2593 = vrot.lane.b32.xlu0 %v812, 8
        %v2594 = vpop.permute.xlu0 %2593
        %2595 = vrot.lane.b32.xlu0 %v813, 8
        %v2596 = vpop.permute.xlu0 %2595
        %2597 = vrot.lane.b32.xlu0 %v814, 8
        %v2598 = vpop.permute.xlu0 %2597
        %2599 = vrot.lane.b32.xlu0 %v815, 8
        %v2600 = vpop.permute.xlu0 %2599
        %2601 = vrot.lane.b32.xlu0 %v816, 8
        %v2602 = vpop.permute.xlu0 %2601
        %2603 = vrot.lane.b32.xlu0 %v817, 8
        %v2604 = vpop.permute.xlu0 %2603
        %2605 = vrot.lane.b32.xlu0 %v818, 8
        %v2606 = vpop.permute.xlu0 %2605
        %2607 = vrot.lane.b32.xlu0 %v819, 8
        %v2608 = vpop.permute.xlu0 %2607
        %2609 = vrot.lane.b32.xlu0 %v820, 8
        %v2610 = vpop.permute.xlu0 %2609
        %2611 = vrot.lane.b32.xlu0 %v821, 8
        %v2612 = vpop.permute.xlu0 %2611
        %2613 = vrot.lane.b32.xlu0 %v822, 8
        %v2614 = vpop.permute.xlu0 %2613
        %2615 = vrot.lane.b32.xlu0 %v823, 8
        %v2616 = vpop.permute.xlu0 %2615
        %2617 = vrot.lane.b32.xlu0 %v824, 8
        %v2618 = vpop.permute.xlu0 %2617
        %2619 = vrot.lane.b32.xlu0 %v825, 8
        %v2620 = vpop.permute.xlu0 %2619
        %2621 = vrot.lane.b32.xlu0 %v826, 8
        %v2622 = vpop.permute.xlu0 %2621
        %2623 = vrot.lane.b32.xlu0 %v827, 8
        %v2624 = vpop.permute.xlu0 %2623
        %2625 = vrot.lane.b32.xlu0 %v828, 8
        %v2626 = vpop.permute.xlu0 %2625
        %2627 = vrot.lane.b32.xlu0 %v829, 8
        %v2628 = vpop.permute.xlu0 %2627
        %2757 = vrot.lane.b32.xlu0 %v830, 16
        %v2758 = vpop.permute.xlu0 %2757
        %2759 = vrot.lane.b32.xlu0 %v831, 16
        %v2760 = vpop.permute.xlu0 %2759
        %2761 = vrot.lane.b32.xlu0 %v832, 16
        %v2762 = vpop.permute.xlu0 %2761
        %2763 = vrot.lane.b32.xlu0 %v833, 16
        %v2764 = vpop.permute.xlu0 %2763
        %2765 = vrot.lane.b32.xlu0 %v834, 16
        %v2766 = vpop.permute.xlu0 %2765
        %2767 = vrot.lane.b32.xlu0 %v835, 16
        %v2768 = vpop.permute.xlu0 %2767
        %2769 = vrot.lane.b32.xlu0 %v836, 16
        %v2770 = vpop.permute.xlu0 %2769
        %2771 = vrot.lane.b32.xlu0 %v837, 16
        %v2772 = vpop.permute.xlu0 %2771
        %2773 = vrot.lane.b32.xlu0 %v838, 16
        %v2774 = vpop.permute.xlu0 %2773
        %2775 = vrot.lane.b32.xlu0 %v839, 16
        %v2776 = vpop.permute.xlu0 %2775
        %2777 = vrot.lane.b32.xlu0 %v840, 16
        %v2778 = vpop.permute.xlu0 %2777
        %2779 = vrot.lane.b32.xlu0 %v841, 16
        %v2780 = vpop.permute.xlu0 %2779
        %2781 = vrot.lane.b32.xlu0 %v842, 16
        %v2782 = vpop.permute.xlu0 %2781
        %2783 = vrot.lane.b32.xlu0 %v843, 16
        %v2784 = vpop.permute.xlu0 %2783
        %2785 = vrot.lane.b32.xlu0 %v844, 16
        %v2786 = vpop.permute.xlu0 %2785
        %2787 = vrot.lane.b32.xlu0 %v845, 16
        %v2788 = vpop.permute.xlu0 %2787
        %2789 = vrot.lane.b32.xlu0 %v846, 16
        %v2790 = vpop.permute.xlu0 %2789
        %2791 = vrot.lane.b32.xlu0 %v847, 16
        %v2792 = vpop.permute.xlu0 %2791
        %2793 = vrot.lane.b32.xlu0 %v848, 16
        %v2794 = vpop.permute.xlu0 %2793
        %2795 = vrot.lane.b32.xlu0 %v849, 16
        %v2796 = vpop.permute.xlu0 %2795
        %2797 = vrot.lane.b32.xlu0 %v850, 16
        %v2798 = vpop.permute.xlu0 %2797
        %2799 = vrot.lane.b32.xlu0 %v851, 16
        %v2800 = vpop.permute.xlu0 %2799
        %2801 = vrot.lane.b32.xlu0 %v852, 16
        %v2802 = vpop.permute.xlu0 %2801
        %2803 = vrot.lane.b32.xlu0 %v853, 16
        %v2804 = vpop.permute.xlu0 %2803
        %2805 = vrot.lane.b32.xlu0 %v854, 16
        %v2806 = vpop.permute.xlu0 %2805
        %2807 = vrot.lane.b32.xlu0 %v855, 16
        %v2808 = vpop.permute.xlu0 %2807
        %2809 = vrot.lane.b32.xlu0 %v856, 16
        %v2810 = vpop.permute.xlu0 %2809
        %2811 = vrot.lane.b32.xlu0 %v857, 16
        %v2812 = vpop.permute.xlu0 %2811
        %2813 = vrot.lane.b32.xlu0 %v858, 16
        %v2814 = vpop.permute.xlu0 %2813
        %2815 = vrot.lane.b32.xlu0 %v859, 16
        %v2816 = vpop.permute.xlu0 %2815
        %2817 = vrot.lane.b32.xlu0 %v860, 16
        %v2818 = vpop.permute.xlu0 %2817
        %2819 = vrot.lane.b32.xlu0 %v861, 16
        %v2820 = vpop.permute.xlu0 %2819
        %2821 = vrot.lane.b32.xlu0 %v862, 16
        %v2822 = vpop.permute.xlu0 %2821
        %2823 = vrot.lane.b32.xlu0 %v863, 16
        %v2824 = vpop.permute.xlu0 %2823
        %2825 = vrot.lane.b32.xlu0 %v864, 16
        %v2826 = vpop.permute.xlu0 %2825
        %2827 = vrot.lane.b32.xlu0 %v865, 16
        %v2828 = vpop.permute.xlu0 %2827
        %2829 = vrot.lane.b32.xlu0 %v866, 16
        %v2830 = vpop.permute.xlu0 %2829
        %2831 = vrot.lane.b32.xlu0 %v867, 16
        %v2832 = vpop.permute.xlu0 %2831
        %2833 = vrot.lane.b32.xlu0 %v868, 16
        %v2834 = vpop.permute.xlu0 %2833
        %2835 = vrot.lane.b32.xlu0 %v869, 16
        %v2836 = vpop.permute.xlu0 %2835
        %2837 = vrot.lane.b32.xlu0 %v870, 16
        %v2838 = vpop.permute.xlu0 %2837
        %2839 = vrot.lane.b32.xlu0 %v871, 16
        %v2840 = vpop.permute.xlu0 %2839
        %2841 = vrot.lane.b32.xlu0 %v872, 16
        %v2842 = vpop.permute.xlu0 %2841
        %2843 = vrot.lane.b32.xlu0 %v873, 16
        %v2844 = vpop.permute.xlu0 %2843
        %2845 = vrot.lane.b32.xlu0 %v874, 16
        %v2846 = vpop.permute.xlu0 %2845
        %2847 = vrot.lane.b32.xlu0 %v875, 16
        %v2848 = vpop.permute.xlu0 %2847
        %2849 = vrot.lane.b32.xlu0 %v876, 16
        %v2850 = vpop.permute.xlu0 %2849
        %2851 = vrot.lane.b32.xlu0 %v877, 16
        %v2852 = vpop.permute.xlu0 %2851
        %2853 = vrot.lane.b32.xlu0 %v878, 16
        %v2854 = vpop.permute.xlu0 %2853
        %2855 = vrot.lane.b32.xlu0 %v879, 16
        %v2856 = vpop.permute.xlu0 %2855
        %2857 = vrot.lane.b32.xlu0 %v880, 16
        %v2858 = vpop.permute.xlu0 %2857
        %2859 = vrot.lane.b32.xlu0 %v881, 16
        %v2860 = vpop.permute.xlu0 %2859
        %2861 = vrot.lane.b32.xlu0 %v882, 16
        %v2862 = vpop.permute.xlu0 %2861
        %2863 = vrot.lane.b32.xlu0 %v883, 16
        %v2864 = vpop.permute.xlu0 %2863
        %2865 = vrot.lane.b32.xlu0 %v884, 16
        %v2866 = vpop.permute.xlu0 %2865
        %2867 = vrot.lane.b32.xlu0 %v885, 16
        %v2868 = vpop.permute.xlu0 %2867
        %2869 = vrot.lane.b32.xlu0 %v886, 16
        %v2870 = vpop.permute.xlu0 %2869
        %2871 = vrot.lane.b32.xlu0 %v887, 16
        %v2872 = vpop.permute.xlu0 %2871
        %2873 = vrot.lane.b32.xlu0 %v888, 16
        %v2874 = vpop.permute.xlu0 %2873
        %2875 = vrot.lane.b32.xlu0 %v889, 16
        %v2876 = vpop.permute.xlu0 %2875
        %2877 = vrot.lane.b32.xlu0 %v890, 16
        %v2878 = vpop.permute.xlu0 %2877
        %2879 = vrot.lane.b32.xlu0 %v891, 16
        %v2880 = vpop.permute.xlu0 %2879
        %2881 = vrot.lane.b32.xlu0 %v892, 16
        %v2882 = vpop.permute.xlu0 %2881
        %2883 = vrot.lane.b32.xlu0 %v893, 16
        %v2884 = vpop.permute.xlu0 %2883
        %3013 = vrot.lane.b32.xlu0 %v895, 24
        %v3014 = vpop.permute.xlu0 %3013
        %3015 = vrot.lane.b32.xlu0 %v896, 24
        %v3016 = vpop.permute.xlu0 %3015
        %3017 = vrot.lane.b32.xlu0 %v897, 24
        %v3018 = vpop.permute.xlu0 %3017
        %3019 = vrot.lane.b32.xlu0 %v898, 24
        %v3020 = vpop.permute.xlu0 %3019
        %3021 = vrot.lane.b32.xlu0 %v899, 24
        %v3022 = vpop.permute.xlu0 %3021
        %3023 = vrot.lane.b32.xlu0 %v900, 24
        %v3024 = vpop.permute.xlu0 %3023
        %3025 = vrot.lane.b32.xlu0 %v901, 24
        %v3026 = vpop.permute.xlu0 %3025
        %3027 = vrot.lane.b32.xlu0 %v902, 24
        %v3028 = vpop.permute.xlu0 %3027
        %3029 = vrot.lane.b32.xlu0 %v903, 24
        %v3030 = vpop.permute.xlu0 %3029
        %3031 = vrot.lane.b32.xlu0 %v904, 24
        %v3032 = vpop.permute.xlu0 %3031
        %3033 = vrot.lane.b32.xlu0 %v905, 24
        %v3034 = vpop.permute.xlu0 %3033
        %3035 = vrot.lane.b32.xlu0 %v906, 24
        %v3036 = vpop.permute.xlu0 %3035
        %3037 = vrot.lane.b32.xlu0 %v907, 24
        %v3038 = vpop.permute.xlu0 %3037
        %3039 = vrot.lane.b32.xlu0 %v908, 24
        %v3040 = vpop.permute.xlu0 %3039
        %3041 = vrot.lane.b32.xlu0 %v909, 24
        %v3042 = vpop.permute.xlu0 %3041
        %3043 = vrot.lane.b32.xlu0 %v910, 24
        %v3044 = vpop.permute.xlu0 %3043
        %3045 = vrot.lane.b32.xlu0 %v911, 24
        %v3046 = vpop.permute.xlu0 %3045
        %3047 = vrot.lane.b32.xlu0 %v912, 24
        %v3048 = vpop.permute.xlu0 %3047
        %3049 = vrot.lane.b32.xlu0 %v913, 24
        %v3050 = vpop.permute.xlu0 %3049
        %3051 = vrot.lane.b32.xlu0 %v914, 24
        %v3052 = vpop.permute.xlu0 %3051
        %3053 = vrot.lane.b32.xlu0 %v915, 24
        %v3054 = vpop.permute.xlu0 %3053
        %3055 = vrot.lane.b32.xlu0 %v916, 24
        %v3056 = vpop.permute.xlu0 %3055
        %3057 = vrot.lane.b32.xlu0 %v917, 24
        %v3058 = vpop.permute.xlu0 %3057
        %3059 = vrot.lane.b32.xlu0 %v918, 24
        %v3060 = vpop.permute.xlu0 %3059
        %3061 = vrot.lane.b32.xlu0 %v919, 24
        %v3062 = vpop.permute.xlu0 %3061
        %3063 = vrot.lane.b32.xlu0 %v920, 24
        %v3064 = vpop.permute.xlu0 %3063
        %3065 = vrot.lane.b32.xlu0 %v921, 24
        %v3066 = vpop.permute.xlu0 %3065
        %3067 = vrot.lane.b32.xlu0 %v922, 24
        %v3068 = vpop.permute.xlu0 %3067
        %3069 = vrot.lane.b32.xlu0 %v923, 24
        %v3070 = vpop.permute.xlu0 %3069
        %3071 = vrot.lane.b32.xlu0 %v924, 24
        %v3072 = vpop.permute.xlu0 %3071
        %3073 = vrot.lane.b32.xlu0 %v925, 24
        %v3074 = vpop.permute.xlu0 %3073
        %3075 = vrot.lane.b32.xlu0 %v926, 24
        %v3076 = vpop.permute.xlu0 %3075
        %3077 = vrot.lane.b32.xlu0 %v927, 24
        %v3078 = vpop.permute.xlu0 %3077
        %3079 = vrot.lane.b32.xlu0 %v928, 24
        %v3080 = vpop.permute.xlu0 %3079
        %3081 = vrot.lane.b32.xlu0 %v929, 24
        %v3082 = vpop.permute.xlu0 %3081
        %3083 = vrot.lane.b32.xlu0 %v930, 24
        %v3084 = vpop.permute.xlu0 %3083
        %3085 = vrot.lane.b32.xlu0 %v931, 24
        %v3086 = vpop.permute.xlu0 %3085
        %3087 = vrot.lane.b32.xlu0 %v932, 24
        %v3088 = vpop.permute.xlu0 %3087
        %3089 = vrot.lane.b32.xlu0 %v933, 24
        %v3090 = vpop.permute.xlu0 %3089
        %3091 = vrot.lane.b32.xlu0 %v934, 24
        %v3092 = vpop.permute.xlu0 %3091
        %3093 = vrot.lane.b32.xlu0 %v935, 24
        %v3094 = vpop.permute.xlu0 %3093
        %3095 = vrot.lane.b32.xlu0 %v936, 24
        %v3096 = vpop.permute.xlu0 %3095
        %3097 = vrot.lane.b32.xlu0 %v937, 24
        %v3098 = vpop.permute.xlu0 %3097
        %3099 = vrot.lane.b32.xlu0 %v938, 24
        %v3100 = vpop.permute.xlu0 %3099
        %3101 = vrot.lane.b32.xlu0 %v939, 24
        %v3102 = vpop.permute.xlu0 %3101
        %3103 = vrot.lane.b32.xlu0 %v940, 24
        %v3104 = vpop.permute.xlu0 %3103
        %3105 = vrot.lane.b32.xlu0 %v941, 24
        %v3106 = vpop.permute.xlu0 %3105
        %3107 = vrot.lane.b32.xlu0 %v942, 24
        %v3108 = vpop.permute.xlu0 %3107
        %3109 = vrot.lane.b32.xlu0 %v943, 24
        %v3110 = vpop.permute.xlu0 %3109
        %3111 = vrot.lane.b32.xlu0 %v944, 24
        %v3112 = vpop.permute.xlu0 %3111
        %3113 = vrot.lane.b32.xlu0 %v945, 24
        %v3114 = vpop.permute.xlu0 %3113
        %3115 = vrot.lane.b32.xlu0 %v946, 24
        %v3116 = vpop.permute.xlu0 %3115
        %3117 = vrot.lane.b32.xlu0 %v947, 24
        %v3118 = vpop.permute.xlu0 %3117
        %3119 = vrot.lane.b32.xlu0 %v948, 24
        %v3120 = vpop.permute.xlu0 %3119
        %3121 = vrot.lane.b32.xlu0 %v949, 24
        %v3122 = vpop.permute.xlu0 %3121
        %3123 = vrot.lane.b32.xlu0 %v950, 24
        %v3124 = vpop.permute.xlu0 %3123
        %3125 = vrot.lane.b32.xlu0 %v951, 24
        %v3126 = vpop.permute.xlu0 %3125
        %3127 = vrot.lane.b32.xlu0 %v952, 24
        %v3128 = vpop.permute.xlu0 %3127
        %3129 = vrot.lane.b32.xlu0 %v953, 24
        %v3130 = vpop.permute.xlu0 %3129
        %3131 = vrot.lane.b32.xlu0 %v954, 24
        %v3132 = vpop.permute.xlu0 %3131
        %3133 = vrot.lane.b32.xlu0 %v955, 24
        %v3134 = vpop.permute.xlu0 %3133
        %3135 = vrot.lane.b32.xlu0 %v956, 24
        %v3136 = vpop.permute.xlu0 %3135
        %3137 = vrot.lane.b32.xlu0 %v957, 24
        %v3138 = vpop.permute.xlu0 %3137
        %3139 = vrot.lane.b32.xlu0 %v958, 24
        %v3140 = vpop.permute.xlu0 %3139
        %3269 = vrot.lane.b32.xlu0 %v959, 32
        %v3270 = vpop.permute.xlu0 %3269
        %3271 = vrot.lane.b32.xlu0 %v960, 32
        %v3272 = vpop.permute.xlu0 %3271
        %3273 = vrot.lane.b32.xlu0 %v961, 32
        %v3274 = vpop.permute.xlu0 %3273
        %3275 = vrot.lane.b32.xlu0 %v962, 32
        %v3276 = vpop.permute.xlu0 %3275
        %3277 = vrot.lane.b32.xlu0 %v963, 32
        %v3278 = vpop.permute.xlu0 %3277
        %3279 = vrot.lane.b32.xlu0 %v964, 32
        %v3280 = vpop.permute.xlu0 %3279
        %3281 = vrot.lane.b32.xlu0 %v965, 32
        %v3282 = vpop.permute.xlu0 %3281
        %3283 = vrot.lane.b32.xlu0 %v966, 32
        %v3284 = vpop.permute.xlu0 %3283
        %3285 = vrot.lane.b32.xlu0 %v967, 32
        %v3286 = vpop.permute.xlu0 %3285
        %3287 = vrot.lane.b32.xlu0 %v968, 32
        %v3288 = vpop.permute.xlu0 %3287
        %3289 = vrot.lane.b32.xlu0 %v969, 32
        %v3290 = vpop.permute.xlu0 %3289
        %3291 = vrot.lane.b32.xlu0 %v970, 32
        %v3292 = vpop.permute.xlu0 %3291
        %3293 = vrot.lane.b32.xlu0 %v971, 32
        %v3294 = vpop.permute.xlu0 %3293
        %3295 = vrot.lane.b32.xlu0 %v972, 32
        %v3296 = vpop.permute.xlu0 %3295
        %3297 = vrot.lane.b32.xlu0 %v973, 32
        %v3298 = vpop.permute.xlu0 %3297
        %3299 = vrot.lane.b32.xlu0 %v974, 32
        %v3300 = vpop.permute.xlu0 %3299
        %3301 = vrot.lane.b32.xlu0 %v975, 32
        %v3302 = vpop.permute.xlu0 %3301
        %3303 = vrot.lane.b32.xlu0 %v976, 32
        %v3304 = vpop.permute.xlu0 %3303
        %3305 = vrot.lane.b32.xlu0 %v977, 32
        %v3306 = vpop.permute.xlu0 %3305
        %3307 = vrot.lane.b32.xlu0 %v978, 32
        %v3308 = vpop.permute.xlu0 %3307
        %3309 = vrot.lane.b32.xlu0 %v979, 32
        %v3310 = vpop.permute.xlu0 %3309
        %3311 = vrot.lane.b32.xlu0 %v980, 32
        %v3312 = vpop.permute.xlu0 %3311
        %3313 = vrot.lane.b32.xlu0 %v981, 32
        %v3314 = vpop.permute.xlu0 %3313
        %3315 = vrot.lane.b32.xlu0 %v982, 32
        %v3316 = vpop.permute.xlu0 %3315
        %3317 = vrot.lane.b32.xlu0 %v983, 32
        %v3318 = vpop.permute.xlu0 %3317
        %3319 = vrot.lane.b32.xlu0 %v984, 32
        %v3320 = vpop.permute.xlu0 %3319
        %3321 = vrot.lane.b32.xlu0 %v985, 32
        %v3322 = vpop.permute.xlu0 %3321
        %3323 = vrot.lane.b32.xlu0 %v986, 32
        %v3324 = vpop.permute.xlu0 %3323
        %3325 = vrot.lane.b32.xlu0 %v987, 32
        %v3326 = vpop.permute.xlu0 %3325
        %3327 = vrot.lane.b32.xlu0 %v988, 32
        %v3328 = vpop.permute.xlu0 %3327
        %3329 = vrot.lane.b32.xlu0 %v989, 32
        %v3330 = vpop.permute.xlu0 %3329
        %3331 = vrot.lane.b32.xlu0 %v990, 32
        %v3332 = vpop.permute.xlu0 %3331
        %3333 = vrot.lane.b32.xlu0 %v991, 32
        %v3334 = vpop.permute.xlu0 %3333
        %3335 = vrot.lane.b32.xlu0 %v992, 32
        %v3336 = vpop.permute.xlu0 %3335
        %3337 = vrot.lane.b32.xlu0 %v993, 32
        %v3338 = vpop.permute.xlu0 %3337
        %3339 = vrot.lane.b32.xlu0 %v994, 32
        %v3340 = vpop.permute.xlu0 %3339
        %3341 = vrot.lane.b32.xlu0 %v995, 32
        %v3342 = vpop.permute.xlu0 %3341
        %3343 = vrot.lane.b32.xlu0 %v996, 32
        %v3344 = vpop.permute.xlu0 %3343
        %3345 = vrot.lane.b32.xlu0 %v997, 32
        %v3346 = vpop.permute.xlu0 %3345
        %3347 = vrot.lane.b32.xlu0 %v998, 32
        %v3348 = vpop.permute.xlu0 %3347
        %3349 = vrot.lane.b32.xlu0 %v999, 32
        %v3350 = vpop.permute.xlu0 %3349
        %3351 = vrot.lane.b32.xlu0 %v1000, 32
        %v3352 = vpop.permute.xlu0 %3351
        %3353 = vrot.lane.b32.xlu0 %v1001, 32
        %v3354 = vpop.permute.xlu0 %3353
        %3355 = vrot.lane.b32.xlu0 %v1002, 32
        %v3356 = vpop.permute.xlu0 %3355
        %3357 = vrot.lane.b32.xlu0 %v1003, 32
        %v3358 = vpop.permute.xlu0 %3357
        %3359 = vrot.lane.b32.xlu0 %v1004, 32
        %v3360 = vpop.permute.xlu0 %3359
        %3361 = vrot.lane.b32.xlu0 %v1005, 32
        %v3362 = vpop.permute.xlu0 %3361
        %3363 = vrot.lane.b32.xlu0 %v1006, 32
        %v3364 = vpop.permute.xlu0 %3363
        %3365 = vrot.lane.b32.xlu0 %v1007, 32
        %v3366 = vpop.permute.xlu0 %3365
        %3367 = vrot.lane.b32.xlu0 %v1008, 32
        %v3368 = vpop.permute.xlu0 %3367
        %3369 = vrot.lane.b32.xlu0 %v1009, 32
        %v3370 = vpop.permute.xlu0 %3369
        %3371 = vrot.lane.b32.xlu0 %v1010, 32
        %v3372 = vpop.permute.xlu0 %3371
        %3373 = vrot.lane.b32.xlu0 %v1011, 32
        %v3374 = vpop.permute.xlu0 %3373
        %3375 = vrot.lane.b32.xlu0 %v1012, 32
        %v3376 = vpop.permute.xlu0 %3375
        %3377 = vrot.lane.b32.xlu0 %v1013, 32
        %v3378 = vpop.permute.xlu0 %3377
        %3379 = vrot.lane.b32.xlu0 %v1014, 32
        %v3380 = vpop.permute.xlu0 %3379
        %3381 = vrot.lane.b32.xlu0 %v1015, 32
        %v3382 = vpop.permute.xlu0 %3381
        %3383 = vrot.lane.b32.xlu0 %v1016, 32
        %v3384 = vpop.permute.xlu0 %3383
        %3385 = vrot.lane.b32.xlu0 %v1017, 32
        %v3386 = vpop.permute.xlu0 %3385
        %3387 = vrot.lane.b32.xlu0 %v1018, 32
        %v3388 = vpop.permute.xlu0 %3387
        %3389 = vrot.lane.b32.xlu0 %v1019, 32
        %v3390 = vpop.permute.xlu0 %3389
        %3391 = vrot.lane.b32.xlu0 %v1020, 32
        %v3392 = vpop.permute.xlu0 %3391
        %3393 = vrot.lane.b32.xlu0 %v1021, 32
        %v3394 = vpop.permute.xlu0 %3393
        %3395 = vrot.lane.b32.xlu0 %v1022, 32
        %v3396 = vpop.permute.xlu0 %3395
        %3525 = vrot.lane.b32.xlu0 %v1023, 40
        %v3526 = vpop.permute.xlu0 %3525
        %3527 = vrot.lane.b32.xlu0 %v1024, 40
        %v3528 = vpop.permute.xlu0 %3527
        %3529 = vrot.lane.b32.xlu0 %v1025, 40
        %v3530 = vpop.permute.xlu0 %3529
        %3531 = vrot.lane.b32.xlu0 %v1026, 40
        %v3532 = vpop.permute.xlu0 %3531
        %3533 = vrot.lane.b32.xlu0 %v1027, 40
        %v3534 = vpop.permute.xlu0 %3533
        %3535 = vrot.lane.b32.xlu0 %v1028, 40
        %v3536 = vpop.permute.xlu0 %3535
        %3537 = vrot.lane.b32.xlu0 %v1029, 40
        %v3538 = vpop.permute.xlu0 %3537
        %3539 = vrot.lane.b32.xlu0 %v1030, 40
        %v3540 = vpop.permute.xlu0 %3539
        %3541 = vrot.lane.b32.xlu0 %v1031, 40
        %v3542 = vpop.permute.xlu0 %3541
        %3543 = vrot.lane.b32.xlu0 %v1032, 40
        %v3544 = vpop.permute.xlu0 %3543
        %3545 = vrot.lane.b32.xlu0 %v1033, 40
        %v3546 = vpop.permute.xlu0 %3545
        %3547 = vrot.lane.b32.xlu0 %v1034, 40
        %v3548 = vpop.permute.xlu0 %3547
        %3549 = vrot.lane.b32.xlu0 %v1035, 40
        %v3550 = vpop.permute.xlu0 %3549
        %3551 = vrot.lane.b32.xlu0 %v1036, 40
        %v3552 = vpop.permute.xlu0 %3551
        %3553 = vrot.lane.b32.xlu0 %v1037, 40
        %v3554 = vpop.permute.xlu0 %3553
        %3555 = vrot.lane.b32.xlu0 %v1038, 40
        %v3556 = vpop.permute.xlu0 %3555
        %3557 = vrot.lane.b32.xlu0 %v1039, 40
        %v3558 = vpop.permute.xlu0 %3557
        %3559 = vrot.lane.b32.xlu0 %v1040, 40
        %v3560 = vpop.permute.xlu0 %3559
        %3561 = vrot.lane.b32.xlu0 %v1041, 40
        %v3562 = vpop.permute.xlu0 %3561
        %3563 = vrot.lane.b32.xlu0 %v1042, 40
        %v3564 = vpop.permute.xlu0 %3563
        %3565 = vrot.lane.b32.xlu0 %v1043, 40
        %v3566 = vpop.permute.xlu0 %3565
        %3567 = vrot.lane.b32.xlu0 %v1044, 40
        %v3568 = vpop.permute.xlu0 %3567
        %3569 = vrot.lane.b32.xlu0 %v1045, 40
        %v3570 = vpop.permute.xlu0 %3569
        %3571 = vrot.lane.b32.xlu0 %v1046, 40
        %v3572 = vpop.permute.xlu0 %3571
        %3573 = vrot.lane.b32.xlu0 %v1047, 40
        %v3574 = vpop.permute.xlu0 %3573
        %3575 = vrot.lane.b32.xlu0 %v1048, 40
        %v3576 = vpop.permute.xlu0 %3575
        %3577 = vrot.lane.b32.xlu0 %v1049, 40
        %v3578 = vpop.permute.xlu0 %3577
        %3579 = vrot.lane.b32.xlu0 %v1050, 40
        %v3580 = vpop.permute.xlu0 %3579
        %3581 = vrot.lane.b32.xlu0 %v1051, 40
        %v3582 = vpop.permute.xlu0 %3581
        %3583 = vrot.lane.b32.xlu0 %v1052, 40
        %v3584 = vpop.permute.xlu0 %3583
        %3585 = vrot.lane.b32.xlu0 %v1053, 40
        %v3586 = vpop.permute.xlu0 %3585
        %3587 = vrot.lane.b32.xlu0 %v1054, 40
        %v3588 = vpop.permute.xlu0 %3587
        %3589 = vrot.lane.b32.xlu0 %v1055, 40
        %v3590 = vpop.permute.xlu0 %3589
        %3591 = vrot.lane.b32.xlu0 %v1056, 40
        %v3592 = vpop.permute.xlu0 %3591
        %3593 = vrot.lane.b32.xlu0 %v1057, 40
        %v3594 = vpop.permute.xlu0 %3593
        %3595 = vrot.lane.b32.xlu0 %v1058, 40
        %v3596 = vpop.permute.xlu0 %3595
        %3597 = vrot.lane.b32.xlu0 %v1059, 40
        %v3598 = vpop.permute.xlu0 %3597
        %3599 = vrot.lane.b32.xlu0 %v1060, 40
        %v3600 = vpop.permute.xlu0 %3599
        %3601 = vrot.lane.b32.xlu0 %v1061, 40
        %v3602 = vpop.permute.xlu0 %3601
        %3603 = vrot.lane.b32.xlu0 %v1062, 40
        %v3604 = vpop.permute.xlu0 %3603
        %3605 = vrot.lane.b32.xlu0 %v1063, 40
        %v3606 = vpop.permute.xlu0 %3605
        %3607 = vrot.lane.b32.xlu0 %v1064, 40
        %v3608 = vpop.permute.xlu0 %3607
        %3609 = vrot.lane.b32.xlu0 %v1065, 40
        %v3610 = vpop.permute.xlu0 %3609
        %3611 = vrot.lane.b32.xlu0 %v1066, 40
        %v3612 = vpop.permute.xlu0 %3611
        %3613 = vrot.lane.b32.xlu0 %v1067, 40
        %v3614 = vpop.permute.xlu0 %3613
        %3615 = vrot.lane.b32.xlu0 %v1068, 40
        %v3616 = vpop.permute.xlu0 %3615
        %3617 = vrot.lane.b32.xlu0 %v1069, 40
        %v3618 = vpop.permute.xlu0 %3617
        %3619 = vrot.lane.b32.xlu0 %v1070, 40
        %v3620 = vpop.permute.xlu0 %3619
        %3621 = vrot.lane.b32.xlu0 %v1071, 40
        %v3622 = vpop.permute.xlu0 %3621
        %3623 = vrot.lane.b32.xlu0 %v1072, 40
        %v3624 = vpop.permute.xlu0 %3623
        %3625 = vrot.lane.b32.xlu0 %v1073, 40
        %v3626 = vpop.permute.xlu0 %3625
        %3627 = vrot.lane.b32.xlu0 %v1074, 40
        %v3628 = vpop.permute.xlu0 %3627
        %3629 = vrot.lane.b32.xlu0 %v1075, 40
        %v3630 = vpop.permute.xlu0 %3629
        %3631 = vrot.lane.b32.xlu0 %v1076, 40
        %v3632 = vpop.permute.xlu0 %3631
        %3633 = vrot.lane.b32.xlu0 %v1077, 40
        %v3634 = vpop.permute.xlu0 %3633
        %3635 = vrot.lane.b32.xlu0 %v1078, 40
        %v3636 = vpop.permute.xlu0 %3635
        %3637 = vrot.lane.b32.xlu0 %v1079, 40
        %v3638 = vpop.permute.xlu0 %3637
        %3639 = vrot.lane.b32.xlu0 %v1080, 40
        %v3640 = vpop.permute.xlu0 %3639
        %3641 = vrot.lane.b32.xlu0 %v1081, 40
        %v3642 = vpop.permute.xlu0 %3641
        %3643 = vrot.lane.b32.xlu0 %v1082, 40
        %v3644 = vpop.permute.xlu0 %3643
        %3645 = vrot.lane.b32.xlu0 %v1083, 40
        %v3646 = vpop.permute.xlu0 %3645
        %3647 = vrot.lane.b32.xlu0 %v1084, 40
        %v3648 = vpop.permute.xlu0 %3647
        %3649 = vrot.lane.b32.xlu0 %v1085, 40
        %v3650 = vpop.permute.xlu0 %3649
        %3651 = vrot.lane.b32.xlu0 %v1086, 40
        %v3652 = vpop.permute.xlu0 %3651
        %3781 = vrot.lane.b32.xlu0 %v1088, 48
        %v3782 = vpop.permute.xlu0 %3781
        %3783 = vrot.lane.b32.xlu0 %v1089, 48
        %v3784 = vpop.permute.xlu0 %3783
        %3785 = vrot.lane.b32.xlu0 %v1090, 48
        %v3786 = vpop.permute.xlu0 %3785
        %3787 = vrot.lane.b32.xlu0 %v1091, 48
        %v3788 = vpop.permute.xlu0 %3787
        %3789 = vrot.lane.b32.xlu0 %v1092, 48
        %v3790 = vpop.permute.xlu0 %3789
        %3791 = vrot.lane.b32.xlu0 %v1093, 48
        %v3792 = vpop.permute.xlu0 %3791
        %3793 = vrot.lane.b32.xlu0 %v1094, 48
        %v3794 = vpop.permute.xlu0 %3793
        %3795 = vrot.lane.b32.xlu0 %v1095, 48
        %v3796 = vpop.permute.xlu0 %3795
        %3797 = vrot.lane.b32.xlu0 %v1096, 48
        %v3798 = vpop.permute.xlu0 %3797
        %3799 = vrot.lane.b32.xlu0 %v1097, 48
        %v3800 = vpop.permute.xlu0 %3799
        %3801 = vrot.lane.b32.xlu0 %v1098, 48
        %v3802 = vpop.permute.xlu0 %3801
        %3803 = vrot.lane.b32.xlu0 %v1099, 48
        %v3804 = vpop.permute.xlu0 %3803
        %3805 = vrot.lane.b32.xlu0 %v1100, 48
        %v3806 = vpop.permute.xlu0 %3805
        %3807 = vrot.lane.b32.xlu0 %v1101, 48
        %v3808 = vpop.permute.xlu0 %3807
        %3809 = vrot.lane.b32.xlu0 %v1102, 48
        %v3810 = vpop.permute.xlu0 %3809
        %3811 = vrot.lane.b32.xlu0 %v1103, 48
        %v3812 = vpop.permute.xlu0 %3811
        %3813 = vrot.lane.b32.xlu0 %v1104, 48
        %v3814 = vpop.permute.xlu0 %3813
        %3815 = vrot.lane.b32.xlu0 %v1105, 48
        %v3816 = vpop.permute.xlu0 %3815
        %3817 = vrot.lane.b32.xlu0 %v1106, 48
        %v3818 = vpop.permute.xlu0 %3817
        %3819 = vrot.lane.b32.xlu0 %v1107, 48
        %v3820 = vpop.permute.xlu0 %3819
        %3821 = vrot.lane.b32.xlu0 %v1108, 48
        %v3822 = vpop.permute.xlu0 %3821
        %3823 = vrot.lane.b32.xlu0 %v1109, 48
        %v3824 = vpop.permute.xlu0 %3823
        %3825 = vrot.lane.b32.xlu0 %v1110, 48
        %v3826 = vpop.permute.xlu0 %3825
        %3827 = vrot.lane.b32.xlu0 %v1111, 48
        %v3828 = vpop.permute.xlu0 %3827
        %3829 = vrot.lane.b32.xlu0 %v1112, 48
        %v3830 = vpop.permute.xlu0 %3829
        %3831 = vrot.lane.b32.xlu0 %v1113, 48
        %v3832 = vpop.permute.xlu0 %3831
        %3833 = vrot.lane.b32.xlu0 %v1114, 48
        %v3834 = vpop.permute.xlu0 %3833
        %3835 = vrot.lane.b32.xlu0 %v1115, 48
        %v3836 = vpop.permute.xlu0 %3835
        %3837 = vrot.lane.b32.xlu0 %v1116, 48
        %v3838 = vpop.permute.xlu0 %3837
        %3839 = vrot.lane.b32.xlu0 %v1117, 48
        %v3840 = vpop.permute.xlu0 %3839
        %3841 = vrot.lane.b32.xlu0 %v1118, 48
        %v3842 = vpop.permute.xlu0 %3841
        %3843 = vrot.lane.b32.xlu0 %v1119, 48
        %v3844 = vpop.permute.xlu0 %3843
        %3845 = vrot.lane.b32.xlu0 %v1120, 48
        %v3846 = vpop.permute.xlu0 %3845
        %3847 = vrot.lane.b32.xlu0 %v1121, 48
        %v3848 = vpop.permute.xlu0 %3847
        %3849 = vrot.lane.b32.xlu0 %v1122, 48
        %v3850 = vpop.permute.xlu0 %3849
        %3851 = vrot.lane.b32.xlu0 %v1123, 48
        %v3852 = vpop.permute.xlu0 %3851
        %3853 = vrot.lane.b32.xlu0 %v1124, 48
        %v3854 = vpop.permute.xlu0 %3853
        %3855 = vrot.lane.b32.xlu0 %v1125, 48
        %v3856 = vpop.permute.xlu0 %3855
        %3857 = vrot.lane.b32.xlu0 %v1126, 48
        %v3858 = vpop.permute.xlu0 %3857
        %3859 = vrot.lane.b32.xlu0 %v1127, 48
        %v3860 = vpop.permute.xlu0 %3859
        %3861 = vrot.lane.b32.xlu0 %v1128, 48
        %v3862 = vpop.permute.xlu0 %3861
        %3863 = vrot.lane.b32.xlu0 %v1129, 48
        %v3864 = vpop.permute.xlu0 %3863
        %3865 = vrot.lane.b32.xlu0 %v1130, 48
        %v3866 = vpop.permute.xlu0 %3865
        %3867 = vrot.lane.b32.xlu0 %v1131, 48
        %v3868 = vpop.permute.xlu0 %3867
        %3869 = vrot.lane.b32.xlu0 %v1132, 48
        %v3870 = vpop.permute.xlu0 %3869
        %3871 = vrot.lane.b32.xlu0 %v1133, 48
        %v3872 = vpop.permute.xlu0 %3871
        %3873 = vrot.lane.b32.xlu0 %v1134, 48
        %v3874 = vpop.permute.xlu0 %3873
        %3875 = vrot.lane.b32.xlu0 %v1135, 48
        %v3876 = vpop.permute.xlu0 %3875
        %3877 = vrot.lane.b32.xlu0 %v1136, 48
        %v3878 = vpop.permute.xlu0 %3877
        %3879 = vrot.lane.b32.xlu0 %v1137, 48
        %v3880 = vpop.permute.xlu0 %3879
        %3881 = vrot.lane.b32.xlu0 %v1138, 48
        %v3882 = vpop.permute.xlu0 %3881
        %3883 = vrot.lane.b32.xlu0 %v1139, 48
        %v3884 = vpop.permute.xlu0 %3883
        %3885 = vrot.lane.b32.xlu0 %v1140, 48
        %v3886 = vpop.permute.xlu0 %3885
        %3887 = vrot.lane.b32.xlu0 %v1141, 48
        %v3888 = vpop.permute.xlu0 %3887
        %3889 = vrot.lane.b32.xlu0 %v1142, 48
        %v3890 = vpop.permute.xlu0 %3889
        %3891 = vrot.lane.b32.xlu0 %v1143, 48
        %v3892 = vpop.permute.xlu0 %3891
        %3893 = vrot.lane.b32.xlu0 %v1144, 48
        %v3894 = vpop.permute.xlu0 %3893
        %3895 = vrot.lane.b32.xlu0 %v1145, 48
        %v3896 = vpop.permute.xlu0 %3895
        %3897 = vrot.lane.b32.xlu0 %v1146, 48
        %v3898 = vpop.permute.xlu0 %3897
        %3899 = vrot.lane.b32.xlu0 %v1147, 48
        %v3900 = vpop.permute.xlu0 %3899
        %3901 = vrot.lane.b32.xlu0 %v1148, 48
        %v3902 = vpop.permute.xlu0 %3901
        %3903 = vrot.lane.b32.xlu0 %v1149, 48
        %v3904 = vpop.permute.xlu0 %3903
        %3905 = vrot.lane.b32.xlu0 %v1150, 48
        %v3906 = vpop.permute.xlu0 %3905
        %3907 = vrot.lane.b32.xlu0 %v1151, 48
        %v3908 = vpop.permute.xlu0 %3907
        %4037 = vrot.lane.b32.xlu0 %v1152, 56
        %v4038 = vpop.permute.xlu0 %4037
        %4039 = vrot.lane.b32.xlu0 %v1153, 56
        %v4040 = vpop.permute.xlu0 %4039
        %4041 = vrot.lane.b32.xlu0 %v1154, 56
        %v4042 = vpop.permute.xlu0 %4041
        %4043 = vrot.lane.b32.xlu0 %v1155, 56
        %v4044 = vpop.permute.xlu0 %4043
        %4045 = vrot.lane.b32.xlu0 %v1156, 56
        %v4046 = vpop.permute.xlu0 %4045
        %4047 = vrot.lane.b32.xlu0 %v1157, 56
        %v4048 = vpop.permute.xlu0 %4047
        %4049 = vrot.lane.b32.xlu0 %v1158, 56
        %v4050 = vpop.permute.xlu0 %4049
        %4051 = vrot.lane.b32.xlu0 %v1159, 56
        %v4052 = vpop.permute.xlu0 %4051
        %4053 = vrot.lane.b32.xlu0 %v1160, 56
        %v4054 = vpop.permute.xlu0 %4053
        %4055 = vrot.lane.b32.xlu0 %v1161, 56
        %v4056 = vpop.permute.xlu0 %4055
        %4057 = vrot.lane.b32.xlu0 %v1162, 56
        %v4058 = vpop.permute.xlu0 %4057
        %4059 = vrot.lane.b32.xlu0 %v1163, 56
        %v4060 = vpop.permute.xlu0 %4059
        %4061 = vrot.lane.b32.xlu0 %v1164, 56
        %v4062 = vpop.permute.xlu0 %4061
        %4063 = vrot.lane.b32.xlu0 %v1165, 56
        %v4064 = vpop.permute.xlu0 %4063
        %4065 = vrot.lane.b32.xlu0 %v1166, 56
        %v4066 = vpop.permute.xlu0 %4065
        %4067 = vrot.lane.b32.xlu0 %v1167, 56
        %v4068 = vpop.permute.xlu0 %4067
        %4069 = vrot.lane.b32.xlu0 %v1168, 56
        %v4070 = vpop.permute.xlu0 %4069
        %4071 = vrot.lane.b32.xlu0 %v1169, 56
        %v4072 = vpop.permute.xlu0 %4071
        %4073 = vrot.lane.b32.xlu0 %v1170, 56
        %v4074 = vpop.permute.xlu0 %4073
        %4075 = vrot.lane.b32.xlu0 %v1171, 56
        %v4076 = vpop.permute.xlu0 %4075
        %4077 = vrot.lane.b32.xlu0 %v1172, 56
        %v4078 = vpop.permute.xlu0 %4077
        %4079 = vrot.lane.b32.xlu0 %v1173, 56
        %v4080 = vpop.permute.xlu0 %4079
        %4081 = vrot.lane.b32.xlu0 %v1174, 56
        %v4082 = vpop.permute.xlu0 %4081
        %4083 = vrot.lane.b32.xlu0 %v1175, 56
        %v4084 = vpop.permute.xlu0 %4083
        %4085 = vrot.lane.b32.xlu0 %v1176, 56
        %v4086 = vpop.permute.xlu0 %4085
        %4087 = vrot.lane.b32.xlu0 %v1177, 56
        %v4088 = vpop.permute.xlu0 %4087
        %4089 = vrot.lane.b32.xlu0 %v1178, 56
        %v4090 = vpop.permute.xlu0 %4089
        %4091 = vrot.lane.b32.xlu0 %v1179, 56
        %v4092 = vpop.permute.xlu0 %4091
        %4093 = vrot.lane.b32.xlu0 %v1180, 56
        %v4094 = vpop.permute.xlu0 %4093
        %4095 = vrot.lane.b32.xlu0 %v1181, 56
        %v4096 = vpop.permute.xlu0 %4095
        %4097 = vrot.lane.b32.xlu0 %v1182, 56
        %v4098 = vpop.permute.xlu0 %4097
        %4099 = vrot.lane.b32.xlu0 %v1183, 56
        %v4100 = vpop.permute.xlu0 %4099
        %4101 = vrot.lane.b32.xlu0 %v1184, 56
        %v4102 = vpop.permute.xlu0 %4101
        %4103 = vrot.lane.b32.xlu0 %v1185, 56
        %v4104 = vpop.permute.xlu0 %4103
        %4105 = vrot.lane.b32.xlu0 %v1186, 56
        %v4106 = vpop.permute.xlu0 %4105
        %4107 = vrot.lane.b32.xlu0 %v1187, 56
        %v4108 = vpop.permute.xlu0 %4107
        %4109 = vrot.lane.b32.xlu0 %v1188, 56
        %v4110 = vpop.permute.xlu0 %4109
        %4111 = vrot.lane.b32.xlu0 %v1189, 56
        %v4112 = vpop.permute.xlu0 %4111
        %4113 = vrot.lane.b32.xlu0 %v1190, 56
        %v4114 = vpop.permute.xlu0 %4113
        %4115 = vrot.lane.b32.xlu0 %v1191, 56
        %v4116 = vpop.permute.xlu0 %4115
        %4117 = vrot.lane.b32.xlu0 %v1192, 56
        %v4118 = vpop.permute.xlu0 %4117
        %4119 = vrot.lane.b32.xlu0 %v1193, 56
        %v4120 = vpop.permute.xlu0 %4119
        %4121 = vrot.lane.b32.xlu0 %v1194, 56
        %v4122 = vpop.permute.xlu0 %4121
        %4123 = vrot.lane.b32.xlu0 %v1195, 56
        %v4124 = vpop.permute.xlu0 %4123
        %4125 = vrot.lane.b32.xlu0 %v1196, 56
        %v4126 = vpop.permute.xlu0 %4125
        %4127 = vrot.lane.b32.xlu0 %v1197, 56
        %v4128 = vpop.permute.xlu0 %4127
        %4129 = vrot.lane.b32.xlu0 %v1198, 56
        %v4130 = vpop.permute.xlu0 %4129
        %4131 = vrot.lane.b32.xlu0 %v1199, 56
        %v4132 = vpop.permute.xlu0 %4131
        %4133 = vrot.lane.b32.xlu0 %v1200, 56
        %v4134 = vpop.permute.xlu0 %4133
        %4135 = vrot.lane.b32.xlu0 %v1201, 56
        %v4136 = vpop.permute.xlu0 %4135
        %4137 = vrot.lane.b32.xlu0 %v1202, 56
        %v4138 = vpop.permute.xlu0 %4137
        %4139 = vrot.lane.b32.xlu0 %v1203, 56
        %v4140 = vpop.permute.xlu0 %4139
        %4141 = vrot.lane.b32.xlu0 %v1204, 56
        %v4142 = vpop.permute.xlu0 %4141
        %4143 = vrot.lane.b32.xlu0 %v1205, 56
        %v4144 = vpop.permute.xlu0 %4143
        %4145 = vrot.lane.b32.xlu0 %v1206, 56
        %v4146 = vpop.permute.xlu0 %4145
        %4147 = vrot.lane.b32.xlu0 %v1207, 56
        %v4148 = vpop.permute.xlu0 %4147
        %4149 = vrot.lane.b32.xlu0 %v1208, 56
        %v4150 = vpop.permute.xlu0 %4149
        %4151 = vrot.lane.b32.xlu0 %v1209, 56
        %v4152 = vpop.permute.xlu0 %4151
        %4153 = vrot.lane.b32.xlu0 %v1210, 56
        %v4154 = vpop.permute.xlu0 %4153
        %4155 = vrot.lane.b32.xlu0 %v1211, 56
        %v4156 = vpop.permute.xlu0 %4155
        %4157 = vrot.lane.b32.xlu0 %v1212, 56
        %v4158 = vpop.permute.xlu0 %4157
        %4159 = vrot.lane.b32.xlu0 %v1213, 56
        %v4160 = vpop.permute.xlu0 %4159
        %4161 = vrot.lane.b32.xlu0 %v1214, 56
        %v4162 = vpop.permute.xlu0 %4161
        %4163 = vrot.lane.b32.xlu0 %v1215, 56
        %v4164 = vpop.permute.xlu0 %4163
        %4293 = vrot.lane.b32.xlu0 %v1216, 64
        %v4294 = vpop.permute.xlu0 %4293
        %4295 = vrot.lane.b32.xlu0 %v1217, 64
        %v4296 = vpop.permute.xlu0 %4295
        %4297 = vrot.lane.b32.xlu0 %v1218, 64
        %v4298 = vpop.permute.xlu0 %4297
        %4299 = vrot.lane.b32.xlu0 %v1219, 64
        %v4300 = vpop.permute.xlu0 %4299
        %4301 = vrot.lane.b32.xlu0 %v1220, 64
        %v4302 = vpop.permute.xlu0 %4301
        %4303 = vrot.lane.b32.xlu0 %v1221, 64
        %v4304 = vpop.permute.xlu0 %4303
        %4305 = vrot.lane.b32.xlu0 %v1222, 64
        %v4306 = vpop.permute.xlu0 %4305
        %4307 = vrot.lane.b32.xlu0 %v1223, 64
        %v4308 = vpop.permute.xlu0 %4307
        %4309 = vrot.lane.b32.xlu0 %v1224, 64
        %v4310 = vpop.permute.xlu0 %4309
        %4311 = vrot.lane.b32.xlu0 %v1225, 64
        %v4312 = vpop.permute.xlu0 %4311
        %4313 = vrot.lane.b32.xlu0 %v1226, 64
        %v4314 = vpop.permute.xlu0 %4313
        %4315 = vrot.lane.b32.xlu0 %v1227, 64
        %v4316 = vpop.permute.xlu0 %4315
        %4317 = vrot.lane.b32.xlu0 %v1228, 64
        %v4318 = vpop.permute.xlu0 %4317
        %4319 = vrot.lane.b32.xlu0 %v1229, 64
        %v4320 = vpop.permute.xlu0 %4319
        %4321 = vrot.lane.b32.xlu0 %v1230, 64
        %v4322 = vpop.permute.xlu0 %4321
        %4323 = vrot.lane.b32.xlu0 %v1231, 64
        %v4324 = vpop.permute.xlu0 %4323
        %4325 = vrot.lane.b32.xlu0 %v1232, 64
        %v4326 = vpop.permute.xlu0 %4325
        %4327 = vrot.lane.b32.xlu0 %v1233, 64
        %v4328 = vpop.permute.xlu0 %4327
        %4329 = vrot.lane.b32.xlu0 %v1234, 64
        %v4330 = vpop.permute.xlu0 %4329
        %4331 = vrot.lane.b32.xlu0 %v1235, 64
        %v4332 = vpop.permute.xlu0 %4331
        %4333 = vrot.lane.b32.xlu0 %v1236, 64
        %v4334 = vpop.permute.xlu0 %4333
        %4335 = vrot.lane.b32.xlu0 %v1237, 64
        %v4336 = vpop.permute.xlu0 %4335
        %4337 = vrot.lane.b32.xlu0 %v1238, 64
        %v4338 = vpop.permute.xlu0 %4337
        %4339 = vrot.lane.b32.xlu0 %v1239, 64
        %v4340 = vpop.permute.xlu0 %4339
        %4341 = vrot.lane.b32.xlu0 %v1240, 64
        %v4342 = vpop.permute.xlu0 %4341
        %4343 = vrot.lane.b32.xlu0 %v1241, 64
        %v4344 = vpop.permute.xlu0 %4343
        %4345 = vrot.lane.b32.xlu0 %v1242, 64
        %v4346 = vpop.permute.xlu0 %4345
        %4347 = vrot.lane.b32.xlu0 %v1243, 64
        %v4348 = vpop.permute.xlu0 %4347
        %4349 = vrot.lane.b32.xlu0 %v1244, 64
        %v4350 = vpop.permute.xlu0 %4349
        %4351 = vrot.lane.b32.xlu0 %v1245, 64
        %v4352 = vpop.permute.xlu0 %4351
        %4353 = vrot.lane.b32.xlu0 %v1246, 64
        %v4354 = vpop.permute.xlu0 %4353
        %4355 = vrot.lane.b32.xlu0 %v1247, 64
        %v4356 = vpop.permute.xlu0 %4355
        %4357 = vrot.lane.b32.xlu0 %v1248, 64
        %v4358 = vpop.permute.xlu0 %4357
        %4359 = vrot.lane.b32.xlu0 %v1249, 64
        %v4360 = vpop.permute.xlu0 %4359
        %4361 = vrot.lane.b32.xlu0 %v1250, 64
        %v4362 = vpop.permute.xlu0 %4361
        %4363 = vrot.lane.b32.xlu0 %v1251, 64
        %v4364 = vpop.permute.xlu0 %4363
        %4365 = vrot.lane.b32.xlu0 %v1252, 64
        %v4366 = vpop.permute.xlu0 %4365
        %4367 = vrot.lane.b32.xlu0 %v1253, 64
        %v4368 = vpop.permute.xlu0 %4367
        %4369 = vrot.lane.b32.xlu0 %v1254, 64
        %v4370 = vpop.permute.xlu0 %4369
        %4371 = vrot.lane.b32.xlu0 %v1255, 64
        %v4372 = vpop.permute.xlu0 %4371
        %4373 = vrot.lane.b32.xlu0 %v1256, 64
        %v4374 = vpop.permute.xlu0 %4373
        %4375 = vrot.lane.b32.xlu0 %v1257, 64
        %v4376 = vpop.permute.xlu0 %4375
        %4377 = vrot.lane.b32.xlu0 %v1258, 64
        %v4378 = vpop.permute.xlu0 %4377
        %4379 = vrot.lane.b32.xlu0 %v1259, 64
        %v4380 = vpop.permute.xlu0 %4379
        %4381 = vrot.lane.b32.xlu0 %v1260, 64
        %v4382 = vpop.permute.xlu0 %4381
        %4383 = vrot.lane.b32.xlu0 %v1261, 64
        %v4384 = vpop.permute.xlu0 %4383
        %4385 = vrot.lane.b32.xlu0 %v1262, 64
        %v4386 = vpop.permute.xlu0 %4385
        %4387 = vrot.lane.b32.xlu0 %v1263, 64
        %v4388 = vpop.permute.xlu0 %4387
        %4389 = vrot.lane.b32.xlu0 %v1264, 64
        %v4390 = vpop.permute.xlu0 %4389
        %4391 = vrot.lane.b32.xlu0 %v1265, 64
        %v4392 = vpop.permute.xlu0 %4391
        %4393 = vrot.lane.b32.xlu0 %v1266, 64
        %v4394 = vpop.permute.xlu0 %4393
        %4395 = vrot.lane.b32.xlu0 %v1267, 64
        %v4396 = vpop.permute.xlu0 %4395
        %4397 = vrot.lane.b32.xlu0 %v1268, 64
        %v4398 = vpop.permute.xlu0 %4397
        %4399 = vrot.lane.b32.xlu0 %v1269, 64
        %v4400 = vpop.permute.xlu0 %4399
        %4401 = vrot.lane.b32.xlu0 %v1270, 64
        %v4402 = vpop.permute.xlu0 %4401
        %4403 = vrot.lane.b32.xlu0 %v1271, 64
        %v4404 = vpop.permute.xlu0 %4403
        %4405 = vrot.lane.b32.xlu0 %v1272, 64
        %v4406 = vpop.permute.xlu0 %4405
        %4407 = vrot.lane.b32.xlu0 %v1273, 64
        %v4408 = vpop.permute.xlu0 %4407
        %4409 = vrot.lane.b32.xlu0 %v1274, 64
        %v4410 = vpop.permute.xlu0 %4409
        %4411 = vrot.lane.b32.xlu0 %v1275, 64
        %v4412 = vpop.permute.xlu0 %4411
        %4413 = vrot.lane.b32.xlu0 %v1276, 64
        %v4414 = vpop.permute.xlu0 %4413
        %4415 = vrot.lane.b32.xlu0 %v1277, 64
        %v4416 = vpop.permute.xlu0 %4415
        %4417 = vrot.lane.b32.xlu0 %v1278, 64
        %v4418 = vpop.permute.xlu0 %4417
        %4419 = vrot.lane.b32.xlu0 %v1279, 64
        %v4420 = vpop.permute.xlu0 %4419
        %4549 = vrot.lane.b32.xlu0 %v1281, 72
        %v4550 = vpop.permute.xlu0 %4549
        %4551 = vrot.lane.b32.xlu0 %v1282, 72
        %v4552 = vpop.permute.xlu0 %4551
        %4553 = vrot.lane.b32.xlu0 %v1283, 72
        %v4554 = vpop.permute.xlu0 %4553
        %4555 = vrot.lane.b32.xlu0 %v1284, 72
        %v4556 = vpop.permute.xlu0 %4555
        %4557 = vrot.lane.b32.xlu0 %v1285, 72
        %v4558 = vpop.permute.xlu0 %4557
        %4559 = vrot.lane.b32.xlu0 %v1286, 72
        %v4560 = vpop.permute.xlu0 %4559
        %4561 = vrot.lane.b32.xlu0 %v1287, 72
        %v4562 = vpop.permute.xlu0 %4561
        %4563 = vrot.lane.b32.xlu0 %v1288, 72
        %v4564 = vpop.permute.xlu0 %4563
        %4565 = vrot.lane.b32.xlu0 %v1289, 72
        %v4566 = vpop.permute.xlu0 %4565
        %4567 = vrot.lane.b32.xlu0 %v1290, 72
        %v4568 = vpop.permute.xlu0 %4567
        %4569 = vrot.lane.b32.xlu0 %v1291, 72
        %v4570 = vpop.permute.xlu0 %4569
        %4571 = vrot.lane.b32.xlu0 %v1292, 72
        %v4572 = vpop.permute.xlu0 %4571
        %4573 = vrot.lane.b32.xlu0 %v1293, 72
        %v4574 = vpop.permute.xlu0 %4573
        %4575 = vrot.lane.b32.xlu0 %v1294, 72
        %v4576 = vpop.permute.xlu0 %4575
        %4577 = vrot.lane.b32.xlu0 %v1295, 72
        %v4578 = vpop.permute.xlu0 %4577
        %4579 = vrot.lane.b32.xlu0 %v1296, 72
        %v4580 = vpop.permute.xlu0 %4579
        %4581 = vrot.lane.b32.xlu0 %v1297, 72
        %v4582 = vpop.permute.xlu0 %4581
        %4583 = vrot.lane.b32.xlu0 %v1298, 72
        %v4584 = vpop.permute.xlu0 %4583
        %4585 = vrot.lane.b32.xlu0 %v1299, 72
        %v4586 = vpop.permute.xlu0 %4585
        %4587 = vrot.lane.b32.xlu0 %v1300, 72
        %v4588 = vpop.permute.xlu0 %4587
        %4589 = vrot.lane.b32.xlu0 %v1301, 72
        %v4590 = vpop.permute.xlu0 %4589
        %4591 = vrot.lane.b32.xlu0 %v1302, 72
        %v4592 = vpop.permute.xlu0 %4591
        %4593 = vrot.lane.b32.xlu0 %v1303, 72
        %v4594 = vpop.permute.xlu0 %4593
        %4595 = vrot.lane.b32.xlu0 %v1304, 72
        %v4596 = vpop.permute.xlu0 %4595
        %4597 = vrot.lane.b32.xlu0 %v1305, 72
        %v4598 = vpop.permute.xlu0 %4597
        %4599 = vrot.lane.b32.xlu0 %v1306, 72
        %v4600 = vpop.permute.xlu0 %4599
        %4601 = vrot.lane.b32.xlu0 %v1307, 72
        %v4602 = vpop.permute.xlu0 %4601
        %4603 = vrot.lane.b32.xlu0 %v1308, 72
        %v4604 = vpop.permute.xlu0 %4603
        %4605 = vrot.lane.b32.xlu0 %v1309, 72
        %v4606 = vpop.permute.xlu0 %4605
        %4607 = vrot.lane.b32.xlu0 %v1310, 72
        %v4608 = vpop.permute.xlu0 %4607
        %4609 = vrot.lane.b32.xlu0 %v1311, 72
        %v4610 = vpop.permute.xlu0 %4609
        %4611 = vrot.lane.b32.xlu0 %v1312, 72
        %v4612 = vpop.permute.xlu0 %4611
        %4613 = vrot.lane.b32.xlu0 %v1313, 72
        %v4614 = vpop.permute.xlu0 %4613
        %4615 = vrot.lane.b32.xlu0 %v1314, 72
        %v4616 = vpop.permute.xlu0 %4615
        %4617 = vrot.lane.b32.xlu0 %v1315, 72
        %v4618 = vpop.permute.xlu0 %4617
        %4619 = vrot.lane.b32.xlu0 %v1316, 72
        %v4620 = vpop.permute.xlu0 %4619
        %4621 = vrot.lane.b32.xlu0 %v1317, 72
        %v4622 = vpop.permute.xlu0 %4621
        %4623 = vrot.lane.b32.xlu0 %v1318, 72
        %v4624 = vpop.permute.xlu0 %4623
        %4625 = vrot.lane.b32.xlu0 %v1319, 72
        %v4626 = vpop.permute.xlu0 %4625
        %4627 = vrot.lane.b32.xlu0 %v1320, 72
        %v4628 = vpop.permute.xlu0 %4627
        %4629 = vrot.lane.b32.xlu0 %v1321, 72
        %v4630 = vpop.permute.xlu0 %4629
        %4631 = vrot.lane.b32.xlu0 %v1322, 72
        %v4632 = vpop.permute.xlu0 %4631
        %4633 = vrot.lane.b32.xlu0 %v1323, 72
        %v4634 = vpop.permute.xlu0 %4633
        %4635 = vrot.lane.b32.xlu0 %v1324, 72
        %v4636 = vpop.permute.xlu0 %4635
        %4637 = vrot.lane.b32.xlu0 %v1325, 72
        %v4638 = vpop.permute.xlu0 %4637
        %4639 = vrot.lane.b32.xlu0 %v1326, 72
        %v4640 = vpop.permute.xlu0 %4639
        %4641 = vrot.lane.b32.xlu0 %v1327, 72
        %v4642 = vpop.permute.xlu0 %4641
        %4643 = vrot.lane.b32.xlu0 %v1328, 72
        %v4644 = vpop.permute.xlu0 %4643
        %4645 = vrot.lane.b32.xlu0 %v1329, 72
        %v4646 = vpop.permute.xlu0 %4645
        %4647 = vrot.lane.b32.xlu0 %v1330, 72
        %v4648 = vpop.permute.xlu0 %4647
        %4649 = vrot.lane.b32.xlu0 %v1331, 72
        %v4650 = vpop.permute.xlu0 %4649
        %4651 = vrot.lane.b32.xlu0 %v1332, 72
        %v4652 = vpop.permute.xlu0 %4651
        %4653 = vrot.lane.b32.xlu0 %v1333, 72
        %v4654 = vpop.permute.xlu0 %4653
        %4655 = vrot.lane.b32.xlu0 %v1334, 72
        %v4656 = vpop.permute.xlu0 %4655
        %4657 = vrot.lane.b32.xlu0 %v1335, 72
        %v4658 = vpop.permute.xlu0 %4657
        %4659 = vrot.lane.b32.xlu0 %v1336, 72
        %v4660 = vpop.permute.xlu0 %4659
        %4661 = vrot.lane.b32.xlu0 %v1337, 72
        %v4662 = vpop.permute.xlu0 %4661
        %4663 = vrot.lane.b32.xlu0 %v1338, 72
        %v4664 = vpop.permute.xlu0 %4663
        %4665 = vrot.lane.b32.xlu0 %v1339, 72
        %v4666 = vpop.permute.xlu0 %4665
        %4667 = vrot.lane.b32.xlu0 %v1340, 72
        %v4668 = vpop.permute.xlu0 %4667
        %4669 = vrot.lane.b32.xlu0 %v1341, 72
        %v4670 = vpop.permute.xlu0 %4669
        %4671 = vrot.lane.b32.xlu0 %v1342, 72
        %v4672 = vpop.permute.xlu0 %4671
        %4673 = vrot.lane.b32.xlu0 %v1343, 72
        %v4674 = vpop.permute.xlu0 %4673
        %4675 = vrot.lane.b32.xlu0 %v1344, 72
        %v4676 = vpop.permute.xlu0 %4675
        %4805 = vrot.lane.b32.xlu0 %v1345, 80
        %v4806 = vpop.permute.xlu0 %4805
        %4807 = vrot.lane.b32.xlu0 %v1346, 80
        %v4808 = vpop.permute.xlu0 %4807
        %4809 = vrot.lane.b32.xlu0 %v1347, 80
        %v4810 = vpop.permute.xlu0 %4809
        %4811 = vrot.lane.b32.xlu0 %v1348, 80
        %v4812 = vpop.permute.xlu0 %4811
        %4813 = vrot.lane.b32.xlu0 %v1349, 80
        %v4814 = vpop.permute.xlu0 %4813
        %4815 = vrot.lane.b32.xlu0 %v1350, 80
        %v4816 = vpop.permute.xlu0 %4815
        %4817 = vrot.lane.b32.xlu0 %v1351, 80
        %v4818 = vpop.permute.xlu0 %4817
        %4819 = vrot.lane.b32.xlu0 %v1352, 80
        %v4820 = vpop.permute.xlu0 %4819
        %4821 = vrot.lane.b32.xlu0 %v1353, 80
        %v4822 = vpop.permute.xlu0 %4821
        %4823 = vrot.lane.b32.xlu0 %v1354, 80
        %v4824 = vpop.permute.xlu0 %4823
        %4825 = vrot.lane.b32.xlu0 %v1355, 80
        %v4826 = vpop.permute.xlu0 %4825
        %4827 = vrot.lane.b32.xlu0 %v1356, 80
        %v4828 = vpop.permute.xlu0 %4827
        %4829 = vrot.lane.b32.xlu0 %v1357, 80
        %v4830 = vpop.permute.xlu0 %4829
        %4831 = vrot.lane.b32.xlu0 %v1358, 80
        %v4832 = vpop.permute.xlu0 %4831
        %4833 = vrot.lane.b32.xlu0 %v1359, 80
        %v4834 = vpop.permute.xlu0 %4833
        %4835 = vrot.lane.b32.xlu0 %v1360, 80
        %v4836 = vpop.permute.xlu0 %4835
        %4837 = vrot.lane.b32.xlu0 %v1361, 80
        %v4838 = vpop.permute.xlu0 %4837
        %4839 = vrot.lane.b32.xlu0 %v1362, 80
        %v4840 = vpop.permute.xlu0 %4839
        %4841 = vrot.lane.b32.xlu0 %v1363, 80
        %v4842 = vpop.permute.xlu0 %4841
        %4843 = vrot.lane.b32.xlu0 %v1364, 80
        %v4844 = vpop.permute.xlu0 %4843
        %4845 = vrot.lane.b32.xlu0 %v1365, 80
        %v4846 = vpop.permute.xlu0 %4845
        %4847 = vrot.lane.b32.xlu0 %v1366, 80
        %v4848 = vpop.permute.xlu0 %4847
        %4849 = vrot.lane.b32.xlu0 %v1367, 80
        %v4850 = vpop.permute.xlu0 %4849
        %4851 = vrot.lane.b32.xlu0 %v1368, 80
        %v4852 = vpop.permute.xlu0 %4851
        %4853 = vrot.lane.b32.xlu0 %v1369, 80
        %v4854 = vpop.permute.xlu0 %4853
        %4855 = vrot.lane.b32.xlu0 %v1370, 80
        %v4856 = vpop.permute.xlu0 %4855
        %4857 = vrot.lane.b32.xlu0 %v1371, 80
        %v4858 = vpop.permute.xlu0 %4857
        %4859 = vrot.lane.b32.xlu0 %v1372, 80
        %v4860 = vpop.permute.xlu0 %4859
        %4861 = vrot.lane.b32.xlu0 %v1373, 80
        %v4862 = vpop.permute.xlu0 %4861
        %4863 = vrot.lane.b32.xlu0 %v1374, 80
        %v4864 = vpop.permute.xlu0 %4863
        %4865 = vrot.lane.b32.xlu0 %v1375, 80
        %v4866 = vpop.permute.xlu0 %4865
        %4867 = vrot.lane.b32.xlu0 %v1376, 80
        %v4868 = vpop.permute.xlu0 %4867
        %4869 = vrot.lane.b32.xlu0 %v1377, 80
        %v4870 = vpop.permute.xlu0 %4869
        %4871 = vrot.lane.b32.xlu0 %v1378, 80
        %v4872 = vpop.permute.xlu0 %4871
        %4873 = vrot.lane.b32.xlu0 %v1379, 80
        %v4874 = vpop.permute.xlu0 %4873
        %4875 = vrot.lane.b32.xlu0 %v1380, 80
        %v4876 = vpop.permute.xlu0 %4875
        %4877 = vrot.lane.b32.xlu0 %v1381, 80
        %v4878 = vpop.permute.xlu0 %4877
        %4879 = vrot.lane.b32.xlu0 %v1382, 80
        %v4880 = vpop.permute.xlu0 %4879
        %4881 = vrot.lane.b32.xlu0 %v1383, 80
        %v4882 = vpop.permute.xlu0 %4881
        %4883 = vrot.lane.b32.xlu0 %v1384, 80
        %v4884 = vpop.permute.xlu0 %4883
        %4885 = vrot.lane.b32.xlu0 %v1385, 80
        %v4886 = vpop.permute.xlu0 %4885
        %4887 = vrot.lane.b32.xlu0 %v1386, 80
        %v4888 = vpop.permute.xlu0 %4887
        %4889 = vrot.lane.b32.xlu0 %v1387, 80
        %v4890 = vpop.permute.xlu0 %4889
        %4891 = vrot.lane.b32.xlu0 %v1388, 80
        %v4892 = vpop.permute.xlu0 %4891
        %4893 = vrot.lane.b32.xlu0 %v1389, 80
        %v4894 = vpop.permute.xlu0 %4893
        %4895 = vrot.lane.b32.xlu0 %v1390, 80
        %v4896 = vpop.permute.xlu0 %4895
        %4897 = vrot.lane.b32.xlu0 %v1391, 80
        %v4898 = vpop.permute.xlu0 %4897
        %4899 = vrot.lane.b32.xlu0 %v1392, 80
        %v4900 = vpop.permute.xlu0 %4899
        %4901 = vrot.lane.b32.xlu0 %v1393, 80
        %v4902 = vpop.permute.xlu0 %4901
        %4903 = vrot.lane.b32.xlu0 %v1394, 80
        %v4904 = vpop.permute.xlu0 %4903
        %4905 = vrot.lane.b32.xlu0 %v1395, 80
        %v4906 = vpop.permute.xlu0 %4905
        %4907 = vrot.lane.b32.xlu0 %v1396, 80
        %v4908 = vpop.permute.xlu0 %4907
        %4909 = vrot.lane.b32.xlu0 %v1397, 80
        %v4910 = vpop.permute.xlu0 %4909
        %4911 = vrot.lane.b32.xlu0 %v1398, 80
        %v4912 = vpop.permute.xlu0 %4911
        %4913 = vrot.lane.b32.xlu0 %v1399, 80
        %v4914 = vpop.permute.xlu0 %4913
        %4915 = vrot.lane.b32.xlu0 %v1400, 80
        %v4916 = vpop.permute.xlu0 %4915
        %4917 = vrot.lane.b32.xlu0 %v1401, 80
        %v4918 = vpop.permute.xlu0 %4917
        %4919 = vrot.lane.b32.xlu0 %v1402, 80
        %v4920 = vpop.permute.xlu0 %4919
        %4921 = vrot.lane.b32.xlu0 %v1403, 80
        %v4922 = vpop.permute.xlu0 %4921
        %4923 = vrot.lane.b32.xlu0 %v1404, 80
        %v4924 = vpop.permute.xlu0 %4923
        %4925 = vrot.lane.b32.xlu0 %v1405, 80
        %v4926 = vpop.permute.xlu0 %4925
        %4927 = vrot.lane.b32.xlu0 %v1406, 80
        %v4928 = vpop.permute.xlu0 %4927
        %4929 = vrot.lane.b32.xlu0 %v1407, 80
        %v4930 = vpop.permute.xlu0 %4929
        %4931 = vrot.lane.b32.xlu0 %v1408, 80
        %v4932 = vpop.permute.xlu0 %4931
        %5061 = vrot.lane.b32.xlu0 %v1409, 88
        %v5062 = vpop.permute.xlu0 %5061
        %5063 = vrot.lane.b32.xlu0 %v1410, 88
        %v5064 = vpop.permute.xlu0 %5063
        %5065 = vrot.lane.b32.xlu0 %v1411, 88
        %v5066 = vpop.permute.xlu0 %5065
        %5067 = vrot.lane.b32.xlu0 %v1412, 88
        %v5068 = vpop.permute.xlu0 %5067
        %5069 = vrot.lane.b32.xlu0 %v1413, 88
        %v5070 = vpop.permute.xlu0 %5069
        %5071 = vrot.lane.b32.xlu0 %v1414, 88
        %v5072 = vpop.permute.xlu0 %5071
        %5073 = vrot.lane.b32.xlu0 %v1415, 88
        %v5074 = vpop.permute.xlu0 %5073
        %5075 = vrot.lane.b32.xlu0 %v1416, 88
        %v5076 = vpop.permute.xlu0 %5075
        %5077 = vrot.lane.b32.xlu0 %v1417, 88
        %v5078 = vpop.permute.xlu0 %5077
        %5079 = vrot.lane.b32.xlu0 %v1418, 88
        %v5080 = vpop.permute.xlu0 %5079
        %5081 = vrot.lane.b32.xlu0 %v1419, 88
        %v5082 = vpop.permute.xlu0 %5081
        %5083 = vrot.lane.b32.xlu0 %v1420, 88
        %v5084 = vpop.permute.xlu0 %5083
        %5085 = vrot.lane.b32.xlu0 %v1421, 88
        %v5086 = vpop.permute.xlu0 %5085
        %5087 = vrot.lane.b32.xlu0 %v1422, 88
        %v5088 = vpop.permute.xlu0 %5087
        %5089 = vrot.lane.b32.xlu0 %v1423, 88
        %v5090 = vpop.permute.xlu0 %5089
        %5091 = vrot.lane.b32.xlu0 %v1424, 88
        %v5092 = vpop.permute.xlu0 %5091
        %5093 = vrot.lane.b32.xlu0 %v1425, 88
        %v5094 = vpop.permute.xlu0 %5093
        %5095 = vrot.lane.b32.xlu0 %v1426, 88
        %v5096 = vpop.permute.xlu0 %5095
        %5097 = vrot.lane.b32.xlu0 %v1427, 88
        %v5098 = vpop.permute.xlu0 %5097
        %5099 = vrot.lane.b32.xlu0 %v1428, 88
        %v5100 = vpop.permute.xlu0 %5099
        %5101 = vrot.lane.b32.xlu0 %v1429, 88
        %v5102 = vpop.permute.xlu0 %5101
        %5103 = vrot.lane.b32.xlu0 %v1430, 88
        %v5104 = vpop.permute.xlu0 %5103
        %5105 = vrot.lane.b32.xlu0 %v1431, 88
        %v5106 = vpop.permute.xlu0 %5105
        %5107 = vrot.lane.b32.xlu0 %v1432, 88
        %v5108 = vpop.permute.xlu0 %5107
        %5109 = vrot.lane.b32.xlu0 %v1433, 88
        %v5110 = vpop.permute.xlu0 %5109
        %5111 = vrot.lane.b32.xlu0 %v1434, 88
        %v5112 = vpop.permute.xlu0 %5111
        %5113 = vrot.lane.b32.xlu0 %v1435, 88
        %v5114 = vpop.permute.xlu0 %5113
        %5115 = vrot.lane.b32.xlu0 %v1436, 88
        %v5116 = vpop.permute.xlu0 %5115
        %5117 = vrot.lane.b32.xlu0 %v1437, 88
        %v5118 = vpop.permute.xlu0 %5117
        %5119 = vrot.lane.b32.xlu0 %v1438, 88
        %v5120 = vpop.permute.xlu0 %5119
        %5121 = vrot.lane.b32.xlu0 %v1439, 88
        %v5122 = vpop.permute.xlu0 %5121
        %5123 = vrot.lane.b32.xlu0 %v1440, 88
        %v5124 = vpop.permute.xlu0 %5123
        %5125 = vrot.lane.b32.xlu0 %v1441, 88
        %v5126 = vpop.permute.xlu0 %5125
        %5127 = vrot.lane.b32.xlu0 %v1442, 88
        %v5128 = vpop.permute.xlu0 %5127
        %5129 = vrot.lane.b32.xlu0 %v1443, 88
        %v5130 = vpop.permute.xlu0 %5129
        %5131 = vrot.lane.b32.xlu0 %v1444, 88
        %v5132 = vpop.permute.xlu0 %5131
        %5133 = vrot.lane.b32.xlu0 %v1445, 88
        %v5134 = vpop.permute.xlu0 %5133
        %5135 = vrot.lane.b32.xlu0 %v1446, 88
        %v5136 = vpop.permute.xlu0 %5135
        %5137 = vrot.lane.b32.xlu0 %v1447, 88
        %v5138 = vpop.permute.xlu0 %5137
        %5139 = vrot.lane.b32.xlu0 %v1448, 88
        %v5140 = vpop.permute.xlu0 %5139
        %5141 = vrot.lane.b32.xlu0 %v1449, 88
        %v5142 = vpop.permute.xlu0 %5141
        %5143 = vrot.lane.b32.xlu0 %v1450, 88
        %v5144 = vpop.permute.xlu0 %5143
        %5145 = vrot.lane.b32.xlu0 %v1451, 88
        %v5146 = vpop.permute.xlu0 %5145
        %5147 = vrot.lane.b32.xlu0 %v1452, 88
        %v5148 = vpop.permute.xlu0 %5147
        %5149 = vrot.lane.b32.xlu0 %v1453, 88
        %v5150 = vpop.permute.xlu0 %5149
        %5151 = vrot.lane.b32.xlu0 %v1454, 88
        %v5152 = vpop.permute.xlu0 %5151
        %5153 = vrot.lane.b32.xlu0 %v1455, 88
        %v5154 = vpop.permute.xlu0 %5153
        %5155 = vrot.lane.b32.xlu0 %v1456, 88
        %v5156 = vpop.permute.xlu0 %5155
        %5157 = vrot.lane.b32.xlu0 %v1457, 88
        %v5158 = vpop.permute.xlu0 %5157
        %5159 = vrot.lane.b32.xlu0 %v1458, 88
        %v5160 = vpop.permute.xlu0 %5159
        %5161 = vrot.lane.b32.xlu0 %v1459, 88
        %v5162 = vpop.permute.xlu0 %5161
        %5163 = vrot.lane.b32.xlu0 %v1460, 88
        %v5164 = vpop.permute.xlu0 %5163
        %5165 = vrot.lane.b32.xlu0 %v1461, 88
        %v5166 = vpop.permute.xlu0 %5165
        %5167 = vrot.lane.b32.xlu0 %v1462, 88
        %v5168 = vpop.permute.xlu0 %5167
        %5169 = vrot.lane.b32.xlu0 %v1463, 88
        %v5170 = vpop.permute.xlu0 %5169
        %5171 = vrot.lane.b32.xlu0 %v1464, 88
        %v5172 = vpop.permute.xlu0 %5171
        %5173 = vrot.lane.b32.xlu0 %v1465, 88
        %v5174 = vpop.permute.xlu0 %5173
        %5175 = vrot.lane.b32.xlu0 %v1466, 88
        %v5176 = vpop.permute.xlu0 %5175
        %5177 = vrot.lane.b32.xlu0 %v1467, 88
        %v5178 = vpop.permute.xlu0 %5177
        %5179 = vrot.lane.b32.xlu0 %v1468, 88
        %v5180 = vpop.permute.xlu0 %5179
        %5181 = vrot.lane.b32.xlu0 %v1469, 88
        %v5182 = vpop.permute.xlu0 %5181
        %5183 = vrot.lane.b32.xlu0 %v1470, 88
        %v5184 = vpop.permute.xlu0 %5183
        %5185 = vrot.lane.b32.xlu0 %v1471, 88
        %v5186 = vpop.permute.xlu0 %5185
        %5187 = vrot.lane.b32.xlu0 %v1472, 88
        %v5188 = vpop.permute.xlu0 %5187
        %5317 = vrot.lane.b32.xlu0 %v1473, 96
        %v5318 = vpop.permute.xlu0 %5317
        %5319 = vrot.lane.b32.xlu0 %v1474, 96
        %v5320 = vpop.permute.xlu0 %5319
        %5321 = vrot.lane.b32.xlu0 %v1475, 96
        %v5322 = vpop.permute.xlu0 %5321
        %5323 = vrot.lane.b32.xlu0 %v1476, 96
        %v5324 = vpop.permute.xlu0 %5323
        %5325 = vrot.lane.b32.xlu0 %v1477, 96
        %v5326 = vpop.permute.xlu0 %5325
        %5327 = vrot.lane.b32.xlu0 %v1478, 96
        %v5328 = vpop.permute.xlu0 %5327
        %5329 = vrot.lane.b32.xlu0 %v1479, 96
        %v5330 = vpop.permute.xlu0 %5329
        %5331 = vrot.lane.b32.xlu0 %v1480, 96
        %v5332 = vpop.permute.xlu0 %5331
        %5333 = vrot.lane.b32.xlu0 %v1481, 96
        %v5334 = vpop.permute.xlu0 %5333
        %5335 = vrot.lane.b32.xlu0 %v1482, 96
        %v5336 = vpop.permute.xlu0 %5335
        %5337 = vrot.lane.b32.xlu0 %v1483, 96
        %v5338 = vpop.permute.xlu0 %5337
        %5339 = vrot.lane.b32.xlu0 %v1484, 96
        %v5340 = vpop.permute.xlu0 %5339
        %5341 = vrot.lane.b32.xlu0 %v1485, 96
        %v5342 = vpop.permute.xlu0 %5341
        %5343 = vrot.lane.b32.xlu0 %v1486, 96
        %v5344 = vpop.permute.xlu0 %5343
        %5345 = vrot.lane.b32.xlu0 %v1487, 96
        %v5346 = vpop.permute.xlu0 %5345
        %5347 = vrot.lane.b32.xlu0 %v1488, 96
        %v5348 = vpop.permute.xlu0 %5347
        %5349 = vrot.lane.b32.xlu0 %v1489, 96
        %v5350 = vpop.permute.xlu0 %5349
        %5351 = vrot.lane.b32.xlu0 %v1490, 96
        %v5352 = vpop.permute.xlu0 %5351
        %5353 = vrot.lane.b32.xlu0 %v1491, 96
        %v5354 = vpop.permute.xlu0 %5353
        %5355 = vrot.lane.b32.xlu0 %v1492, 96
        %v5356 = vpop.permute.xlu0 %5355
        %5357 = vrot.lane.b32.xlu0 %v1493, 96
        %v5358 = vpop.permute.xlu0 %5357
        %5359 = vrot.lane.b32.xlu0 %v1494, 96
        %v5360 = vpop.permute.xlu0 %5359
        %5361 = vrot.lane.b32.xlu0 %v1495, 96
        %v5362 = vpop.permute.xlu0 %5361
        %5363 = vrot.lane.b32.xlu0 %v1496, 96
        %v5364 = vpop.permute.xlu0 %5363
        %5365 = vrot.lane.b32.xlu0 %v1497, 96
        %v5366 = vpop.permute.xlu0 %5365
        %5367 = vrot.lane.b32.xlu0 %v1498, 96
        %v5368 = vpop.permute.xlu0 %5367
        %5369 = vrot.lane.b32.xlu0 %v1499, 96
        %v5370 = vpop.permute.xlu0 %5369
        %5371 = vrot.lane.b32.xlu0 %v1500, 96
        %v5372 = vpop.permute.xlu0 %5371
        %5373 = vrot.lane.b32.xlu0 %v1501, 96
        %v5374 = vpop.permute.xlu0 %5373
        %5375 = vrot.lane.b32.xlu0 %v1502, 96
        %v5376 = vpop.permute.xlu0 %5375
        %5377 = vrot.lane.b32.xlu0 %v1503, 96
        %v5378 = vpop.permute.xlu0 %5377
        %5379 = vrot.lane.b32.xlu0 %v1504, 96
        %v5380 = vpop.permute.xlu0 %5379
        %5381 = vrot.lane.b32.xlu0 %v1505, 96
        %v5382 = vpop.permute.xlu0 %5381
        %5383 = vrot.lane.b32.xlu0 %v1506, 96
        %v5384 = vpop.permute.xlu0 %5383
        %5385 = vrot.lane.b32.xlu0 %v1507, 96
        %v5386 = vpop.permute.xlu0 %5385
        %5387 = vrot.lane.b32.xlu0 %v1508, 96
        %v5388 = vpop.permute.xlu0 %5387
        %5389 = vrot.lane.b32.xlu0 %v1509, 96
        %v5390 = vpop.permute.xlu0 %5389
        %5391 = vrot.lane.b32.xlu0 %v1510, 96
        %v5392 = vpop.permute.xlu0 %5391
        %5393 = vrot.lane.b32.xlu0 %v1511, 96
        %v5394 = vpop.permute.xlu0 %5393
        %5395 = vrot.lane.b32.xlu0 %v1512, 96
        %v5396 = vpop.permute.xlu0 %5395
        %5397 = vrot.lane.b32.xlu0 %v1513, 96
        %v5398 = vpop.permute.xlu0 %5397
        %5399 = vrot.lane.b32.xlu0 %v1514, 96
        %v5400 = vpop.permute.xlu0 %5399
        %5401 = vrot.lane.b32.xlu0 %v1515, 96
        %v5402 = vpop.permute.xlu0 %5401
        %5403 = vrot.lane.b32.xlu0 %v1516, 96
        %v5404 = vpop.permute.xlu0 %5403
        %5405 = vrot.lane.b32.xlu0 %v1517, 96
        %v5406 = vpop.permute.xlu0 %5405
        %5407 = vrot.lane.b32.xlu0 %v1518, 96
        %v5408 = vpop.permute.xlu0 %5407
        %5409 = vrot.lane.b32.xlu0 %v1519, 96
        %v5410 = vpop.permute.xlu0 %5409
        %5411 = vrot.lane.b32.xlu0 %v1520, 96
        %v5412 = vpop.permute.xlu0 %5411
        %5413 = vrot.lane.b32.xlu0 %v1521, 96
        %v5414 = vpop.permute.xlu0 %5413
        %5415 = vrot.lane.b32.xlu0 %v1522, 96
        %v5416 = vpop.permute.xlu0 %5415
        %5417 = vrot.lane.b32.xlu0 %v1523, 96
        %v5418 = vpop.permute.xlu0 %5417
        %5419 = vrot.lane.b32.xlu0 %v1524, 96
        %v5420 = vpop.permute.xlu0 %5419
        %5421 = vrot.lane.b32.xlu0 %v1525, 96
        %v5422 = vpop.permute.xlu0 %5421
        %5423 = vrot.lane.b32.xlu0 %v1526, 96
        %v5424 = vpop.permute.xlu0 %5423
        %5425 = vrot.lane.b32.xlu0 %v1527, 96
        %v5426 = vpop.permute.xlu0 %5425
        %5427 = vrot.lane.b32.xlu0 %v1528, 96
        %v5428 = vpop.permute.xlu0 %5427
        %5429 = vrot.lane.b32.xlu0 %v1529, 96
        %v5430 = vpop.permute.xlu0 %5429
        %5431 = vrot.lane.b32.xlu0 %v1530, 96
        %v5432 = vpop.permute.xlu0 %5431
        %5433 = vrot.lane.b32.xlu0 %v1531, 96
        %v5434 = vpop.permute.xlu0 %5433
        %5435 = vrot.lane.b32.xlu0 %v1532, 96
        %v5436 = vpop.permute.xlu0 %5435
        %5437 = vrot.lane.b32.xlu0 %v1533, 96
        %v5438 = vpop.permute.xlu0 %5437
        %5439 = vrot.lane.b32.xlu0 %v1534, 96
        %v5440 = vpop.permute.xlu0 %5439
        %5441 = vrot.lane.b32.xlu0 %v1535, 96
        %v5442 = vpop.permute.xlu0 %5441
        %5443 = vrot.lane.b32.xlu0 %v1536, 96
        %v5444 = vpop.permute.xlu0 %5443
        %5573 = vrot.lane.b32.xlu0 %v1537, 104
        %v5574 = vpop.permute.xlu0 %5573
        %5575 = vrot.lane.b32.xlu0 %v1538, 104
        %v5576 = vpop.permute.xlu0 %5575
        %5577 = vrot.lane.b32.xlu0 %v1539, 104
        %v5578 = vpop.permute.xlu0 %5577
        %5579 = vrot.lane.b32.xlu0 %v1540, 104
        %v5580 = vpop.permute.xlu0 %5579
        %5581 = vrot.lane.b32.xlu0 %v1541, 104
        %v5582 = vpop.permute.xlu0 %5581
        %5583 = vrot.lane.b32.xlu0 %v1542, 104
        %v5584 = vpop.permute.xlu0 %5583
        %5585 = vrot.lane.b32.xlu0 %v1543, 104
        %v5586 = vpop.permute.xlu0 %5585
        %5587 = vrot.lane.b32.xlu0 %v1544, 104
        %v5588 = vpop.permute.xlu0 %5587
        %5589 = vrot.lane.b32.xlu0 %v1545, 104
        %v5590 = vpop.permute.xlu0 %5589
        %5591 = vrot.lane.b32.xlu0 %v1546, 104
        %v5592 = vpop.permute.xlu0 %5591
        %5593 = vrot.lane.b32.xlu0 %v1547, 104
        %v5594 = vpop.permute.xlu0 %5593
        %5595 = vrot.lane.b32.xlu0 %v1548, 104
        %v5596 = vpop.permute.xlu0 %5595
        %5597 = vrot.lane.b32.xlu0 %v1549, 104
        %v5598 = vpop.permute.xlu0 %5597
        %5599 = vrot.lane.b32.xlu0 %v1550, 104
        %v5600 = vpop.permute.xlu0 %5599
        %5601 = vrot.lane.b32.xlu0 %v1551, 104
        %v5602 = vpop.permute.xlu0 %5601
        %5603 = vrot.lane.b32.xlu0 %v1552, 104
        %v5604 = vpop.permute.xlu0 %5603
        %5605 = vrot.lane.b32.xlu0 %v1553, 104
        %v5606 = vpop.permute.xlu0 %5605
        %5607 = vrot.lane.b32.xlu0 %v1554, 104
        %v5608 = vpop.permute.xlu0 %5607
        %5609 = vrot.lane.b32.xlu0 %v1555, 104
        %v5610 = vpop.permute.xlu0 %5609
        %5611 = vrot.lane.b32.xlu0 %v1556, 104
        %v5612 = vpop.permute.xlu0 %5611
        %5613 = vrot.lane.b32.xlu0 %v1557, 104
        %v5614 = vpop.permute.xlu0 %5613
        %5615 = vrot.lane.b32.xlu0 %v1558, 104
        %v5616 = vpop.permute.xlu0 %5615
        %5617 = vrot.lane.b32.xlu0 %v1559, 104
        %v5618 = vpop.permute.xlu0 %5617
        %5619 = vrot.lane.b32.xlu0 %v1560, 104
        %v5620 = vpop.permute.xlu0 %5619
        %5621 = vrot.lane.b32.xlu0 %v1561, 104
        %v5622 = vpop.permute.xlu0 %5621
        %5623 = vrot.lane.b32.xlu0 %v1562, 104
        %v5624 = vpop.permute.xlu0 %5623
        %5625 = vrot.lane.b32.xlu0 %v1563, 104
        %v5626 = vpop.permute.xlu0 %5625
        %5627 = vrot.lane.b32.xlu0 %v1564, 104
        %v5628 = vpop.permute.xlu0 %5627
        %5629 = vrot.lane.b32.xlu0 %v1565, 104
        %v5630 = vpop.permute.xlu0 %5629
        %5631 = vrot.lane.b32.xlu0 %v1566, 104
        %v5632 = vpop.permute.xlu0 %5631
        %5633 = vrot.lane.b32.xlu0 %v1567, 104
        %v5634 = vpop.permute.xlu0 %5633
        %5635 = vrot.lane.b32.xlu0 %v1568, 104
        %v5636 = vpop.permute.xlu0 %5635
        %5637 = vrot.lane.b32.xlu0 %v1569, 104
        %v5638 = vpop.permute.xlu0 %5637
        %5639 = vrot.lane.b32.xlu0 %v1570, 104
        %v5640 = vpop.permute.xlu0 %5639
        %5641 = vrot.lane.b32.xlu0 %v1571, 104
        %v5642 = vpop.permute.xlu0 %5641
        %5643 = vrot.lane.b32.xlu0 %v1572, 104
        %v5644 = vpop.permute.xlu0 %5643
        %5645 = vrot.lane.b32.xlu0 %v1573, 104
        %v5646 = vpop.permute.xlu0 %5645
        %5647 = vrot.lane.b32.xlu0 %v1574, 104
        %v5648 = vpop.permute.xlu0 %5647
        %5649 = vrot.lane.b32.xlu0 %v1575, 104
        %v5650 = vpop.permute.xlu0 %5649
        %5651 = vrot.lane.b32.xlu0 %v1576, 104
        %v5652 = vpop.permute.xlu0 %5651
        %5653 = vrot.lane.b32.xlu0 %v1577, 104
        %v5654 = vpop.permute.xlu0 %5653
        %5655 = vrot.lane.b32.xlu0 %v1578, 104
        %v5656 = vpop.permute.xlu0 %5655
        %5657 = vrot.lane.b32.xlu0 %v1579, 104
        %v5658 = vpop.permute.xlu0 %5657
        %5659 = vrot.lane.b32.xlu0 %v1580, 104
        %v5660 = vpop.permute.xlu0 %5659
        %5661 = vrot.lane.b32.xlu0 %v1581, 104
        %v5662 = vpop.permute.xlu0 %5661
        %5663 = vrot.lane.b32.xlu0 %v1582, 104
        %v5664 = vpop.permute.xlu0 %5663
        %5665 = vrot.lane.b32.xlu0 %v1583, 104
        %v5666 = vpop.permute.xlu0 %5665
        %5667 = vrot.lane.b32.xlu0 %v1584, 104
        %v5668 = vpop.permute.xlu0 %5667
        %5669 = vrot.lane.b32.xlu0 %v1585, 104
        %v5670 = vpop.permute.xlu0 %5669
        %5671 = vrot.lane.b32.xlu0 %v1586, 104
        %v5672 = vpop.permute.xlu0 %5671
        %5673 = vrot.lane.b32.xlu0 %v1587, 104
        %v5674 = vpop.permute.xlu0 %5673
        %5675 = vrot.lane.b32.xlu0 %v1588, 104
        %v5676 = vpop.permute.xlu0 %5675
        %5677 = vrot.lane.b32.xlu0 %v1589, 104
        %v5678 = vpop.permute.xlu0 %5677
        %5679 = vrot.lane.b32.xlu0 %v1590, 104
        %v5680 = vpop.permute.xlu0 %5679
        %5681 = vrot.lane.b32.xlu0 %v1591, 104
        %v5682 = vpop.permute.xlu0 %5681
        %5683 = vrot.lane.b32.xlu0 %v1592, 104
        %v5684 = vpop.permute.xlu0 %5683
        %5685 = vrot.lane.b32.xlu0 %v1593, 104
        %v5686 = vpop.permute.xlu0 %5685
        %5687 = vrot.lane.b32.xlu0 %v1594, 104
        %v5688 = vpop.permute.xlu0 %5687
        %5689 = vrot.lane.b32.xlu0 %v1595, 104
        %v5690 = vpop.permute.xlu0 %5689
        %5691 = vrot.lane.b32.xlu0 %v1596, 104
        %v5692 = vpop.permute.xlu0 %5691
        %5693 = vrot.lane.b32.xlu0 %v1597, 104
        %v5694 = vpop.permute.xlu0 %5693
        %5695 = vrot.lane.b32.xlu0 %v1598, 104
        %v5696 = vpop.permute.xlu0 %5695
        %5697 = vrot.lane.b32.xlu0 %v1599, 104
        %v5698 = vpop.permute.xlu0 %5697
        %5699 = vrot.lane.b32.xlu0 %v1600, 104
        %v5700 = vpop.permute.xlu0 %5699
        %5829 = vrot.lane.b32.xlu0 %v1601, 112
        %v5830 = vpop.permute.xlu0 %5829
        %5831 = vrot.lane.b32.xlu0 %v1602, 112
        %v5832 = vpop.permute.xlu0 %5831
        %5833 = vrot.lane.b32.xlu0 %v1603, 112
        %v5834 = vpop.permute.xlu0 %5833
        %5835 = vrot.lane.b32.xlu0 %v1604, 112
        %v5836 = vpop.permute.xlu0 %5835
        %5837 = vrot.lane.b32.xlu0 %v1605, 112
        %v5838 = vpop.permute.xlu0 %5837
        %5839 = vrot.lane.b32.xlu0 %v1606, 112
        %v5840 = vpop.permute.xlu0 %5839
        %5841 = vrot.lane.b32.xlu0 %v1607, 112
        %v5842 = vpop.permute.xlu0 %5841
        %5843 = vrot.lane.b32.xlu0 %v1608, 112
        %v5844 = vpop.permute.xlu0 %5843
        %5845 = vrot.lane.b32.xlu0 %v1609, 112
        %v5846 = vpop.permute.xlu0 %5845
        %5847 = vrot.lane.b32.xlu0 %v1610, 112
        %v5848 = vpop.permute.xlu0 %5847
        %5849 = vrot.lane.b32.xlu0 %v1611, 112
        %v5850 = vpop.permute.xlu0 %5849
        %5851 = vrot.lane.b32.xlu0 %v1612, 112
        %v5852 = vpop.permute.xlu0 %5851
        %5853 = vrot.lane.b32.xlu0 %v1613, 112
        %v5854 = vpop.permute.xlu0 %5853
        %5855 = vrot.lane.b32.xlu0 %v1614, 112
        %v5856 = vpop.permute.xlu0 %5855
        %5857 = vrot.lane.b32.xlu0 %v1615, 112
        %v5858 = vpop.permute.xlu0 %5857
        %5859 = vrot.lane.b32.xlu0 %v1616, 112
        %v5860 = vpop.permute.xlu0 %5859
        %5861 = vrot.lane.b32.xlu0 %v1617, 112
        %v5862 = vpop.permute.xlu0 %5861
        %5863 = vrot.lane.b32.xlu0 %v1618, 112
        %v5864 = vpop.permute.xlu0 %5863
        %5865 = vrot.lane.b32.xlu0 %v1619, 112
        %v5866 = vpop.permute.xlu0 %5865
        %5867 = vrot.lane.b32.xlu0 %v1620, 112
        %v5868 = vpop.permute.xlu0 %5867
        %5869 = vrot.lane.b32.xlu0 %v1621, 112
        %v5870 = vpop.permute.xlu0 %5869
        %5871 = vrot.lane.b32.xlu0 %v1622, 112
        %v5872 = vpop.permute.xlu0 %5871
        %5873 = vrot.lane.b32.xlu0 %v1623, 112
        %v5874 = vpop.permute.xlu0 %5873
        %5875 = vrot.lane.b32.xlu0 %v1624, 112
        %v5876 = vpop.permute.xlu0 %5875
        %5877 = vrot.lane.b32.xlu0 %v1625, 112
        %v5878 = vpop.permute.xlu0 %5877
        %5879 = vrot.lane.b32.xlu0 %v1626, 112
        %v5880 = vpop.permute.xlu0 %5879
        %5881 = vrot.lane.b32.xlu0 %v1627, 112
        %v5882 = vpop.permute.xlu0 %5881
        %5883 = vrot.lane.b32.xlu0 %v1628, 112
        %v5884 = vpop.permute.xlu0 %5883
        %5885 = vrot.lane.b32.xlu0 %v1629, 112
        %v5886 = vpop.permute.xlu0 %5885
        %5887 = vrot.lane.b32.xlu0 %v1630, 112
        %v5888 = vpop.permute.xlu0 %5887
        %5889 = vrot.lane.b32.xlu0 %v1631, 112
        %v5890 = vpop.permute.xlu0 %5889
        %5891 = vrot.lane.b32.xlu0 %v1632, 112
        %v5892 = vpop.permute.xlu0 %5891
        %5893 = vrot.lane.b32.xlu0 %v1633, 112
        %v5894 = vpop.permute.xlu0 %5893
        %5895 = vrot.lane.b32.xlu0 %v1634, 112
        %v5896 = vpop.permute.xlu0 %5895
        %5897 = vrot.lane.b32.xlu0 %v1635, 112
        %v5898 = vpop.permute.xlu0 %5897
        %5899 = vrot.lane.b32.xlu0 %v1636, 112
        %v5900 = vpop.permute.xlu0 %5899
        %5901 = vrot.lane.b32.xlu0 %v1637, 112
        %v5902 = vpop.permute.xlu0 %5901
        %5903 = vrot.lane.b32.xlu0 %v1638, 112
        %v5904 = vpop.permute.xlu0 %5903
        %5905 = vrot.lane.b32.xlu0 %v1639, 112
        %v5906 = vpop.permute.xlu0 %5905
        %5907 = vrot.lane.b32.xlu0 %v1640, 112
        %v5908 = vpop.permute.xlu0 %5907
        %5909 = vrot.lane.b32.xlu0 %v1641, 112
        %v5910 = vpop.permute.xlu0 %5909
        %5911 = vrot.lane.b32.xlu0 %v1642, 112
        %v5912 = vpop.permute.xlu0 %5911
        %5913 = vrot.lane.b32.xlu0 %v1643, 112
        %v5914 = vpop.permute.xlu0 %5913
        %5915 = vrot.lane.b32.xlu0 %v1644, 112
        %v5916 = vpop.permute.xlu0 %5915
        %5917 = vrot.lane.b32.xlu0 %v1645, 112
        %v5918 = vpop.permute.xlu0 %5917
        %5919 = vrot.lane.b32.xlu0 %v1646, 112
        %v5920 = vpop.permute.xlu0 %5919
        %5921 = vrot.lane.b32.xlu0 %v1647, 112
        %v5922 = vpop.permute.xlu0 %5921
        %5923 = vrot.lane.b32.xlu0 %v1648, 112
        %v5924 = vpop.permute.xlu0 %5923
        %5925 = vrot.lane.b32.xlu0 %v1649, 112
        %v5926 = vpop.permute.xlu0 %5925
        %5927 = vrot.lane.b32.xlu0 %v1650, 112
        %v5928 = vpop.permute.xlu0 %5927
        %5929 = vrot.lane.b32.xlu0 %v1651, 112
        %v5930 = vpop.permute.xlu0 %5929
        %5931 = vrot.lane.b32.xlu0 %v1652, 112
        %v5932 = vpop.permute.xlu0 %5931
        %5933 = vrot.lane.b32.xlu0 %v1653, 112
        %v5934 = vpop.permute.xlu0 %5933
        %5935 = vrot.lane.b32.xlu0 %v1654, 112
        %v5936 = vpop.permute.xlu0 %5935
        %5937 = vrot.lane.b32.xlu0 %v1655, 112
        %v5938 = vpop.permute.xlu0 %5937
        %5939 = vrot.lane.b32.xlu0 %v1656, 112
        %v5940 = vpop.permute.xlu0 %5939
        %5941 = vrot.lane.b32.xlu0 %v1657, 112
        %v5942 = vpop.permute.xlu0 %5941
        %5943 = vrot.lane.b32.xlu0 %v1658, 112
        %v5944 = vpop.permute.xlu0 %5943
        %5945 = vrot.lane.b32.xlu0 %v1659, 112
        %v5946 = vpop.permute.xlu0 %5945
        %5947 = vrot.lane.b32.xlu0 %v1660, 112
        %v5948 = vpop.permute.xlu0 %5947
        %5949 = vrot.lane.b32.xlu0 %v1661, 112
        %v5950 = vpop.permute.xlu0 %5949
        %5951 = vrot.lane.b32.xlu0 %v1662, 112
        %v5952 = vpop.permute.xlu0 %5951
        %5953 = vrot.lane.b32.xlu0 %v1663, 112
        %v5954 = vpop.permute.xlu0 %5953
        %5955 = vrot.lane.b32.xlu0 %v1664, 112
        %v5956 = vpop.permute.xlu0 %5955
        %6085 = vrot.lane.b32.xlu0 %v1666, 120
        %v6086 = vpop.permute.xlu0 %6085
        %6087 = vrot.lane.b32.xlu0 %v1667, 120
        %v6088 = vpop.permute.xlu0 %6087
        %6089 = vrot.lane.b32.xlu0 %v1668, 120
        %v6090 = vpop.permute.xlu0 %6089
        %6091 = vrot.lane.b32.xlu0 %v1669, 120
        %v6092 = vpop.permute.xlu0 %6091
        %6093 = vrot.lane.b32.xlu0 %v1670, 120
        %v6094 = vpop.permute.xlu0 %6093
        %6095 = vrot.lane.b32.xlu0 %v1671, 120
        %v6096 = vpop.permute.xlu0 %6095
        %6097 = vrot.lane.b32.xlu0 %v1672, 120
        %v6098 = vpop.permute.xlu0 %6097
        %6099 = vrot.lane.b32.xlu0 %v1673, 120
        %v6100 = vpop.permute.xlu0 %6099
        %6101 = vrot.lane.b32.xlu0 %v1674, 120
        %v6102 = vpop.permute.xlu0 %6101
        %6103 = vrot.lane.b32.xlu0 %v1675, 120
        %v6104 = vpop.permute.xlu0 %6103
        %6105 = vrot.lane.b32.xlu0 %v1676, 120
        %v6106 = vpop.permute.xlu0 %6105
        %6107 = vrot.lane.b32.xlu0 %v1677, 120
        %v6108 = vpop.permute.xlu0 %6107
        %6109 = vrot.lane.b32.xlu0 %v1678, 120
        %v6110 = vpop.permute.xlu0 %6109
        %6111 = vrot.lane.b32.xlu0 %v1679, 120
        %v6112 = vpop.permute.xlu0 %6111
        %6113 = vrot.lane.b32.xlu0 %v1680, 120
        %v6114 = vpop.permute.xlu0 %6113
        %6115 = vrot.lane.b32.xlu0 %v1681, 120
        %v6116 = vpop.permute.xlu0 %6115
        %6117 = vrot.lane.b32.xlu0 %v1682, 120
        %v6118 = vpop.permute.xlu0 %6117
        %6119 = vrot.lane.b32.xlu0 %v1683, 120
        %v6120 = vpop.permute.xlu0 %6119
        %6121 = vrot.lane.b32.xlu0 %v1684, 120
        %v6122 = vpop.permute.xlu0 %6121
        %6123 = vrot.lane.b32.xlu0 %v1685, 120
        %v6124 = vpop.permute.xlu0 %6123
        %6125 = vrot.lane.b32.xlu0 %v1686, 120
        %v6126 = vpop.permute.xlu0 %6125
        %6127 = vrot.lane.b32.xlu0 %v1687, 120
        %v6128 = vpop.permute.xlu0 %6127
        %6129 = vrot.lane.b32.xlu0 %v1688, 120
        %v6130 = vpop.permute.xlu0 %6129
        %6131 = vrot.lane.b32.xlu0 %v1689, 120
        %v6132 = vpop.permute.xlu0 %6131
        %6133 = vrot.lane.b32.xlu0 %v1690, 120
        %v6134 = vpop.permute.xlu0 %6133
        %6135 = vrot.lane.b32.xlu0 %v1691, 120
        %v6136 = vpop.permute.xlu0 %6135
        %6137 = vrot.lane.b32.xlu0 %v1692, 120
        %v6138 = vpop.permute.xlu0 %6137
        %6139 = vrot.lane.b32.xlu0 %v1693, 120
        %v6140 = vpop.permute.xlu0 %6139
        %6141 = vrot.lane.b32.xlu0 %v1694, 120
        %v6142 = vpop.permute.xlu0 %6141
        %6143 = vrot.lane.b32.xlu0 %v1695, 120
        %v6144 = vpop.permute.xlu0 %6143
        %6145 = vrot.lane.b32.xlu0 %v1696, 120
        %v6146 = vpop.permute.xlu0 %6145
        %6147 = vrot.lane.b32.xlu0 %v1697, 120
        %v6148 = vpop.permute.xlu0 %6147
        %6149 = vrot.lane.b32.xlu0 %v1698, 120
        %v6150 = vpop.permute.xlu0 %6149
        %6151 = vrot.lane.b32.xlu0 %v1699, 120
        %v6152 = vpop.permute.xlu0 %6151
        %6153 = vrot.lane.b32.xlu0 %v1700, 120
        %v6154 = vpop.permute.xlu0 %6153
        %6155 = vrot.lane.b32.xlu0 %v1701, 120
        %v6156 = vpop.permute.xlu0 %6155
        %6157 = vrot.lane.b32.xlu0 %v1702, 120
        %v6158 = vpop.permute.xlu0 %6157
        %6159 = vrot.lane.b32.xlu0 %v1703, 120
        %v6160 = vpop.permute.xlu0 %6159
        %6161 = vrot.lane.b32.xlu0 %v1704, 120
        %v6162 = vpop.permute.xlu0 %6161
        %6163 = vrot.lane.b32.xlu0 %v1705, 120
        %v6164 = vpop.permute.xlu0 %6163
        %6165 = vrot.lane.b32.xlu0 %v1706, 120
        %v6166 = vpop.permute.xlu0 %6165
        %6167 = vrot.lane.b32.xlu0 %v1707, 120
        %v6168 = vpop.permute.xlu0 %6167
        %6169 = vrot.lane.b32.xlu0 %v1708, 120
        %v6170 = vpop.permute.xlu0 %6169
        %6171 = vrot.lane.b32.xlu0 %v1709, 120
        %v6172 = vpop.permute.xlu0 %6171
        %6173 = vrot.lane.b32.xlu0 %v1710, 120
        %v6174 = vpop.permute.xlu0 %6173
        %6175 = vrot.lane.b32.xlu0 %v1711, 120
        %v6176 = vpop.permute.xlu0 %6175
        %6177 = vrot.lane.b32.xlu0 %v1712, 120
        %v6178 = vpop.permute.xlu0 %6177
        %6179 = vrot.lane.b32.xlu0 %v1713, 120
        %v6180 = vpop.permute.xlu0 %6179
        %6181 = vrot.lane.b32.xlu0 %v1714, 120
        %v6182 = vpop.permute.xlu0 %6181
        %6183 = vrot.lane.b32.xlu0 %v1715, 120
        %v6184 = vpop.permute.xlu0 %6183
        %6185 = vrot.lane.b32.xlu0 %v1716, 120
        %v6186 = vpop.permute.xlu0 %6185
        %6187 = vrot.lane.b32.xlu0 %v1717, 120
        %v6188 = vpop.permute.xlu0 %6187
        %6189 = vrot.lane.b32.xlu0 %v1718, 120
        %v6190 = vpop.permute.xlu0 %6189
        %6191 = vrot.lane.b32.xlu0 %v1719, 120
        %v6192 = vpop.permute.xlu0 %6191
        %6193 = vrot.lane.b32.xlu0 %v1720, 120
        %v6194 = vpop.permute.xlu0 %6193
        %6195 = vrot.lane.b32.xlu0 %v1721, 120
        %v6196 = vpop.permute.xlu0 %6195
        %6197 = vrot.lane.b32.xlu0 %v1722, 120
        %v6198 = vpop.permute.xlu0 %6197
        %6199 = vrot.lane.b32.xlu0 %v1723, 120
        %v6200 = vpop.permute.xlu0 %6199
        %6201 = vrot.lane.b32.xlu0 %v1724, 120
        %v6202 = vpop.permute.xlu0 %6201
        %6203 = vrot.lane.b32.xlu0 %v1725, 120
        %v6204 = vpop.permute.xlu0 %6203
        %6205 = vrot.lane.b32.xlu0 %v1726, 120
        %v6206 = vpop.permute.xlu0 %6205
        %6207 = vrot.lane.b32.xlu0 %v1727, 120
        %v6208 = vpop.permute.xlu0 %6207
        %6209 = vrot.lane.b32.xlu0 %v1728, 120
        %v6210 = vpop.permute.xlu0 %6209
        %6211 = vrot.lane.b32.xlu0 %v1729, 120
        %v6212 = vpop.permute.xlu0 %6211
        %v6277 = vsel %vm371, %v702, %v2502
        %v6278 = vsel %vm371, %v703, %v2504
        %v6279 = vsel %vm371, %v704, %v2506
        %v6280 = vsel %vm371, %v705, %v2508
        %v6281 = vsel %vm371, %v706, %v2510
        %v6282 = vsel %vm371, %v707, %v2512
        %v6283 = vsel %vm371, %v708, %v2514
        %v6284 = vsel %vm371, %v709, %v2516
        %v6285 = vsel %vm371, %v710, %v2518
        %v6286 = vsel %vm371, %v711, %v2520
        %v6287 = vsel %vm371, %v712, %v2522
        %v6288 = vsel %vm371, %v713, %v2524
        %v6289 = vsel %vm371, %v714, %v2526
        %v6290 = vsel %vm371, %v715, %v2528
        %v6291 = vsel %vm371, %v716, %v2530
        %v6292 = vsel %vm371, %v717, %v2532
        %v6293 = vsel %vm371, %v718, %v2534
        %v6294 = vsel %vm371, %v719, %v2536
        %v6295 = vsel %vm371, %v720, %v2538
        %v6296 = vsel %vm371, %v721, %v2540
        %v6297 = vsel %vm371, %v722, %v2542
        %v6298 = vsel %vm371, %v723, %v2544
        %v6299 = vsel %vm371, %v724, %v2546
        %v6300 = vsel %vm371, %v725, %v2548
        %v6301 = vsel %vm371, %v726, %v2550
        %v6302 = vsel %vm371, %v727, %v2552
        %v6303 = vsel %vm371, %v728, %v2554
        %v6304 = vsel %vm371, %v729, %v2556
        %v6305 = vsel %vm371, %v730, %v2558
        %v6306 = vsel %vm371, %v731, %v2560
        %v6307 = vsel %vm371, %v732, %v2562
        %v6308 = vsel %vm371, %v733, %v2564
        %v6309 = vsel %vm371, %v734, %v2566
        %v6310 = vsel %vm371, %v735, %v2568
        %v6311 = vsel %vm371, %v736, %v2570
        %v6312 = vsel %vm371, %v737, %v2572
        %v6313 = vsel %vm371, %v738, %v2574
        %v6314 = vsel %vm371, %v739, %v2576
        %v6315 = vsel %vm371, %v740, %v2578
        %v6316 = vsel %vm371, %v741, %v2580
        %v6317 = vsel %vm371, %v742, %v2582
        %v6318 = vsel %vm371, %v743, %v2584
        %v6319 = vsel %vm371, %v744, %v2586
        %v6320 = vsel %vm371, %v745, %v2588
        %v6321 = vsel %vm371, %v746, %v2590
        %v6322 = vsel %vm371, %v747, %v2592
        %v6323 = vsel %vm371, %v748, %v2594
        %v6324 = vsel %vm371, %v749, %v2596
        %v6325 = vsel %vm371, %v750, %v2598
        %v6326 = vsel %vm371, %v751, %v2600
        %v6327 = vsel %vm371, %v752, %v2602
        %v6328 = vsel %vm371, %v753, %v2604
        %v6329 = vsel %vm371, %v754, %v2606
        %v6330 = vsel %vm371, %v755, %v2608
        %v6331 = vsel %vm371, %v756, %v2610
        %v6332 = vsel %vm371, %v757, %v2612
        %v6333 = vsel %vm371, %v758, %v2614
        %v6334 = vsel %vm371, %v759, %v2616
        %v6335 = vsel %vm371, %v760, %v2618
        %v6336 = vsel %vm371, %v761, %v2620
        %v6337 = vsel %vm371, %v762, %v2622
        %v6338 = vsel %vm371, %v763, %v2624
        %v6339 = vsel %vm371, %v764, %v2626
        %v6340 = vsel %vm371, %v765, %v2628
        %vm6341 = vcmask 130048
        %v6342 = vsel %vm6341, %v6277, %v2758
        %v6343 = vsel %vm6341, %v6278, %v2760
        %v6344 = vsel %vm6341, %v6279, %v2762
        %v6345 = vsel %vm6341, %v6280, %v2764
        %v6346 = vsel %vm6341, %v6281, %v2766
        %v6347 = vsel %vm6341, %v6282, %v2768
        %v6348 = vsel %vm6341, %v6283, %v2770
        %v6349 = vsel %vm6341, %v6284, %v2772
        %v6350 = vsel %vm6341, %v6285, %v2774
        %v6351 = vsel %vm6341, %v6286, %v2776
        %v6352 = vsel %vm6341, %v6287, %v2778
        %v6353 = vsel %vm6341, %v6288, %v2780
        %v6354 = vsel %vm6341, %v6289, %v2782
        %v6355 = vsel %vm6341, %v6290, %v2784
        %v6356 = vsel %vm6341, %v6291, %v2786
        %v6357 = vsel %vm6341, %v6292, %v2788
        %v6358 = vsel %vm6341, %v6293, %v2790
        %v6359 = vsel %vm6341, %v6294, %v2792
        %v6360 = vsel %vm6341, %v6295, %v2794
        %v6361 = vsel %vm6341, %v6296, %v2796
        %v6362 = vsel %vm6341, %v6297, %v2798
        %v6363 = vsel %vm6341, %v6298, %v2800
        %v6364 = vsel %vm6341, %v6299, %v2802
        %v6365 = vsel %vm6341, %v6300, %v2804
        %v6366 = vsel %vm6341, %v6301, %v2806
        %v6367 = vsel %vm6341, %v6302, %v2808
        %v6368 = vsel %vm6341, %v6303, %v2810
        %v6369 = vsel %vm6341, %v6304, %v2812
        %v6370 = vsel %vm6341, %v6305, %v2814
        %v6371 = vsel %vm6341, %v6306, %v2816
        %v6372 = vsel %vm6341, %v6307, %v2818
        %v6373 = vsel %vm6341, %v6308, %v2820
        %v6374 = vsel %vm6341, %v6309, %v2822
        %v6375 = vsel %vm6341, %v6310, %v2824
        %v6376 = vsel %vm6341, %v6311, %v2826
        %v6377 = vsel %vm6341, %v6312, %v2828
        %v6378 = vsel %vm6341, %v6313, %v2830
        %v6379 = vsel %vm6341, %v6314, %v2832
        %v6380 = vsel %vm6341, %v6315, %v2834
        %v6381 = vsel %vm6341, %v6316, %v2836
        %v6382 = vsel %vm6341, %v6317, %v2838
        %v6383 = vsel %vm6341, %v6318, %v2840
        %v6384 = vsel %vm6341, %v6319, %v2842
        %v6385 = vsel %vm6341, %v6320, %v2844
        %v6386 = vsel %vm6341, %v6321, %v2846
        %v6387 = vsel %vm6341, %v6322, %v2848
        %v6388 = vsel %vm6341, %v6323, %v2850
        %v6389 = vsel %vm6341, %v6324, %v2852
        %v6390 = vsel %vm6341, %v6325, %v2854
        %v6391 = vsel %vm6341, %v6326, %v2856
        %v6392 = vsel %vm6341, %v6327, %v2858
        %v6393 = vsel %vm6341, %v6328, %v2860
        %v6394 = vsel %vm6341, %v6329, %v2862
        %v6395 = vsel %vm6341, %v6330, %v2864
        %v6396 = vsel %vm6341, %v6331, %v2866
        %v6397 = vsel %vm6341, %v6332, %v2868
        %v6398 = vsel %vm6341, %v6333, %v2870
        %v6399 = vsel %vm6341, %v6334, %v2872
        %v6400 = vsel %vm6341, %v6335, %v2874
        %v6401 = vsel %vm6341, %v6336, %v2876
        %v6402 = vsel %vm6341, %v6337, %v2878
        %v6403 = vsel %vm6341, %v6338, %v2880
        %v6404 = vsel %vm6341, %v6339, %v2882
        %v6405 = vsel %vm6341, %v6340, %v2884
        %vm6406 = vcmask 195584
        %v6407 = vsel %vm6406, %v6342, %v3014
        %v6408 = vsel %vm6406, %v6343, %v3016
        %v6409 = vsel %vm6406, %v6344, %v3018
        %v6410 = vsel %vm6406, %v6345, %v3020
        %v6411 = vsel %vm6406, %v6346, %v3022
        %v6412 = vsel %vm6406, %v6347, %v3024
        %v6413 = vsel %vm6406, %v6348, %v3026
        %v6414 = vsel %vm6406, %v6349, %v3028
        %v6415 = vsel %vm6406, %v6350, %v3030
        %v6416 = vsel %vm6406, %v6351, %v3032
        %v6417 = vsel %vm6406, %v6352, %v3034
        %v6418 = vsel %vm6406, %v6353, %v3036
        %v6419 = vsel %vm6406, %v6354, %v3038
        %v6420 = vsel %vm6406, %v6355, %v3040
        %v6421 = vsel %vm6406, %v6356, %v3042
        %v6422 = vsel %vm6406, %v6357, %v3044
        %v6423 = vsel %vm6406, %v6358, %v3046
        %v6424 = vsel %vm6406, %v6359, %v3048
        %v6425 = vsel %vm6406, %v6360, %v3050
        %v6426 = vsel %vm6406, %v6361, %v3052
        %v6427 = vsel %vm6406, %v6362, %v3054
        %v6428 = vsel %vm6406, %v6363, %v3056
        %v6429 = vsel %vm6406, %v6364, %v3058
        %v6430 = vsel %vm6406, %v6365, %v3060
        %v6431 = vsel %vm6406, %v6366, %v3062
        %v6432 = vsel %vm6406, %v6367, %v3064
        %v6433 = vsel %vm6406, %v6368, %v3066
        %v6434 = vsel %vm6406, %v6369, %v3068
        %v6435 = vsel %vm6406, %v6370, %v3070
        %v6436 = vsel %vm6406, %v6371, %v3072
        %v6437 = vsel %vm6406, %v6372, %v3074
        %v6438 = vsel %vm6406, %v6373, %v3076
        %v6439 = vsel %vm6406, %v6374, %v3078
        %v6440 = vsel %vm6406, %v6375, %v3080
        %v6441 = vsel %vm6406, %v6376, %v3082
        %v6442 = vsel %vm6406, %v6377, %v3084
        %v6443 = vsel %vm6406, %v6378, %v3086
        %v6444 = vsel %vm6406, %v6379, %v3088
        %v6445 = vsel %vm6406, %v6380, %v3090
        %v6446 = vsel %vm6406, %v6381, %v3092
        %v6447 = vsel %vm6406, %v6382, %v3094
        %v6448 = vsel %vm6406, %v6383, %v3096
        %v6449 = vsel %vm6406, %v6384, %v3098
        %v6450 = vsel %vm6406, %v6385, %v3100
        %v6451 = vsel %vm6406, %v6386, %v3102
        %v6452 = vsel %vm6406, %v6387, %v3104
        %v6453 = vsel %vm6406, %v6388, %v3106
        %v6454 = vsel %vm6406, %v6389, %v3108
        %v6455 = vsel %vm6406, %v6390, %v3110
        %v6456 = vsel %vm6406, %v6391, %v3112
        %v6457 = vsel %vm6406, %v6392, %v3114
        %v6458 = vsel %vm6406, %v6393, %v3116
        %v6459 = vsel %vm6406, %v6394, %v3118
        %v6460 = vsel %vm6406, %v6395, %v3120
        %v6461 = vsel %vm6406, %v6396, %v3122
        %v6462 = vsel %vm6406, %v6397, %v3124
        %v6463 = vsel %vm6406, %v6398, %v3126
        %v6464 = vsel %vm6406, %v6399, %v3128
        %v6465 = vsel %vm6406, %v6400, %v3130
        %v6466 = vsel %vm6406, %v6401, %v3132
        %v6467 = vsel %vm6406, %v6402, %v3134
        %v6468 = vsel %vm6406, %v6403, %v3136
        %v6469 = vsel %vm6406, %v6404, %v3138
        %v6470 = vsel %vm6406, %v6405, %v3140
        %vm6471 = vcmask 261120
        %v6472 = vsel %vm6471, %v6407, %v3270
        %v6473 = vsel %vm6471, %v6408, %v3272
        %v6474 = vsel %vm6471, %v6409, %v3274
        %v6475 = vsel %vm6471, %v6410, %v3276
        %v6476 = vsel %vm6471, %v6411, %v3278
        %v6477 = vsel %vm6471, %v6412, %v3280
        %v6478 = vsel %vm6471, %v6413, %v3282
        %v6479 = vsel %vm6471, %v6414, %v3284
        %v6480 = vsel %vm6471, %v6415, %v3286
        %v6481 = vsel %vm6471, %v6416, %v3288
        %v6482 = vsel %vm6471, %v6417, %v3290
        %v6483 = vsel %vm6471, %v6418, %v3292
        %v6484 = vsel %vm6471, %v6419, %v3294
        %v6485 = vsel %vm6471, %v6420, %v3296
        %v6486 = vsel %vm6471, %v6421, %v3298
        %v6487 = vsel %vm6471, %v6422, %v3300
        %v6488 = vsel %vm6471, %v6423, %v3302
        %v6489 = vsel %vm6471, %v6424, %v3304
        %v6490 = vsel %vm6471, %v6425, %v3306
        %v6491 = vsel %vm6471, %v6426, %v3308
        %v6492 = vsel %vm6471, %v6427, %v3310
        %v6493 = vsel %vm6471, %v6428, %v3312
        %v6494 = vsel %vm6471, %v6429, %v3314
        %v6495 = vsel %vm6471, %v6430, %v3316
        %v6496 = vsel %vm6471, %v6431, %v3318
        %v6497 = vsel %vm6471, %v6432, %v3320
        %v6498 = vsel %vm6471, %v6433, %v3322
        %v6499 = vsel %vm6471, %v6434, %v3324
        %v6500 = vsel %vm6471, %v6435, %v3326
        %v6501 = vsel %vm6471, %v6436, %v3328
        %v6502 = vsel %vm6471, %v6437, %v3330
        %v6503 = vsel %vm6471, %v6438, %v3332
        %v6504 = vsel %vm6471, %v6439, %v3334
        %v6505 = vsel %vm6471, %v6440, %v3336
        %v6506 = vsel %vm6471, %v6441, %v3338
        %v6507 = vsel %vm6471, %v6442, %v3340
        %v6508 = vsel %vm6471, %v6443, %v3342
        %v6509 = vsel %vm6471, %v6444, %v3344
        %v6510 = vsel %vm6471, %v6445, %v3346
        %v6511 = vsel %vm6471, %v6446, %v3348
        %v6512 = vsel %vm6471, %v6447, %v3350
        %v6513 = vsel %vm6471, %v6448, %v3352
        %v6514 = vsel %vm6471, %v6449, %v3354
        %v6515 = vsel %vm6471, %v6450, %v3356
        %v6516 = vsel %vm6471, %v6451, %v3358
        %v6517 = vsel %vm6471, %v6452, %v3360
        %v6518 = vsel %vm6471, %v6453, %v3362
        %v6519 = vsel %vm6471, %v6454, %v3364
        %v6520 = vsel %vm6471, %v6455, %v3366
        %v6521 = vsel %vm6471, %v6456, %v3368
        %v6522 = vsel %vm6471, %v6457, %v3370
        %v6523 = vsel %vm6471, %v6458, %v3372
        %v6524 = vsel %vm6471, %v6459, %v3374
        %v6525 = vsel %vm6471, %v6460, %v3376
        %v6526 = vsel %vm6471, %v6461, %v3378
        %v6527 = vsel %vm6471, %v6462, %v3380
        %v6528 = vsel %vm6471, %v6463, %v3382
        %v6529 = vsel %vm6471, %v6464, %v3384
        %v6530 = vsel %vm6471, %v6465, %v3386
        %v6531 = vsel %vm6471, %v6466, %v3388
        %v6532 = vsel %vm6471, %v6467, %v3390
        %v6533 = vsel %vm6471, %v6468, %v3392
        %v6534 = vsel %vm6471, %v6469, %v3394
        %v6535 = vsel %vm6471, %v6470, %v3396
        %vm6536 = vcmask 326656
        %v6537 = vsel %vm6536, %v6472, %v3526
        %v6538 = vsel %vm6536, %v6473, %v3528
        %v6539 = vsel %vm6536, %v6474, %v3530
        %v6540 = vsel %vm6536, %v6475, %v3532
        %v6541 = vsel %vm6536, %v6476, %v3534
        %v6542 = vsel %vm6536, %v6477, %v3536
        %v6543 = vsel %vm6536, %v6478, %v3538
        %v6544 = vsel %vm6536, %v6479, %v3540
        %v6545 = vsel %vm6536, %v6480, %v3542
        %v6546 = vsel %vm6536, %v6481, %v3544
        %v6547 = vsel %vm6536, %v6482, %v3546
        %v6548 = vsel %vm6536, %v6483, %v3548
        %v6549 = vsel %vm6536, %v6484, %v3550
        %v6550 = vsel %vm6536, %v6485, %v3552
        %v6551 = vsel %vm6536, %v6486, %v3554
        %v6552 = vsel %vm6536, %v6487, %v3556
        %v6553 = vsel %vm6536, %v6488, %v3558
        %v6554 = vsel %vm6536, %v6489, %v3560
        %v6555 = vsel %vm6536, %v6490, %v3562
        %v6556 = vsel %vm6536, %v6491, %v3564
        %v6557 = vsel %vm6536, %v6492, %v3566
        %v6558 = vsel %vm6536, %v6493, %v3568
        %v6559 = vsel %vm6536, %v6494, %v3570
        %v6560 = vsel %vm6536, %v6495, %v3572
        %v6561 = vsel %vm6536, %v6496, %v3574
        %v6562 = vsel %vm6536, %v6497, %v3576
        %v6563 = vsel %vm6536, %v6498, %v3578
        %v6564 = vsel %vm6536, %v6499, %v3580
        %v6565 = vsel %vm6536, %v6500, %v3582
        %v6566 = vsel %vm6536, %v6501, %v3584
        %v6567 = vsel %vm6536, %v6502, %v3586
        %v6568 = vsel %vm6536, %v6503, %v3588
        %v6569 = vsel %vm6536, %v6504, %v3590
        %v6570 = vsel %vm6536, %v6505, %v3592
        %v6571 = vsel %vm6536, %v6506, %v3594
        %v6572 = vsel %vm6536, %v6507, %v3596
        %v6573 = vsel %vm6536, %v6508, %v3598
        %v6574 = vsel %vm6536, %v6509, %v3600
        %v6575 = vsel %vm6536, %v6510, %v3602
        %v6576 = vsel %vm6536, %v6511, %v3604
        %v6577 = vsel %vm6536, %v6512, %v3606
        %v6578 = vsel %vm6536, %v6513, %v3608
        %v6579 = vsel %vm6536, %v6514, %v3610
        %v6580 = vsel %vm6536, %v6515, %v3612
        %v6581 = vsel %vm6536, %v6516, %v3614
        %v6582 = vsel %vm6536, %v6517, %v3616
        %v6583 = vsel %vm6536, %v6518, %v3618
        %v6584 = vsel %vm6536, %v6519, %v3620
        %v6585 = vsel %vm6536, %v6520, %v3622
        %v6586 = vsel %vm6536, %v6521, %v3624
        %v6587 = vsel %vm6536, %v6522, %v3626
        %v6588 = vsel %vm6536, %v6523, %v3628
        %v6589 = vsel %vm6536, %v6524, %v3630
        %v6590 = vsel %vm6536, %v6525, %v3632
        %v6591 = vsel %vm6536, %v6526, %v3634
        %v6592 = vsel %vm6536, %v6527, %v3636
        %v6593 = vsel %vm6536, %v6528, %v3638
        %v6594 = vsel %vm6536, %v6529, %v3640
        %v6595 = vsel %vm6536, %v6530, %v3642
        %v6596 = vsel %vm6536, %v6531, %v3644
        %v6597 = vsel %vm6536, %v6532, %v3646
        %v6598 = vsel %vm6536, %v6533, %v3648
        %v6599 = vsel %vm6536, %v6534, %v3650
        %v6600 = vsel %vm6536, %v6535, %v3652
        %vm6601 = vcmask 392192
        %v6602 = vsel %vm6601, %v6537, %v3782
        %v6603 = vsel %vm6601, %v6538, %v3784
        %v6604 = vsel %vm6601, %v6539, %v3786
        %v6605 = vsel %vm6601, %v6540, %v3788
        %v6606 = vsel %vm6601, %v6541, %v3790
        %v6607 = vsel %vm6601, %v6542, %v3792
        %v6608 = vsel %vm6601, %v6543, %v3794
        %v6609 = vsel %vm6601, %v6544, %v3796
        %v6610 = vsel %vm6601, %v6545, %v3798
        %v6611 = vsel %vm6601, %v6546, %v3800
        %v6612 = vsel %vm6601, %v6547, %v3802
        %v6613 = vsel %vm6601, %v6548, %v3804
        %v6614 = vsel %vm6601, %v6549, %v3806
        %v6615 = vsel %vm6601, %v6550, %v3808
        %v6616 = vsel %vm6601, %v6551, %v3810
        %v6617 = vsel %vm6601, %v6552, %v3812
        %v6618 = vsel %vm6601, %v6553, %v3814
        %v6619 = vsel %vm6601, %v6554, %v3816
        %v6620 = vsel %vm6601, %v6555, %v3818
        %v6621 = vsel %vm6601, %v6556, %v3820
        %v6622 = vsel %vm6601, %v6557, %v3822
        %v6623 = vsel %vm6601, %v6558, %v3824
        %v6624 = vsel %vm6601, %v6559, %v3826
        %v6625 = vsel %vm6601, %v6560, %v3828
        %v6626 = vsel %vm6601, %v6561, %v3830
        %v6627 = vsel %vm6601, %v6562, %v3832
        %v6628 = vsel %vm6601, %v6563, %v3834
        %v6629 = vsel %vm6601, %v6564, %v3836
        %v6630 = vsel %vm6601, %v6565, %v3838
        %v6631 = vsel %vm6601, %v6566, %v3840
        %v6632 = vsel %vm6601, %v6567, %v3842
        %v6633 = vsel %vm6601, %v6568, %v3844
        %v6634 = vsel %vm6601, %v6569, %v3846
        %v6635 = vsel %vm6601, %v6570, %v3848
        %v6636 = vsel %vm6601, %v6571, %v3850
        %v6637 = vsel %vm6601, %v6572, %v3852
        %v6638 = vsel %vm6601, %v6573, %v3854
        %v6639 = vsel %vm6601, %v6574, %v3856
        %v6640 = vsel %vm6601, %v6575, %v3858
        %v6641 = vsel %vm6601, %v6576, %v3860
        %v6642 = vsel %vm6601, %v6577, %v3862
        %v6643 = vsel %vm6601, %v6578, %v3864
        %v6644 = vsel %vm6601, %v6579, %v3866
        %v6645 = vsel %vm6601, %v6580, %v3868
        %v6646 = vsel %vm6601, %v6581, %v3870
        %v6647 = vsel %vm6601, %v6582, %v3872
        %v6648 = vsel %vm6601, %v6583, %v3874
        %v6649 = vsel %vm6601, %v6584, %v3876
        %v6650 = vsel %vm6601, %v6585, %v3878
        %v6651 = vsel %vm6601, %v6586, %v3880
        %v6652 = vsel %vm6601, %v6587, %v3882
        %v6653 = vsel %vm6601, %v6588, %v3884
        %v6654 = vsel %vm6601, %v6589, %v3886
        %v6655 = vsel %vm6601, %v6590, %v3888
        %v6656 = vsel %vm6601, %v6591, %v3890
        %v6657 = vsel %vm6601, %v6592, %v3892
        %v6658 = vsel %vm6601, %v6593, %v3894
        %v6659 = vsel %vm6601, %v6594, %v3896
        %v6660 = vsel %vm6601, %v6595, %v3898
        %v6661 = vsel %vm6601, %v6596, %v3900
        %v6662 = vsel %vm6601, %v6597, %v3902
        %v6663 = vsel %vm6601, %v6598, %v3904
        %v6664 = vsel %vm6601, %v6599, %v3906
        %v6665 = vsel %vm6601, %v6600, %v3908
        %vm6666 = vcmask 457728
        %v6667 = vsel %vm6666, %v6602, %v4038
        %v6668 = vsel %vm6666, %v6603, %v4040
        %v6669 = vsel %vm6666, %v6604, %v4042
        %v6670 = vsel %vm6666, %v6605, %v4044
        %v6671 = vsel %vm6666, %v6606, %v4046
        %v6672 = vsel %vm6666, %v6607, %v4048
        %v6673 = vsel %vm6666, %v6608, %v4050
        %v6674 = vsel %vm6666, %v6609, %v4052
        %v6675 = vsel %vm6666, %v6610, %v4054
        %v6676 = vsel %vm6666, %v6611, %v4056
        %v6677 = vsel %vm6666, %v6612, %v4058
        %v6678 = vsel %vm6666, %v6613, %v4060
        %v6679 = vsel %vm6666, %v6614, %v4062
        %v6680 = vsel %vm6666, %v6615, %v4064
        %v6681 = vsel %vm6666, %v6616, %v4066
        %v6682 = vsel %vm6666, %v6617, %v4068
        %v6683 = vsel %vm6666, %v6618, %v4070
        %v6684 = vsel %vm6666, %v6619, %v4072
        %v6685 = vsel %vm6666, %v6620, %v4074
        %v6686 = vsel %vm6666, %v6621, %v4076
        %v6687 = vsel %vm6666, %v6622, %v4078
        %v6688 = vsel %vm6666, %v6623, %v4080
        %v6689 = vsel %vm6666, %v6624, %v4082
        %v6690 = vsel %vm6666, %v6625, %v4084
        %v6691 = vsel %vm6666, %v6626, %v4086
        %v6692 = vsel %vm6666, %v6627, %v4088
        %v6693 = vsel %vm6666, %v6628, %v4090
        %v6694 = vsel %vm6666, %v6629, %v4092
        %v6695 = vsel %vm6666, %v6630, %v4094
        %v6696 = vsel %vm6666, %v6631, %v4096
        %v6697 = vsel %vm6666, %v6632, %v4098
        %v6698 = vsel %vm6666, %v6633, %v4100
        %v6699 = vsel %vm6666, %v6634, %v4102
        %v6700 = vsel %vm6666, %v6635, %v4104
        %v6701 = vsel %vm6666, %v6636, %v4106
        %v6702 = vsel %vm6666, %v6637, %v4108
        %v6703 = vsel %vm6666, %v6638, %v4110
        %v6704 = vsel %vm6666, %v6639, %v4112
        %v6705 = vsel %vm6666, %v6640, %v4114
        %v6706 = vsel %vm6666, %v6641, %v4116
        %v6707 = vsel %vm6666, %v6642, %v4118
        %v6708 = vsel %vm6666, %v6643, %v4120
        %v6709 = vsel %vm6666, %v6644, %v4122
        %v6710 = vsel %vm6666, %v6645, %v4124
        %v6711 = vsel %vm6666, %v6646, %v4126
        %v6712 = vsel %vm6666, %v6647, %v4128
        %v6713 = vsel %vm6666, %v6648, %v4130
        %v6714 = vsel %vm6666, %v6649, %v4132
        %v6715 = vsel %vm6666, %v6650, %v4134
        %v6716 = vsel %vm6666, %v6651, %v4136
        %v6717 = vsel %vm6666, %v6652, %v4138
        %v6718 = vsel %vm6666, %v6653, %v4140
        %v6719 = vsel %vm6666, %v6654, %v4142
        %v6720 = vsel %vm6666, %v6655, %v4144
        %v6721 = vsel %vm6666, %v6656, %v4146
        %v6722 = vsel %vm6666, %v6657, %v4148
        %v6723 = vsel %vm6666, %v6658, %v4150
        %v6724 = vsel %vm6666, %v6659, %v4152
        %v6725 = vsel %vm6666, %v6660, %v4154
        %v6726 = vsel %vm6666, %v6661, %v4156
        %v6727 = vsel %vm6666, %v6662, %v4158
        %v6728 = vsel %vm6666, %v6663, %v4160
        %v6729 = vsel %vm6666, %v6664, %v4162
        %v6730 = vsel %vm6666, %v6665, %v4164
        %vm6731 = vcmask 523264
        %v6732 = vsel %vm6731, %v6667, %v4294
        %v6733 = vsel %vm6731, %v6668, %v4296
        %v6734 = vsel %vm6731, %v6669, %v4298
        %v6735 = vsel %vm6731, %v6670, %v4300
        %v6736 = vsel %vm6731, %v6671, %v4302
        %v6737 = vsel %vm6731, %v6672, %v4304
        %v6738 = vsel %vm6731, %v6673, %v4306
        %v6739 = vsel %vm6731, %v6674, %v4308
        %v6740 = vsel %vm6731, %v6675, %v4310
        %v6741 = vsel %vm6731, %v6676, %v4312
        %v6742 = vsel %vm6731, %v6677, %v4314
        %v6743 = vsel %vm6731, %v6678, %v4316
        %v6744 = vsel %vm6731, %v6679, %v4318
        %v6745 = vsel %vm6731, %v6680, %v4320
        %v6746 = vsel %vm6731, %v6681, %v4322
        %v6747 = vsel %vm6731, %v6682, %v4324
        %v6748 = vsel %vm6731, %v6683, %v4326
        %v6749 = vsel %vm6731, %v6684, %v4328
        %v6750 = vsel %vm6731, %v6685, %v4330
        %v6751 = vsel %vm6731, %v6686, %v4332
        %v6752 = vsel %vm6731, %v6687, %v4334
        %v6753 = vsel %vm6731, %v6688, %v4336
        %v6754 = vsel %vm6731, %v6689, %v4338
        %v6755 = vsel %vm6731, %v6690, %v4340
        %v6756 = vsel %vm6731, %v6691, %v4342
        %v6757 = vsel %vm6731, %v6692, %v4344
        %v6758 = vsel %vm6731, %v6693, %v4346
        %v6759 = vsel %vm6731, %v6694, %v4348
        %v6760 = vsel %vm6731, %v6695, %v4350
        %v6761 = vsel %vm6731, %v6696, %v4352
        %v6762 = vsel %vm6731, %v6697, %v4354
        %v6763 = vsel %vm6731, %v6698, %v4356
        %v6764 = vsel %vm6731, %v6699, %v4358
        %v6765 = vsel %vm6731, %v6700, %v4360
        %v6766 = vsel %vm6731, %v6701, %v4362
        %v6767 = vsel %vm6731, %v6702, %v4364
        %v6768 = vsel %vm6731, %v6703, %v4366
        %v6769 = vsel %vm6731, %v6704, %v4368
        %v6770 = vsel %vm6731, %v6705, %v4370
        %v6771 = vsel %vm6731, %v6706, %v4372
        %v6772 = vsel %vm6731, %v6707, %v4374
        %v6773 = vsel %vm6731, %v6708, %v4376
        %v6774 = vsel %vm6731, %v6709, %v4378
        %v6775 = vsel %vm6731, %v6710, %v4380
        %v6776 = vsel %vm6731, %v6711, %v4382
        %v6777 = vsel %vm6731, %v6712, %v4384
        %v6778 = vsel %vm6731, %v6713, %v4386
        %v6779 = vsel %vm6731, %v6714, %v4388
        %v6780 = vsel %vm6731, %v6715, %v4390
        %v6781 = vsel %vm6731, %v6716, %v4392
        %v6782 = vsel %vm6731, %v6717, %v4394
        %v6783 = vsel %vm6731, %v6718, %v4396
        %v6784 = vsel %vm6731, %v6719, %v4398
        %v6785 = vsel %vm6731, %v6720, %v4400
        %v6786 = vsel %vm6731, %v6721, %v4402
        %v6787 = vsel %vm6731, %v6722, %v4404
        %v6788 = vsel %vm6731, %v6723, %v4406
        %v6789 = vsel %vm6731, %v6724, %v4408
        %v6790 = vsel %vm6731, %v6725, %v4410
        %v6791 = vsel %vm6731, %v6726, %v4412
        %v6792 = vsel %vm6731, %v6727, %v4414
        %v6793 = vsel %vm6731, %v6728, %v4416
        %v6794 = vsel %vm6731, %v6729, %v4418
        %v6795 = vsel %vm6731, %v6730, %v4420
        %vm6796 = vcmask 588800
        %v6797 = vsel %vm6796, %v6732, %v4550
        %v6798 = vsel %vm6796, %v6733, %v4552
        %v6799 = vsel %vm6796, %v6734, %v4554
        %v6800 = vsel %vm6796, %v6735, %v4556
        %v6801 = vsel %vm6796, %v6736, %v4558
        %v6802 = vsel %vm6796, %v6737, %v4560
        %v6803 = vsel %vm6796, %v6738, %v4562
        %v6804 = vsel %vm6796, %v6739, %v4564
        %v6805 = vsel %vm6796, %v6740, %v4566
        %v6806 = vsel %vm6796, %v6741, %v4568
        %v6807 = vsel %vm6796, %v6742, %v4570
        %v6808 = vsel %vm6796, %v6743, %v4572
        %v6809 = vsel %vm6796, %v6744, %v4574
        %v6810 = vsel %vm6796, %v6745, %v4576
        %v6811 = vsel %vm6796, %v6746, %v4578
        %v6812 = vsel %vm6796, %v6747, %v4580
        %v6813 = vsel %vm6796, %v6748, %v4582
        %v6814 = vsel %vm6796, %v6749, %v4584
        %v6815 = vsel %vm6796, %v6750, %v4586
        %v6816 = vsel %vm6796, %v6751, %v4588
        %v6817 = vsel %vm6796, %v6752, %v4590
        %v6818 = vsel %vm6796, %v6753, %v4592
        %v6819 = vsel %vm6796, %v6754, %v4594
        %v6820 = vsel %vm6796, %v6755, %v4596
        %v6821 = vsel %vm6796, %v6756, %v4598
        %v6822 = vsel %vm6796, %v6757, %v4600
        %v6823 = vsel %vm6796, %v6758, %v4602
        %v6824 = vsel %vm6796, %v6759, %v4604
        %v6825 = vsel %vm6796, %v6760, %v4606
        %v6826 = vsel %vm6796, %v6761, %v4608
        %v6827 = vsel %vm6796, %v6762, %v4610
        %v6828 = vsel %vm6796, %v6763, %v4612
        %v6829 = vsel %vm6796, %v6764, %v4614
        %v6830 = vsel %vm6796, %v6765, %v4616
        %v6831 = vsel %vm6796, %v6766, %v4618
        %v6832 = vsel %vm6796, %v6767, %v4620
        %v6833 = vsel %vm6796, %v6768, %v4622
        %v6834 = vsel %vm6796, %v6769, %v4624
        %v6835 = vsel %vm6796, %v6770, %v4626
        %v6836 = vsel %vm6796, %v6771, %v4628
        %v6837 = vsel %vm6796, %v6772, %v4630
        %v6838 = vsel %vm6796, %v6773, %v4632
        %v6839 = vsel %vm6796, %v6774, %v4634
        %v6840 = vsel %vm6796, %v6775, %v4636
        %v6841 = vsel %vm6796, %v6776, %v4638
        %v6842 = vsel %vm6796, %v6777, %v4640
        %v6843 = vsel %vm6796, %v6778, %v4642
        %v6844 = vsel %vm6796, %v6779, %v4644
        %v6845 = vsel %vm6796, %v6780, %v4646
        %v6846 = vsel %vm6796, %v6781, %v4648
        %v6847 = vsel %vm6796, %v6782, %v4650
        %v6848 = vsel %vm6796, %v6783, %v4652
        %v6849 = vsel %vm6796, %v6784, %v4654
        %v6850 = vsel %vm6796, %v6785, %v4656
        %v6851 = vsel %vm6796, %v6786, %v4658
        %v6852 = vsel %vm6796, %v6787, %v4660
        %v6853 = vsel %vm6796, %v6788, %v4662
        %v6854 = vsel %vm6796, %v6789, %v4664
        %v6855 = vsel %vm6796, %v6790, %v4666
        %v6856 = vsel %vm6796, %v6791, %v4668
        %v6857 = vsel %vm6796, %v6792, %v4670
        %v6858 = vsel %vm6796, %v6793, %v4672
        %v6859 = vsel %vm6796, %v6794, %v4674
        %v6860 = vsel %vm6796, %v6795, %v4676
        %vm6861 = vcmask 654336
        %v6862 = vsel %vm6861, %v6797, %v4806
        %v6863 = vsel %vm6861, %v6798, %v4808
        %v6864 = vsel %vm6861, %v6799, %v4810
        %v6865 = vsel %vm6861, %v6800, %v4812
        %v6866 = vsel %vm6861, %v6801, %v4814
        %v6867 = vsel %vm6861, %v6802, %v4816
        %v6868 = vsel %vm6861, %v6803, %v4818
        %v6869 = vsel %vm6861, %v6804, %v4820
        %v6870 = vsel %vm6861, %v6805, %v4822
        %v6871 = vsel %vm6861, %v6806, %v4824
        %v6872 = vsel %vm6861, %v6807, %v4826
        %v6873 = vsel %vm6861, %v6808, %v4828
        %v6874 = vsel %vm6861, %v6809, %v4830
        %v6875 = vsel %vm6861, %v6810, %v4832
        %v6876 = vsel %vm6861, %v6811, %v4834
        %v6877 = vsel %vm6861, %v6812, %v4836
        %v6878 = vsel %vm6861, %v6813, %v4838
        %v6879 = vsel %vm6861, %v6814, %v4840
        %v6880 = vsel %vm6861, %v6815, %v4842
        %v6881 = vsel %vm6861, %v6816, %v4844
        %v6882 = vsel %vm6861, %v6817, %v4846
        %v6883 = vsel %vm6861, %v6818, %v4848
        %v6884 = vsel %vm6861, %v6819, %v4850
        %v6885 = vsel %vm6861, %v6820, %v4852
        %v6886 = vsel %vm6861, %v6821, %v4854
        %v6887 = vsel %vm6861, %v6822, %v4856
        %v6888 = vsel %vm6861, %v6823, %v4858
        %v6889 = vsel %vm6861, %v6824, %v4860
        %v6890 = vsel %vm6861, %v6825, %v4862
        %v6891 = vsel %vm6861, %v6826, %v4864
        %v6892 = vsel %vm6861, %v6827, %v4866
        %v6893 = vsel %vm6861, %v6828, %v4868
        %v6894 = vsel %vm6861, %v6829, %v4870
        %v6895 = vsel %vm6861, %v6830, %v4872
        %v6896 = vsel %vm6861, %v6831, %v4874
        %v6897 = vsel %vm6861, %v6832, %v4876
        %v6898 = vsel %vm6861, %v6833, %v4878
        %v6899 = vsel %vm6861, %v6834, %v4880
        %v6900 = vsel %vm6861, %v6835, %v4882
        %v6901 = vsel %vm6861, %v6836, %v4884
        %v6902 = vsel %vm6861, %v6837, %v4886
        %v6903 = vsel %vm6861, %v6838, %v4888
        %v6904 = vsel %vm6861, %v6839, %v4890
        %v6905 = vsel %vm6861, %v6840, %v4892
        %v6906 = vsel %vm6861, %v6841, %v4894
        %v6907 = vsel %vm6861, %v6842, %v4896
        %v6908 = vsel %vm6861, %v6843, %v4898
        %v6909 = vsel %vm6861, %v6844, %v4900
        %v6910 = vsel %vm6861, %v6845, %v4902
        %v6911 = vsel %vm6861, %v6846, %v4904
        %v6912 = vsel %vm6861, %v6847, %v4906
        %v6913 = vsel %vm6861, %v6848, %v4908
        %v6914 = vsel %vm6861, %v6849, %v4910
        %v6915 = vsel %vm6861, %v6850, %v4912
        %v6916 = vsel %vm6861, %v6851, %v4914
        %v6917 = vsel %vm6861, %v6852, %v4916
        %v6918 = vsel %vm6861, %v6853, %v4918
        %v6919 = vsel %vm6861, %v6854, %v4920
        %v6920 = vsel %vm6861, %v6855, %v4922
        %v6921 = vsel %vm6861, %v6856, %v4924
        %v6922 = vsel %vm6861, %v6857, %v4926
        %v6923 = vsel %vm6861, %v6858, %v4928
        %v6924 = vsel %vm6861, %v6859, %v4930
        %v6925 = vsel %vm6861, %v6860, %v4932
        %vm6926 = vcmask 719872
        %v6927 = vsel %vm6926, %v6862, %v5062
        %v6928 = vsel %vm6926, %v6863, %v5064
        %v6929 = vsel %vm6926, %v6864, %v5066
        %v6930 = vsel %vm6926, %v6865, %v5068
        %v6931 = vsel %vm6926, %v6866, %v5070
        %v6932 = vsel %vm6926, %v6867, %v5072
        %v6933 = vsel %vm6926, %v6868, %v5074
        %v6934 = vsel %vm6926, %v6869, %v5076
        %v6935 = vsel %vm6926, %v6870, %v5078
        %v6936 = vsel %vm6926, %v6871, %v5080
        %v6937 = vsel %vm6926, %v6872, %v5082
        %v6938 = vsel %vm6926, %v6873, %v5084
        %v6939 = vsel %vm6926, %v6874, %v5086
        %v6940 = vsel %vm6926, %v6875, %v5088
        %v6941 = vsel %vm6926, %v6876, %v5090
        %v6942 = vsel %vm6926, %v6877, %v5092
        %v6943 = vsel %vm6926, %v6878, %v5094
        %v6944 = vsel %vm6926, %v6879, %v5096
        %v6945 = vsel %vm6926, %v6880, %v5098
        %v6946 = vsel %vm6926, %v6881, %v5100
        %v6947 = vsel %vm6926, %v6882, %v5102
        %v6948 = vsel %vm6926, %v6883, %v5104
        %v6949 = vsel %vm6926, %v6884, %v5106
        %v6950 = vsel %vm6926, %v6885, %v5108
        %v6951 = vsel %vm6926, %v6886, %v5110
        %v6952 = vsel %vm6926, %v6887, %v5112
        %v6953 = vsel %vm6926, %v6888, %v5114
        %v6954 = vsel %vm6926, %v6889, %v5116
        %v6955 = vsel %vm6926, %v6890, %v5118
        %v6956 = vsel %vm6926, %v6891, %v5120
        %v6957 = vsel %vm6926, %v6892, %v5122
        %v6958 = vsel %vm6926, %v6893, %v5124
        %v6959 = vsel %vm6926, %v6894, %v5126
        %v6960 = vsel %vm6926, %v6895, %v5128
        %v6961 = vsel %vm6926, %v6896, %v5130
        %v6962 = vsel %vm6926, %v6897, %v5132
        %v6963 = vsel %vm6926, %v6898, %v5134
        %v6964 = vsel %vm6926, %v6899, %v5136
        %v6965 = vsel %vm6926, %v6900, %v5138
        %v6966 = vsel %vm6926, %v6901, %v5140
        %v6967 = vsel %vm6926, %v6902, %v5142
        %v6968 = vsel %vm6926, %v6903, %v5144
        %v6969 = vsel %vm6926, %v6904, %v5146
        %v6970 = vsel %vm6926, %v6905, %v5148
        %v6971 = vsel %vm6926, %v6906, %v5150
        %v6972 = vsel %vm6926, %v6907, %v5152
        %v6973 = vsel %vm6926, %v6908, %v5154
        %v6974 = vsel %vm6926, %v6909, %v5156
        %v6975 = vsel %vm6926, %v6910, %v5158
        %v6976 = vsel %vm6926, %v6911, %v5160
        %v6977 = vsel %vm6926, %v6912, %v5162
        %v6978 = vsel %vm6926, %v6913, %v5164
        %v6979 = vsel %vm6926, %v6914, %v5166
        %v6980 = vsel %vm6926, %v6915, %v5168
        %v6981 = vsel %vm6926, %v6916, %v5170
        %v6982 = vsel %vm6926, %v6917, %v5172
        %v6983 = vsel %vm6926, %v6918, %v5174
        %v6984 = vsel %vm6926, %v6919, %v5176
        %v6985 = vsel %vm6926, %v6920, %v5178
        %v6986 = vsel %vm6926, %v6921, %v5180
        %v6987 = vsel %vm6926, %v6922, %v5182
        %v6988 = vsel %vm6926, %v6923, %v5184
        %v6989 = vsel %vm6926, %v6924, %v5186
        %v6990 = vsel %vm6926, %v6925, %v5188
        %vm6991 = vcmask 785408
        %v6992 = vsel %vm6991, %v6927, %v5318
        %v6993 = vsel %vm6991, %v6928, %v5320
        %v6994 = vsel %vm6991, %v6929, %v5322
        %v6995 = vsel %vm6991, %v6930, %v5324
        %v6996 = vsel %vm6991, %v6931, %v5326
        %v6997 = vsel %vm6991, %v6932, %v5328
        %v6998 = vsel %vm6991, %v6933, %v5330
        %v6999 = vsel %vm6991, %v6934, %v5332
        %v7000 = vsel %vm6991, %v6935, %v5334
        %v7001 = vsel %vm6991, %v6936, %v5336
        %v7002 = vsel %vm6991, %v6937, %v5338
        %v7003 = vsel %vm6991, %v6938, %v5340
        %v7004 = vsel %vm6991, %v6939, %v5342
        %v7005 = vsel %vm6991, %v6940, %v5344
        %v7006 = vsel %vm6991, %v6941, %v5346
        %v7007 = vsel %vm6991, %v6942, %v5348
        %v7008 = vsel %vm6991, %v6943, %v5350
        %v7009 = vsel %vm6991, %v6944, %v5352
        %v7010 = vsel %vm6991, %v6945, %v5354
        %v7011 = vsel %vm6991, %v6946, %v5356
        %v7012 = vsel %vm6991, %v6947, %v5358
        %v7013 = vsel %vm6991, %v6948, %v5360
        %v7014 = vsel %vm6991, %v6949, %v5362
        %v7015 = vsel %vm6991, %v6950, %v5364
        %v7016 = vsel %vm6991, %v6951, %v5366
        %v7017 = vsel %vm6991, %v6952, %v5368
        %v7018 = vsel %vm6991, %v6953, %v5370
        %v7019 = vsel %vm6991, %v6954, %v5372
        %v7020 = vsel %vm6991, %v6955, %v5374
        %v7021 = vsel %vm6991, %v6956, %v5376
        %v7022 = vsel %vm6991, %v6957, %v5378
        %v7023 = vsel %vm6991, %v6958, %v5380
        %v7024 = vsel %vm6991, %v6959, %v5382
        %v7025 = vsel %vm6991, %v6960, %v5384
        %v7026 = vsel %vm6991, %v6961, %v5386
        %v7027 = vsel %vm6991, %v6962, %v5388
        %v7028 = vsel %vm6991, %v6963, %v5390
        %v7029 = vsel %vm6991, %v6964, %v5392
        %v7030 = vsel %vm6991, %v6965, %v5394
        %v7031 = vsel %vm6991, %v6966, %v5396
        %v7032 = vsel %vm6991, %v6967, %v5398
        %v7033 = vsel %vm6991, %v6968, %v5400
        %v7034 = vsel %vm6991, %v6969, %v5402
        %v7035 = vsel %vm6991, %v6970, %v5404
        %v7036 = vsel %vm6991, %v6971, %v5406
        %v7037 = vsel %vm6991, %v6972, %v5408
        %v7038 = vsel %vm6991, %v6973, %v5410
        %v7039 = vsel %vm6991, %v6974, %v5412
        %v7040 = vsel %vm6991, %v6975, %v5414
        %v7041 = vsel %vm6991, %v6976, %v5416
        %v7042 = vsel %vm6991, %v6977, %v5418
        %v7043 = vsel %vm6991, %v6978, %v5420
        %v7044 = vsel %vm6991, %v6979, %v5422
        %v7045 = vsel %vm6991, %v6980, %v5424
        %v7046 = vsel %vm6991, %v6981, %v5426
        %v7047 = vsel %vm6991, %v6982, %v5428
        %v7048 = vsel %vm6991, %v6983, %v5430
        %v7049 = vsel %vm6991, %v6984, %v5432
        %v7050 = vsel %vm6991, %v6985, %v5434
        %v7051 = vsel %vm6991, %v6986, %v5436
        %v7052 = vsel %vm6991, %v6987, %v5438
        %v7053 = vsel %vm6991, %v6988, %v5440
        %v7054 = vsel %vm6991, %v6989, %v5442
        %v7055 = vsel %vm6991, %v6990, %v5444
        %vm7056 = vcmask 850944
        %v7057 = vsel %vm7056, %v6992, %v5574
        %v7058 = vsel %vm7056, %v6993, %v5576
        %v7059 = vsel %vm7056, %v6994, %v5578
        %v7060 = vsel %vm7056, %v6995, %v5580
        %v7061 = vsel %vm7056, %v6996, %v5582
        %v7062 = vsel %vm7056, %v6997, %v5584
        %v7063 = vsel %vm7056, %v6998, %v5586
        %v7064 = vsel %vm7056, %v6999, %v5588
        %v7065 = vsel %vm7056, %v7000, %v5590
        %v7066 = vsel %vm7056, %v7001, %v5592
        %v7067 = vsel %vm7056, %v7002, %v5594
        %v7068 = vsel %vm7056, %v7003, %v5596
        %v7069 = vsel %vm7056, %v7004, %v5598
        %v7070 = vsel %vm7056, %v7005, %v5600
        %v7071 = vsel %vm7056, %v7006, %v5602
        %v7072 = vsel %vm7056, %v7007, %v5604
        %v7073 = vsel %vm7056, %v7008, %v5606
        %v7074 = vsel %vm7056, %v7009, %v5608
        %v7075 = vsel %vm7056, %v7010, %v5610
        %v7076 = vsel %vm7056, %v7011, %v5612
        %v7077 = vsel %vm7056, %v7012, %v5614
        %v7078 = vsel %vm7056, %v7013, %v5616
        %v7079 = vsel %vm7056, %v7014, %v5618
        %v7080 = vsel %vm7056, %v7015, %v5620
        %v7081 = vsel %vm7056, %v7016, %v5622
        %v7082 = vsel %vm7056, %v7017, %v5624
        %v7083 = vsel %vm7056, %v7018, %v5626
        %v7084 = vsel %vm7056, %v7019, %v5628
        %v7085 = vsel %vm7056, %v7020, %v5630
        %v7086 = vsel %vm7056, %v7021, %v5632
        %v7087 = vsel %vm7056, %v7022, %v5634
        %v7088 = vsel %vm7056, %v7023, %v5636
        %v7089 = vsel %vm7056, %v7024, %v5638
        %v7090 = vsel %vm7056, %v7025, %v5640
        %v7091 = vsel %vm7056, %v7026, %v5642
        %v7092 = vsel %vm7056, %v7027, %v5644
        %v7093 = vsel %vm7056, %v7028, %v5646
        %v7094 = vsel %vm7056, %v7029, %v5648
        %v7095 = vsel %vm7056, %v7030, %v5650
        %v7096 = vsel %vm7056, %v7031, %v5652
        %v7097 = vsel %vm7056, %v7032, %v5654
        %v7098 = vsel %vm7056, %v7033, %v5656
        %v7099 = vsel %vm7056, %v7034, %v5658
        %v7100 = vsel %vm7056, %v7035, %v5660
        %v7101 = vsel %vm7056, %v7036, %v5662
        %v7102 = vsel %vm7056, %v7037, %v5664
        %v7103 = vsel %vm7056, %v7038, %v5666
        %v7104 = vsel %vm7056, %v7039, %v5668
        %v7105 = vsel %vm7056, %v7040, %v5670
        %v7106 = vsel %vm7056, %v7041, %v5672
        %v7107 = vsel %vm7056, %v7042, %v5674
        %v7108 = vsel %vm7056, %v7043, %v5676
        %v7109 = vsel %vm7056, %v7044, %v5678
        %v7110 = vsel %vm7056, %v7045, %v5680
        %v7111 = vsel %vm7056, %v7046, %v5682
        %v7112 = vsel %vm7056, %v7047, %v5684
        %v7113 = vsel %vm7056, %v7048, %v5686
        %v7114 = vsel %vm7056, %v7049, %v5688
        %v7115 = vsel %vm7056, %v7050, %v5690
        %v7116 = vsel %vm7056, %v7051, %v5692
        %v7117 = vsel %vm7056, %v7052, %v5694
        %v7118 = vsel %vm7056, %v7053, %v5696
        %v7119 = vsel %vm7056, %v7054, %v5698
        %v7120 = vsel %vm7056, %v7055, %v5700
        %vm7121 = vcmask 916480
        %v7122 = vsel %vm7121, %v7057, %v5830
        %v7123 = vsel %vm7121, %v7058, %v5832
        %v7124 = vsel %vm7121, %v7059, %v5834
        %v7125 = vsel %vm7121, %v7060, %v5836
        %v7126 = vsel %vm7121, %v7061, %v5838
        %v7127 = vsel %vm7121, %v7062, %v5840
        %v7128 = vsel %vm7121, %v7063, %v5842
        %v7129 = vsel %vm7121, %v7064, %v5844
        %v7130 = vsel %vm7121, %v7065, %v5846
        %v7131 = vsel %vm7121, %v7066, %v5848
        %v7132 = vsel %vm7121, %v7067, %v5850
        %v7133 = vsel %vm7121, %v7068, %v5852
        %v7134 = vsel %vm7121, %v7069, %v5854
        %v7135 = vsel %vm7121, %v7070, %v5856
        %v7136 = vsel %vm7121, %v7071, %v5858
        %v7137 = vsel %vm7121, %v7072, %v5860
        %v7138 = vsel %vm7121, %v7073, %v5862
        %v7139 = vsel %vm7121, %v7074, %v5864
        %v7140 = vsel %vm7121, %v7075, %v5866
        %v7141 = vsel %vm7121, %v7076, %v5868
        %v7142 = vsel %vm7121, %v7077, %v5870
        %v7143 = vsel %vm7121, %v7078, %v5872
        %v7144 = vsel %vm7121, %v7079, %v5874
        %v7145 = vsel %vm7121, %v7080, %v5876
        %v7146 = vsel %vm7121, %v7081, %v5878
        %v7147 = vsel %vm7121, %v7082, %v5880
        %v7148 = vsel %vm7121, %v7083, %v5882
        %v7149 = vsel %vm7121, %v7084, %v5884
        %v7150 = vsel %vm7121, %v7085, %v5886
        %v7151 = vsel %vm7121, %v7086, %v5888
        %v7152 = vsel %vm7121, %v7087, %v5890
        %v7153 = vsel %vm7121, %v7088, %v5892
        %v7154 = vsel %vm7121, %v7089, %v5894
        %v7155 = vsel %vm7121, %v7090, %v5896
        %v7156 = vsel %vm7121, %v7091, %v5898
        %v7157 = vsel %vm7121, %v7092, %v5900
        %v7158 = vsel %vm7121, %v7093, %v5902
        %v7159 = vsel %vm7121, %v7094, %v5904
        %v7160 = vsel %vm7121, %v7095, %v5906
        %v7161 = vsel %vm7121, %v7096, %v5908
        %v7162 = vsel %vm7121, %v7097, %v5910
        %v7163 = vsel %vm7121, %v7098, %v5912
        %v7164 = vsel %vm7121, %v7099, %v5914
        %v7165 = vsel %vm7121, %v7100, %v5916
        %v7166 = vsel %vm7121, %v7101, %v5918
        %v7167 = vsel %vm7121, %v7102, %v5920
        %v7168 = vsel %vm7121, %v7103, %v5922
        %v7169 = vsel %vm7121, %v7104, %v5924
        %v7170 = vsel %vm7121, %v7105, %v5926
        %v7171 = vsel %vm7121, %v7106, %v5928
        %v7172 = vsel %vm7121, %v7107, %v5930
        %v7173 = vsel %vm7121, %v7108, %v5932
        %v7174 = vsel %vm7121, %v7109, %v5934
        %v7175 = vsel %vm7121, %v7110, %v5936
        %v7176 = vsel %vm7121, %v7111, %v5938
        %v7177 = vsel %vm7121, %v7112, %v5940
        %v7178 = vsel %vm7121, %v7113, %v5942
        %v7179 = vsel %vm7121, %v7114, %v5944
        %v7180 = vsel %vm7121, %v7115, %v5946
        %v7181 = vsel %vm7121, %v7116, %v5948
        %v7182 = vsel %vm7121, %v7117, %v5950
        %v7183 = vsel %vm7121, %v7118, %v5952
        %v7184 = vsel %vm7121, %v7119, %v5954
        %v7185 = vsel %vm7121, %v7120, %v5956
        %vm7186 = vcmask 982016
        %v7187 = vsel %vm7186, %v7122, %v6086
        %v7188 = vsel %vm7186, %v7123, %v6088
        %v7189 = vsel %vm7186, %v7124, %v6090
        %v7190 = vsel %vm7186, %v7125, %v6092
        %v7191 = vsel %vm7186, %v7126, %v6094
        %v7192 = vsel %vm7186, %v7127, %v6096
        %v7193 = vsel %vm7186, %v7128, %v6098
        %v7194 = vsel %vm7186, %v7129, %v6100
        %v7195 = vsel %vm7186, %v7130, %v6102
        %v7196 = vsel %vm7186, %v7131, %v6104
        %v7197 = vsel %vm7186, %v7132, %v6106
        %v7198 = vsel %vm7186, %v7133, %v6108
        %v7199 = vsel %vm7186, %v7134, %v6110
        %v7200 = vsel %vm7186, %v7135, %v6112
        %v7201 = vsel %vm7186, %v7136, %v6114
        %v7202 = vsel %vm7186, %v7137, %v6116
        %v7203 = vsel %vm7186, %v7138, %v6118
        %v7204 = vsel %vm7186, %v7139, %v6120
        %v7205 = vsel %vm7186, %v7140, %v6122
        %v7206 = vsel %vm7186, %v7141, %v6124
        %v7207 = vsel %vm7186, %v7142, %v6126
        %v7208 = vsel %vm7186, %v7143, %v6128
        %v7209 = vsel %vm7186, %v7144, %v6130
        %v7210 = vsel %vm7186, %v7145, %v6132
        %v7211 = vsel %vm7186, %v7146, %v6134
        %v7212 = vsel %vm7186, %v7147, %v6136
        %v7213 = vsel %vm7186, %v7148, %v6138
        %v7214 = vsel %vm7186, %v7149, %v6140
        %v7215 = vsel %vm7186, %v7150, %v6142
        %v7216 = vsel %vm7186, %v7151, %v6144
        %v7217 = vsel %vm7186, %v7152, %v6146
        %v7218 = vsel %vm7186, %v7153, %v6148
        %v7219 = vsel %vm7186, %v7154, %v6150
        %v7220 = vsel %vm7186, %v7155, %v6152
        %v7221 = vsel %vm7186, %v7156, %v6154
        %v7222 = vsel %vm7186, %v7157, %v6156
        %v7223 = vsel %vm7186, %v7158, %v6158
        %v7224 = vsel %vm7186, %v7159, %v6160
        %v7225 = vsel %vm7186, %v7160, %v6162
        %v7226 = vsel %vm7186, %v7161, %v6164
        %v7227 = vsel %vm7186, %v7162, %v6166
        %v7228 = vsel %vm7186, %v7163, %v6168
        %v7229 = vsel %vm7186, %v7164, %v6170
        %v7230 = vsel %vm7186, %v7165, %v6172
        %v7231 = vsel %vm7186, %v7166, %v6174
        %v7232 = vsel %vm7186, %v7167, %v6176
        %v7233 = vsel %vm7186, %v7168, %v6178
        %v7234 = vsel %vm7186, %v7169, %v6180
        %v7235 = vsel %vm7186, %v7170, %v6182
        %v7236 = vsel %vm7186, %v7171, %v6184
        %v7237 = vsel %vm7186, %v7172, %v6186
        %v7238 = vsel %vm7186, %v7173, %v6188
        %v7239 = vsel %vm7186, %v7174, %v6190
        %v7240 = vsel %vm7186, %v7175, %v6192
        %v7241 = vsel %vm7186, %v7176, %v6194
        %v7242 = vsel %vm7186, %v7177, %v6196
        %v7243 = vsel %vm7186, %v7178, %v6198
        %v7244 = vsel %vm7186, %v7179, %v6200
        %v7245 = vsel %vm7186, %v7180, %v6202
        %v7246 = vsel %vm7186, %v7181, %v6204
        %v7247 = vsel %vm7186, %v7182, %v6206
        %v7248 = vsel %vm7186, %v7183, %v6208
        %v7249 = vsel %vm7186, %v7184, %v6210
        %v7250 = vsel %vm7186, %v7185, %v6212
        %7315 = vrot.lane.b32.xlu0 %v1794, 8
        %v7316 = vpop.permute.xlu0 %7315
        %7317 = vrot.lane.b32.xlu0 %v1795, 8
        %v7318 = vpop.permute.xlu0 %7317
        %7319 = vrot.lane.b32.xlu0 %v1796, 8
        %v7320 = vpop.permute.xlu0 %7319
        %7321 = vrot.lane.b32.xlu0 %v1797, 8
        %v7322 = vpop.permute.xlu0 %7321
        %7323 = vrot.lane.b32.xlu0 %v1798, 8
        %v7324 = vpop.permute.xlu0 %7323
        %7325 = vrot.lane.b32.xlu0 %v1799, 8
        %v7326 = vpop.permute.xlu0 %7325
        %7327 = vrot.lane.b32.xlu0 %v1800, 8
        %v7328 = vpop.permute.xlu0 %7327
        %7329 = vrot.lane.b32.xlu0 %v1801, 8
        %v7330 = vpop.permute.xlu0 %7329
        %7331 = vrot.lane.b32.xlu0 %v1802, 8
        %v7332 = vpop.permute.xlu0 %7331
        %7333 = vrot.lane.b32.xlu0 %v1803, 8
        %v7334 = vpop.permute.xlu0 %7333
        %7335 = vrot.lane.b32.xlu0 %v1804, 8
        %v7336 = vpop.permute.xlu0 %7335
        %7337 = vrot.lane.b32.xlu0 %v1805, 8
        %v7338 = vpop.permute.xlu0 %7337
        %7339 = vrot.lane.b32.xlu0 %v1806, 8
        %v7340 = vpop.permute.xlu0 %7339
        %7341 = vrot.lane.b32.xlu0 %v1807, 8
        %v7342 = vpop.permute.xlu0 %7341
        %7343 = vrot.lane.b32.xlu0 %v1808, 8
        %v7344 = vpop.permute.xlu0 %7343
        %7345 = vrot.lane.b32.xlu0 %v1809, 8
        %v7346 = vpop.permute.xlu0 %7345
        %7347 = vrot.lane.b32.xlu0 %v1810, 8
        %v7348 = vpop.permute.xlu0 %7347
        %7349 = vrot.lane.b32.xlu0 %v1811, 8
        %v7350 = vpop.permute.xlu0 %7349
        %7351 = vrot.lane.b32.xlu0 %v1812, 8
        %v7352 = vpop.permute.xlu0 %7351
        %7353 = vrot.lane.b32.xlu0 %v1813, 8
        %v7354 = vpop.permute.xlu0 %7353
        %7355 = vrot.lane.b32.xlu0 %v1814, 8
        %v7356 = vpop.permute.xlu0 %7355
        %7357 = vrot.lane.b32.xlu0 %v1815, 8
        %v7358 = vpop.permute.xlu0 %7357
        %7359 = vrot.lane.b32.xlu0 %v1816, 8
        %v7360 = vpop.permute.xlu0 %7359
        %7361 = vrot.lane.b32.xlu0 %v1817, 8
        %v7362 = vpop.permute.xlu0 %7361
        %7363 = vrot.lane.b32.xlu0 %v1818, 8
        %v7364 = vpop.permute.xlu0 %7363
        %7365 = vrot.lane.b32.xlu0 %v1819, 8
        %v7366 = vpop.permute.xlu0 %7365
        %7367 = vrot.lane.b32.xlu0 %v1820, 8
        %v7368 = vpop.permute.xlu0 %7367
        %7369 = vrot.lane.b32.xlu0 %v1821, 8
        %v7370 = vpop.permute.xlu0 %7369
        %7371 = vrot.lane.b32.xlu0 %v1822, 8
        %v7372 = vpop.permute.xlu0 %7371
        %7373 = vrot.lane.b32.xlu0 %v1823, 8
        %v7374 = vpop.permute.xlu0 %7373
        %7375 = vrot.lane.b32.xlu0 %v1824, 8
        %v7376 = vpop.permute.xlu0 %7375
        %7377 = vrot.lane.b32.xlu0 %v1825, 8
        %v7378 = vpop.permute.xlu0 %7377
        %7379 = vrot.lane.b32.xlu0 %v1826, 8
        %v7380 = vpop.permute.xlu0 %7379
        %7381 = vrot.lane.b32.xlu0 %v1827, 8
        %v7382 = vpop.permute.xlu0 %7381
        %7383 = vrot.lane.b32.xlu0 %v1828, 8
        %v7384 = vpop.permute.xlu0 %7383
        %7385 = vrot.lane.b32.xlu0 %v1829, 8
        %v7386 = vpop.permute.xlu0 %7385
        %7387 = vrot.lane.b32.xlu0 %v1830, 8
        %v7388 = vpop.permute.xlu0 %7387
        %7389 = vrot.lane.b32.xlu0 %v1831, 8
        %v7390 = vpop.permute.xlu0 %7389
        %7391 = vrot.lane.b32.xlu0 %v1832, 8
        %v7392 = vpop.permute.xlu0 %7391
        %7393 = vrot.lane.b32.xlu0 %v1833, 8
        %v7394 = vpop.permute.xlu0 %7393
        %7395 = vrot.lane.b32.xlu0 %v1834, 8
        %v7396 = vpop.permute.xlu0 %7395
        %7397 = vrot.lane.b32.xlu0 %v1835, 8
        %v7398 = vpop.permute.xlu0 %7397
        %7399 = vrot.lane.b32.xlu0 %v1836, 8
        %v7400 = vpop.permute.xlu0 %7399
        %7401 = vrot.lane.b32.xlu0 %v1837, 8
        %v7402 = vpop.permute.xlu0 %7401
        %7403 = vrot.lane.b32.xlu0 %v1838, 8
        %v7404 = vpop.permute.xlu0 %7403
        %7405 = vrot.lane.b32.xlu0 %v1839, 8
        %v7406 = vpop.permute.xlu0 %7405
        %7407 = vrot.lane.b32.xlu0 %v1840, 8
        %v7408 = vpop.permute.xlu0 %7407
        %7409 = vrot.lane.b32.xlu0 %v1841, 8
        %v7410 = vpop.permute.xlu0 %7409
        %7411 = vrot.lane.b32.xlu0 %v1842, 8
        %v7412 = vpop.permute.xlu0 %7411
        %7413 = vrot.lane.b32.xlu0 %v1843, 8
        %v7414 = vpop.permute.xlu0 %7413
        %7415 = vrot.lane.b32.xlu0 %v1844, 8
        %v7416 = vpop.permute.xlu0 %7415
        %7417 = vrot.lane.b32.xlu0 %v1845, 8
        %v7418 = vpop.permute.xlu0 %7417
        %7419 = vrot.lane.b32.xlu0 %v1846, 8
        %v7420 = vpop.permute.xlu0 %7419
        %7421 = vrot.lane.b32.xlu0 %v1847, 8
        %v7422 = vpop.permute.xlu0 %7421
        %7423 = vrot.lane.b32.xlu0 %v1848, 8
        %v7424 = vpop.permute.xlu0 %7423
        %7425 = vrot.lane.b32.xlu0 %v1849, 8
        %v7426 = vpop.permute.xlu0 %7425
        %7427 = vrot.lane.b32.xlu0 %v1850, 8
        %v7428 = vpop.permute.xlu0 %7427
        %7429 = vrot.lane.b32.xlu0 %v1851, 8
        %v7430 = vpop.permute.xlu0 %7429
        %7431 = vrot.lane.b32.xlu0 %v1852, 8
        %v7432 = vpop.permute.xlu0 %7431
        %7433 = vrot.lane.b32.xlu0 %v1853, 8
        %v7434 = vpop.permute.xlu0 %7433
        %7435 = vrot.lane.b32.xlu0 %v1854, 8
        %v7436 = vpop.permute.xlu0 %7435
        %7437 = vrot.lane.b32.xlu0 %v1855, 8
        %v7438 = vpop.permute.xlu0 %7437
        %7439 = vrot.lane.b32.xlu0 %v1856, 8
        %v7440 = vpop.permute.xlu0 %7439
        %7441 = vrot.lane.b32.xlu0 %v1857, 8
        %v7442 = vpop.permute.xlu0 %7441
        %7571 = vrot.lane.b32.xlu0 %v1859, 16
        %v7572 = vpop.permute.xlu0 %7571
        %7573 = vrot.lane.b32.xlu0 %v1860, 16
        %v7574 = vpop.permute.xlu0 %7573
        %7575 = vrot.lane.b32.xlu0 %v1861, 16
        %v7576 = vpop.permute.xlu0 %7575
        %7577 = vrot.lane.b32.xlu0 %v1862, 16
        %v7578 = vpop.permute.xlu0 %7577
        %7579 = vrot.lane.b32.xlu0 %v1863, 16
        %v7580 = vpop.permute.xlu0 %7579
        %7581 = vrot.lane.b32.xlu0 %v1864, 16
        %v7582 = vpop.permute.xlu0 %7581
        %7583 = vrot.lane.b32.xlu0 %v1865, 16
        %v7584 = vpop.permute.xlu0 %7583
        %7585 = vrot.lane.b32.xlu0 %v1866, 16
        %v7586 = vpop.permute.xlu0 %7585
        %7587 = vrot.lane.b32.xlu0 %v1867, 16
        %v7588 = vpop.permute.xlu0 %7587
        %7589 = vrot.lane.b32.xlu0 %v1868, 16
        %v7590 = vpop.permute.xlu0 %7589
        %7591 = vrot.lane.b32.xlu0 %v1869, 16
        %v7592 = vpop.permute.xlu0 %7591
        %7593 = vrot.lane.b32.xlu0 %v1870, 16
        %v7594 = vpop.permute.xlu0 %7593
        %7595 = vrot.lane.b32.xlu0 %v1871, 16
        %v7596 = vpop.permute.xlu0 %7595
        %7597 = vrot.lane.b32.xlu0 %v1872, 16
        %v7598 = vpop.permute.xlu0 %7597
        %7599 = vrot.lane.b32.xlu0 %v1873, 16
        %v7600 = vpop.permute.xlu0 %7599
        %7601 = vrot.lane.b32.xlu0 %v1874, 16
        %v7602 = vpop.permute.xlu0 %7601
        %7603 = vrot.lane.b32.xlu0 %v1875, 16
        %v7604 = vpop.permute.xlu0 %7603
        %7605 = vrot.lane.b32.xlu0 %v1876, 16
        %v7606 = vpop.permute.xlu0 %7605
        %7607 = vrot.lane.b32.xlu0 %v1877, 16
        %v7608 = vpop.permute.xlu0 %7607
        %7609 = vrot.lane.b32.xlu0 %v1878, 16
        %v7610 = vpop.permute.xlu0 %7609
        %7611 = vrot.lane.b32.xlu0 %v1879, 16
        %v7612 = vpop.permute.xlu0 %7611
        %7613 = vrot.lane.b32.xlu0 %v1880, 16
        %v7614 = vpop.permute.xlu0 %7613
        %7615 = vrot.lane.b32.xlu0 %v1881, 16
        %v7616 = vpop.permute.xlu0 %7615
        %7617 = vrot.lane.b32.xlu0 %v1882, 16
        %v7618 = vpop.permute.xlu0 %7617
        %7619 = vrot.lane.b32.xlu0 %v1883, 16
        %v7620 = vpop.permute.xlu0 %7619
        %7621 = vrot.lane.b32.xlu0 %v1884, 16
        %v7622 = vpop.permute.xlu0 %7621
        %7623 = vrot.lane.b32.xlu0 %v1885, 16
        %v7624 = vpop.permute.xlu0 %7623
        %7625 = vrot.lane.b32.xlu0 %v1886, 16
        %v7626 = vpop.permute.xlu0 %7625
        %7627 = vrot.lane.b32.xlu0 %v1887, 16
        %v7628 = vpop.permute.xlu0 %7627
        %7629 = vrot.lane.b32.xlu0 %v1888, 16
        %v7630 = vpop.permute.xlu0 %7629
        %7631 = vrot.lane.b32.xlu0 %v1889, 16
        %v7632 = vpop.permute.xlu0 %7631
        %7633 = vrot.lane.b32.xlu0 %v1890, 16
        %v7634 = vpop.permute.xlu0 %7633
        %7635 = vrot.lane.b32.xlu0 %v1891, 16
        %v7636 = vpop.permute.xlu0 %7635
        %7637 = vrot.lane.b32.xlu0 %v1892, 16
        %v7638 = vpop.permute.xlu0 %7637
        %7639 = vrot.lane.b32.xlu0 %v1893, 16
        %v7640 = vpop.permute.xlu0 %7639
        %7641 = vrot.lane.b32.xlu0 %v1894, 16
        %v7642 = vpop.permute.xlu0 %7641
        %7643 = vrot.lane.b32.xlu0 %v1895, 16
        %v7644 = vpop.permute.xlu0 %7643
        %7645 = vrot.lane.b32.xlu0 %v1896, 16
        %v7646 = vpop.permute.xlu0 %7645
        %7647 = vrot.lane.b32.xlu0 %v1897, 16
        %v7648 = vpop.permute.xlu0 %7647
        %7649 = vrot.lane.b32.xlu0 %v1898, 16
        %v7650 = vpop.permute.xlu0 %7649
        %7651 = vrot.lane.b32.xlu0 %v1899, 16
        %v7652 = vpop.permute.xlu0 %7651
        %7653 = vrot.lane.b32.xlu0 %v1900, 16
        %v7654 = vpop.permute.xlu0 %7653
        %7655 = vrot.lane.b32.xlu0 %v1901, 16
        %v7656 = vpop.permute.xlu0 %7655
        %7657 = vrot.lane.b32.xlu0 %v1902, 16
        %v7658 = vpop.permute.xlu0 %7657
        %7659 = vrot.lane.b32.xlu0 %v1903, 16
        %v7660 = vpop.permute.xlu0 %7659
        %7661 = vrot.lane.b32.xlu0 %v1904, 16
        %v7662 = vpop.permute.xlu0 %7661
        %7663 = vrot.lane.b32.xlu0 %v1905, 16
        %v7664 = vpop.permute.xlu0 %7663
        %7665 = vrot.lane.b32.xlu0 %v1906, 16
        %v7666 = vpop.permute.xlu0 %7665
        %7667 = vrot.lane.b32.xlu0 %v1907, 16
        %v7668 = vpop.permute.xlu0 %7667
        %7669 = vrot.lane.b32.xlu0 %v1908, 16
        %v7670 = vpop.permute.xlu0 %7669
        %7671 = vrot.lane.b32.xlu0 %v1909, 16
        %v7672 = vpop.permute.xlu0 %7671
        %7673 = vrot.lane.b32.xlu0 %v1910, 16
        %v7674 = vpop.permute.xlu0 %7673
        %7675 = vrot.lane.b32.xlu0 %v1911, 16
        %v7676 = vpop.permute.xlu0 %7675
        %7677 = vrot.lane.b32.xlu0 %v1912, 16
        %v7678 = vpop.permute.xlu0 %7677
        %7679 = vrot.lane.b32.xlu0 %v1913, 16
        %v7680 = vpop.permute.xlu0 %7679
        %7681 = vrot.lane.b32.xlu0 %v1914, 16
        %v7682 = vpop.permute.xlu0 %7681
        %7683 = vrot.lane.b32.xlu0 %v1915, 16
        %v7684 = vpop.permute.xlu0 %7683
        %7685 = vrot.lane.b32.xlu0 %v1916, 16
        %v7686 = vpop.permute.xlu0 %7685
        %7687 = vrot.lane.b32.xlu0 %v1917, 16
        %v7688 = vpop.permute.xlu0 %7687
        %7689 = vrot.lane.b32.xlu0 %v1918, 16
        %v7690 = vpop.permute.xlu0 %7689
        %7691 = vrot.lane.b32.xlu0 %v1919, 16
        %v7692 = vpop.permute.xlu0 %7691
        %7693 = vrot.lane.b32.xlu0 %v1920, 16
        %v7694 = vpop.permute.xlu0 %7693
        %7695 = vrot.lane.b32.xlu0 %v1921, 16
        %v7696 = vpop.permute.xlu0 %7695
        %7697 = vrot.lane.b32.xlu0 %v1922, 16
        %v7698 = vpop.permute.xlu0 %7697
        %7827 = vrot.lane.b32.xlu0 %v1923, 24
        %v7828 = vpop.permute.xlu0 %7827
        %7829 = vrot.lane.b32.xlu0 %v1924, 24
        %v7830 = vpop.permute.xlu0 %7829
        %7831 = vrot.lane.b32.xlu0 %v1925, 24
        %v7832 = vpop.permute.xlu0 %7831
        %7833 = vrot.lane.b32.xlu0 %v1926, 24
        %v7834 = vpop.permute.xlu0 %7833
        %7835 = vrot.lane.b32.xlu0 %v1927, 24
        %v7836 = vpop.permute.xlu0 %7835
        %7837 = vrot.lane.b32.xlu0 %v1928, 24
        %v7838 = vpop.permute.xlu0 %7837
        %7839 = vrot.lane.b32.xlu0 %v1929, 24
        %v7840 = vpop.permute.xlu0 %7839
        %7841 = vrot.lane.b32.xlu0 %v1930, 24
        %v7842 = vpop.permute.xlu0 %7841
        %7843 = vrot.lane.b32.xlu0 %v1931, 24
        %v7844 = vpop.permute.xlu0 %7843
        %7845 = vrot.lane.b32.xlu0 %v1932, 24
        %v7846 = vpop.permute.xlu0 %7845
        %7847 = vrot.lane.b32.xlu0 %v1933, 24
        %v7848 = vpop.permute.xlu0 %7847
        %7849 = vrot.lane.b32.xlu0 %v1934, 24
        %v7850 = vpop.permute.xlu0 %7849
        %7851 = vrot.lane.b32.xlu0 %v1935, 24
        %v7852 = vpop.permute.xlu0 %7851
        %7853 = vrot.lane.b32.xlu0 %v1936, 24
        %v7854 = vpop.permute.xlu0 %7853
        %7855 = vrot.lane.b32.xlu0 %v1937, 24
        %v7856 = vpop.permute.xlu0 %7855
        %7857 = vrot.lane.b32.xlu0 %v1938, 24
        %v7858 = vpop.permute.xlu0 %7857
        %7859 = vrot.lane.b32.xlu0 %v1939, 24
        %v7860 = vpop.permute.xlu0 %7859
        %7861 = vrot.lane.b32.xlu0 %v1940, 24
        %v7862 = vpop.permute.xlu0 %7861
        %7863 = vrot.lane.b32.xlu0 %v1941, 24
        %v7864 = vpop.permute.xlu0 %7863
        %7865 = vrot.lane.b32.xlu0 %v1942, 24
        %v7866 = vpop.permute.xlu0 %7865
        %7867 = vrot.lane.b32.xlu0 %v1943, 24
        %v7868 = vpop.permute.xlu0 %7867
        %7869 = vrot.lane.b32.xlu0 %v1944, 24
        %v7870 = vpop.permute.xlu0 %7869
        %7871 = vrot.lane.b32.xlu0 %v1945, 24
        %v7872 = vpop.permute.xlu0 %7871
        %7873 = vrot.lane.b32.xlu0 %v1946, 24
        %v7874 = vpop.permute.xlu0 %7873
        %7875 = vrot.lane.b32.xlu0 %v1947, 24
        %v7876 = vpop.permute.xlu0 %7875
        %7877 = vrot.lane.b32.xlu0 %v1948, 24
        %v7878 = vpop.permute.xlu0 %7877
        %7879 = vrot.lane.b32.xlu0 %v1949, 24
        %v7880 = vpop.permute.xlu0 %7879
        %7881 = vrot.lane.b32.xlu0 %v1950, 24
        %v7882 = vpop.permute.xlu0 %7881
        %7883 = vrot.lane.b32.xlu0 %v1951, 24
        %v7884 = vpop.permute.xlu0 %7883
        %7885 = vrot.lane.b32.xlu0 %v1952, 24
        %v7886 = vpop.permute.xlu0 %7885
        %7887 = vrot.lane.b32.xlu0 %v1953, 24
        %v7888 = vpop.permute.xlu0 %7887
        %7889 = vrot.lane.b32.xlu0 %v1954, 24
        %v7890 = vpop.permute.xlu0 %7889
        %7891 = vrot.lane.b32.xlu0 %v1955, 24
        %v7892 = vpop.permute.xlu0 %7891
        %7893 = vrot.lane.b32.xlu0 %v1956, 24
        %v7894 = vpop.permute.xlu0 %7893
        %7895 = vrot.lane.b32.xlu0 %v1957, 24
        %v7896 = vpop.permute.xlu0 %7895
        %7897 = vrot.lane.b32.xlu0 %v1958, 24
        %v7898 = vpop.permute.xlu0 %7897
        %7899 = vrot.lane.b32.xlu0 %v1959, 24
        %v7900 = vpop.permute.xlu0 %7899
        %7901 = vrot.lane.b32.xlu0 %v1960, 24
        %v7902 = vpop.permute.xlu0 %7901
        %7903 = vrot.lane.b32.xlu0 %v1961, 24
        %v7904 = vpop.permute.xlu0 %7903
        %7905 = vrot.lane.b32.xlu0 %v1962, 24
        %v7906 = vpop.permute.xlu0 %7905
        %7907 = vrot.lane.b32.xlu0 %v1963, 24
        %v7908 = vpop.permute.xlu0 %7907
        %7909 = vrot.lane.b32.xlu0 %v1964, 24
        %v7910 = vpop.permute.xlu0 %7909
        %7911 = vrot.lane.b32.xlu0 %v1965, 24
        %v7912 = vpop.permute.xlu0 %7911
        %7913 = vrot.lane.b32.xlu0 %v1966, 24
        %v7914 = vpop.permute.xlu0 %7913
        %7915 = vrot.lane.b32.xlu0 %v1967, 24
        %v7916 = vpop.permute.xlu0 %7915
        %7917 = vrot.lane.b32.xlu0 %v1968, 24
        %v7918 = vpop.permute.xlu0 %7917
        %7919 = vrot.lane.b32.xlu0 %v1969, 24
        %v7920 = vpop.permute.xlu0 %7919
        %7921 = vrot.lane.b32.xlu0 %v1970, 24
        %v7922 = vpop.permute.xlu0 %7921
        %7923 = vrot.lane.b32.xlu0 %v1971, 24
        %v7924 = vpop.permute.xlu0 %7923
        %7925 = vrot.lane.b32.xlu0 %v1972, 24
        %v7926 = vpop.permute.xlu0 %7925
        %7927 = vrot.lane.b32.xlu0 %v1973, 24
        %v7928 = vpop.permute.xlu0 %7927
        %7929 = vrot.lane.b32.xlu0 %v1974, 24
        %v7930 = vpop.permute.xlu0 %7929
        %7931 = vrot.lane.b32.xlu0 %v1975, 24
        %v7932 = vpop.permute.xlu0 %7931
        %7933 = vrot.lane.b32.xlu0 %v1976, 24
        %v7934 = vpop.permute.xlu0 %7933
        %7935 = vrot.lane.b32.xlu0 %v1977, 24
        %v7936 = vpop.permute.xlu0 %7935
        %7937 = vrot.lane.b32.xlu0 %v1978, 24
        %v7938 = vpop.permute.xlu0 %7937
        %7939 = vrot.lane.b32.xlu0 %v1979, 24
        %v7940 = vpop.permute.xlu0 %7939
        %7941 = vrot.lane.b32.xlu0 %v1980, 24
        %v7942 = vpop.permute.xlu0 %7941
        %7943 = vrot.lane.b32.xlu0 %v1981, 24
        %v7944 = vpop.permute.xlu0 %7943
        %7945 = vrot.lane.b32.xlu0 %v1982, 24
        %v7946 = vpop.permute.xlu0 %7945
        %7947 = vrot.lane.b32.xlu0 %v1983, 24
        %v7948 = vpop.permute.xlu0 %7947
        %7949 = vrot.lane.b32.xlu0 %v1984, 24
        %v7950 = vpop.permute.xlu0 %7949
        %7951 = vrot.lane.b32.xlu0 %v1985, 24
        %v7952 = vpop.permute.xlu0 %7951
        %7953 = vrot.lane.b32.xlu0 %v1986, 24
        %v7954 = vpop.permute.xlu0 %7953
        %8083 = vrot.lane.b32.xlu0 %v1987, 32
        %v8084 = vpop.permute.xlu0 %8083
        %8085 = vrot.lane.b32.xlu0 %v1988, 32
        %v8086 = vpop.permute.xlu0 %8085
        %8087 = vrot.lane.b32.xlu0 %v1989, 32
        %v8088 = vpop.permute.xlu0 %8087
        %8089 = vrot.lane.b32.xlu0 %v1990, 32
        %v8090 = vpop.permute.xlu0 %8089
        %8091 = vrot.lane.b32.xlu0 %v1991, 32
        %v8092 = vpop.permute.xlu0 %8091
        %8093 = vrot.lane.b32.xlu0 %v1992, 32
        %v8094 = vpop.permute.xlu0 %8093
        %8095 = vrot.lane.b32.xlu0 %v1993, 32
        %v8096 = vpop.permute.xlu0 %8095
        %8097 = vrot.lane.b32.xlu0 %v1994, 32
        %v8098 = vpop.permute.xlu0 %8097
        %8099 = vrot.lane.b32.xlu0 %v1995, 32
        %v8100 = vpop.permute.xlu0 %8099
        %8101 = vrot.lane.b32.xlu0 %v1996, 32
        %v8102 = vpop.permute.xlu0 %8101
        %8103 = vrot.lane.b32.xlu0 %v1997, 32
        %v8104 = vpop.permute.xlu0 %8103
        %8105 = vrot.lane.b32.xlu0 %v1998, 32
        %v8106 = vpop.permute.xlu0 %8105
        %8107 = vrot.lane.b32.xlu0 %v1999, 32
        %v8108 = vpop.permute.xlu0 %8107
        %8109 = vrot.lane.b32.xlu0 %v2000, 32
        %v8110 = vpop.permute.xlu0 %8109
        %8111 = vrot.lane.b32.xlu0 %v2001, 32
        %v8112 = vpop.permute.xlu0 %8111
        %8113 = vrot.lane.b32.xlu0 %v2002, 32
        %v8114 = vpop.permute.xlu0 %8113
        %8115 = vrot.lane.b32.xlu0 %v2003, 32
        %v8116 = vpop.permute.xlu0 %8115
        %8117 = vrot.lane.b32.xlu0 %v2004, 32
        %v8118 = vpop.permute.xlu0 %8117
        %8119 = vrot.lane.b32.xlu0 %v2005, 32
        %v8120 = vpop.permute.xlu0 %8119
        %8121 = vrot.lane.b32.xlu0 %v2006, 32
        %v8122 = vpop.permute.xlu0 %8121
        %8123 = vrot.lane.b32.xlu0 %v2007, 32
        %v8124 = vpop.permute.xlu0 %8123
        %8125 = vrot.lane.b32.xlu0 %v2008, 32
        %v8126 = vpop.permute.xlu0 %8125
        %8127 = vrot.lane.b32.xlu0 %v2009, 32
        %v8128 = vpop.permute.xlu0 %8127
        %8129 = vrot.lane.b32.xlu0 %v2010, 32
        %v8130 = vpop.permute.xlu0 %8129
        %8131 = vrot.lane.b32.xlu0 %v2011, 32
        %v8132 = vpop.permute.xlu0 %8131
        %8133 = vrot.lane.b32.xlu0 %v2012, 32
        %v8134 = vpop.permute.xlu0 %8133
        %8135 = vrot.lane.b32.xlu0 %v2013, 32
        %v8136 = vpop.permute.xlu0 %8135
        %8137 = vrot.lane.b32.xlu0 %v2014, 32
        %v8138 = vpop.permute.xlu0 %8137
        %8139 = vrot.lane.b32.xlu0 %v2015, 32
        %v8140 = vpop.permute.xlu0 %8139
        %8141 = vrot.lane.b32.xlu0 %v2016, 32
        %v8142 = vpop.permute.xlu0 %8141
        %8143 = vrot.lane.b32.xlu0 %v2017, 32
        %v8144 = vpop.permute.xlu0 %8143
        %8145 = vrot.lane.b32.xlu0 %v2018, 32
        %v8146 = vpop.permute.xlu0 %8145
        %8147 = vrot.lane.b32.xlu0 %v2019, 32
        %v8148 = vpop.permute.xlu0 %8147
        %8149 = vrot.lane.b32.xlu0 %v2020, 32
        %v8150 = vpop.permute.xlu0 %8149
        %8151 = vrot.lane.b32.xlu0 %v2021, 32
        %v8152 = vpop.permute.xlu0 %8151
        %8153 = vrot.lane.b32.xlu0 %v2022, 32
        %v8154 = vpop.permute.xlu0 %8153
        %8155 = vrot.lane.b32.xlu0 %v2023, 32
        %v8156 = vpop.permute.xlu0 %8155
        %8157 = vrot.lane.b32.xlu0 %v2024, 32
        %v8158 = vpop.permute.xlu0 %8157
        %8159 = vrot.lane.b32.xlu0 %v2025, 32
        %v8160 = vpop.permute.xlu0 %8159
        %8161 = vrot.lane.b32.xlu0 %v2026, 32
        %v8162 = vpop.permute.xlu0 %8161
        %8163 = vrot.lane.b32.xlu0 %v2027, 32
        %v8164 = vpop.permute.xlu0 %8163
        %8165 = vrot.lane.b32.xlu0 %v2028, 32
        %v8166 = vpop.permute.xlu0 %8165
        %8167 = vrot.lane.b32.xlu0 %v2029, 32
        %v8168 = vpop.permute.xlu0 %8167
        %8169 = vrot.lane.b32.xlu0 %v2030, 32
        %v8170 = vpop.permute.xlu0 %8169
        %8171 = vrot.lane.b32.xlu0 %v2031, 32
        %v8172 = vpop.permute.xlu0 %8171
        %8173 = vrot.lane.b32.xlu0 %v2032, 32
        %v8174 = vpop.permute.xlu0 %8173
        %8175 = vrot.lane.b32.xlu0 %v2033, 32
        %v8176 = vpop.permute.xlu0 %8175
        %8177 = vrot.lane.b32.xlu0 %v2034, 32
        %v8178 = vpop.permute.xlu0 %8177
        %8179 = vrot.lane.b32.xlu0 %v2035, 32
        %v8180 = vpop.permute.xlu0 %8179
        %8181 = vrot.lane.b32.xlu0 %v2036, 32
        %v8182 = vpop.permute.xlu0 %8181
        %8183 = vrot.lane.b32.xlu0 %v2037, 32
        %v8184 = vpop.permute.xlu0 %8183
        %8185 = vrot.lane.b32.xlu0 %v2038, 32
        %v8186 = vpop.permute.xlu0 %8185
        %8187 = vrot.lane.b32.xlu0 %v2039, 32
        %v8188 = vpop.permute.xlu0 %8187
        %8189 = vrot.lane.b32.xlu0 %v2040, 32
        %v8190 = vpop.permute.xlu0 %8189
        %8191 = vrot.lane.b32.xlu0 %v2041, 32
        %v8192 = vpop.permute.xlu0 %8191
        %8193 = vrot.lane.b32.xlu0 %v2042, 32
        %v8194 = vpop.permute.xlu0 %8193
        %8195 = vrot.lane.b32.xlu0 %v2043, 32
        %v8196 = vpop.permute.xlu0 %8195
        %8197 = vrot.lane.b32.xlu0 %v2044, 32
        %v8198 = vpop.permute.xlu0 %8197
        %8199 = vrot.lane.b32.xlu0 %v2045, 32
        %v8200 = vpop.permute.xlu0 %8199
        %8201 = vrot.lane.b32.xlu0 %v2046, 32
        %v8202 = vpop.permute.xlu0 %8201
        %8203 = vrot.lane.b32.xlu0 %v2047, 32
        %v8204 = vpop.permute.xlu0 %8203
        %8205 = vrot.lane.b32.xlu0 %v2048, 32
        %v8206 = vpop.permute.xlu0 %8205
        %8207 = vrot.lane.b32.xlu0 %v2049, 32
        %v8208 = vpop.permute.xlu0 %8207
        %8209 = vrot.lane.b32.xlu0 %v2050, 32
        %v8210 = vpop.permute.xlu0 %8209
        %8339 = vrot.lane.b32.xlu0 %v2052, 40
        %v8340 = vpop.permute.xlu0 %8339
        %8341 = vrot.lane.b32.xlu0 %v2053, 40
        %v8342 = vpop.permute.xlu0 %8341
        %8343 = vrot.lane.b32.xlu0 %v2054, 40
        %v8344 = vpop.permute.xlu0 %8343
        %8345 = vrot.lane.b32.xlu0 %v2055, 40
        %v8346 = vpop.permute.xlu0 %8345
        %8347 = vrot.lane.b32.xlu0 %v2056, 40
        %v8348 = vpop.permute.xlu0 %8347
        %8349 = vrot.lane.b32.xlu0 %v2057, 40
        %v8350 = vpop.permute.xlu0 %8349
        %8351 = vrot.lane.b32.xlu0 %v2058, 40
        %v8352 = vpop.permute.xlu0 %8351
        %8353 = vrot.lane.b32.xlu0 %v2059, 40
        %v8354 = vpop.permute.xlu0 %8353
        %8355 = vrot.lane.b32.xlu0 %v2060, 40
        %v8356 = vpop.permute.xlu0 %8355
        %8357 = vrot.lane.b32.xlu0 %v2061, 40
        %v8358 = vpop.permute.xlu0 %8357
        %8359 = vrot.lane.b32.xlu0 %v2062, 40
        %v8360 = vpop.permute.xlu0 %8359
        %8361 = vrot.lane.b32.xlu0 %v2063, 40
        %v8362 = vpop.permute.xlu0 %8361
        %8363 = vrot.lane.b32.xlu0 %v2064, 40
        %v8364 = vpop.permute.xlu0 %8363
        %8365 = vrot.lane.b32.xlu0 %v2065, 40
        %v8366 = vpop.permute.xlu0 %8365
        %8367 = vrot.lane.b32.xlu0 %v2066, 40
        %v8368 = vpop.permute.xlu0 %8367
        %8369 = vrot.lane.b32.xlu0 %v2067, 40
        %v8370 = vpop.permute.xlu0 %8369
        %8371 = vrot.lane.b32.xlu0 %v2068, 40
        %v8372 = vpop.permute.xlu0 %8371
        %8373 = vrot.lane.b32.xlu0 %v2069, 40
        %v8374 = vpop.permute.xlu0 %8373
        %8375 = vrot.lane.b32.xlu0 %v2070, 40
        %v8376 = vpop.permute.xlu0 %8375
        %8377 = vrot.lane.b32.xlu0 %v2071, 40
        %v8378 = vpop.permute.xlu0 %8377
        %8379 = vrot.lane.b32.xlu0 %v2072, 40
        %v8380 = vpop.permute.xlu0 %8379
        %8381 = vrot.lane.b32.xlu0 %v2073, 40
        %v8382 = vpop.permute.xlu0 %8381
        %8383 = vrot.lane.b32.xlu0 %v2074, 40
        %v8384 = vpop.permute.xlu0 %8383
        %8385 = vrot.lane.b32.xlu0 %v2075, 40
        %v8386 = vpop.permute.xlu0 %8385
        %8387 = vrot.lane.b32.xlu0 %v2076, 40
        %v8388 = vpop.permute.xlu0 %8387
        %8389 = vrot.lane.b32.xlu0 %v2077, 40
        %v8390 = vpop.permute.xlu0 %8389
        %8391 = vrot.lane.b32.xlu0 %v2078, 40
        %v8392 = vpop.permute.xlu0 %8391
        %8393 = vrot.lane.b32.xlu0 %v2079, 40
        %v8394 = vpop.permute.xlu0 %8393
        %8395 = vrot.lane.b32.xlu0 %v2080, 40
        %v8396 = vpop.permute.xlu0 %8395
        %8397 = vrot.lane.b32.xlu0 %v2081, 40
        %v8398 = vpop.permute.xlu0 %8397
        %8399 = vrot.lane.b32.xlu0 %v2082, 40
        %v8400 = vpop.permute.xlu0 %8399
        %8401 = vrot.lane.b32.xlu0 %v2083, 40
        %v8402 = vpop.permute.xlu0 %8401
        %8403 = vrot.lane.b32.xlu0 %v2084, 40
        %v8404 = vpop.permute.xlu0 %8403
        %8405 = vrot.lane.b32.xlu0 %v2085, 40
        %v8406 = vpop.permute.xlu0 %8405
        %8407 = vrot.lane.b32.xlu0 %v2086, 40
        %v8408 = vpop.permute.xlu0 %8407
        %8409 = vrot.lane.b32.xlu0 %v2087, 40
        %v8410 = vpop.permute.xlu0 %8409
        %8411 = vrot.lane.b32.xlu0 %v2088, 40
        %v8412 = vpop.permute.xlu0 %8411
        %8413 = vrot.lane.b32.xlu0 %v2089, 40
        %v8414 = vpop.permute.xlu0 %8413
        %8415 = vrot.lane.b32.xlu0 %v2090, 40
        %v8416 = vpop.permute.xlu0 %8415
        %8417 = vrot.lane.b32.xlu0 %v2091, 40
        %v8418 = vpop.permute.xlu0 %8417
        %8419 = vrot.lane.b32.xlu0 %v2092, 40
        %v8420 = vpop.permute.xlu0 %8419
        %8421 = vrot.lane.b32.xlu0 %v2093, 40
        %v8422 = vpop.permute.xlu0 %8421
        %8423 = vrot.lane.b32.xlu0 %v2094, 40
        %v8424 = vpop.permute.xlu0 %8423
        %8425 = vrot.lane.b32.xlu0 %v2095, 40
        %v8426 = vpop.permute.xlu0 %8425
        %8427 = vrot.lane.b32.xlu0 %v2096, 40
        %v8428 = vpop.permute.xlu0 %8427
        %8429 = vrot.lane.b32.xlu0 %v2097, 40
        %v8430 = vpop.permute.xlu0 %8429
        %8431 = vrot.lane.b32.xlu0 %v2098, 40
        %v8432 = vpop.permute.xlu0 %8431
        %8433 = vrot.lane.b32.xlu0 %v2099, 40
        %v8434 = vpop.permute.xlu0 %8433
        %8435 = vrot.lane.b32.xlu0 %v2100, 40
        %v8436 = vpop.permute.xlu0 %8435
        %8437 = vrot.lane.b32.xlu0 %v2101, 40
        %v8438 = vpop.permute.xlu0 %8437
        %8439 = vrot.lane.b32.xlu0 %v2102, 40
        %v8440 = vpop.permute.xlu0 %8439
        %8441 = vrot.lane.b32.xlu0 %v2103, 40
        %v8442 = vpop.permute.xlu0 %8441
        %8443 = vrot.lane.b32.xlu0 %v2104, 40
        %v8444 = vpop.permute.xlu0 %8443
        %8445 = vrot.lane.b32.xlu0 %v2105, 40
        %v8446 = vpop.permute.xlu0 %8445
        %8447 = vrot.lane.b32.xlu0 %v2106, 40
        %v8448 = vpop.permute.xlu0 %8447
        %8449 = vrot.lane.b32.xlu0 %v2107, 40
        %v8450 = vpop.permute.xlu0 %8449
        %8451 = vrot.lane.b32.xlu0 %v2108, 40
        %v8452 = vpop.permute.xlu0 %8451
        %8453 = vrot.lane.b32.xlu0 %v2109, 40
        %v8454 = vpop.permute.xlu0 %8453
        %8455 = vrot.lane.b32.xlu0 %v2110, 40
        %v8456 = vpop.permute.xlu0 %8455
        %8457 = vrot.lane.b32.xlu0 %v2111, 40
        %v8458 = vpop.permute.xlu0 %8457
        %8459 = vrot.lane.b32.xlu0 %v2112, 40
        %v8460 = vpop.permute.xlu0 %8459
        %8461 = vrot.lane.b32.xlu0 %v2113, 40
        %v8462 = vpop.permute.xlu0 %8461
        %8463 = vrot.lane.b32.xlu0 %v2114, 40
        %v8464 = vpop.permute.xlu0 %8463
        %8465 = vrot.lane.b32.xlu0 %v2115, 40
        %v8466 = vpop.permute.xlu0 %8465
        %8595 = vrot.lane.b32.xlu0 %v2116, 48
        %v8596 = vpop.permute.xlu0 %8595
        %8597 = vrot.lane.b32.xlu0 %v2117, 48
        %v8598 = vpop.permute.xlu0 %8597
        %8599 = vrot.lane.b32.xlu0 %v2118, 48
        %v8600 = vpop.permute.xlu0 %8599
        %8601 = vrot.lane.b32.xlu0 %v2119, 48
        %v8602 = vpop.permute.xlu0 %8601
        %8603 = vrot.lane.b32.xlu0 %v2120, 48
        %v8604 = vpop.permute.xlu0 %8603
        %8605 = vrot.lane.b32.xlu0 %v2121, 48
        %v8606 = vpop.permute.xlu0 %8605
        %8607 = vrot.lane.b32.xlu0 %v2122, 48
        %v8608 = vpop.permute.xlu0 %8607
        %8609 = vrot.lane.b32.xlu0 %v2123, 48
        %v8610 = vpop.permute.xlu0 %8609
        %8611 = vrot.lane.b32.xlu0 %v2124, 48
        %v8612 = vpop.permute.xlu0 %8611
        %8613 = vrot.lane.b32.xlu0 %v2125, 48
        %v8614 = vpop.permute.xlu0 %8613
        %8615 = vrot.lane.b32.xlu0 %v2126, 48
        %v8616 = vpop.permute.xlu0 %8615
        %8617 = vrot.lane.b32.xlu0 %v2127, 48
        %v8618 = vpop.permute.xlu0 %8617
        %8619 = vrot.lane.b32.xlu0 %v2128, 48
        %v8620 = vpop.permute.xlu0 %8619
        %8621 = vrot.lane.b32.xlu0 %v2129, 48
        %v8622 = vpop.permute.xlu0 %8621
        %8623 = vrot.lane.b32.xlu0 %v2130, 48
        %v8624 = vpop.permute.xlu0 %8623
        %8625 = vrot.lane.b32.xlu0 %v2131, 48
        %v8626 = vpop.permute.xlu0 %8625
        %8627 = vrot.lane.b32.xlu0 %v2132, 48
        %v8628 = vpop.permute.xlu0 %8627
        %8629 = vrot.lane.b32.xlu0 %v2133, 48
        %v8630 = vpop.permute.xlu0 %8629
        %8631 = vrot.lane.b32.xlu0 %v2134, 48
        %v8632 = vpop.permute.xlu0 %8631
        %8633 = vrot.lane.b32.xlu0 %v2135, 48
        %v8634 = vpop.permute.xlu0 %8633
        %8635 = vrot.lane.b32.xlu0 %v2136, 48
        %v8636 = vpop.permute.xlu0 %8635
        %8637 = vrot.lane.b32.xlu0 %v2137, 48
        %v8638 = vpop.permute.xlu0 %8637
        %8639 = vrot.lane.b32.xlu0 %v2138, 48
        %v8640 = vpop.permute.xlu0 %8639
        %8641 = vrot.lane.b32.xlu0 %v2139, 48
        %v8642 = vpop.permute.xlu0 %8641
        %8643 = vrot.lane.b32.xlu0 %v2140, 48
        %v8644 = vpop.permute.xlu0 %8643
        %8645 = vrot.lane.b32.xlu0 %v2141, 48
        %v8646 = vpop.permute.xlu0 %8645
        %8647 = vrot.lane.b32.xlu0 %v2142, 48
        %v8648 = vpop.permute.xlu0 %8647
        %8649 = vrot.lane.b32.xlu0 %v2143, 48
        %v8650 = vpop.permute.xlu0 %8649
        %8651 = vrot.lane.b32.xlu0 %v2144, 48
        %v8652 = vpop.permute.xlu0 %8651
        %8653 = vrot.lane.b32.xlu0 %v2145, 48
        %v8654 = vpop.permute.xlu0 %8653
        %8655 = vrot.lane.b32.xlu0 %v2146, 48
        %v8656 = vpop.permute.xlu0 %8655
        %8657 = vrot.lane.b32.xlu0 %v2147, 48
        %v8658 = vpop.permute.xlu0 %8657
        %8659 = vrot.lane.b32.xlu0 %v2148, 48
        %v8660 = vpop.permute.xlu0 %8659
        %8661 = vrot.lane.b32.xlu0 %v2149, 48
        %v8662 = vpop.permute.xlu0 %8661
        %8663 = vrot.lane.b32.xlu0 %v2150, 48
        %v8664 = vpop.permute.xlu0 %8663
        %8665 = vrot.lane.b32.xlu0 %v2151, 48
        %v8666 = vpop.permute.xlu0 %8665
        %8667 = vrot.lane.b32.xlu0 %v2152, 48
        %v8668 = vpop.permute.xlu0 %8667
        %8669 = vrot.lane.b32.xlu0 %v2153, 48
        %v8670 = vpop.permute.xlu0 %8669
        %8671 = vrot.lane.b32.xlu0 %v2154, 48
        %v8672 = vpop.permute.xlu0 %8671
        %8673 = vrot.lane.b32.xlu0 %v2155, 48
        %v8674 = vpop.permute.xlu0 %8673
        %8675 = vrot.lane.b32.xlu0 %v2156, 48
        %v8676 = vpop.permute.xlu0 %8675
        %8677 = vrot.lane.b32.xlu0 %v2157, 48
        %v8678 = vpop.permute.xlu0 %8677
        %8679 = vrot.lane.b32.xlu0 %v2158, 48
        %v8680 = vpop.permute.xlu0 %8679
        %8681 = vrot.lane.b32.xlu0 %v2159, 48
        %v8682 = vpop.permute.xlu0 %8681
        %8683 = vrot.lane.b32.xlu0 %v2160, 48
        %v8684 = vpop.permute.xlu0 %8683
        %8685 = vrot.lane.b32.xlu0 %v2161, 48
        %v8686 = vpop.permute.xlu0 %8685
        %8687 = vrot.lane.b32.xlu0 %v2162, 48
        %v8688 = vpop.permute.xlu0 %8687
        %8689 = vrot.lane.b32.xlu0 %v2163, 48
        %v8690 = vpop.permute.xlu0 %8689
        %8691 = vrot.lane.b32.xlu0 %v2164, 48
        %v8692 = vpop.permute.xlu0 %8691
        %8693 = vrot.lane.b32.xlu0 %v2165, 48
        %v8694 = vpop.permute.xlu0 %8693
        %8695 = vrot.lane.b32.xlu0 %v2166, 48
        %v8696 = vpop.permute.xlu0 %8695
        %8697 = vrot.lane.b32.xlu0 %v2167, 48
        %v8698 = vpop.permute.xlu0 %8697
        %8699 = vrot.lane.b32.xlu0 %v2168, 48
        %v8700 = vpop.permute.xlu0 %8699
        %8701 = vrot.lane.b32.xlu0 %v2169, 48
        %v8702 = vpop.permute.xlu0 %8701
        %8703 = vrot.lane.b32.xlu0 %v2170, 48
        %v8704 = vpop.permute.xlu0 %8703
        %8705 = vrot.lane.b32.xlu0 %v2171, 48
        %v8706 = vpop.permute.xlu0 %8705
        %8707 = vrot.lane.b32.xlu0 %v2172, 48
        %v8708 = vpop.permute.xlu0 %8707
        %8709 = vrot.lane.b32.xlu0 %v2173, 48
        %v8710 = vpop.permute.xlu0 %8709
        %8711 = vrot.lane.b32.xlu0 %v2174, 48
        %v8712 = vpop.permute.xlu0 %8711
        %8713 = vrot.lane.b32.xlu0 %v2175, 48
        %v8714 = vpop.permute.xlu0 %8713
        %8715 = vrot.lane.b32.xlu0 %v2176, 48
        %v8716 = vpop.permute.xlu0 %8715
        %8717 = vrot.lane.b32.xlu0 %v2177, 48
        %v8718 = vpop.permute.xlu0 %8717
        %8719 = vrot.lane.b32.xlu0 %v2178, 48
        %v8720 = vpop.permute.xlu0 %8719
        %8721 = vrot.lane.b32.xlu0 %v2179, 48
        %v8722 = vpop.permute.xlu0 %8721
        %8851 = vrot.lane.b32.xlu0 %v2180, 56
        %v8852 = vpop.permute.xlu0 %8851
        %8853 = vrot.lane.b32.xlu0 %v2181, 56
        %v8854 = vpop.permute.xlu0 %8853
        %8855 = vrot.lane.b32.xlu0 %v2182, 56
        %v8856 = vpop.permute.xlu0 %8855
        %8857 = vrot.lane.b32.xlu0 %v2183, 56
        %v8858 = vpop.permute.xlu0 %8857
        %8859 = vrot.lane.b32.xlu0 %v2184, 56
        %v8860 = vpop.permute.xlu0 %8859
        %8861 = vrot.lane.b32.xlu0 %v2185, 56
        %v8862 = vpop.permute.xlu0 %8861
        %8863 = vrot.lane.b32.xlu0 %v2186, 56
        %v8864 = vpop.permute.xlu0 %8863
        %8865 = vrot.lane.b32.xlu0 %v2187, 56
        %v8866 = vpop.permute.xlu0 %8865
        %8867 = vrot.lane.b32.xlu0 %v2188, 56
        %v8868 = vpop.permute.xlu0 %8867
        %8869 = vrot.lane.b32.xlu0 %v2189, 56
        %v8870 = vpop.permute.xlu0 %8869
        %8871 = vrot.lane.b32.xlu0 %v2190, 56
        %v8872 = vpop.permute.xlu0 %8871
        %8873 = vrot.lane.b32.xlu0 %v2191, 56
        %v8874 = vpop.permute.xlu0 %8873
        %8875 = vrot.lane.b32.xlu0 %v2192, 56
        %v8876 = vpop.permute.xlu0 %8875
        %8877 = vrot.lane.b32.xlu0 %v2193, 56
        %v8878 = vpop.permute.xlu0 %8877
        %8879 = vrot.lane.b32.xlu0 %v2194, 56
        %v8880 = vpop.permute.xlu0 %8879
        %8881 = vrot.lane.b32.xlu0 %v2195, 56
        %v8882 = vpop.permute.xlu0 %8881
        %8883 = vrot.lane.b32.xlu0 %v2196, 56
        %v8884 = vpop.permute.xlu0 %8883
        %8885 = vrot.lane.b32.xlu0 %v2197, 56
        %v8886 = vpop.permute.xlu0 %8885
        %8887 = vrot.lane.b32.xlu0 %v2198, 56
        %v8888 = vpop.permute.xlu0 %8887
        %8889 = vrot.lane.b32.xlu0 %v2199, 56
        %v8890 = vpop.permute.xlu0 %8889
        %8891 = vrot.lane.b32.xlu0 %v2200, 56
        %v8892 = vpop.permute.xlu0 %8891
        %8893 = vrot.lane.b32.xlu0 %v2201, 56
        %v8894 = vpop.permute.xlu0 %8893
        %8895 = vrot.lane.b32.xlu0 %v2202, 56
        %v8896 = vpop.permute.xlu0 %8895
        %8897 = vrot.lane.b32.xlu0 %v2203, 56
        %v8898 = vpop.permute.xlu0 %8897
        %8899 = vrot.lane.b32.xlu0 %v2204, 56
        %v8900 = vpop.permute.xlu0 %8899
        %8901 = vrot.lane.b32.xlu0 %v2205, 56
        %v8902 = vpop.permute.xlu0 %8901
        %8903 = vrot.lane.b32.xlu0 %v2206, 56
        %v8904 = vpop.permute.xlu0 %8903
        %8905 = vrot.lane.b32.xlu0 %v2207, 56
        %v8906 = vpop.permute.xlu0 %8905
        %8907 = vrot.lane.b32.xlu0 %v2208, 56
        %v8908 = vpop.permute.xlu0 %8907
        %8909 = vrot.lane.b32.xlu0 %v2209, 56
        %v8910 = vpop.permute.xlu0 %8909
        %8911 = vrot.lane.b32.xlu0 %v2210, 56
        %v8912 = vpop.permute.xlu0 %8911
        %8913 = vrot.lane.b32.xlu0 %v2211, 56
        %v8914 = vpop.permute.xlu0 %8913
        %8915 = vrot.lane.b32.xlu0 %v2212, 56
        %v8916 = vpop.permute.xlu0 %8915
        %8917 = vrot.lane.b32.xlu0 %v2213, 56
        %v8918 = vpop.permute.xlu0 %8917
        %8919 = vrot.lane.b32.xlu0 %v2214, 56
        %v8920 = vpop.permute.xlu0 %8919
        %8921 = vrot.lane.b32.xlu0 %v2215, 56
        %v8922 = vpop.permute.xlu0 %8921
        %8923 = vrot.lane.b32.xlu0 %v2216, 56
        %v8924 = vpop.permute.xlu0 %8923
        %8925 = vrot.lane.b32.xlu0 %v2217, 56
        %v8926 = vpop.permute.xlu0 %8925
        %8927 = vrot.lane.b32.xlu0 %v2218, 56
        %v8928 = vpop.permute.xlu0 %8927
        %8929 = vrot.lane.b32.xlu0 %v2219, 56
        %v8930 = vpop.permute.xlu0 %8929
        %8931 = vrot.lane.b32.xlu0 %v2220, 56
        %v8932 = vpop.permute.xlu0 %8931
        %8933 = vrot.lane.b32.xlu0 %v2221, 56
        %v8934 = vpop.permute.xlu0 %8933
        %8935 = vrot.lane.b32.xlu0 %v2222, 56
        %v8936 = vpop.permute.xlu0 %8935
        %8937 = vrot.lane.b32.xlu0 %v2223, 56
        %v8938 = vpop.permute.xlu0 %8937
        %8939 = vrot.lane.b32.xlu0 %v2224, 56
        %v8940 = vpop.permute.xlu0 %8939
        %8941 = vrot.lane.b32.xlu0 %v2225, 56
        %v8942 = vpop.permute.xlu0 %8941
        %8943 = vrot.lane.b32.xlu0 %v2226, 56
        %v8944 = vpop.permute.xlu0 %8943
        %8945 = vrot.lane.b32.xlu0 %v2227, 56
        %v8946 = vpop.permute.xlu0 %8945
        %8947 = vrot.lane.b32.xlu0 %v2228, 56
        %v8948 = vpop.permute.xlu0 %8947
        %8949 = vrot.lane.b32.xlu0 %v2229, 56
        %v8950 = vpop.permute.xlu0 %8949
        %8951 = vrot.lane.b32.xlu0 %v2230, 56
        %v8952 = vpop.permute.xlu0 %8951
        %8953 = vrot.lane.b32.xlu0 %v2231, 56
        %v8954 = vpop.permute.xlu0 %8953
        %8955 = vrot.lane.b32.xlu0 %v2232, 56
        %v8956 = vpop.permute.xlu0 %8955
        %8957 = vrot.lane.b32.xlu0 %v2233, 56
        %v8958 = vpop.permute.xlu0 %8957
        %8959 = vrot.lane.b32.xlu0 %v2234, 56
        %v8960 = vpop.permute.xlu0 %8959
        %8961 = vrot.lane.b32.xlu0 %v2235, 56
        %v8962 = vpop.permute.xlu0 %8961
        %8963 = vrot.lane.b32.xlu0 %v2236, 56
        %v8964 = vpop.permute.xlu0 %8963
        %8965 = vrot.lane.b32.xlu0 %v2237, 56
        %v8966 = vpop.permute.xlu0 %8965
        %8967 = vrot.lane.b32.xlu0 %v2238, 56
        %v8968 = vpop.permute.xlu0 %8967
        %8969 = vrot.lane.b32.xlu0 %v2239, 56
        %v8970 = vpop.permute.xlu0 %8969
        %8971 = vrot.lane.b32.xlu0 %v2240, 56
        %v8972 = vpop.permute.xlu0 %8971
        %8973 = vrot.lane.b32.xlu0 %v2241, 56
        %v8974 = vpop.permute.xlu0 %8973
        %8975 = vrot.lane.b32.xlu0 %v2242, 56
        %v8976 = vpop.permute.xlu0 %8975
        %8977 = vrot.lane.b32.xlu0 %v2243, 56
        %v8978 = vpop.permute.xlu0 %8977
        %9107 = vrot.lane.b32.xlu0 %v2245, 64
        %v9108 = vpop.permute.xlu0 %9107
        %9109 = vrot.lane.b32.xlu0 %v2246, 64
        %v9110 = vpop.permute.xlu0 %9109
        %9111 = vrot.lane.b32.xlu0 %v2247, 64
        %v9112 = vpop.permute.xlu0 %9111
        %9113 = vrot.lane.b32.xlu0 %v2248, 64
        %v9114 = vpop.permute.xlu0 %9113
        %9115 = vrot.lane.b32.xlu0 %v2249, 64
        %v9116 = vpop.permute.xlu0 %9115
        %9117 = vrot.lane.b32.xlu0 %v2250, 64
        %v9118 = vpop.permute.xlu0 %9117
        %9119 = vrot.lane.b32.xlu0 %v2251, 64
        %v9120 = vpop.permute.xlu0 %9119
        %9121 = vrot.lane.b32.xlu0 %v2252, 64
        %v9122 = vpop.permute.xlu0 %9121
        %9123 = vrot.lane.b32.xlu0 %v2253, 64
        %v9124 = vpop.permute.xlu0 %9123
        %9125 = vrot.lane.b32.xlu0 %v2254, 64
        %v9126 = vpop.permute.xlu0 %9125
        %9127 = vrot.lane.b32.xlu0 %v2255, 64
        %v9128 = vpop.permute.xlu0 %9127
        %9129 = vrot.lane.b32.xlu0 %v2256, 64
        %v9130 = vpop.permute.xlu0 %9129
        %9131 = vrot.lane.b32.xlu0 %v2257, 64
        %v9132 = vpop.permute.xlu0 %9131
        %9133 = vrot.lane.b32.xlu0 %v2258, 64
        %v9134 = vpop.permute.xlu0 %9133
        %9135 = vrot.lane.b32.xlu0 %v2259, 64
        %v9136 = vpop.permute.xlu0 %9135
        %9137 = vrot.lane.b32.xlu0 %v2260, 64
        %v9138 = vpop.permute.xlu0 %9137
        %9139 = vrot.lane.b32.xlu0 %v2261, 64
        %v9140 = vpop.permute.xlu0 %9139
        %9141 = vrot.lane.b32.xlu0 %v2262, 64
        %v9142 = vpop.permute.xlu0 %9141
        %9143 = vrot.lane.b32.xlu0 %v2263, 64
        %v9144 = vpop.permute.xlu0 %9143
        %9145 = vrot.lane.b32.xlu0 %v2264, 64
        %v9146 = vpop.permute.xlu0 %9145
        %9147 = vrot.lane.b32.xlu0 %v2265, 64
        %v9148 = vpop.permute.xlu0 %9147
        %9149 = vrot.lane.b32.xlu0 %v2266, 64
        %v9150 = vpop.permute.xlu0 %9149
        %9151 = vrot.lane.b32.xlu0 %v2267, 64
        %v9152 = vpop.permute.xlu0 %9151
        %9153 = vrot.lane.b32.xlu0 %v2268, 64
        %v9154 = vpop.permute.xlu0 %9153
        %9155 = vrot.lane.b32.xlu0 %v2269, 64
        %v9156 = vpop.permute.xlu0 %9155
        %9157 = vrot.lane.b32.xlu0 %v2270, 64
        %v9158 = vpop.permute.xlu0 %9157
        %9159 = vrot.lane.b32.xlu0 %v2271, 64
        %v9160 = vpop.permute.xlu0 %9159
        %9161 = vrot.lane.b32.xlu0 %v2272, 64
        %v9162 = vpop.permute.xlu0 %9161
        %9163 = vrot.lane.b32.xlu0 %v2273, 64
        %v9164 = vpop.permute.xlu0 %9163
        %9165 = vrot.lane.b32.xlu0 %v2274, 64
        %v9166 = vpop.permute.xlu0 %9165
        %9167 = vrot.lane.b32.xlu0 %v2275, 64
        %v9168 = vpop.permute.xlu0 %9167
        %9169 = vrot.lane.b32.xlu0 %v2276, 64
        %v9170 = vpop.permute.xlu0 %9169
        %9171 = vrot.lane.b32.xlu0 %v2277, 64
        %v9172 = vpop.permute.xlu0 %9171
        %9173 = vrot.lane.b32.xlu0 %v2278, 64
        %v9174 = vpop.permute.xlu0 %9173
        %9175 = vrot.lane.b32.xlu0 %v2279, 64
        %v9176 = vpop.permute.xlu0 %9175
        %9177 = vrot.lane.b32.xlu0 %v2280, 64
        %v9178 = vpop.permute.xlu0 %9177
        %9179 = vrot.lane.b32.xlu0 %v2281, 64
        %v9180 = vpop.permute.xlu0 %9179
        %9181 = vrot.lane.b32.xlu0 %v2282, 64
        %v9182 = vpop.permute.xlu0 %9181
        %9183 = vrot.lane.b32.xlu0 %v2283, 64
        %v9184 = vpop.permute.xlu0 %9183
        %9185 = vrot.lane.b32.xlu0 %v2284, 64
        %v9186 = vpop.permute.xlu0 %9185
        %9187 = vrot.lane.b32.xlu0 %v2285, 64
        %v9188 = vpop.permute.xlu0 %9187
        %9189 = vrot.lane.b32.xlu0 %v2286, 64
        %v9190 = vpop.permute.xlu0 %9189
        %9191 = vrot.lane.b32.xlu0 %v2287, 64
        %v9192 = vpop.permute.xlu0 %9191
        %9193 = vrot.lane.b32.xlu0 %v2288, 64
        %v9194 = vpop.permute.xlu0 %9193
        %9195 = vrot.lane.b32.xlu0 %v2289, 64
        %v9196 = vpop.permute.xlu0 %9195
        %9197 = vrot.lane.b32.xlu0 %v2290, 64
        %v9198 = vpop.permute.xlu0 %9197
        %9199 = vrot.lane.b32.xlu0 %v2291, 64
        %v9200 = vpop.permute.xlu0 %9199
        %9201 = vrot.lane.b32.xlu0 %v2292, 64
        %v9202 = vpop.permute.xlu0 %9201
        %9203 = vrot.lane.b32.xlu0 %v2293, 64
        %v9204 = vpop.permute.xlu0 %9203
        %9205 = vrot.lane.b32.xlu0 %v2294, 64
        %v9206 = vpop.permute.xlu0 %9205
        %9207 = vrot.lane.b32.xlu0 %v2295, 64
        %v9208 = vpop.permute.xlu0 %9207
        %9209 = vrot.lane.b32.xlu0 %v2296, 64
        %v9210 = vpop.permute.xlu0 %9209
        %9211 = vrot.lane.b32.xlu0 %v2297, 64
        %v9212 = vpop.permute.xlu0 %9211
        %9213 = vrot.lane.b32.xlu0 %v2298, 64
        %v9214 = vpop.permute.xlu0 %9213
        %9215 = vrot.lane.b32.xlu0 %v2299, 64
        %v9216 = vpop.permute.xlu0 %9215
        %9217 = vrot.lane.b32.xlu0 %v2300, 64
        %v9218 = vpop.permute.xlu0 %9217
        %9219 = vrot.lane.b32.xlu0 %v2301, 64
        %v9220 = vpop.permute.xlu0 %9219
        %9221 = vrot.lane.b32.xlu0 %v2302, 64
        %v9222 = vpop.permute.xlu0 %9221
        %9223 = vrot.lane.b32.xlu0 %v2303, 64
        %v9224 = vpop.permute.xlu0 %9223
        %9225 = vrot.lane.b32.xlu0 %v2304, 64
        %v9226 = vpop.permute.xlu0 %9225
        %9227 = vrot.lane.b32.xlu0 %v2305, 64
        %v9228 = vpop.permute.xlu0 %9227
        %9229 = vrot.lane.b32.xlu0 %v2306, 64
        %v9230 = vpop.permute.xlu0 %9229
        %9231 = vrot.lane.b32.xlu0 %v2307, 64
        %v9232 = vpop.permute.xlu0 %9231
        %9233 = vrot.lane.b32.xlu0 %v2308, 64
        %v9234 = vpop.permute.xlu0 %9233
        %9363 = vrot.lane.b32.xlu0 %v2309, 72
        %v9364 = vpop.permute.xlu0 %9363
        %9365 = vrot.lane.b32.xlu0 %v2310, 72
        %v9366 = vpop.permute.xlu0 %9365
        %9367 = vrot.lane.b32.xlu0 %v2311, 72
        %v9368 = vpop.permute.xlu0 %9367
        %9369 = vrot.lane.b32.xlu0 %v2312, 72
        %v9370 = vpop.permute.xlu0 %9369
        %9371 = vrot.lane.b32.xlu0 %v2313, 72
        %v9372 = vpop.permute.xlu0 %9371
        %9373 = vrot.lane.b32.xlu0 %v2314, 72
        %v9374 = vpop.permute.xlu0 %9373
        %9375 = vrot.lane.b32.xlu0 %v2315, 72
        %v9376 = vpop.permute.xlu0 %9375
        %9377 = vrot.lane.b32.xlu0 %v2316, 72
        %v9378 = vpop.permute.xlu0 %9377
        %9379 = vrot.lane.b32.xlu0 %v2317, 72
        %v9380 = vpop.permute.xlu0 %9379
        %9381 = vrot.lane.b32.xlu0 %v2318, 72
        %v9382 = vpop.permute.xlu0 %9381
        %9383 = vrot.lane.b32.xlu0 %v2319, 72
        %v9384 = vpop.permute.xlu0 %9383
        %9385 = vrot.lane.b32.xlu0 %v2320, 72
        %v9386 = vpop.permute.xlu0 %9385
        %9387 = vrot.lane.b32.xlu0 %v2321, 72
        %v9388 = vpop.permute.xlu0 %9387
        %9389 = vrot.lane.b32.xlu0 %v2322, 72
        %v9390 = vpop.permute.xlu0 %9389
        %9391 = vrot.lane.b32.xlu0 %v2323, 72
        %v9392 = vpop.permute.xlu0 %9391
        %9393 = vrot.lane.b32.xlu0 %v2324, 72
        %v9394 = vpop.permute.xlu0 %9393
        %9395 = vrot.lane.b32.xlu0 %v2325, 72
        %v9396 = vpop.permute.xlu0 %9395
        %9397 = vrot.lane.b32.xlu0 %v2326, 72
        %v9398 = vpop.permute.xlu0 %9397
        %9399 = vrot.lane.b32.xlu0 %v2327, 72
        %v9400 = vpop.permute.xlu0 %9399
        %9401 = vrot.lane.b32.xlu0 %v2328, 72
        %v9402 = vpop.permute.xlu0 %9401
        %9403 = vrot.lane.b32.xlu0 %v2329, 72
        %v9404 = vpop.permute.xlu0 %9403
        %9405 = vrot.lane.b32.xlu0 %v2330, 72
        %v9406 = vpop.permute.xlu0 %9405
        %9407 = vrot.lane.b32.xlu0 %v2331, 72
        %v9408 = vpop.permute.xlu0 %9407
        %9409 = vrot.lane.b32.xlu0 %v2332, 72
        %v9410 = vpop.permute.xlu0 %9409
        %9411 = vrot.lane.b32.xlu0 %v2333, 72
        %v9412 = vpop.permute.xlu0 %9411
        %9413 = vrot.lane.b32.xlu0 %v2334, 72
        %v9414 = vpop.permute.xlu0 %9413
        %9415 = vrot.lane.b32.xlu0 %v2335, 72
        %v9416 = vpop.permute.xlu0 %9415
        %9417 = vrot.lane.b32.xlu0 %v2336, 72
        %v9418 = vpop.permute.xlu0 %9417
        %9419 = vrot.lane.b32.xlu0 %v2337, 72
        %v9420 = vpop.permute.xlu0 %9419
        %9421 = vrot.lane.b32.xlu0 %v2338, 72
        %v9422 = vpop.permute.xlu0 %9421
        %9423 = vrot.lane.b32.xlu0 %v2339, 72
        %v9424 = vpop.permute.xlu0 %9423
        %9425 = vrot.lane.b32.xlu0 %v2340, 72
        %v9426 = vpop.permute.xlu0 %9425
        %9427 = vrot.lane.b32.xlu0 %v2341, 72
        %v9428 = vpop.permute.xlu0 %9427
        %9429 = vrot.lane.b32.xlu0 %v2342, 72
        %v9430 = vpop.permute.xlu0 %9429
        %9431 = vrot.lane.b32.xlu0 %v2343, 72
        %v9432 = vpop.permute.xlu0 %9431
        %9433 = vrot.lane.b32.xlu0 %v2344, 72
        %v9434 = vpop.permute.xlu0 %9433
        %9435 = vrot.lane.b32.xlu0 %v2345, 72
        %v9436 = vpop.permute.xlu0 %9435
        %9437 = vrot.lane.b32.xlu0 %v2346, 72
        %v9438 = vpop.permute.xlu0 %9437
        %9439 = vrot.lane.b32.xlu0 %v2347, 72
        %v9440 = vpop.permute.xlu0 %9439
        %9441 = vrot.lane.b32.xlu0 %v2348, 72
        %v9442 = vpop.permute.xlu0 %9441
        %9443 = vrot.lane.b32.xlu0 %v2349, 72
        %v9444 = vpop.permute.xlu0 %9443
        %9445 = vrot.lane.b32.xlu0 %v2350, 72
        %v9446 = vpop.permute.xlu0 %9445
        %9447 = vrot.lane.b32.xlu0 %v2351, 72
        %v9448 = vpop.permute.xlu0 %9447
        %9449 = vrot.lane.b32.xlu0 %v2352, 72
        %v9450 = vpop.permute.xlu0 %9449
        %9451 = vrot.lane.b32.xlu0 %v2353, 72
        %v9452 = vpop.permute.xlu0 %9451
        %9453 = vrot.lane.b32.xlu0 %v2354, 72
        %v9454 = vpop.permute.xlu0 %9453
        %9455 = vrot.lane.b32.xlu0 %v2355, 72
        %v9456 = vpop.permute.xlu0 %9455
        %9457 = vrot.lane.b32.xlu0 %v2356, 72
        %v9458 = vpop.permute.xlu0 %9457
        %9459 = vrot.lane.b32.xlu0 %v2357, 72
        %v9460 = vpop.permute.xlu0 %9459
        %9461 = vrot.lane.b32.xlu0 %v2358, 72
        %v9462 = vpop.permute.xlu0 %9461
        %9463 = vrot.lane.b32.xlu0 %v2359, 72
        %v9464 = vpop.permute.xlu0 %9463
        %9465 = vrot.lane.b32.xlu0 %v2360, 72
        %v9466 = vpop.permute.xlu0 %9465
        %9467 = vrot.lane.b32.xlu0 %v2361, 72
        %v9468 = vpop.permute.xlu0 %9467
        %9469 = vrot.lane.b32.xlu0 %v2362, 72
        %v9470 = vpop.permute.xlu0 %9469
        %9471 = vrot.lane.b32.xlu0 %v2363, 72
        %v9472 = vpop.permute.xlu0 %9471
        %9473 = vrot.lane.b32.xlu0 %v2364, 72
        %v9474 = vpop.permute.xlu0 %9473
        %9475 = vrot.lane.b32.xlu0 %v2365, 72
        %v9476 = vpop.permute.xlu0 %9475
        %9477 = vrot.lane.b32.xlu0 %v2366, 72
        %v9478 = vpop.permute.xlu0 %9477
        %9479 = vrot.lane.b32.xlu0 %v2367, 72
        %v9480 = vpop.permute.xlu0 %9479
        %9481 = vrot.lane.b32.xlu0 %v2368, 72
        %v9482 = vpop.permute.xlu0 %9481
        %9483 = vrot.lane.b32.xlu0 %v2369, 72
        %v9484 = vpop.permute.xlu0 %9483
        %9485 = vrot.lane.b32.xlu0 %v2370, 72
        %v9486 = vpop.permute.xlu0 %9485
        %9487 = vrot.lane.b32.xlu0 %v2371, 72
        %v9488 = vpop.permute.xlu0 %9487
        %9489 = vrot.lane.b32.xlu0 %v2372, 72
        %v9490 = vpop.permute.xlu0 %9489
        %9619 = vrot.lane.b32.xlu0 %v2373, 80
        %v9620 = vpop.permute.xlu0 %9619
        %9621 = vrot.lane.b32.xlu0 %v2374, 80
        %v9622 = vpop.permute.xlu0 %9621
        %9623 = vrot.lane.b32.xlu0 %v2375, 80
        %v9624 = vpop.permute.xlu0 %9623
        %9625 = vrot.lane.b32.xlu0 %v2376, 80
        %v9626 = vpop.permute.xlu0 %9625
        %9627 = vrot.lane.b32.xlu0 %v2377, 80
        %v9628 = vpop.permute.xlu0 %9627
        %9629 = vrot.lane.b32.xlu0 %v2378, 80
        %v9630 = vpop.permute.xlu0 %9629
        %9631 = vrot.lane.b32.xlu0 %v2379, 80
        %v9632 = vpop.permute.xlu0 %9631
        %9633 = vrot.lane.b32.xlu0 %v2380, 80
        %v9634 = vpop.permute.xlu0 %9633
        %9635 = vrot.lane.b32.xlu0 %v2381, 80
        %v9636 = vpop.permute.xlu0 %9635
        %9637 = vrot.lane.b32.xlu0 %v2382, 80
        %v9638 = vpop.permute.xlu0 %9637
        %9639 = vrot.lane.b32.xlu0 %v2383, 80
        %v9640 = vpop.permute.xlu0 %9639
        %9641 = vrot.lane.b32.xlu0 %v2384, 80
        %v9642 = vpop.permute.xlu0 %9641
        %9643 = vrot.lane.b32.xlu0 %v2385, 80
        %v9644 = vpop.permute.xlu0 %9643
        %9645 = vrot.lane.b32.xlu0 %v2386, 80
        %v9646 = vpop.permute.xlu0 %9645
        %9647 = vrot.lane.b32.xlu0 %v2387, 80
        %v9648 = vpop.permute.xlu0 %9647
        %9649 = vrot.lane.b32.xlu0 %v2388, 80
        %v9650 = vpop.permute.xlu0 %9649
        %9651 = vrot.lane.b32.xlu0 %v2389, 80
        %v9652 = vpop.permute.xlu0 %9651
        %9653 = vrot.lane.b32.xlu0 %v2390, 80
        %v9654 = vpop.permute.xlu0 %9653
        %9655 = vrot.lane.b32.xlu0 %v2391, 80
        %v9656 = vpop.permute.xlu0 %9655
        %9657 = vrot.lane.b32.xlu0 %v2392, 80
        %v9658 = vpop.permute.xlu0 %9657
        %9659 = vrot.lane.b32.xlu0 %v2393, 80
        %v9660 = vpop.permute.xlu0 %9659
        %9661 = vrot.lane.b32.xlu0 %v2394, 80
        %v9662 = vpop.permute.xlu0 %9661
        %9663 = vrot.lane.b32.xlu0 %v2395, 80
        %v9664 = vpop.permute.xlu0 %9663
        %9665 = vrot.lane.b32.xlu0 %v2396, 80
        %v9666 = vpop.permute.xlu0 %9665
        %9667 = vrot.lane.b32.xlu0 %v2397, 80
        %v9668 = vpop.permute.xlu0 %9667
        %9669 = vrot.lane.b32.xlu0 %v2398, 80
        %v9670 = vpop.permute.xlu0 %9669
        %9671 = vrot.lane.b32.xlu0 %v2399, 80
        %v9672 = vpop.permute.xlu0 %9671
        %9673 = vrot.lane.b32.xlu0 %v2400, 80
        %v9674 = vpop.permute.xlu0 %9673
        %9675 = vrot.lane.b32.xlu0 %v2401, 80
        %v9676 = vpop.permute.xlu0 %9675
        %9677 = vrot.lane.b32.xlu0 %v2402, 80
        %v9678 = vpop.permute.xlu0 %9677
        %9679 = vrot.lane.b32.xlu0 %v2403, 80
        %v9680 = vpop.permute.xlu0 %9679
        %9681 = vrot.lane.b32.xlu0 %v2404, 80
        %v9682 = vpop.permute.xlu0 %9681
        %9683 = vrot.lane.b32.xlu0 %v2405, 80
        %v9684 = vpop.permute.xlu0 %9683
        %9685 = vrot.lane.b32.xlu0 %v2406, 80
        %v9686 = vpop.permute.xlu0 %9685
        %9687 = vrot.lane.b32.xlu0 %v2407, 80
        %v9688 = vpop.permute.xlu0 %9687
        %9689 = vrot.lane.b32.xlu0 %v2408, 80
        %v9690 = vpop.permute.xlu0 %9689
        %9691 = vrot.lane.b32.xlu0 %v2409, 80
        %v9692 = vpop.permute.xlu0 %9691
        %9693 = vrot.lane.b32.xlu0 %v2410, 80
        %v9694 = vpop.permute.xlu0 %9693
        %9695 = vrot.lane.b32.xlu0 %v2411, 80
        %v9696 = vpop.permute.xlu0 %9695
        %9697 = vrot.lane.b32.xlu0 %v2412, 80
        %v9698 = vpop.permute.xlu0 %9697
        %9699 = vrot.lane.b32.xlu0 %v2413, 80
        %v9700 = vpop.permute.xlu0 %9699
        %9701 = vrot.lane.b32.xlu0 %v2414, 80
        %v9702 = vpop.permute.xlu0 %9701
        %9703 = vrot.lane.b32.xlu0 %v2415, 80
        %v9704 = vpop.permute.xlu0 %9703
        %9705 = vrot.lane.b32.xlu0 %v2416, 80
        %v9706 = vpop.permute.xlu0 %9705
        %9707 = vrot.lane.b32.xlu0 %v2417, 80
        %v9708 = vpop.permute.xlu0 %9707
        %9709 = vrot.lane.b32.xlu0 %v2418, 80
        %v9710 = vpop.permute.xlu0 %9709
        %9711 = vrot.lane.b32.xlu0 %v2419, 80
        %v9712 = vpop.permute.xlu0 %9711
        %9713 = vrot.lane.b32.xlu0 %v2420, 80
        %v9714 = vpop.permute.xlu0 %9713
        %9715 = vrot.lane.b32.xlu0 %v2421, 80
        %v9716 = vpop.permute.xlu0 %9715
        %9717 = vrot.lane.b32.xlu0 %v2422, 80
        %v9718 = vpop.permute.xlu0 %9717
        %9719 = vrot.lane.b32.xlu0 %v2423, 80
        %v9720 = vpop.permute.xlu0 %9719
        %9721 = vrot.lane.b32.xlu0 %v2424, 80
        %v9722 = vpop.permute.xlu0 %9721
        %9723 = vrot.lane.b32.xlu0 %v2425, 80
        %v9724 = vpop.permute.xlu0 %9723
        %9725 = vrot.lane.b32.xlu0 %v2426, 80
        %v9726 = vpop.permute.xlu0 %9725
        %9727 = vrot.lane.b32.xlu0 %v2427, 80
        %v9728 = vpop.permute.xlu0 %9727
        %9729 = vrot.lane.b32.xlu0 %v2428, 80
        %v9730 = vpop.permute.xlu0 %9729
        %9731 = vrot.lane.b32.xlu0 %v2429, 80
        %v9732 = vpop.permute.xlu0 %9731
        %9733 = vrot.lane.b32.xlu0 %v2430, 80
        %v9734 = vpop.permute.xlu0 %9733
        %9735 = vrot.lane.b32.xlu0 %v2431, 80
        %v9736 = vpop.permute.xlu0 %9735
        %9737 = vrot.lane.b32.xlu0 %v2432, 80
        %v9738 = vpop.permute.xlu0 %9737
        %9739 = vrot.lane.b32.xlu0 %v2433, 80
        %v9740 = vpop.permute.xlu0 %9739
        %9741 = vrot.lane.b32.xlu0 %v2434, 80
        %v9742 = vpop.permute.xlu0 %9741
        %9743 = vrot.lane.b32.xlu0 %v2435, 80
        %v9744 = vpop.permute.xlu0 %9743
        %9745 = vrot.lane.b32.xlu0 %v2436, 80
        %v9746 = vpop.permute.xlu0 %9745
        %v9811 = vsel %vm371, %v1730, %v7316
        %v9812 = vsel %vm371, %v1731, %v7318
        %v9813 = vsel %vm371, %v1732, %v7320
        %v9814 = vsel %vm371, %v1733, %v7322
        %v9815 = vsel %vm371, %v1734, %v7324
        %v9816 = vsel %vm371, %v1735, %v7326
        %v9817 = vsel %vm371, %v1736, %v7328
        %v9818 = vsel %vm371, %v1737, %v7330
        %v9819 = vsel %vm371, %v1738, %v7332
        %v9820 = vsel %vm371, %v1739, %v7334
        %v9821 = vsel %vm371, %v1740, %v7336
        %v9822 = vsel %vm371, %v1741, %v7338
        %v9823 = vsel %vm371, %v1742, %v7340
        %v9824 = vsel %vm371, %v1743, %v7342
        %v9825 = vsel %vm371, %v1744, %v7344
        %v9826 = vsel %vm371, %v1745, %v7346
        %v9827 = vsel %vm371, %v1746, %v7348
        %v9828 = vsel %vm371, %v1747, %v7350
        %v9829 = vsel %vm371, %v1748, %v7352
        %v9830 = vsel %vm371, %v1749, %v7354
        %v9831 = vsel %vm371, %v1750, %v7356
        %v9832 = vsel %vm371, %v1751, %v7358
        %v9833 = vsel %vm371, %v1752, %v7360
        %v9834 = vsel %vm371, %v1753, %v7362
        %v9835 = vsel %vm371, %v1754, %v7364
        %v9836 = vsel %vm371, %v1755, %v7366
        %v9837 = vsel %vm371, %v1756, %v7368
        %v9838 = vsel %vm371, %v1757, %v7370
        %v9839 = vsel %vm371, %v1758, %v7372
        %v9840 = vsel %vm371, %v1759, %v7374
        %v9841 = vsel %vm371, %v1760, %v7376
        %v9842 = vsel %vm371, %v1761, %v7378
        %v9843 = vsel %vm371, %v1762, %v7380
        %v9844 = vsel %vm371, %v1763, %v7382
        %v9845 = vsel %vm371, %v1764, %v7384
        %v9846 = vsel %vm371, %v1765, %v7386
        %v9847 = vsel %vm371, %v1766, %v7388
        %v9848 = vsel %vm371, %v1767, %v7390
        %v9849 = vsel %vm371, %v1768, %v7392
        %v9850 = vsel %vm371, %v1769, %v7394
        %v9851 = vsel %vm371, %v1770, %v7396
        %v9852 = vsel %vm371, %v1771, %v7398
        %v9853 = vsel %vm371, %v1772, %v7400
        %v9854 = vsel %vm371, %v1773, %v7402
        %v9855 = vsel %vm371, %v1774, %v7404
        %v9856 = vsel %vm371, %v1775, %v7406
        %v9857 = vsel %vm371, %v1776, %v7408
        %v9858 = vsel %vm371, %v1777, %v7410
        %v9859 = vsel %vm371, %v1778, %v7412
        %v9860 = vsel %vm371, %v1779, %v7414
        %v9861 = vsel %vm371, %v1780, %v7416
        %v9862 = vsel %vm371, %v1781, %v7418
        %v9863 = vsel %vm371, %v1782, %v7420
        %v9864 = vsel %vm371, %v1783, %v7422
        %v9865 = vsel %vm371, %v1784, %v7424
        %v9866 = vsel %vm371, %v1785, %v7426
        %v9867 = vsel %vm371, %v1786, %v7428
        %v9868 = vsel %vm371, %v1787, %v7430
        %v9869 = vsel %vm371, %v1788, %v7432
        %v9870 = vsel %vm371, %v1789, %v7434
        %v9871 = vsel %vm371, %v1790, %v7436
        %v9872 = vsel %vm371, %v1791, %v7438
        %v9873 = vsel %vm371, %v1792, %v7440
        %v9874 = vsel %vm371, %v1793, %v7442
        %v9875 = vsel %vm6341, %v9811, %v7572
        %v9876 = vsel %vm6341, %v9812, %v7574
        %v9877 = vsel %vm6341, %v9813, %v7576
        %v9878 = vsel %vm6341, %v9814, %v7578
        %v9879 = vsel %vm6341, %v9815, %v7580
        %v9880 = vsel %vm6341, %v9816, %v7582
        %v9881 = vsel %vm6341, %v9817, %v7584
        %v9882 = vsel %vm6341, %v9818, %v7586
        %v9883 = vsel %vm6341, %v9819, %v7588
        %v9884 = vsel %vm6341, %v9820, %v7590
        %v9885 = vsel %vm6341, %v9821, %v7592
        %v9886 = vsel %vm6341, %v9822, %v7594
        %v9887 = vsel %vm6341, %v9823, %v7596
        %v9888 = vsel %vm6341, %v9824, %v7598
        %v9889 = vsel %vm6341, %v9825, %v7600
        %v9890 = vsel %vm6341, %v9826, %v7602
        %v9891 = vsel %vm6341, %v9827, %v7604
        %v9892 = vsel %vm6341, %v9828, %v7606
        %v9893 = vsel %vm6341, %v9829, %v7608
        %v9894 = vsel %vm6341, %v9830, %v7610
        %v9895 = vsel %vm6341, %v9831, %v7612
        %v9896 = vsel %vm6341, %v9832, %v7614
        %v9897 = vsel %vm6341, %v9833, %v7616
        %v9898 = vsel %vm6341, %v9834, %v7618
        %v9899 = vsel %vm6341, %v9835, %v7620
        %v9900 = vsel %vm6341, %v9836, %v7622
        %v9901 = vsel %vm6341, %v9837, %v7624
        %v9902 = vsel %vm6341, %v9838, %v7626
        %v9903 = vsel %vm6341, %v9839, %v7628
        %v9904 = vsel %vm6341, %v9840, %v7630
        %v9905 = vsel %vm6341, %v9841, %v7632
        %v9906 = vsel %vm6341, %v9842, %v7634
        %v9907 = vsel %vm6341, %v9843, %v7636
        %v9908 = vsel %vm6341, %v9844, %v7638
        %v9909 = vsel %vm6341, %v9845, %v7640
        %v9910 = vsel %vm6341, %v9846, %v7642
        %v9911 = vsel %vm6341, %v9847, %v7644
        %v9912 = vsel %vm6341, %v9848, %v7646
        %v9913 = vsel %vm6341, %v9849, %v7648
        %v9914 = vsel %vm6341, %v9850, %v7650
        %v9915 = vsel %vm6341, %v9851, %v7652
        %v9916 = vsel %vm6341, %v9852, %v7654
        %v9917 = vsel %vm6341, %v9853, %v7656
        %v9918 = vsel %vm6341, %v9854, %v7658
        %v9919 = vsel %vm6341, %v9855, %v7660
        %v9920 = vsel %vm6341, %v9856, %v7662
        %v9921 = vsel %vm6341, %v9857, %v7664
        %v9922 = vsel %vm6341, %v9858, %v7666
        %v9923 = vsel %vm6341, %v9859, %v7668
        %v9924 = vsel %vm6341, %v9860, %v7670
        %v9925 = vsel %vm6341, %v9861, %v7672
        %v9926 = vsel %vm6341, %v9862, %v7674
        %v9927 = vsel %vm6341, %v9863, %v7676
        %v9928 = vsel %vm6341, %v9864, %v7678
        %v9929 = vsel %vm6341, %v9865, %v7680
        %v9930 = vsel %vm6341, %v9866, %v7682
        %v9931 = vsel %vm6341, %v9867, %v7684
        %v9932 = vsel %vm6341, %v9868, %v7686
        %v9933 = vsel %vm6341, %v9869, %v7688
        %v9934 = vsel %vm6341, %v9870, %v7690
        %v9935 = vsel %vm6341, %v9871, %v7692
        %v9936 = vsel %vm6341, %v9872, %v7694
        %v9937 = vsel %vm6341, %v9873, %v7696
        %v9938 = vsel %vm6341, %v9874, %v7698
        %v9939 = vsel %vm6406, %v9875, %v7828
        %v9940 = vsel %vm6406, %v9876, %v7830
        %v9941 = vsel %vm6406, %v9877, %v7832
        %v9942 = vsel %vm6406, %v9878, %v7834
        %v9943 = vsel %vm6406, %v9879, %v7836
        %v9944 = vsel %vm6406, %v9880, %v7838
        %v9945 = vsel %vm6406, %v9881, %v7840
        %v9946 = vsel %vm6406, %v9882, %v7842
        %v9947 = vsel %vm6406, %v9883, %v7844
        %v9948 = vsel %vm6406, %v9884, %v7846
        %v9949 = vsel %vm6406, %v9885, %v7848
        %v9950 = vsel %vm6406, %v9886, %v7850
        %v9951 = vsel %vm6406, %v9887, %v7852
        %v9952 = vsel %vm6406, %v9888, %v7854
        %v9953 = vsel %vm6406, %v9889, %v7856
        %v9954 = vsel %vm6406, %v9890, %v7858
        %v9955 = vsel %vm6406, %v9891, %v7860
        %v9956 = vsel %vm6406, %v9892, %v7862
        %v9957 = vsel %vm6406, %v9893, %v7864
        %v9958 = vsel %vm6406, %v9894, %v7866
        %v9959 = vsel %vm6406, %v9895, %v7868
        %v9960 = vsel %vm6406, %v9896, %v7870
        %v9961 = vsel %vm6406, %v9897, %v7872
        %v9962 = vsel %vm6406, %v9898, %v7874
        %v9963 = vsel %vm6406, %v9899, %v7876
        %v9964 = vsel %vm6406, %v9900, %v7878
        %v9965 = vsel %vm6406, %v9901, %v7880
        %v9966 = vsel %vm6406, %v9902, %v7882
        %v9967 = vsel %vm6406, %v9903, %v7884
        %v9968 = vsel %vm6406, %v9904, %v7886
        %v9969 = vsel %vm6406, %v9905, %v7888
        %v9970 = vsel %vm6406, %v9906, %v7890
        %v9971 = vsel %vm6406, %v9907, %v7892
        %v9972 = vsel %vm6406, %v9908, %v7894
        %v9973 = vsel %vm6406, %v9909, %v7896
        %v9974 = vsel %vm6406, %v9910, %v7898
        %v9975 = vsel %vm6406, %v9911, %v7900
        %v9976 = vsel %vm6406, %v9912, %v7902
        %v9977 = vsel %vm6406, %v9913, %v7904
        %v9978 = vsel %vm6406, %v9914, %v7906
        %v9979 = vsel %vm6406, %v9915, %v7908
        %v9980 = vsel %vm6406, %v9916, %v7910
        %v9981 = vsel %vm6406, %v9917, %v7912
        %v9982 = vsel %vm6406, %v9918, %v7914
        %v9983 = vsel %vm6406, %v9919, %v7916
        %v9984 = vsel %vm6406, %v9920, %v7918
        %v9985 = vsel %vm6406, %v9921, %v7920
        %v9986 = vsel %vm6406, %v9922, %v7922
        %v9987 = vsel %vm6406, %v9923, %v7924
        %v9988 = vsel %vm6406, %v9924, %v7926
        %v9989 = vsel %vm6406, %v9925, %v7928
        %v9990 = vsel %vm6406, %v9926, %v7930
        %v9991 = vsel %vm6406, %v9927, %v7932
        %v9992 = vsel %vm6406, %v9928, %v7934
        %v9993 = vsel %vm6406, %v9929, %v7936
        %v9994 = vsel %vm6406, %v9930, %v7938
        %v9995 = vsel %vm6406, %v9931, %v7940
        %v9996 = vsel %vm6406, %v9932, %v7942
        %v9997 = vsel %vm6406, %v9933, %v7944
        %v9998 = vsel %vm6406, %v9934, %v7946
        %v9999 = vsel %vm6406, %v9935, %v7948
        %v10000 = vsel %vm6406, %v9936, %v7950
        %v10001 = vsel %vm6406, %v9937, %v7952
        %v10002 = vsel %vm6406, %v9938, %v7954
        %v10003 = vsel %vm6471, %v9939, %v8084
        %v10004 = vsel %vm6471, %v9940, %v8086
        %v10005 = vsel %vm6471, %v9941, %v8088
        %v10006 = vsel %vm6471, %v9942, %v8090
        %v10007 = vsel %vm6471, %v9943, %v8092
        %v10008 = vsel %vm6471, %v9944, %v8094
        %v10009 = vsel %vm6471, %v9945, %v8096
        %v10010 = vsel %vm6471, %v9946, %v8098
        %v10011 = vsel %vm6471, %v9947, %v8100
        %v10012 = vsel %vm6471, %v9948, %v8102
        %v10013 = vsel %vm6471, %v9949, %v8104
        %v10014 = vsel %vm6471, %v9950, %v8106
        %v10015 = vsel %vm6471, %v9951, %v8108
        %v10016 = vsel %vm6471, %v9952, %v8110
        %v10017 = vsel %vm6471, %v9953, %v8112
        %v10018 = vsel %vm6471, %v9954, %v8114
        %v10019 = vsel %vm6471, %v9955, %v8116
        %v10020 = vsel %vm6471, %v9956, %v8118
        %v10021 = vsel %vm6471, %v9957, %v8120
        %v10022 = vsel %vm6471, %v9958, %v8122
        %v10023 = vsel %vm6471, %v9959, %v8124
        %v10024 = vsel %vm6471, %v9960, %v8126
        %v10025 = vsel %vm6471, %v9961, %v8128
        %v10026 = vsel %vm6471, %v9962, %v8130
        %v10027 = vsel %vm6471, %v9963, %v8132
        %v10028 = vsel %vm6471, %v9964, %v8134
        %v10029 = vsel %vm6471, %v9965, %v8136
        %v10030 = vsel %vm6471, %v9966, %v8138
        %v10031 = vsel %vm6471, %v9967, %v8140
        %v10032 = vsel %vm6471, %v9968, %v8142
        %v10033 = vsel %vm6471, %v9969, %v8144
        %v10034 = vsel %vm6471, %v9970, %v8146
        %v10035 = vsel %vm6471, %v9971, %v8148
        %v10036 = vsel %vm6471, %v9972, %v8150
        %v10037 = vsel %vm6471, %v9973, %v8152
        %v10038 = vsel %vm6471, %v9974, %v8154
        %v10039 = vsel %vm6471, %v9975, %v8156
        %v10040 = vsel %vm6471, %v9976, %v8158
        %v10041 = vsel %vm6471, %v9977, %v8160
        %v10042 = vsel %vm6471, %v9978, %v8162
        %v10043 = vsel %vm6471, %v9979, %v8164
        %v10044 = vsel %vm6471, %v9980, %v8166
        %v10045 = vsel %vm6471, %v9981, %v8168
        %v10046 = vsel %vm6471, %v9982, %v8170
        %v10047 = vsel %vm6471, %v9983, %v8172
        %v10048 = vsel %vm6471, %v9984, %v8174
        %v10049 = vsel %vm6471, %v9985, %v8176
        %v10050 = vsel %vm6471, %v9986, %v8178
        %v10051 = vsel %vm6471, %v9987, %v8180
        %v10052 = vsel %vm6471, %v9988, %v8182
        %v10053 = vsel %vm6471, %v9989, %v8184
        %v10054 = vsel %vm6471, %v9990, %v8186
        %v10055 = vsel %vm6471, %v9991, %v8188
        %v10056 = vsel %vm6471, %v9992, %v8190
        %v10057 = vsel %vm6471, %v9993, %v8192
        %v10058 = vsel %vm6471, %v9994, %v8194
        %v10059 = vsel %vm6471, %v9995, %v8196
        %v10060 = vsel %vm6471, %v9996, %v8198
        %v10061 = vsel %vm6471, %v9997, %v8200
        %v10062 = vsel %vm6471, %v9998, %v8202
        %v10063 = vsel %vm6471, %v9999, %v8204
        %v10064 = vsel %vm6471, %v10000, %v8206
        %v10065 = vsel %vm6471, %v10001, %v8208
        %v10066 = vsel %vm6471, %v10002, %v8210
        %v10067 = vsel %vm6536, %v10003, %v8340
        %v10068 = vsel %vm6536, %v10004, %v8342
        %v10069 = vsel %vm6536, %v10005, %v8344
        %v10070 = vsel %vm6536, %v10006, %v8346
        %v10071 = vsel %vm6536, %v10007, %v8348
        %v10072 = vsel %vm6536, %v10008, %v8350
        %v10073 = vsel %vm6536, %v10009, %v8352
        %v10074 = vsel %vm6536, %v10010, %v8354
        %v10075 = vsel %vm6536, %v10011, %v8356
        %v10076 = vsel %vm6536, %v10012, %v8358
        %v10077 = vsel %vm6536, %v10013, %v8360
        %v10078 = vsel %vm6536, %v10014, %v8362
        %v10079 = vsel %vm6536, %v10015, %v8364
        %v10080 = vsel %vm6536, %v10016, %v8366
        %v10081 = vsel %vm6536, %v10017, %v8368
        %v10082 = vsel %vm6536, %v10018, %v8370
        %v10083 = vsel %vm6536, %v10019, %v8372
        %v10084 = vsel %vm6536, %v10020, %v8374
        %v10085 = vsel %vm6536, %v10021, %v8376
        %v10086 = vsel %vm6536, %v10022, %v8378
        %v10087 = vsel %vm6536, %v10023, %v8380
        %v10088 = vsel %vm6536, %v10024, %v8382
        %v10089 = vsel %vm6536, %v10025, %v8384
        %v10090 = vsel %vm6536, %v10026, %v8386
        %v10091 = vsel %vm6536, %v10027, %v8388
        %v10092 = vsel %vm6536, %v10028, %v8390
        %v10093 = vsel %vm6536, %v10029, %v8392
        %v10094 = vsel %vm6536, %v10030, %v8394
        %v10095 = vsel %vm6536, %v10031, %v8396
        %v10096 = vsel %vm6536, %v10032, %v8398
        %v10097 = vsel %vm6536, %v10033, %v8400
        %v10098 = vsel %vm6536, %v10034, %v8402
        %v10099 = vsel %vm6536, %v10035, %v8404
        %v10100 = vsel %vm6536, %v10036, %v8406
        %v10101 = vsel %vm6536, %v10037, %v8408
        %v10102 = vsel %vm6536, %v10038, %v8410
        %v10103 = vsel %vm6536, %v10039, %v8412
        %v10104 = vsel %vm6536, %v10040, %v8414
        %v10105 = vsel %vm6536, %v10041, %v8416
        %v10106 = vsel %vm6536, %v10042, %v8418
        %v10107 = vsel %vm6536, %v10043, %v8420
        %v10108 = vsel %vm6536, %v10044, %v8422
        %v10109 = vsel %vm6536, %v10045, %v8424
        %v10110 = vsel %vm6536, %v10046, %v8426
        %v10111 = vsel %vm6536, %v10047, %v8428
        %v10112 = vsel %vm6536, %v10048, %v8430
        %v10113 = vsel %vm6536, %v10049, %v8432
        %v10114 = vsel %vm6536, %v10050, %v8434
        %v10115 = vsel %vm6536, %v10051, %v8436
        %v10116 = vsel %vm6536, %v10052, %v8438
        %v10117 = vsel %vm6536, %v10053, %v8440
        %v10118 = vsel %vm6536, %v10054, %v8442
        %v10119 = vsel %vm6536, %v10055, %v8444
        %v10120 = vsel %vm6536, %v10056, %v8446
        %v10121 = vsel %vm6536, %v10057, %v8448
        %v10122 = vsel %vm6536, %v10058, %v8450
        %v10123 = vsel %vm6536, %v10059, %v8452
        %v10124 = vsel %vm6536, %v10060, %v8454
        %v10125 = vsel %vm6536, %v10061, %v8456
        %v10126 = vsel %vm6536, %v10062, %v8458
        %v10127 = vsel %vm6536, %v10063, %v8460
        %v10128 = vsel %vm6536, %v10064, %v8462
        %v10129 = vsel %vm6536, %v10065, %v8464
        %v10130 = vsel %vm6536, %v10066, %v8466
        %v10131 = vsel %vm6601, %v10067, %v8596
        %v10132 = vsel %vm6601, %v10068, %v8598
        %v10133 = vsel %vm6601, %v10069, %v8600
        %v10134 = vsel %vm6601, %v10070, %v8602
        %v10135 = vsel %vm6601, %v10071, %v8604
        %v10136 = vsel %vm6601, %v10072, %v8606
        %v10137 = vsel %vm6601, %v10073, %v8608
        %v10138 = vsel %vm6601, %v10074, %v8610
        %v10139 = vsel %vm6601, %v10075, %v8612
        %v10140 = vsel %vm6601, %v10076, %v8614
        %v10141 = vsel %vm6601, %v10077, %v8616
        %v10142 = vsel %vm6601, %v10078, %v8618
        %v10143 = vsel %vm6601, %v10079, %v8620
        %v10144 = vsel %vm6601, %v10080, %v8622
        %v10145 = vsel %vm6601, %v10081, %v8624
        %v10146 = vsel %vm6601, %v10082, %v8626
        %v10147 = vsel %vm6601, %v10083, %v8628
        %v10148 = vsel %vm6601, %v10084, %v8630
        %v10149 = vsel %vm6601, %v10085, %v8632
        %v10150 = vsel %vm6601, %v10086, %v8634
        %v10151 = vsel %vm6601, %v10087, %v8636
        %v10152 = vsel %vm6601, %v10088, %v8638
        %v10153 = vsel %vm6601, %v10089, %v8640
        %v10154 = vsel %vm6601, %v10090, %v8642
        %v10155 = vsel %vm6601, %v10091, %v8644
        %v10156 = vsel %vm6601, %v10092, %v8646
        %v10157 = vsel %vm6601, %v10093, %v8648
        %v10158 = vsel %vm6601, %v10094, %v8650
        %v10159 = vsel %vm6601, %v10095, %v8652
        %v10160 = vsel %vm6601, %v10096, %v8654
        %v10161 = vsel %vm6601, %v10097, %v8656
        %v10162 = vsel %vm6601, %v10098, %v8658
        %v10163 = vsel %vm6601, %v10099, %v8660
        %v10164 = vsel %vm6601, %v10100, %v8662
        %v10165 = vsel %vm6601, %v10101, %v8664
        %v10166 = vsel %vm6601, %v10102, %v8666
        %v10167 = vsel %vm6601, %v10103, %v8668
        %v10168 = vsel %vm6601, %v10104, %v8670
        %v10169 = vsel %vm6601, %v10105, %v8672
        %v10170 = vsel %vm6601, %v10106, %v8674
        %v10171 = vsel %vm6601, %v10107, %v8676
        %v10172 = vsel %vm6601, %v10108, %v8678
        %v10173 = vsel %vm6601, %v10109, %v8680
        %v10174 = vsel %vm6601, %v10110, %v8682
        %v10175 = vsel %vm6601, %v10111, %v8684
        %v10176 = vsel %vm6601, %v10112, %v8686
        %v10177 = vsel %vm6601, %v10113, %v8688
        %v10178 = vsel %vm6601, %v10114, %v8690
        %v10179 = vsel %vm6601, %v10115, %v8692
        %v10180 = vsel %vm6601, %v10116, %v8694
        %v10181 = vsel %vm6601, %v10117, %v8696
        %v10182 = vsel %vm6601, %v10118, %v8698
        %v10183 = vsel %vm6601, %v10119, %v8700
        %v10184 = vsel %vm6601, %v10120, %v8702
        %v10185 = vsel %vm6601, %v10121, %v8704
        %v10186 = vsel %vm6601, %v10122, %v8706
        %v10187 = vsel %vm6601, %v10123, %v8708
        %v10188 = vsel %vm6601, %v10124, %v8710
        %v10189 = vsel %vm6601, %v10125, %v8712
        %v10190 = vsel %vm6601, %v10126, %v8714
        %v10191 = vsel %vm6601, %v10127, %v8716
        %v10192 = vsel %vm6601, %v10128, %v8718
        %v10193 = vsel %vm6601, %v10129, %v8720
        %v10194 = vsel %vm6601, %v10130, %v8722
        %v10195 = vsel %vm6666, %v10131, %v8852
        %v10196 = vsel %vm6666, %v10132, %v8854
        %v10197 = vsel %vm6666, %v10133, %v8856
        %v10198 = vsel %vm6666, %v10134, %v8858
        %v10199 = vsel %vm6666, %v10135, %v8860
        %v10200 = vsel %vm6666, %v10136, %v8862
        %v10201 = vsel %vm6666, %v10137, %v8864
        %v10202 = vsel %vm6666, %v10138, %v8866
        %v10203 = vsel %vm6666, %v10139, %v8868
        %v10204 = vsel %vm6666, %v10140, %v8870
        %v10205 = vsel %vm6666, %v10141, %v8872
        %v10206 = vsel %vm6666, %v10142, %v8874
        %v10207 = vsel %vm6666, %v10143, %v8876
        %v10208 = vsel %vm6666, %v10144, %v8878
        %v10209 = vsel %vm6666, %v10145, %v8880
        %v10210 = vsel %vm6666, %v10146, %v8882
        %v10211 = vsel %vm6666, %v10147, %v8884
        %v10212 = vsel %vm6666, %v10148, %v8886
        %v10213 = vsel %vm6666, %v10149, %v8888
        %v10214 = vsel %vm6666, %v10150, %v8890
        %v10215 = vsel %vm6666, %v10151, %v8892
        %v10216 = vsel %vm6666, %v10152, %v8894
        %v10217 = vsel %vm6666, %v10153, %v8896
        %v10218 = vsel %vm6666, %v10154, %v8898
        %v10219 = vsel %vm6666, %v10155, %v8900
        %v10220 = vsel %vm6666, %v10156, %v8902
        %v10221 = vsel %vm6666, %v10157, %v8904
        %v10222 = vsel %vm6666, %v10158, %v8906
        %v10223 = vsel %vm6666, %v10159, %v8908
        %v10224 = vsel %vm6666, %v10160, %v8910
        %v10225 = vsel %vm6666, %v10161, %v8912
        %v10226 = vsel %vm6666, %v10162, %v8914
        %v10227 = vsel %vm6666, %v10163, %v8916
        %v10228 = vsel %vm6666, %v10164, %v8918
        %v10229 = vsel %vm6666, %v10165, %v8920
        %v10230 = vsel %vm6666, %v10166, %v8922
        %v10231 = vsel %vm6666, %v10167, %v8924
        %v10232 = vsel %vm6666, %v10168, %v8926
        %v10233 = vsel %vm6666, %v10169, %v8928
        %v10234 = vsel %vm6666, %v10170, %v8930
        %v10235 = vsel %vm6666, %v10171, %v8932
        %v10236 = vsel %vm6666, %v10172, %v8934
        %v10237 = vsel %vm6666, %v10173, %v8936
        %v10238 = vsel %vm6666, %v10174, %v8938
        %v10239 = vsel %vm6666, %v10175, %v8940
        %v10240 = vsel %vm6666, %v10176, %v8942
        %v10241 = vsel %vm6666, %v10177, %v8944
        %v10242 = vsel %vm6666, %v10178, %v8946
        %v10243 = vsel %vm6666, %v10179, %v8948
        %v10244 = vsel %vm6666, %v10180, %v8950
        %v10245 = vsel %vm6666, %v10181, %v8952
        %v10246 = vsel %vm6666, %v10182, %v8954
        %v10247 = vsel %vm6666, %v10183, %v8956
        %v10248 = vsel %vm6666, %v10184, %v8958
        %v10249 = vsel %vm6666, %v10185, %v8960
        %v10250 = vsel %vm6666, %v10186, %v8962
        %v10251 = vsel %vm6666, %v10187, %v8964
        %v10252 = vsel %vm6666, %v10188, %v8966
        %v10253 = vsel %vm6666, %v10189, %v8968
        %v10254 = vsel %vm6666, %v10190, %v8970
        %v10255 = vsel %vm6666, %v10191, %v8972
        %v10256 = vsel %vm6666, %v10192, %v8974
        %v10257 = vsel %vm6666, %v10193, %v8976
        %v10258 = vsel %vm6666, %v10194, %v8978
        %v10259 = vsel %vm6731, %v10195, %v9108
        %v10260 = vsel %vm6731, %v10196, %v9110
        %v10261 = vsel %vm6731, %v10197, %v9112
        %v10262 = vsel %vm6731, %v10198, %v9114
        %v10263 = vsel %vm6731, %v10199, %v9116
        %v10264 = vsel %vm6731, %v10200, %v9118
        %v10265 = vsel %vm6731, %v10201, %v9120
        %v10266 = vsel %vm6731, %v10202, %v9122
        %v10267 = vsel %vm6731, %v10203, %v9124
        %v10268 = vsel %vm6731, %v10204, %v9126
        %v10269 = vsel %vm6731, %v10205, %v9128
        %v10270 = vsel %vm6731, %v10206, %v9130
        %v10271 = vsel %vm6731, %v10207, %v9132
        %v10272 = vsel %vm6731, %v10208, %v9134
        %v10273 = vsel %vm6731, %v10209, %v9136
        %v10274 = vsel %vm6731, %v10210, %v9138
        %v10275 = vsel %vm6731, %v10211, %v9140
        %v10276 = vsel %vm6731, %v10212, %v9142
        %v10277 = vsel %vm6731, %v10213, %v9144
        %v10278 = vsel %vm6731, %v10214, %v9146
        %v10279 = vsel %vm6731, %v10215, %v9148
        %v10280 = vsel %vm6731, %v10216, %v9150
        %v10281 = vsel %vm6731, %v10217, %v9152
        %v10282 = vsel %vm6731, %v10218, %v9154
        %v10283 = vsel %vm6731, %v10219, %v9156
        %v10284 = vsel %vm6731, %v10220, %v9158
        %v10285 = vsel %vm6731, %v10221, %v9160
        %v10286 = vsel %vm6731, %v10222, %v9162
        %v10287 = vsel %vm6731, %v10223, %v9164
        %v10288 = vsel %vm6731, %v10224, %v9166
        %v10289 = vsel %vm6731, %v10225, %v9168
        %v10290 = vsel %vm6731, %v10226, %v9170
        %v10291 = vsel %vm6731, %v10227, %v9172
        %v10292 = vsel %vm6731, %v10228, %v9174
        %v10293 = vsel %vm6731, %v10229, %v9176
        %v10294 = vsel %vm6731, %v10230, %v9178
        %v10295 = vsel %vm6731, %v10231, %v9180
        %v10296 = vsel %vm6731, %v10232, %v9182
        %v10297 = vsel %vm6731, %v10233, %v9184
        %v10298 = vsel %vm6731, %v10234, %v9186
        %v10299 = vsel %vm6731, %v10235, %v9188
        %v10300 = vsel %vm6731, %v10236, %v9190
        %v10301 = vsel %vm6731, %v10237, %v9192
        %v10302 = vsel %vm6731, %v10238, %v9194
        %v10303 = vsel %vm6731, %v10239, %v9196
        %v10304 = vsel %vm6731, %v10240, %v9198
        %v10305 = vsel %vm6731, %v10241, %v9200
        %v10306 = vsel %vm6731, %v10242, %v9202
        %v10307 = vsel %vm6731, %v10243, %v9204
        %v10308 = vsel %vm6731, %v10244, %v9206
        %v10309 = vsel %vm6731, %v10245, %v9208
        %v10310 = vsel %vm6731, %v10246, %v9210
        %v10311 = vsel %vm6731, %v10247, %v9212
        %v10312 = vsel %vm6731, %v10248, %v9214
        %v10313 = vsel %vm6731, %v10249, %v9216
        %v10314 = vsel %vm6731, %v10250, %v9218
        %v10315 = vsel %vm6731, %v10251, %v9220
        %v10316 = vsel %vm6731, %v10252, %v9222
        %v10317 = vsel %vm6731, %v10253, %v9224
        %v10318 = vsel %vm6731, %v10254, %v9226
        %v10319 = vsel %vm6731, %v10255, %v9228
        %v10320 = vsel %vm6731, %v10256, %v9230
        %v10321 = vsel %vm6731, %v10257, %v9232
        %v10322 = vsel %vm6731, %v10258, %v9234
        %v10323 = vsel %vm6796, %v10259, %v9364
        %v10324 = vsel %vm6796, %v10260, %v9366
        %v10325 = vsel %vm6796, %v10261, %v9368
        %v10326 = vsel %vm6796, %v10262, %v9370
        %v10327 = vsel %vm6796, %v10263, %v9372
        %v10328 = vsel %vm6796, %v10264, %v9374
        %v10329 = vsel %vm6796, %v10265, %v9376
        %v10330 = vsel %vm6796, %v10266, %v9378
        %v10331 = vsel %vm6796, %v10267, %v9380
        %v10332 = vsel %vm6796, %v10268, %v9382
        %v10333 = vsel %vm6796, %v10269, %v9384
        %v10334 = vsel %vm6796, %v10270, %v9386
        %v10335 = vsel %vm6796, %v10271, %v9388
        %v10336 = vsel %vm6796, %v10272, %v9390
        %v10337 = vsel %vm6796, %v10273, %v9392
        %v10338 = vsel %vm6796, %v10274, %v9394
        %v10339 = vsel %vm6796, %v10275, %v9396
        %v10340 = vsel %vm6796, %v10276, %v9398
        %v10341 = vsel %vm6796, %v10277, %v9400
        %v10342 = vsel %vm6796, %v10278, %v9402
        %v10343 = vsel %vm6796, %v10279, %v9404
        %v10344 = vsel %vm6796, %v10280, %v9406
        %v10345 = vsel %vm6796, %v10281, %v9408
        %v10346 = vsel %vm6796, %v10282, %v9410
        %v10347 = vsel %vm6796, %v10283, %v9412
        %v10348 = vsel %vm6796, %v10284, %v9414
        %v10349 = vsel %vm6796, %v10285, %v9416
        %v10350 = vsel %vm6796, %v10286, %v9418
        %v10351 = vsel %vm6796, %v10287, %v9420
        %v10352 = vsel %vm6796, %v10288, %v9422
        %v10353 = vsel %vm6796, %v10289, %v9424
        %v10354 = vsel %vm6796, %v10290, %v9426
        %v10355 = vsel %vm6796, %v10291, %v9428
        %v10356 = vsel %vm6796, %v10292, %v9430
        %v10357 = vsel %vm6796, %v10293, %v9432
        %v10358 = vsel %vm6796, %v10294, %v9434
        %v10359 = vsel %vm6796, %v10295, %v9436
        %v10360 = vsel %vm6796, %v10296, %v9438
        %v10361 = vsel %vm6796, %v10297, %v9440
        %v10362 = vsel %vm6796, %v10298, %v9442
        %v10363 = vsel %vm6796, %v10299, %v9444
        %v10364 = vsel %vm6796, %v10300, %v9446
        %v10365 = vsel %vm6796, %v10301, %v9448
        %v10366 = vsel %vm6796, %v10302, %v9450
        %v10367 = vsel %vm6796, %v10303, %v9452
        %v10368 = vsel %vm6796, %v10304, %v9454
        %v10369 = vsel %vm6796, %v10305, %v9456
        %v10370 = vsel %vm6796, %v10306, %v9458
        %v10371 = vsel %vm6796, %v10307, %v9460
        %v10372 = vsel %vm6796, %v10308, %v9462
        %v10373 = vsel %vm6796, %v10309, %v9464
        %v10374 = vsel %vm6796, %v10310, %v9466
        %v10375 = vsel %vm6796, %v10311, %v9468
        %v10376 = vsel %vm6796, %v10312, %v9470
        %v10377 = vsel %vm6796, %v10313, %v9472
        %v10378 = vsel %vm6796, %v10314, %v9474
        %v10379 = vsel %vm6796, %v10315, %v9476
        %v10380 = vsel %vm6796, %v10316, %v9478
        %v10381 = vsel %vm6796, %v10317, %v9480
        %v10382 = vsel %vm6796, %v10318, %v9482
        %v10383 = vsel %vm6796, %v10319, %v9484
        %v10384 = vsel %vm6796, %v10320, %v9486
        %v10385 = vsel %vm6796, %v10321, %v9488
        %v10386 = vsel %vm6796, %v10322, %v9490
        %v10387 = vsel %vm6861, %v10323, %v9620
        %v10388 = vsel %vm6861, %v10324, %v9622
        %v10389 = vsel %vm6861, %v10325, %v9624
        %v10390 = vsel %vm6861, %v10326, %v9626
        %v10391 = vsel %vm6861, %v10327, %v9628
        %v10392 = vsel %vm6861, %v10328, %v9630
        %v10393 = vsel %vm6861, %v10329, %v9632
        %v10394 = vsel %vm6861, %v10330, %v9634
        %v10395 = vsel %vm6861, %v10331, %v9636
        %v10396 = vsel %vm6861, %v10332, %v9638
        %v10397 = vsel %vm6861, %v10333, %v9640
        %v10398 = vsel %vm6861, %v10334, %v9642
        %v10399 = vsel %vm6861, %v10335, %v9644
        %v10400 = vsel %vm6861, %v10336, %v9646
        %v10401 = vsel %vm6861, %v10337, %v9648
        %v10402 = vsel %vm6861, %v10338, %v9650
        %v10403 = vsel %vm6861, %v10339, %v9652
        %v10404 = vsel %vm6861, %v10340, %v9654
        %v10405 = vsel %vm6861, %v10341, %v9656
        %v10406 = vsel %vm6861, %v10342, %v9658
        %v10407 = vsel %vm6861, %v10343, %v9660
        %v10408 = vsel %vm6861, %v10344, %v9662
        %v10409 = vsel %vm6861, %v10345, %v9664
        %v10410 = vsel %vm6861, %v10346, %v9666
        %v10411 = vsel %vm6861, %v10347, %v9668
        %v10412 = vsel %vm6861, %v10348, %v9670
        %v10413 = vsel %vm6861, %v10349, %v9672
        %v10414 = vsel %vm6861, %v10350, %v9674
        %v10415 = vsel %vm6861, %v10351, %v9676
        %v10416 = vsel %vm6861, %v10352, %v9678
        %v10417 = vsel %vm6861, %v10353, %v9680
        %v10418 = vsel %vm6861, %v10354, %v9682
        %v10419 = vsel %vm6861, %v10355, %v9684
        %v10420 = vsel %vm6861, %v10356, %v9686
        %v10421 = vsel %vm6861, %v10357, %v9688
        %v10422 = vsel %vm6861, %v10358, %v9690
        %v10423 = vsel %vm6861, %v10359, %v9692
        %v10424 = vsel %vm6861, %v10360, %v9694
        %v10425 = vsel %vm6861, %v10361, %v9696
        %v10426 = vsel %vm6861, %v10362, %v9698
        %v10427 = vsel %vm6861, %v10363, %v9700
        %v10428 = vsel %vm6861, %v10364, %v9702
        %v10429 = vsel %vm6861, %v10365, %v9704
        %v10430 = vsel %vm6861, %v10366, %v9706
        %v10431 = vsel %vm6861, %v10367, %v9708
        %v10432 = vsel %vm6861, %v10368, %v9710
        %v10433 = vsel %vm6861, %v10369, %v9712
        %v10434 = vsel %vm6861, %v10370, %v9714
        %v10435 = vsel %vm6861, %v10371, %v9716
        %v10436 = vsel %vm6861, %v10372, %v9718
        %v10437 = vsel %vm6861, %v10373, %v9720
        %v10438 = vsel %vm6861, %v10374, %v9722
        %v10439 = vsel %vm6861, %v10375, %v9724
        %v10440 = vsel %vm6861, %v10376, %v9726
        %v10441 = vsel %vm6861, %v10377, %v9728
        %v10442 = vsel %vm6861, %v10378, %v9730
        %v10443 = vsel %vm6861, %v10379, %v9732
        %v10444 = vsel %vm6861, %v10380, %v9734
        %v10445 = vsel %vm6861, %v10381, %v9736
        %v10446 = vsel %vm6861, %v10382, %v9738
        %v10447 = vsel %vm6861, %v10383, %v9740
        %v10448 = vsel %vm6861, %v10384, %v9742
        %v10449 = vsel %vm6861, %v10385, %v9744
        %v10450 = vsel %vm6861, %v10386, %v9746
        %v10451 = vld [vmem:[%s2] sm:$0xff]
        %v10452 = vld [vmem:[%s2 + $0x8] sm:$0xff]
        %v10453 = vld [vmem:[%s2 + $0x10] sm:$0xff]
        %v10454 = vld [vmem:[%s2 + $0x18] sm:$0xff]
        %v10455 = vld [vmem:[%s2 + $0x20] sm:$0xff]
        %v10456 = vld [vmem:[%s2 + $0x28] sm:$0xff]
        %v10457 = vld [vmem:[%s2 + $0x30] sm:$0xff]
        %v10458 = vld [vmem:[%s2 + $0x38] sm:$0xff]
        %v10459 = vld [vmem:[%s2 + $0x40] sm:$0xff]
        %v10460 = vld [vmem:[%s2 + $0x48] sm:$0xff]
        %v10461 = vld [vmem:[%s2 + $0x50] sm:$0xff]
        %v10462 = vld [vmem:[%s2 + $0x58] sm:$0xff]
        %v10463 = vld [vmem:[%s2 + $0x60] sm:$0xff]
        %v10464 = vld [vmem:[%s2 + $0x68] sm:$0xff]
        %v10465 = vld [vmem:[%s2 + $0x70] sm:$0xff]
        %v10466 = vld [vmem:[%s2 + $0x78] sm:$0xff]
        %v10467 = vld [vmem:[%s2 + $0x80] sm:$0xff]
        %v10468 = vld [vmem:[%s2 + $0x88] sm:$0xff]
        %v10469 = vld [vmem:[%s2 + $0x90] sm:$0xff]
        %v10470 = vld [vmem:[%s2 + $0x98] sm:$0xff]
        %v10471 = vld [vmem:[%s2 + $0xa0] sm:$0xff]
        %v10472 = vld [vmem:[%s2 + $0xa8] sm:$0xff]
        %v10473 = vld [vmem:[%s2 + $0xb0] sm:$0xff]
        %v10474 = vld [vmem:[%s2 + $0xb8] sm:$0xff]
        %v10475 = vld [vmem:[%s2 + $0xc0] sm:$0xff]
        %v10476 = vld [vmem:[%s2 + $0xc8] sm:$0xff]
        %v10477 = vld [vmem:[%s2 + $0xd0] sm:$0xff]
        %v10479 = vsel %vm6926, %v10387, 0
        %v10482 = vsel %vm6926, %v10388, 0
        %v10485 = vsel %vm6926, %v10389, 0
        %v10488 = vsel %vm6926, %v10390, 0
        %v10491 = vsel %vm6926, %v10391, 0
        %v10494 = vsel %vm6926, %v10392, 0
        %v10497 = vsel %vm6926, %v10393, 0
        %v10500 = vsel %vm6926, %v10394, 0
        %v10503 = vsel %vm6926, %v10395, 0
        %v10506 = vsel %vm6926, %v10396, 0
        %v10509 = vsel %vm6926, %v10397, 0
        %v10512 = vsel %vm6926, %v10398, 0
        %v10515 = vsel %vm6926, %v10399, 0
        %v10518 = vsel %vm6926, %v10400, 0
        %v10521 = vsel %vm6926, %v10401, 0
        %v10524 = vsel %vm6926, %v10402, 0
        %v10527 = vsel %vm6926, %v10403, 0
        %v10530 = vsel %vm6926, %v10404, 0
        %v10533 = vsel %vm6926, %v10405, 0
        %v10536 = vsel %vm6926, %v10406, 0
        %v10539 = vsel %vm6926, %v10407, 0
        %v10542 = vsel %vm6926, %v10408, 0
        %v10545 = vsel %vm6926, %v10409, 0
        %v10548 = vsel %vm6926, %v10410, 0
        %v10551 = vsel %vm6926, %v10411, 0
        %v10554 = vsel %vm6926, %v10412, 0
        %v10557 = vsel %vm6926, %v10413, 0
        %v10560 = vsel %vm6926, %v10414, 0
        %v10563 = vsel %vm6926, %v10415, 0
        %v10566 = vsel %vm6926, %v10416, 0
        %v10569 = vsel %vm6926, %v10417, 0
        %v10572 = vsel %vm6926, %v10418, 0
        %v10575 = vsel %vm6926, %v10419, 0
        %v10578 = vsel %vm6926, %v10420, 0
        %v10581 = vsel %vm6926, %v10421, 0
        %v10584 = vsel %vm6926, %v10422, 0
        %v10587 = vsel %vm6926, %v10423, 0
        %v10590 = vsel %vm6926, %v10424, 0
        %v10593 = vsel %vm6926, %v10425, 0
        %v10596 = vsel %vm6926, %v10426, 0
        %v10599 = vsel %vm6926, %v10427, 0
        %v10602 = vsel %vm6926, %v10428, 0
        %v10605 = vsel %vm6926, %v10429, 0
        %v10608 = vsel %vm6926, %v10430, 0
        %v10611 = vsel %vm6926, %v10431, 0
        %v10614 = vsel %vm6926, %v10432, 0
        %v10617 = vsel %vm6926, %v10433, 0
        %v10620 = vsel %vm6926, %v10434, 0
        %v10623 = vsel %vm6926, %v10435, 0
        %v10626 = vsel %vm6926, %v10436, 0
        %v10629 = vsel %vm6926, %v10437, 0
        %v10632 = vsel %vm6926, %v10438, 0
        %v10635 = vsel %vm6926, %v10439, 0
        %v10638 = vsel %vm6926, %v10440, 0
        %v10641 = vsel %vm6926, %v10441, 0
        %v10644 = vsel %vm6926, %v10442, 0
        %v10647 = vsel %vm6926, %v10443, 0
        %v10650 = vsel %vm6926, %v10444, 0
        %v10653 = vsel %vm6926, %v10445, 0
        %v10656 = vsel %vm6926, %v10446, 0
        %v10659 = vsel %vm6926, %v10447, 0
        %v10662 = vsel %vm6926, %v10448, 0
        %v10665 = vsel %vm6926, %v10449, 0
        %v10668 = vsel %vm6926, %v10450, 0
        %10670 = vmatprep.subr.mxu0 0.0
        %10671 = vmatpush1.msra.mxu0 %v10451
        %10672 = vmatprep.subr.mxu0 0.0
        %10673 = vmatpush1.msra.mxu0 %v10452
        %10674 = vmatprep.subr.mxu0 0.0
        %10675 = vmatpush1.msra.mxu0 %v10453
        %10676 = vmatprep.subr.mxu0 0.0
        %10677 = vmatpush1.msra.mxu0 %v10454
        %10678 = vmatprep.subr.mxu0 0.0
        %10679 = vmatpush1.msra.mxu0 %v10455
        %10680 = vmatprep.subr.mxu0 0.0
        %10681 = vmatpush1.msra.mxu0 %v10456
        %10682 = vmatprep.subr.mxu0 0.0
        %10683 = vmatpush1.msra.mxu0 %v10457
        %10684 = vmatprep.subr.mxu0 0.0
        %10685 = vmatpush1.msra.mxu0 %v10458
        %10686 = vmatprep.subr.mxu0 0.0
        %10687 = vmatpush1.msra.mxu0 %v10459
        %10688 = vmatprep.subr.mxu0 0.0
        %10689 = vmatpush1.msra.mxu0 %v10460
        %10690 = vmatprep.subr.mxu0 0.0
        %10691 = vmatpush1.msra.mxu0 %v10461
        %10692 = vmatprep.subr.mxu0 0.0
        %10693 = vmatpush1.msra.mxu0 %v10462
        %10694 = vmatprep.subr.mxu0 0.0
        %10695 = vmatpush1.msra.mxu0 %v10463
        %10696 = vmatprep.subr.mxu0 0.0
        %10697 = vmatpush1.msra.mxu0 %v10464
        %10698 = vmatprep.subr.mxu0 0.0
        %10699 = vmatpush1.msra.mxu0 %v10465
        %10700 = vmatprep.subr.mxu0 0.0
        %10701 = vmatpush1.msra.mxu0 %v10466
        %10702 = vmatprep.subr.mxu0 0.0
        %10703 = vmatpush1.msra.mxu0 %v10467
        %10704 = vmatprep.subr.mxu0 0.0
        %10705 = vmatpush1.msra.mxu0 %v10468
        %10706 = vmatprep.subr.mxu0 0.0
        %10707 = vmatpush1.msra.mxu0 %v10469
        %10708 = vmatprep.subr.mxu0 0.0
        %10709 = vmatpush1.msra.mxu0 %v10470
        %10710 = vmatprep.subr.mxu0 0.0
        %10711 = vmatpush1.msra.mxu0 %v10471
        %10712 = vmatprep.subr.mxu0 0.0
        %10713 = vmatpush1.msra.mxu0 %v10472
        %10714 = vmatprep.subr.mxu0 0.0
        %10715 = vmatpush1.msra.mxu0 %v10473
        %10716 = vmatprep.subr.mxu0 0.0
        %10717 = vmatpush1.msra.mxu0 %v10474
        %10718 = vmatprep.subr.mxu0 0.0
        %10719 = vmatpush1.msra.mxu0 %v10475
        %10720 = vmatprep.subr.mxu0 0.0
        %10721 = vmatpush1.msra.mxu0 %v10476
        %10722 = vmatprep.subr.mxu0 0.0
        %10723 = vmatpush1.msra.mxu0 %v10477
        %10724 = vmatprep.subr.mxu0 0.0
        %10725 = vmatpush1.msra.mxu0 0.0
        %10726 = vmatprep.subr.mxu0 0.0
        %10727 = vmatpush1.msra.mxu0 0.0
        %10728 = vmatprep.subr.mxu0 0.0
        %10729 = vmatpush1.msra.mxu0 0.0
        %10730 = vmatprep.subr.mxu0 0.0
        %10731 = vmatpush1.msra.mxu0 0.0
        %10732 = vmatprep.subr.mxu0 0.0
        %10733 = vmatpush1.msra.mxu0 0.0
        %10734 = vmatprep.mubr.f32.mxu0 %v10479
        %10735 = vmatmul.mubr.f32.gmra.mrb[0].mxu0 %v7187
        %v10736 = vpop.f32.mrb[0].mxu0
        %v10737 = vadd.f32 0.0, %v10736
        %v10738 = vpop.f32.mrb[0].mxu0
        %10739 = vmatprep.mubr.f32.mxu0 %v10482
        %10740 = vmatmul.mubr.f32.gmra.mrb[0].mxu0 %v7188
        %v10741 = vpop.f32.mrb[0].mxu0
        %v10742 = vadd.f32 0.0, %v10741
        %v10743 = vpop.f32.mrb[0].mxu0
        %10744 = vmatprep.mubr.f32.mxu0 %v10485
        %10745 = vmatmul.mubr.f32.gmra.mrb[0].mxu0 %v7189
        %v10746 = vpop.f32.mrb[0].mxu0
        %v10747 = vadd.f32 0.0, %v10746
        %v10748 = vpop.f32.mrb[0].mxu0
        %10749 = vmatprep.mubr.f32.mxu0 %v10488
        %10750 = vmatmul.mubr.f32.gmra.mrb[0].mxu0 %v7190
        %v10751 = vpop.f32.mrb[0].mxu0
        %v10752 = vadd.f32 0.0, %v10751
        %v10753 = vpop.f32.mrb[0].mxu0
        %10754 = vmatprep.mubr.f32.mxu0 %v10491
        %10755 = vmatmul.mubr.f32.gmra.mrb[0].mxu0 %v7191
        %v10756 = vpop.f32.mrb[0].mxu0
        %v10757 = vadd.f32 0.0, %v10756
        %v10758 = vpop.f32.mrb[0].mxu0
        %10759 = vmatprep.mubr.f32.mxu0 %v10494
        %10760 = vmatmul.mubr.f32.gmra.mrb[0].mxu0 %v7192
        %v10761 = vpop.f32.mrb[0].mxu0
        %v10762 = vadd.f32 0.0, %v10761
        %v10763 = vpop.f32.mrb[0].mxu0
        %10764 = vmatprep.mubr.f32.mxu0 %v10497
        %10765 = vmatmul.mubr.f32.gmra.mrb[0].mxu0 %v7193
        %v10766 = vpop.f32.mrb[0].mxu0
        %v10767 = vadd.f32 0.0, %v10766
        %v10768 = vpop.f32.mrb[0].mxu0
        %10769 = vmatprep.mubr.f32.mxu0 %v10500
        %10770 = vmatmul.mubr.f32.gmra.mrb[0].mxu0 %v7194
        %v10771 = vpop.f32.mrb[0].mxu0
        %v10772 = vadd.f32 0.0, %v10771
        %v10773 = vpop.f32.mrb[0].mxu0
        %10774 = vmatprep.mubr.f32.mxu0 %v10503
        %10775 = vmatmul.mubr.f32.gmra.mrb[0].mxu0 %v7195
        %v10776 = vpop.f32.mrb[0].mxu0
        %v10777 = vadd.f32 0.0, %v10776
        %v10778 = vpop.f32.mrb[0].mxu0
        %10779 = vmatprep.mubr.f32.mxu0 %v10506
        %10780 = vmatmul.mubr.f32.gmra.mrb[0].mxu0 %v7196
        %v10781 = vpop.f32.mrb[0].mxu0
        %v10782 = vadd.f32 0.0, %v10781
        %v10783 = vpop.f32.mrb[0].mxu0
        %10784 = vmatprep.mubr.f32.mxu0 %v10509
        %10785 = vmatmul.mubr.f32.gmra.mrb[0].mxu0 %v7197
        %v10786 = vpop.f32.mrb[0].mxu0
        %v10787 = vadd.f32 0.0, %v10786
        %v10788 = vpop.f32.mrb[0].mxu0
        %10789 = vmatprep.mubr.f32.mxu0 %v10512
        %10790 = vmatmul.mubr.f32.gmra.mrb[0].mxu0 %v7198
        %v10791 = vpop.f32.mrb[0].mxu0
        %v10792 = vadd.f32 0.0, %v10791
        %v10793 = vpop.f32.mrb[0].mxu0
        %10794 = vmatprep.mubr.f32.mxu0 %v10515
        %10795 = vmatmul.mubr.f32.gmra.mrb[0].mxu0 %v7199
        %v10796 = vpop.f32.mrb[0].mxu0
        %v10797 = vadd.f32 0.0, %v10796
        %v10798 = vpop.f32.mrb[0].mxu0
        %10799 = vmatprep.mubr.f32.mxu0 %v10518
        %10800 = vmatmul.mubr.f32.gmra.mrb[0].mxu0 %v7200
        %v10801 = vpop.f32.mrb[0].mxu0
        %v10802 = vadd.f32 0.0, %v10801
        %v10803 = vpop.f32.mrb[0].mxu0
        %10804 = vmatprep.mubr.f32.mxu0 %v10521
        %10805 = vmatmul.mubr.f32.gmra.mrb[0].mxu0 %v7201
        %v10806 = vpop.f32.mrb[0].mxu0
        %v10807 = vadd.f32 0.0, %v10806
        %v10808 = vpop.f32.mrb[0].mxu0
        %10809 = vmatprep.mubr.f32.mxu0 %v10524
        %10810 = vmatmul.mubr.f32.gmra.mrb[0].mxu0 %v7202
        %v10811 = vpop.f32.mrb[0].mxu0
        %v10812 = vadd.f32 0.0, %v10811
        %v10813 = vpop.f32.mrb[0].mxu0
        %10814 = vmatprep.mubr.f32.mxu0 %v10527
        %10815 = vmatmul.mubr.f32.gmra.mrb[0].mxu0 %v7203
        %v10816 = vpop.f32.mrb[0].mxu0
        %v10817 = vadd.f32 0.0, %v10816
        %v10818 = vpop.f32.mrb[0].mxu0
        %10819 = vmatprep.mubr.f32.mxu0 %v10530
        %10820 = vmatmul.mubr.f32.gmra.mrb[0].mxu0 %v7204
        %v10821 = vpop.f32.mrb[0].mxu0
        %v10822 = vadd.f32 0.0, %v10821
        %v10823 = vpop.f32.mrb[0].mxu0
        %10824 = vmatprep.mubr.f32.mxu0 %v10533
        %10825 = vmatmul.mubr.f32.gmra.mrb[0].mxu0 %v7205
        %v10826 = vpop.f32.mrb[0].mxu0
        %v10827 = vadd.f32 0.0, %v10826
        %v10828 = vpop.f32.mrb[0].mxu0
        %10829 = vmatprep.mubr.f32.mxu0 %v10536
        %10830 = vmatmul.mubr.f32.gmra.mrb[0].mxu0 %v7206
        %v10831 = vpop.f32.mrb[0].mxu0
        %v10832 = vadd.f32 0.0, %v10831
        %v10833 = vpop.f32.mrb[0].mxu0
        %10834 = vmatprep.mubr.f32.mxu0 %v10539
        %10835 = vmatmul.mubr.f32.gmra.mrb[0].mxu0 %v7207
        %v10836 = vpop.f32.mrb[0].mxu0
        %v10837 = vadd.f32 0.0, %v10836
        %v10838 = vpop.f32.mrb[0].mxu0
        %10839 = vmatprep.mubr.f32.mxu0 %v10542
        %10840 = vmatmul.mubr.f32.gmra.mrb[0].mxu0 %v7208
        %v10841 = vpop.f32.mrb[0].mxu0
        %v10842 = vadd.f32 0.0, %v10841
        %v10843 = vpop.f32.mrb[0].mxu0
        %10844 = vmatprep.mubr.f32.mxu0 %v10545
        %10845 = vmatmul.mubr.f32.gmra.mrb[0].mxu0 %v7209
        %v10846 = vpop.f32.mrb[0].mxu0
        %v10847 = vadd.f32 0.0, %v10846
        %v10848 = vpop.f32.mrb[0].mxu0
        %10849 = vmatprep.mubr.f32.mxu0 %v10548
        %10850 = vmatmul.mubr.f32.gmra.mrb[0].mxu0 %v7210
        %v10851 = vpop.f32.mrb[0].mxu0
        %v10852 = vadd.f32 0.0, %v10851
        %v10853 = vpop.f32.mrb[0].mxu0
        %10854 = vmatprep.mubr.f32.mxu0 %v10551
        %10855 = vmatmul.mubr.f32.gmra.mrb[0].mxu0 %v7211
        %v10856 = vpop.f32.mrb[0].mxu0
        %v10857 = vadd.f32 0.0, %v10856
        %v10858 = vpop.f32.mrb[0].mxu0
        %10859 = vmatprep.mubr.f32.mxu0 %v10554
        %10860 = vmatmul.mubr.f32.gmra.mrb[0].mxu0 %v7212
        %v10861 = vpop.f32.mrb[0].mxu0
        %v10862 = vadd.f32 0.0, %v10861
        %v10863 = vpop.f32.mrb[0].mxu0
        %10864 = vmatprep.mubr.f32.mxu0 %v10557
        %10865 = vmatmul.mubr.f32.gmra.mrb[0].mxu0 %v7213
        %v10866 = vpop.f32.mrb[0].mxu0
        %v10867 = vadd.f32 0.0, %v10866
        %v10868 = vpop.f32.mrb[0].mxu0
        %10869 = vmatprep.mubr.f32.mxu0 %v10560
        %10870 = vmatmul.mubr.f32.gmra.mrb[0].mxu0 %v7214
        %v10871 = vpop.f32.mrb[0].mxu0
        %v10872 = vadd.f32 0.0, %v10871
        %v10873 = vpop.f32.mrb[0].mxu0
        %10874 = vmatprep.mubr.f32.mxu0 %v10563
        %10875 = vmatmul.mubr.f32.gmra.mrb[0].mxu0 %v7215
        %v10876 = vpop.f32.mrb[0].mxu0
        %v10877 = vadd.f32 0.0, %v10876
        %v10878 = vpop.f32.mrb[0].mxu0
        %10879 = vmatprep.mubr.f32.mxu0 %v10566
        %10880 = vmatmul.mubr.f32.gmra.mrb[0].mxu0 %v7216
        %v10881 = vpop.f32.mrb[0].mxu0
        %v10882 = vadd.f32 0.0, %v10881
        %v10883 = vpop.f32.mrb[0].mxu0
        %10884 = vmatprep.mubr.f32.mxu0 %v10569
        %10885 = vmatmul.mubr.f32.gmra.mrb[0].mxu0 %v7217
        %v10886 = vpop.f32.mrb[0].mxu0
        %v10887 = vadd.f32 0.0, %v10886
        %v10888 = vpop.f32.mrb[0].mxu0
        %10889 = vmatprep.mubr.f32.mxu0 %v10572
        %10890 = vmatmul.mubr.f32.gmra.mrb[0].mxu0 %v7218
        %v10891 = vpop.f32.mrb[0].mxu0
        %v10892 = vadd.f32 0.0, %v10891
        %v10893 = vpop.f32.mrb[0].mxu0
        %10894 = vmatprep.mubr.f32.mxu0 %v10575
        %10895 = vmatmul.mubr.f32.gmra.mrb[0].mxu0 %v7219
        %v10896 = vpop.f32.mrb[0].mxu0
        %v10897 = vadd.f32 0.0, %v10896
        %v10898 = vpop.f32.mrb[0].mxu0
        %10899 = vmatprep.mubr.f32.mxu0 %v10578
        %10900 = vmatmul.mubr.f32.gmra.mrb[0].mxu0 %v7220
        %v10901 = vpop.f32.mrb[0].mxu0
        %v10902 = vadd.f32 0.0, %v10901
        %v10903 = vpop.f32.mrb[0].mxu0
        %10904 = vmatprep.mubr.f32.mxu0 %v10581
        %10905 = vmatmul.mubr.f32.gmra.mrb[0].mxu0 %v7221
        %v10906 = vpop.f32.mrb[0].mxu0
        %v10907 = vadd.f32 0.0, %v10906
        %v10908 = vpop.f32.mrb[0].mxu0
        %10909 = vmatprep.mubr.f32.mxu0 %v10584
        %10910 = vmatmul.mubr.f32.gmra.mrb[0].mxu0 %v7222
        %v10911 = vpop.f32.mrb[0].mxu0
        %v10912 = vadd.f32 0.0, %v10911
        %v10913 = vpop.f32.mrb[0].mxu0
        %10914 = vmatprep.mubr.f32.mxu0 %v10587
        %10915 = vmatmul.mubr.f32.gmra.mrb[0].mxu0 %v7223
        %v10916 = vpop.f32.mrb[0].mxu0
        %v10917 = vadd.f32 0.0, %v10916
        %v10918 = vpop.f32.mrb[0].mxu0
        %10919 = vmatprep.mubr.f32.mxu0 %v10590
        %10920 = vmatmul.mubr.f32.gmra.mrb[0].mxu0 %v7224
        %v10921 = vpop.f32.mrb[0].mxu0
        %v10922 = vadd.f32 0.0, %v10921
        %v10923 = vpop.f32.mrb[0].mxu0
        %10924 = vmatprep.mubr.f32.mxu0 %v10593
        %10925 = vmatmul.mubr.f32.gmra.mrb[0].mxu0 %v7225
        %v10926 = vpop.f32.mrb[0].mxu0
        %v10927 = vadd.f32 0.0, %v10926
        %v10928 = vpop.f32.mrb[0].mxu0
        %10929 = vmatprep.mubr.f32.mxu0 %v10596
        %10930 = vmatmul.mubr.f32.gmra.mrb[0].mxu0 %v7226
        %v10931 = vpop.f32.mrb[0].mxu0
        %v10932 = vadd.f32 0.0, %v10931
        %v10933 = vpop.f32.mrb[0].mxu0
        %10934 = vmatprep.mubr.f32.mxu0 %v10599
        %10935 = vmatmul.mubr.f32.gmra.mrb[0].mxu0 %v7227
        %v10936 = vpop.f32.mrb[0].mxu0
        %v10937 = vadd.f32 0.0, %v10936
        %v10938 = vpop.f32.mrb[0].mxu0
        %10939 = vmatprep.mubr.f32.mxu0 %v10602
        %10940 = vmatmul.mubr.f32.gmra.mrb[0].mxu0 %v7228
        %v10941 = vpop.f32.mrb[0].mxu0
        %v10942 = vadd.f32 0.0, %v10941
        %v10943 = vpop.f32.mrb[0].mxu0
        %10944 = vmatprep.mubr.f32.mxu0 %v10605
        %10945 = vmatmul.mubr.f32.gmra.mrb[0].mxu0 %v7229
        %v10946 = vpop.f32.mrb[0].mxu0
        %v10947 = vadd.f32 0.0, %v10946
        %v10948 = vpop.f32.mrb[0].mxu0
        %10949 = vmatprep.mubr.f32.mxu0 %v10608
        %10950 = vmatmul.mubr.f32.gmra.mrb[0].mxu0 %v7230
        %v10951 = vpop.f32.mrb[0].mxu0
        %v10952 = vadd.f32 0.0, %v10951
        %v10953 = vpop.f32.mrb[0].mxu0
        %10954 = vmatprep.mubr.f32.mxu0 %v10611
        %10955 = vmatmul.mubr.f32.gmra.mrb[0].mxu0 %v7231
        %v10956 = vpop.f32.mrb[0].mxu0
        %v10957 = vadd.f32 0.0, %v10956
        %v10958 = vpop.f32.mrb[0].mxu0
        %10959 = vmatprep.mubr.f32.mxu0 %v10614
        %10960 = vmatmul.mubr.f32.gmra.mrb[0].mxu0 %v7232
        %v10961 = vpop.f32.mrb[0].mxu0
        %v10962 = vadd.f32 0.0, %v10961
        %v10963 = vpop.f32.mrb[0].mxu0
        %10964 = vmatprep.mubr.f32.mxu0 %v10617
        %10965 = vmatmul.mubr.f32.gmra.mrb[0].mxu0 %v7233
        %v10966 = vpop.f32.mrb[0].mxu0
        %v10967 = vadd.f32 0.0, %v10966
        %v10968 = vpop.f32.mrb[0].mxu0
        %10969 = vmatprep.mubr.f32.mxu0 %v10620
        %10970 = vmatmul.mubr.f32.gmra.mrb[0].mxu0 %v7234
        %v10971 = vpop.f32.mrb[0].mxu0
        %v10972 = vadd.f32 0.0, %v10971
        %v10973 = vpop.f32.mrb[0].mxu0
        %10974 = vmatprep.mubr.f32.mxu0 %v10623
        %10975 = vmatmul.mubr.f32.gmra.mrb[0].mxu0 %v7235
        %v10976 = vpop.f32.mrb[0].mxu0
        %v10977 = vadd.f32 0.0, %v10976
        %v10978 = vpop.f32.mrb[0].mxu0
        %10979 = vmatprep.mubr.f32.mxu0 %v10626
        %10980 = vmatmul.mubr.f32.gmra.mrb[0].mxu0 %v7236
        %v10981 = vpop.f32.mrb[0].mxu0
        %v10982 = vadd.f32 0.0, %v10981
        %v10983 = vpop.f32.mrb[0].mxu0
        %10984 = vmatprep.mubr.f32.mxu0 %v10629
        %10985 = vmatmul.mubr.f32.gmra.mrb[0].mxu0 %v7237
        %v10986 = vpop.f32.mrb[0].mxu0
        %v10987 = vadd.f32 0.0, %v10986
        %v10988 = vpop.f32.mrb[0].mxu0
        %10989 = vmatprep.mubr.f32.mxu0 %v10632
        %10990 = vmatmul.mubr.f32.gmra.mrb[0].mxu0 %v7238
        %v10991 = vpop.f32.mrb[0].mxu0
        %v10992 = vadd.f32 0.0, %v10991
        %v10993 = vpop.f32.mrb[0].mxu0
        %10994 = vmatprep.mubr.f32.mxu0 %v10635
        %10995 = vmatmul.mubr.f32.gmra.mrb[0].mxu0 %v7239
        %v10996 = vpop.f32.mrb[0].mxu0
        %v10997 = vadd.f32 0.0, %v10996
        %v10998 = vpop.f32.mrb[0].mxu0
        %10999 = vmatprep.mubr.f32.mxu0 %v10638
        %11000 = vmatmul.mubr.f32.gmra.mrb[0].mxu0 %v7240
        %v11001 = vpop.f32.mrb[0].mxu0
        %v11002 = vadd.f32 0.0, %v11001
        %v11003 = vpop.f32.mrb[0].mxu0
        %11004 = vmatprep.mubr.f32.mxu0 %v10641
        %11005 = vmatmul.mubr.f32.gmra.mrb[0].mxu0 %v7241
        %v11006 = vpop.f32.mrb[0].mxu0
        %v11007 = vadd.f32 0.0, %v11006
        %v11008 = vpop.f32.mrb[0].mxu0
        %11009 = vmatprep.mubr.f32.mxu0 %v10644
        %11010 = vmatmul.mubr.f32.gmra.mrb[0].mxu0 %v7242
        %v11011 = vpop.f32.mrb[0].mxu0
        %v11012 = vadd.f32 0.0, %v11011
        %v11013 = vpop.f32.mrb[0].mxu0
        %11014 = vmatprep.mubr.f32.mxu0 %v10647
        %11015 = vmatmul.mubr.f32.gmra.mrb[0].mxu0 %v7243
        %v11016 = vpop.f32.mrb[0].mxu0
        %v11017 = vadd.f32 0.0, %v11016
        %v11018 = vpop.f32.mrb[0].mxu0
        %11019 = vmatprep.mubr.f32.mxu0 %v10650
        %11020 = vmatmul.mubr.f32.gmra.mrb[0].mxu0 %v7244
        %v11021 = vpop.f32.mrb[0].mxu0
        %v11022 = vadd.f32 0.0, %v11021
        %v11023 = vpop.f32.mrb[0].mxu0
        %11024 = vmatprep.mubr.f32.mxu0 %v10653
        %11025 = vmatmul.mubr.f32.gmra.mrb[0].mxu0 %v7245
        %v11026 = vpop.f32.mrb[0].mxu0
        %v11027 = vadd.f32 0.0, %v11026
        %v11028 = vpop.f32.mrb[0].mxu0
        %11029 = vmatprep.mubr.f32.mxu0 %v10656
        %11030 = vmatmul.mubr.f32.gmra.mrb[0].mxu0 %v7246
        %v11031 = vpop.f32.mrb[0].mxu0
        %v11032 = vadd.f32 0.0, %v11031
        %v11033 = vpop.f32.mrb[0].mxu0
        %11034 = vmatprep.mubr.f32.mxu0 %v10659
        %11035 = vmatmul.mubr.f32.gmra.mrb[0].mxu0 %v7247
        %v11036 = vpop.f32.mrb[0].mxu0
        %v11037 = vadd.f32 0.0, %v11036
        %v11038 = vpop.f32.mrb[0].mxu0
        %11039 = vmatprep.mubr.f32.mxu0 %v10662
        %11040 = vmatmul.mubr.f32.gmra.mrb[0].mxu0 %v7248
        %v11041 = vpop.f32.mrb[0].mxu0
        %v11042 = vadd.f32 0.0, %v11041
        %v11043 = vpop.f32.mrb[0].mxu0
        %11044 = vmatprep.mubr.f32.mxu0 %v10665
        %11045 = vmatmul.mubr.f32.gmra.mrb[0].mxu0 %v7249
        %v11046 = vpop.f32.mrb[0].mxu0
        %v11047 = vadd.f32 0.0, %v11046
        %v11048 = vpop.f32.mrb[0].mxu0
        %11049 = vmatprep.mubr.f32.mxu0 %v10668
        %11050 = vmatmul.mubr.f32.gmra.mrb[0].mxu0 %v7250
        %v11051 = vpop.f32.mrb[0].mxu0
        %v11052 = vadd.f32 0.0, %v11051
        %v11053 = vpop.f32.mrb[0].mxu0
        %11054 = vdwg.mxu0
        %11055 = vxpose.xlu0.b32.start [1/16] %v10737, 128
        %11056 = vxpose.xlu0.b32.cont [2/16] %v10742, 128
        %11057 = vxpose.xlu0.b32.cont [3/16] %v10747, 128
        %11058 = vxpose.xlu0.b32.cont [4/16] %v10752, 128
        %11059 = vxpose.xlu0.b32.cont [5/16] %v10757, 128
        %11060 = vxpose.xlu0.b32.cont [6/16] %v10762, 128
        %11061 = vxpose.xlu0.b32.cont [7/16] %v10767, 128
        %11062 = vxpose.xlu0.b32.cont [8/16] %v10772, 128
        %11063 = vxpose.xlu0.b32.cont [9/16] %v10777, 128
        %11064 = vxpose.xlu0.b32.cont [10/16] %v10782, 128
        %11065 = vxpose.xlu0.b32.cont [11/16] %v10787, 128
        %11066 = vxpose.xlu0.b32.cont [12/16] %v10792, 128
        %11067 = vxpose.xlu0.b32.cont [13/16] %v10797, 128
        %11068 = vxpose.xlu0.b32.cont [14/16] %v10802, 128
        %11069 = vxpose.xlu0.b32.cont [15/16] %v10807, 128
        %11070 = vxpose.xlu0.b32.end [16/16] %v10812, 128
        %v11071 = vpop.trf.xlu0
        %v11072 = vpop.trf.xlu0
        %v11073 = vpop.trf.xlu0
        %v11074 = vpop.trf.xlu0
        %v11075 = vpop.trf.xlu0
        %v11076 = vpop.trf.xlu0
        %v11077 = vpop.trf.xlu0
        %v11078 = vpop.trf.xlu0
        %v11079 = vpop.trf.xlu0
        %v11080 = vpop.trf.xlu0
        %v11081 = vpop.trf.xlu0
        %v11082 = vpop.trf.xlu0
        %v11083 = vpop.trf.xlu0
        %v11084 = vpop.trf.xlu0
        %v11085 = vpop.trf.xlu0
        %v11086 = vpop.trf.xlu0
        %11087 = vxpose.xlu0.b32.start [1/16] %v10817, 128
        %11088 = vxpose.xlu0.b32.cont [2/16] %v10822, 128
        %11089 = vxpose.xlu0.b32.cont [3/16] %v10827, 128
        %11090 = vxpose.xlu0.b32.cont [4/16] %v10832, 128
        %11091 = vxpose.xlu0.b32.cont [5/16] %v10837, 128
        %11092 = vxpose.xlu0.b32.cont [6/16] %v10842, 128
        %11093 = vxpose.xlu0.b32.cont [7/16] %v10847, 128
        %11094 = vxpose.xlu0.b32.cont [8/16] %v10852, 128
        %11095 = vxpose.xlu0.b32.cont [9/16] %v10857, 128
        %11096 = vxpose.xlu0.b32.cont [10/16] %v10862, 128
        %11097 = vxpose.xlu0.b32.cont [11/16] %v10867, 128
        %11098 = vxpose.xlu0.b32.cont [12/16] %v10872, 128
        %11099 = vxpose.xlu0.b32.cont [13/16] %v10877, 128
        %11100 = vxpose.xlu0.b32.cont [14/16] %v10882, 128
        %11101 = vxpose.xlu0.b32.cont [15/16] %v10887, 128
        %11102 = vxpose.xlu0.b32.end [16/16] %v10892, 128
        %v11103 = vpop.trf.xlu0
        %v11104 = vpop.trf.xlu0
        %v11105 = vpop.trf.xlu0
        %v11106 = vpop.trf.xlu0
        %v11107 = vpop.trf.xlu0
        %v11108 = vpop.trf.xlu0
        %v11109 = vpop.trf.xlu0
        %v11110 = vpop.trf.xlu0
        %v11111 = vpop.trf.xlu0
        %v11112 = vpop.trf.xlu0
        %v11113 = vpop.trf.xlu0
        %v11114 = vpop.trf.xlu0
        %v11115 = vpop.trf.xlu0
        %v11116 = vpop.trf.xlu0
        %v11117 = vpop.trf.xlu0
        %v11118 = vpop.trf.xlu0
        %11119 = vxpose.xlu0.b32.start [1/16] %v10897, 128
        %11120 = vxpose.xlu0.b32.cont [2/16] %v10902, 128
        %11121 = vxpose.xlu0.b32.cont [3/16] %v10907, 128
        %11122 = vxpose.xlu0.b32.cont [4/16] %v10912, 128
        %11123 = vxpose.xlu0.b32.cont [5/16] %v10917, 128
        %11124 = vxpose.xlu0.b32.cont [6/16] %v10922, 128
        %11125 = vxpose.xlu0.b32.cont [7/16] %v10927, 128
        %11126 = vxpose.xlu0.b32.cont [8/16] %v10932, 128
        %11127 = vxpose.xlu0.b32.cont [9/16] %v10937, 128
        %11128 = vxpose.xlu0.b32.cont [10/16] %v10942, 128
        %11129 = vxpose.xlu0.b32.cont [11/16] %v10947, 128
        %11130 = vxpose.xlu0.b32.cont [12/16] %v10952, 128
        %11131 = vxpose.xlu0.b32.cont [13/16] %v10957, 128
        %11132 = vxpose.xlu0.b32.cont [14/16] %v10962, 128
        %11133 = vxpose.xlu0.b32.cont [15/16] %v10967, 128
        %11134 = vxpose.xlu0.b32.end [16/16] %v10972, 128
        %v11135 = vpop.trf.xlu0
        %v11136 = vpop.trf.xlu0
        %v11137 = vpop.trf.xlu0
        %v11138 = vpop.trf.xlu0
        %v11139 = vpop.trf.xlu0
        %v11140 = vpop.trf.xlu0
        %v11141 = vpop.trf.xlu0
        %v11142 = vpop.trf.xlu0
        %v11143 = vpop.trf.xlu0
        %v11144 = vpop.trf.xlu0
        %v11145 = vpop.trf.xlu0
        %v11146 = vpop.trf.xlu0
        %v11147 = vpop.trf.xlu0
        %v11148 = vpop.trf.xlu0
        %v11149 = vpop.trf.xlu0
        %v11150 = vpop.trf.xlu0
        %11151 = vxpose.xlu0.b32.start [1/16] %v10977, 128
        %11152 = vxpose.xlu0.b32.cont [2/16] %v10982, 128
        %11153 = vxpose.xlu0.b32.cont [3/16] %v10987, 128
        %11154 = vxpose.xlu0.b32.cont [4/16] %v10992, 128
        %11155 = vxpose.xlu0.b32.cont [5/16] %v10997, 128
        %11156 = vxpose.xlu0.b32.cont [6/16] %v11002, 128
        %11157 = vxpose.xlu0.b32.cont [7/16] %v11007, 128
        %11158 = vxpose.xlu0.b32.cont [8/16] %v11012, 128
        %11159 = vxpose.xlu0.b32.cont [9/16] %v11017, 128
        %11160 = vxpose.xlu0.b32.cont [10/16] %v11022, 128
        %11161 = vxpose.xlu0.b32.cont [11/16] %v11027, 128
        %11162 = vxpose.xlu0.b32.cont [12/16] %v11032, 128
        %11163 = vxpose.xlu0.b32.cont [13/16] %v11037, 128
        %11164 = vxpose.xlu0.b32.cont [14/16] %v11042, 128
        %11165 = vxpose.xlu0.b32.cont [15/16] %v11047, 128
        %11166 = vxpose.xlu0.b32.end [16/16] %v11052, 128
        %v11167 = vpop.trf.xlu0
        %v11168 = vpop.trf.xlu0
        %v11169 = vpop.trf.xlu0
        %v11170 = vpop.trf.xlu0
        %v11171 = vpop.trf.xlu0
        %v11172 = vpop.trf.xlu0
        %v11173 = vpop.trf.xlu0
        %v11174 = vpop.trf.xlu0
        %v11175 = vpop.trf.xlu0
        %v11176 = vpop.trf.xlu0
        %v11177 = vpop.trf.xlu0
        %v11178 = vpop.trf.xlu0
        %v11179 = vpop.trf.xlu0
        %v11180 = vpop.trf.xlu0
        %v11181 = vpop.trf.xlu0
        %v11182 = vpop.trf.xlu0
        %v11183 = vld [vmem:[%s3] sm:$0xf]
        %11185 = vset.pattern.permute.xlu0 0
        %11186 = vperm.xlu0 %11185, %v11183
        %v11187 = vpop.permute.xlu0 %11186
        %v11189 = vmul.f32 %v11071, %v11187
        %v11190 = vmul.f32 %v11103, %v11187
        %v11191 = vmul.f32 %v11135, %v11187
        %v11192 = vmul.f32 %v11167, %v11187
        %v11193 = vld [vmem:[%s4] sm:$0xf]
        %11195 = vset.pattern.permute.xlu0 0
        %11196 = vperm.xlu0 %11195, %v11193
        %v11197 = vpop.permute.xlu0 %11196
        %v11199 = vadd.f32 %v11189, %v11197
        %v11200 = vadd.f32 %v11190, %v11197
        %v11201 = vadd.f32 %v11191, %v11197
        %v11202 = vadd.f32 %v11192, %v11197
        %v11203 = vmax.f32 %v11199, 0.0
        %v11204 = vmax.f32 %v11200, 0.0
        %v11205 = vmax.f32 %v11201, 0.0
        %v11206 = vmax.f32 %v11202, 0.0
        %v11207 = vld [vmem:[%s370] sm:$0xff]
        %v11208 = vld [vmem:[%s370 + $0x8] sm:$0xff]
        %v11209 = vld [vmem:[%s5] sm:$0xf]
        %v11210 = vld [vmem:[%s6] sm:$0xf]
        %vm11211 = vcmask 31744
        %v11213 = vsel %vm11211, %v11210, 0
        %vm11215 = vcmask 1043456
        %v11217 = vsel %vm11215, %v11203, 0
        %v11220 = vsel %vm11215, %v11204, 0
        %v11223 = vsel %vm11215, %v11205, 0
        %v11226 = vsel %vm11215, %v11206, 0
        %11228 = vmatprep.subr.mxu0 %v11220
        %11229 = vmatpush1.msra.mxu0 %v11217
        %11230 = vmatprep.subr.mxu0 0.0
        %11231 = vmatpush1.msra.mxu0 0.0
        %11232 = vmatprep.subr.mxu0 0.0
        %11233 = vmatpush1.msra.mxu0 0.0
        %11234 = vmatprep.subr.mxu0 0.0
        %11235 = vmatpush1.msra.mxu0 0.0
        %11236 = vmatprep.subr.mxu0 0.0
        %11237 = vmatpush1.msra.mxu0 0.0
        %11238 = vmatprep.subr.mxu0 0.0
        %11239 = vmatpush1.msra.mxu0 0.0
        %11240 = vmatprep.subr.mxu0 0.0
        %11241 = vmatpush1.msra.mxu0 0.0
        %11242 = vmatprep.subr.mxu0 0.0
        %11243 = vmatpush1.msra.mxu0 0.0
        %11244 = vmatprep.subr.mxu0 0.0
        %11245 = vmatpush1.msra.mxu0 0.0
        %11246 = vmatprep.subr.mxu0 0.0
        %11247 = vmatpush1.msra.mxu0 0.0
        %11248 = vmatprep.subr.mxu0 0.0
        %11249 = vmatpush1.msra.mxu0 0.0
        %11250 = vmatprep.subr.mxu0 0.0
        %11251 = vmatpush1.msra.mxu0 0.0
        %11252 = vmatprep.subr.mxu0 0.0
        %11253 = vmatpush1.msra.mxu0 0.0
        %11254 = vmatprep.subr.mxu0 0.0
        %11255 = vmatpush1.msra.mxu0 0.0
        %11256 = vmatprep.subr.mxu0 0.0
        %11257 = vmatpush1.msra.mxu0 0.0
        %11258 = vmatprep.subr.mxu0 0.0
        %11259 = vmatpush1.msra.mxu0 0.0
        %11260 = vmatprep.subr.mxu0 0.0
        %11261 = vmatpush1.msra.mxu0 0.0
        %11262 = vmatprep.subr.mxu0 0.0
        %11263 = vmatpush1.msra.mxu0 0.0
        %11264 = vmatprep.subr.mxu0 0.0
        %11265 = vmatpush1.msra.mxu0 0.0
        %11266 = vmatprep.subr.mxu0 0.0
        %11267 = vmatpush1.msra.mxu0 0.0
        %11268 = vmatprep.subr.mxu0 0.0
        %11269 = vmatpush1.msra.mxu0 0.0
        %11270 = vmatprep.subr.mxu0 0.0
        %11271 = vmatpush1.msra.mxu0 0.0
        %11272 = vmatprep.subr.mxu0 0.0
        %11273 = vmatpush1.msra.mxu0 0.0
        %11274 = vmatprep.subr.mxu0 0.0
        %11275 = vmatpush1.msra.mxu0 0.0
        %11276 = vmatprep.subr.mxu0 0.0
        %11277 = vmatpush1.msra.mxu0 0.0
        %11278 = vmatprep.subr.mxu0 0.0
        %11279 = vmatpush1.msra.mxu0 0.0
        %11280 = vmatprep.subr.mxu0 0.0
        %11281 = vmatpush1.msra.mxu0 0.0
        %11282 = vmatprep.subr.mxu0 0.0
        %11283 = vmatpush1.msra.mxu0 0.0
        %11284 = vmatprep.subr.mxu0 0.0
        %11285 = vmatpush1.msra.mxu0 0.0
        %11286 = vmatprep.subr.mxu0 0.0
        %11287 = vmatpush1.msra.mxu0 0.0
        %11288 = vmatprep.subr.mxu0 0.0
        %11289 = vmatpush1.msra.mxu0 0.0
        %11290 = vmatprep.subr.mxu0 0.0
        %11291 = vmatpush1.msra.mxu0 0.0
        %11292 = vmatprep.mubr.f32.mxu0 0.0
        %11293 = vmatmul.mubr.f32.gmra.mrb[0].mxu0 %v11213
        %v11294 = vpop.f32.mrb[0].mxu0
        %v11295 = vadd.f32 0.0, %v11294
        %v11296 = vpop.f32.mrb[0].mxu0
        %v11297 = vadd.f32 0.0, %v11296
        %11298 = vdwg.mxu0
        %11299 = vmatprep.subr.mxu0 %v11226
        %11300 = vmatpush1.msra.mxu0 %v11223
        %11301 = vmatprep.subr.mxu0 0.0
        %11302 = vmatpush1.msra.mxu0 0.0
        %11303 = vmatprep.subr.mxu0 0.0
        %11304 = vmatpush1.msra.mxu0 0.0
        %11305 = vmatprep.subr.mxu0 0.0
        %11306 = vmatpush1.msra.mxu0 0.0
        %11307 = vmatprep.subr.mxu0 0.0
        %11308 = vmatpush1.msra.mxu0 0.0
        %11309 = vmatprep.subr.mxu0 0.0
        %11310 = vmatpush1.msra.mxu0 0.0
        %11311 = vmatprep.subr.mxu0 0.0
        %11312 = vmatpush1.msra.mxu0 0.0
        %11313 = vmatprep.subr.mxu0 0.0
        %11314 = vmatpush1.msra.mxu0 0.0
        %11315 = vmatprep.subr.mxu0 0.0
        %11316 = vmatpush1.msra.mxu0 0.0
        %11317 = vmatprep.subr.mxu0 0.0
        %11318 = vmatpush1.msra.mxu0 0.0
        %11319 = vmatprep.subr.mxu0 0.0
        %11320 = vmatpush1.msra.mxu0 0.0
        %11321 = vmatprep.subr.mxu0 0.0
        %11322 = vmatpush1.msra.mxu0 0.0
        %11323 = vmatprep.subr.mxu0 0.0
        %11324 = vmatpush1.msra.mxu0 0.0
        %11325 = vmatprep.subr.mxu0 0.0
        %11326 = vmatpush1.msra.mxu0 0.0
        %11327 = vmatprep.subr.mxu0 0.0
        %11328 = vmatpush1.msra.mxu0 0.0
        %11329 = vmatprep.subr.mxu0 0.0
        %11330 = vmatpush1.msra.mxu0 0.0
        %11331 = vmatprep.subr.mxu0 0.0
        %11332 = vmatpush1.msra.mxu0 0.0
        %11333 = vmatprep.subr.mxu0 0.0
        %11334 = vmatpush1.msra.mxu0 0.0
        %11335 = vmatprep.subr.mxu0 0.0
        %11336 = vmatpush1.msra.mxu0 0.0
        %11337 = vmatprep.subr.mxu0 0.0
        %11338 = vmatpush1.msra.mxu0 0.0
        %11339 = vmatprep.subr.mxu0 0.0
        %11340 = vmatpush1.msra.mxu0 0.0
        %11341 = vmatprep.subr.mxu0 0.0
        %11342 = vmatpush1.msra.mxu0 0.0
        %11343 = vmatprep.subr.mxu0 0.0
        %11344 = vmatpush1.msra.mxu0 0.0
        %11345 = vmatprep.subr.mxu0 0.0
        %11346 = vmatpush1.msra.mxu0 0.0
        %11347 = vmatprep.subr.mxu0 0.0
        %11348 = vmatpush1.msra.mxu0 0.0
        %11349 = vmatprep.subr.mxu0 0.0
        %11350 = vmatpush1.msra.mxu0 0.0
        %11351 = vmatprep.subr.mxu0 0.0
        %11352 = vmatpush1.msra.mxu0 0.0
        %11353 = vmatprep.subr.mxu0 0.0
        %11354 = vmatpush1.msra.mxu0 0.0
        %11355 = vmatprep.subr.mxu0 0.0
        %11356 = vmatpush1.msra.mxu0 0.0
        %11357 = vmatprep.subr.mxu0 0.0
        %11358 = vmatpush1.msra.mxu0 0.0
        %11359 = vmatprep.subr.mxu0 0.0
        %11360 = vmatpush1.msra.mxu0 0.0
        %11361 = vmatprep.subr.mxu0 0.0
        %11362 = vmatpush1.msra.mxu0 0.0
        %11363 = vmatprep.mubr.f32.mxu0 0.0
        %11364 = vmatmul.mubr.f32.gmra.mrb[0].mxu0 %v11213
        %v11365 = vpop.f32.mrb[0].mxu0
        %v11366 = vadd.f32 0.0, %v11365
        %v11367 = vpop.f32.mrb[0].mxu0
        %v11368 = vadd.f32 0.0, %v11367
        %11369 = vdwg.mxu0
        %v11372 = vcombine.high %v11207, %v11207
        %v11373 = vcombine.high %v11208, %v11208
        %v11375 = vsel %vm11211, %v11209, 0
        %v11377 = vsel %vm11215, %v11207, 0
        %v11379 = vsel %vm11215, %v11372, 0
        %v11381 = vsel %vm11215, %v11208, 0
        %v11383 = vsel %vm11215, %v11373, 0
        %11385 = vmatprep.subr.mxu0 %v11379
        %11386 = vmatpush1.msra.mxu0 %v11377
        %11387 = vmatprep.subr.mxu0 0.0
        %11388 = vmatpush1.msra.mxu0 0.0
        %11389 = vmatprep.subr.mxu0 0.0
        %11390 = vmatpush1.msra.mxu0 0.0
        %11391 = vmatprep.subr.mxu0 0.0
        %11392 = vmatpush1.msra.mxu0 0.0
        %11393 = vmatprep.subr.mxu0 0.0
        %11394 = vmatpush1.msra.mxu0 0.0
        %11395 = vmatprep.subr.mxu0 0.0
        %11396 = vmatpush1.msra.mxu0 0.0
        %11397 = vmatprep.subr.mxu0 0.0
        %11398 = vmatpush1.msra.mxu0 0.0
        %11399 = vmatprep.subr.mxu0 0.0
        %11400 = vmatpush1.msra.mxu0 0.0
        %11401 = vmatprep.subr.mxu0 0.0
        %11402 = vmatpush1.msra.mxu0 0.0
        %11403 = vmatprep.subr.mxu0 0.0
        %11404 = vmatpush1.msra.mxu0 0.0
        %11405 = vmatprep.subr.mxu0 0.0
        %11406 = vmatpush1.msra.mxu0 0.0
        %11407 = vmatprep.subr.mxu0 0.0
        %11408 = vmatpush1.msra.mxu0 0.0
        %11409 = vmatprep.subr.mxu0 0.0
        %11410 = vmatpush1.msra.mxu0 0.0
        %11411 = vmatprep.subr.mxu0 0.0
        %11412 = vmatpush1.msra.mxu0 0.0
        %11413 = vmatprep.subr.mxu0 0.0
        %11414 = vmatpush1.msra.mxu0 0.0
        %11415 = vmatprep.subr.mxu0 0.0
        %11416 = vmatpush1.msra.mxu0 0.0
        %11417 = vmatprep.subr.mxu0 0.0
        %11418 = vmatpush1.msra.mxu0 0.0
        %11419 = vmatprep.subr.mxu0 0.0
        %11420 = vmatpush1.msra.mxu0 0.0
        %11421 = vmatprep.subr.mxu0 0.0
        %11422 = vmatpush1.msra.mxu0 0.0
        %11423 = vmatprep.subr.mxu0 0.0
        %11424 = vmatpush1.msra.mxu0 0.0
        %11425 = vmatprep.subr.mxu0 0.0
        %11426 = vmatpush1.msra.mxu0 0.0
        %11427 = vmatprep.subr.mxu0 0.0
        %11428 = vmatpush1.msra.mxu0 0.0
        %11429 = vmatprep.subr.mxu0 0.0
        %11430 = vmatpush1.msra.mxu0 0.0
        %11431 = vmatprep.subr.mxu0 0.0
        %11432 = vmatpush1.msra.mxu0 0.0
        %11433 = vmatprep.subr.mxu0 0.0
        %11434 = vmatpush1.msra.mxu0 0.0
        %11435 = vmatprep.subr.mxu0 0.0
        %11436 = vmatpush1.msra.mxu0 0.0
        %11437 = vmatprep.subr.mxu0 0.0
        %11438 = vmatpush1.msra.mxu0 0.0
        %11439 = vmatprep.subr.mxu0 0.0
        %11440 = vmatpush1.msra.mxu0 0.0
        %11441 = vmatprep.subr.mxu0 0.0
        %11442 = vmatpush1.msra.mxu0 0.0
        %11443 = vmatprep.subr.mxu0 0.0
        %11444 = vmatpush1.msra.mxu0 0.0
        %11445 = vmatprep.subr.mxu0 0.0
        %11446 = vmatpush1.msra.mxu0 0.0
        %11447 = vmatprep.subr.mxu0 0.0
        %11448 = vmatpush1.msra.mxu0 0.0
        %11449 = vmatprep.mubr.f32.mxu0 0.0
        %11450 = vmatmul.mubr.f32.gmra.mrb[0].mxu0 %v11375
        %v11451 = vpop.f32.mrb[0].mxu0
        %v11452 = vadd.f32 %v11295, %v11451
        %v11453 = vpop.f32.mrb[0].mxu0
        %v11454 = vadd.f32 %v11297, %v11453
        %11455 = vdwg.mxu0
        %11456 = vmatprep.subr.mxu0 %v11383
        %11457 = vmatpush1.msra.mxu0 %v11381
        %11458 = vmatprep.subr.mxu0 0.0
        %11459 = vmatpush1.msra.mxu0 0.0
        %11460 = vmatprep.subr.mxu0 0.0
        %11461 = vmatpush1.msra.mxu0 0.0
        %11462 = vmatprep.subr.mxu0 0.0
        %11463 = vmatpush1.msra.mxu0 0.0
        %11464 = vmatprep.subr.mxu0 0.0
        %11465 = vmatpush1.msra.mxu0 0.0
        %11466 = vmatprep.subr.mxu0 0.0
        %11467 = vmatpush1.msra.mxu0 0.0
        %11468 = vmatprep.subr.mxu0 0.0
        %11469 = vmatpush1.msra.mxu0 0.0
        %11470 = vmatprep.subr.mxu0 0.0
        %11471 = vmatpush1.msra.mxu0 0.0
        %11472 = vmatprep.subr.mxu0 0.0
        %11473 = vmatpush1.msra.mxu0 0.0
        %11474 = vmatprep.subr.mxu0 0.0
        %11475 = vmatpush1.msra.mxu0 0.0
        %11476 = vmatprep.subr.mxu0 0.0
        %11477 = vmatpush1.msra.mxu0 0.0
        %11478 = vmatprep.subr.mxu0 0.0
        %11479 = vmatpush1.msra.mxu0 0.0
        %11480 = vmatprep.subr.mxu0 0.0
        %11481 = vmatpush1.msra.mxu0 0.0
        %11482 = vmatprep.subr.mxu0 0.0
        %11483 = vmatpush1.msra.mxu0 0.0
        %11484 = vmatprep.subr.mxu0 0.0
        %11485 = vmatpush1.msra.mxu0 0.0
        %11486 = vmatprep.subr.mxu0 0.0
        %11487 = vmatpush1.msra.mxu0 0.0
        %11488 = vmatprep.subr.mxu0 0.0
        %11489 = vmatpush1.msra.mxu0 0.0
        %11490 = vmatprep.subr.mxu0 0.0
        %11491 = vmatpush1.msra.mxu0 0.0
        %11492 = vmatprep.subr.mxu0 0.0
        %11493 = vmatpush1.msra.mxu0 0.0
        %11494 = vmatprep.subr.mxu0 0.0
        %11495 = vmatpush1.msra.mxu0 0.0
        %11496 = vmatprep.subr.mxu0 0.0
        %11497 = vmatpush1.msra.mxu0 0.0
        %11498 = vmatprep.subr.mxu0 0.0
        %11499 = vmatpush1.msra.mxu0 0.0
        %11500 = vmatprep.subr.mxu0 0.0
        %11501 = vmatpush1.msra.mxu0 0.0
        %11502 = vmatprep.subr.mxu0 0.0
        %11503 = vmatpush1.msra.mxu0 0.0
        %11504 = vmatprep.subr.mxu0 0.0
        %11505 = vmatpush1.msra.mxu0 0.0
        %11506 = vmatprep.subr.mxu0 0.0
        %11507 = vmatpush1.msra.mxu0 0.0
        %11508 = vmatprep.subr.mxu0 0.0
        %11509 = vmatpush1.msra.mxu0 0.0
        %11510 = vmatprep.subr.mxu0 0.0
        %11511 = vmatpush1.msra.mxu0 0.0
        %11512 = vmatprep.subr.mxu0 0.0
        %11513 = vmatpush1.msra.mxu0 0.0
        %11514 = vmatprep.subr.mxu0 0.0
        %11515 = vmatpush1.msra.mxu0 0.0
        %11516 = vmatprep.subr.mxu0 0.0
        %11517 = vmatpush1.msra.mxu0 0.0
        %11518 = vmatprep.subr.mxu0 0.0
        %11519 = vmatpush1.msra.mxu0 0.0
        %11520 = vmatprep.mubr.f32.mxu0 0.0
        %11521 = vmatmul.mubr.f32.gmra.mrb[0].mxu0 %v11375
        %v11522 = vpop.f32.mrb[0].mxu0
        %v11523 = vadd.f32 %v11366, %v11522
        %v11524 = vpop.f32.mrb[0].mxu0
        %v11525 = vadd.f32 %v11368, %v11524
        %11526 = vdwg.mxu0
        %v11527 = vld [vmem:[%s7] sm:$0xf]
        %11529 = vset.pattern.permute.xlu0 0
        %11530 = vperm.xlu0 %11529, %v11527
        %v11531 = vpop.permute.xlu0 %11530
        %v11533 = vmul.f32 %v11452, %v11531
        %v11534 = vmul.f32 %v11454, %v11531
        %v11535 = vmul.f32 %v11523, %v11531
        %v11536 = vmul.f32 %v11525, %v11531
        %v11537 = vld [vmem:[%s8] sm:$0xf]
        %11539 = vset.pattern.permute.xlu0 0
        %11540 = vperm.xlu0 %11539, %v11537
        %v11541 = vpop.permute.xlu0 %11540
        %v11543 = vadd.f32 %v11533, %v11541
        %v11544 = vadd.f32 %v11534, %v11541
        %v11545 = vadd.f32 %v11535, %v11541
        %v11546 = vadd.f32 %v11536, %v11541
        %v11547 = vmax.f32 %v11543, 0.0
        %v11548 = vmax.f32 %v11544, 0.0
        %v11549 = vmax.f32 %v11545, 0.0
        %v11550 = vmax.f32 %v11546, 0.0
        %v11555 = vcombine.low %v11547, %v11548
        %v11556 = vcombine.low %v11549, %v11550
        %11559 = vst [vmem:[%s365] sm:$0xff] %v11555
        %11560 = vst [vmem:[%s365 + $0x8] sm:$0xff] %v11556
        %s11561 = sand.u32 %s233, 1
        %s11562 = scalar_lea.sflag [#allocation5], %s11561
        %s11563 = sand.u32 %s233, 1
        %s11564 = smul.addr %s11563, 16
        %s11565 = scalar_lea.vmem [#allocation6], %s11564
        // Predicated region
        $region61: #{tpu_custom_call.1} parent=55 // pred_check
          %p11566 = pneg %p243
        $region62: #{tpu_custom_call.1} parent=55 // pred_check_branch
          %11568 = sbr.rel (%p11566) target = $region64
        $region63: #{tpu_custom_call.1} parent=55 // pred_region
          %s11570 = ssub.s32 256, 256
          %11571 = vsyncadd %s11562, %s11570
          %s11572 = smul.addr %s26, 4
          %s11573 = smul.addr %s11572, 64
          %s11574 = scalar_lea.hbm %s9, %s11573
          %s11576 = sshll.u32 %s11565, 4
          %s11577 = int_to_ptr.vmem [resolvable:$true] %s11576
          %11579 = dma.vmem_to_hbm [thread:$0]  %s11577, 256, %s11574, %s11562
        $region64: #{tpu_custom_call.1} parent=55 // pred_fallthru
          _
      $region56: #{tpu_custom_call.1} parent=5 // pred_fallthru
        _
      %p11580 = scmp.le.s32.totalorder 2, %s21
      // Predicated region
      $region65: #{tpu_custom_call.1} parent=5 // pred_check
        %p11581 = pneg %p11580
      $region66: #{tpu_custom_call.1} parent=5 // pred_check_branch
        %11583 = sbr.rel (%p11581) target = $region68
      $region67: #{tpu_custom_call.1} parent=5 // pred_region
        %s11584 = ssub.s32 %s21, 2
        // Predicated region
        $region69: #{tpu_custom_call.1} parent=67 // pred_check
          %p11585 = pneg %p249
        $region70: #{tpu_custom_call.1} parent=67 // pred_check_branch
          %11587 = sbr.rel (%p11585) target = $region72
        $region71: #{tpu_custom_call.1} parent=67 // pred_region
          %s11588 = sand.u32 %s234, 1
          %s11589 = scalar_lea.sflag [#allocation5], %s11588
          %s11590 = sand.u32 %s234, 1
          %s11591 = smul.addr %s11590, 16
          %s11592 = scalar_lea.vmem [#allocation6], %s11591
          %11593 = dma.done %s11589, 256
        $region72: #{tpu_custom_call.1} parent=67 // pred_fallthru
          _
      $region68: #{tpu_custom_call.1} parent=5 // pred_fallthru
        _
    $region6: #{tpu_custom_call.1} parent=1 // loop_footer
      %s25 = sadd.s32 1, %s21
    $region7: #{tpu_custom_call.1} parent=1 // loop_footer_branch
      %20 = sbr.rel target = $region3
    $region8: #{tpu_custom_call.1} parent=1 // loop_exit
      _
    %11594 = vsyncpa [#allocation4], 1
    %s11595 = scalar_lea.sflag [#allocation4], 1
    %11596 = vsyncpa %s11595, 1
    %11597 = vsyncpa [#allocation5], 1
    %s11598 = scalar_lea.sflag [#allocation5], 1
    %11599 = vsyncpa %s11598, 1

</llo_original>
